<compile_context>
chip_gen: v6e
topology: v6e:2x2x1
jax: 0.10.0
libtpu: 0.0.40
codegen_flags: <defaults>
</compile_context>

<pallas_src>
import functools

import jax
import jax.numpy as jnp
from jax import lax
from jax.experimental import pallas as pl
from jax.experimental.pallas import tpu as pltpu

EPS = 1e-5
CB = 128          # output-channel block = one lane-dense vreg width


def _im2col_conv_bn(src_pad_ref, w_ref, g_ref, b_ref, patches_ref):
    """3x3 SAME conv (stride 1) + training-mode BN for one Cout block.

    src_pad_ref : (N, H+2, W+2, Cp)  bf16, spatially padded, all input channels
    w_ref       : (9*Cp, CB)         bf16, flattened HWIO weights for this block
    g_ref,b_ref : (1, CB)            f32 BN gamma / beta for this block
    patches_ref : (N*H*W, 9*Cp)      bf16 VMEM scratch (im2col slab)
    returns     : (N*H*W, CB)        f32 normalized activations
    """
    n, hp, wp, cp = src_pad_ref.shape
    h, w = hp - 2, wp - 2

    # Build the im2col slab: 9 shifted copies concatenated along K.
    # (Rebuilt every grid step: with "parallel" semantics the steps may run on
    #  different TensorCores, so VMEM scratch cannot be shared across them.)
    for tap in range(9):
        dy, dx = tap // 3, tap % 3
        patch = src_pad_ref[:, dy:dy + h, dx:dx + w, :]            # (N, H, W, Cp)
        patches_ref[:, tap * cp:(tap + 1) * cp] = patch.reshape(n * h * w, cp)

    # Single MXU matmul, contraction K = 9*Cp, f32 accumulation.
    y = jnp.dot(patches_ref[...], w_ref[...],
                preferred_element_type=jnp.float32)                # (NHW, CB)

    # BatchNorm training-mode forward: per-channel batch stats, biased variance.
    inv_cnt = 1.0 / (n * h * w)
    mean = jnp.sum(y, axis=0, keepdims=True) * inv_cnt
    diff = y - mean
    var = jnp.sum(diff * diff, axis=0, keepdims=True) * inv_cnt
    return diff * lax.rsqrt(var + EPS) * g_ref[...] + b_ref[...]


def conv1_bn1_kernel(xpad_ref, w_ref, g_ref, b_ref, ypad_ref, patches_ref):
    """Stage 1: y1 = bn1(conv1(x)), stored in spatially padded bf16 layout."""
    n, hp, wp, _ = xpad_ref.shape
    h, w = hp - 2, wp - 2
    cb = ypad_ref.shape[-1]

    ybn = _im2col_conv_bn(xpad_ref, w_ref, g_ref, b_ref, patches_ref)

    # Zero only the 1-pixel halo (2 row strips + 2 column strips) ...
    row0 = jnp.zeros((n, 1, wp, cb), ypad_ref.dtype)
    ypad_ref[:, 0:1, :, :] = row0
    ypad_ref[:, h + 1:h + 2, :, :] = row0
    col0 = jnp.zeros((n, hp, 1, cb), ypad_ref.dtype)
    ypad_ref[:, :, 0:1, :] = col0
    ypad_ref[:, :, w + 1:w + 2, :] = col0
    # ... then write the interior once (lane-dense 128-wide channel block).
    ypad_ref[:, 1:h + 1, 1:w + 1, :] = ybn.astype(ypad_ref.dtype).reshape(n, h, w, cb)


def conv2_bn2_res_kernel(y1pad_ref, w_ref, g_ref, b_ref, x_ref, o_ref, patches_ref):
    """Stage 2: out = relu(bn2(conv2(y1)) + identity)."""
    n, h, w, cb = o_ref.shape
    ybn = _im2col_conv_bn(y1pad_ref, w_ref, g_ref, b_ref, patches_ref)   # (NHW, CB) f32
    identity = x_ref[...].astype(jnp.float32).reshape(n * h * w, cb)
    out = jnp.maximum(ybn + identity, 0.0)
    o_ref[...] = out.reshape(n, h, w, cb).astype(o_ref.dtype)


def bloco_residual(x_nhwc, w1_hwio, g1, b1, w2_hwio, g2, b2):
    """x_nhwc (N,H,W,C), conv weights HWIO (3,3,C,C), BN gamma/beta (C,)."""
    n, h, w, c = x_nhwc.shape
    cout = w1_hwio.shape[-1]
    assert c == cout, "stride=1 / downsample=None requires Cin == Cout"
    cp = max(CB, pl.cdiv(c, CB) * CB)           # lane-dense channel padding
    nblk = cp // CB

    # --- lane-dense bf16 operands (zero padding keeps the math exact) ---
    xp = jnp.pad(x_nhwc, ((0, 0), (0, 0), (0, 0), (0, cp - c))).astype(jnp.bfloat16)
    xpad = jnp.pad(xp, ((0, 0), (1, 1), (1, 1), (0, 0)))            # spatial halo

    def prep_w(wh):
        wpad = jnp.pad(wh, ((0, 0), (0, 0), (0, cp - c), (0, cp - cout)))
        return wpad.astype(jnp.bfloat16).reshape(9 * cp, cp)        # (9*Cp, Cp)

    def prep_gb(v):
        return jnp.pad(v.astype(jnp.float32), (0, cp - cout)).reshape(1, cp)

    w1p, w2p = prep_w(w1_hwio), prep_w(w2_hwio)
    g1p, b1p, g2p, b2p = (prep_gb(v) for v in (g1, b1, g2, b2))

    cparams = pltpu.CompilerParams(
        dimension_semantics=("parallel",),       # Cout blocks -> megacore on v7x
        vmem_limit_bytes=32 * 1024 * 1024)
    slab = pltpu.VMEM((n * h * w, 9 * cp), jnp.bfloat16)

    # --- stage 1: conv1 + bn1, output already in padded layout for stage 2 ---
    y1pad = pl.pallas_call(
        conv1_bn1_kernel,
        out_shape=jax.ShapeDtypeStruct((n, h + 2, w + 2, cp), jnp.bfloat16),
        grid_spec=pltpu.PrefetchScalarGridSpec(
            num_scalar_prefetch=0, grid=(nblk,),
            in_specs=[
                pl.BlockSpec((n, h + 2, w + 2, cp), lambda j: (0, 0, 0, 0)),
                pl.BlockSpec((9 * cp, CB), lambda j: (0, j)),
                pl.BlockSpec((1, CB), lambda j: (0, j)),
                pl.BlockSpec((1, CB), lambda j: (0, j)),
            ],
            out_specs=pl.BlockSpec((n, h + 2, w + 2, CB), lambda j: (0, 0, 0, j)),
            scratch_shapes=[slab]),
        compiler_params=cparams,
    )(xpad, w1p, g1p, b1p)

    # --- stage 2: conv2 + bn2 + residual add + relu ---
    out_p = pl.pallas_call(
        conv2_bn2_res_kernel,
        out_shape=jax.ShapeDtypeStruct((n, h, w, cp), jnp.float32),
        grid_spec=pltpu.PrefetchScalarGridSpec(
            num_scalar_prefetch=0, grid=(nblk,),
            in_specs=[
                pl.BlockSpec((n, h + 2, w + 2, cp), lambda j: (0, 0, 0, 0)),
                pl.BlockSpec((9 * cp, CB), lambda j: (0, j)),
                pl.BlockSpec((1, CB), lambda j: (0, j)),
                pl.BlockSpec((1, CB), lambda j: (0, j)),
                pl.BlockSpec((n, h, w, CB), lambda j: (0, 0, 0, j)),
            ],
            out_specs=pl.BlockSpec((n, h, w, CB), lambda j: (0, 0, 0, j)),
            scratch_shapes=[slab]),
        compiler_params=cparams,
    )(y1pad, w2p, g2p, b2p, xp)

    return out_p[..., :cout].astype(x_nhwc.dtype)


def ref_forward(x, w1, g1, b1, w2, g2, b2):
    """Pure-JAX reference mirroring the kernel's bf16-in / f32-accumulate math."""
    conv = functools.partial(
        lax.conv_general_dilated, window_strides=(1, 1), padding="SAME",
        dimension_numbers=("NHWC", "HWIO", "NHWC"),
        preferred_element_type=jnp.float32)

    def bn(y, g, b):
        mean = y.mean(axis=(0, 1, 2))
        var = y.var(axis=(0, 1, 2))              # biased, like BN training forward
        return (y - mean) * lax.rsqrt(var + EPS) * g + b

    xb = x.astype(jnp.bfloat16)
    y1 = bn(conv(xb, w1.astype(jnp.bfloat16)), g1, b1)
    y2 = bn(conv(y1.astype(jnp.bfloat16), w2.astype(jnp.bfloat16)), g2, b2)
    return jnp.maximum(y2 + xb.astype(jnp.float32), 0.0)


if __name__ == "__main__":
    key = jax.random.PRNGKey(0)
    kx, k1, k2, kg1, kb1, kg2, kb2 = jax.random.split(key, 7)

    # Shapes implied by the module: NCHW input, Cin == Cout (no downsample).
    N, C, H, W = 2, 4, 16, 16
    Cout = C

    x_nchw = jax.random.normal(kx, (N, C, H, W), jnp.float32)      # PyTorch layout
    x = jnp.transpose(x_nchw, (0, 2, 3, 1))                        # -> NHWC

    # Deterministic synthetic parameters (conv weights HWIO; BN gamma/beta).
    w1 = 0.1 * jax.random.normal(k1, (3, 3, C, Cout), jnp.float32)
    w2 = 0.1 * jax.random.normal(k2, (3, 3, Cout, Cout), jnp.float32)
    g1 = 1.0 + 0.1 * jax.random.normal(kg1, (Cout,), jnp.float32)
    b1 = 0.1 * jax.random.normal(kb1, (Cout,), jnp.float32)
    g2 = 1.0 + 0.1 * jax.random.normal(kg2, (Cout,), jnp.float32)
    b2 = 0.1 * jax.random.normal(kb2, (Cout,), jnp.float32)

    out = jax.block_until_ready(bloco_residual(x, w1, g1, b1, w2, g2, b2))

    ref = ref_forward(x, w1, g1, b1, w2, g2, b2)
    assert out.shape == (N, H, W, Cout)
    err = float(jnp.max(jnp.abs(out - ref)))
    # bf16 activations/weights with f32 accumulation: remaining differences vs the
    # mirrored reference come from bf16 re-rounding of y1 and reduction order.
    assert jnp.allclose(out, ref, atol=2e-2, rtol=2e-2), f"max abs err = {err}"

    print("KERNEL_OK")
</pallas_src>

<mosaic_0001>
module attributes {stable_mosaic.version = 11 : i64} {
  func.func @conv1_bn1_kernel(%arg0: i32, %arg1: memref<2x18x18x128xbf16, #tpu.memory_space<vmem>>, %arg2: memref<1152x128xbf16, #tpu.memory_space<vmem>>, %arg3: memref<1x128xf32, #tpu.memory_space<vmem>>, %arg4: memref<1x128xf32, #tpu.memory_space<vmem>>, %arg5: memref<2x18x18x128xbf16, #tpu.memory_space<vmem>>, %arg6: memref<512x1152xbf16, #tpu.memory_space<vmem>>) attributes {dimension_semantics = [#tpu.dimension_semantics<parallel>], iteration_bounds = array<i64: 1>, scalar_prefetch = 0 : i64, scratch_operands = 1 : i64, tpu.core_type = #tpu.core_type<tc>, window_params = [{pipeline_mode = #tpu.pipeline_mode<synchronous>, transform_indices = @transform_0, window_bounds = array<i64: 2, 18, 18, 128>}, {transform_indices = @transform_1, window_bounds = array<i64: 1152, 128>}, {transform_indices = @transform_2, window_bounds = array<i64: 1, 128>}, {transform_indices = @transform_3, window_bounds = array<i64: 1, 128>}, {transform_indices = @transform_4, window_bounds = array<i64: 2, 18, 18, 128>}]} {
    %c0 = arith.constant 0 : index
    %c0_0 = arith.constant 0 : index
    %c0_1 = arith.constant 0 : index
    %c0_2 = arith.constant 0 : index
    %0 = vector.load %arg1[%c0, %c0_0, %c0_1, %c0_2] : memref<2x18x18x128xbf16, #tpu.memory_space<vmem>>, vector<2x16x16x128xbf16>
    %1 = vector.shape_cast %0 : vector<2x16x16x128xbf16> to vector<512x128xbf16>
    %c0_3 = arith.constant 0 : index
    %c0_4 = arith.constant 0 : index
    %2 = vector.load %arg6[%c0_3, %c0_4] : memref<512x1152xbf16, #tpu.memory_space<vmem>>, vector<512x128xbf16>
    tpu.vector_store %arg6[%c0_3, %c0_4], %1 {strides = array<i32>} : memref<512x1152xbf16, #tpu.memory_space<vmem>>, vector<512x128xbf16>,
    %c0_5 = arith.constant 0 : index
    %c0_6 = arith.constant 0 : index
    %c1 = arith.constant 1 : index
    %c0_7 = arith.constant 0 : index
    %3 = vector.load %arg1[%c0_5, %c0_6, %c1, %c0_7] : memref<2x18x18x128xbf16, #tpu.memory_space<vmem>>, vector<2x16x16x128xbf16>
    %4 = vector.shape_cast %3 : vector<2x16x16x128xbf16> to vector<512x128xbf16>
    %c0_8 = arith.constant 0 : index
    %c128 = arith.constant 128 : index
    %5 = vector.load %arg6[%c0_8, %c128] : memref<512x1152xbf16, #tpu.memory_space<vmem>>, vector<512x128xbf16>
    tpu.vector_store %arg6[%c0_8, %c128], %4 {strides = array<i32>} : memref<512x1152xbf16, #tpu.memory_space<vmem>>, vector<512x128xbf16>,
    %c0_9 = arith.constant 0 : index
    %c0_10 = arith.constant 0 : index
    %c2 = arith.constant 2 : index
    %c0_11 = arith.constant 0 : index
    %6 = vector.load %arg1[%c0_9, %c0_10, %c2, %c0_11] : memref<2x18x18x128xbf16, #tpu.memory_space<vmem>>, vector<2x16x16x128xbf16>
    %7 = vector.shape_cast %6 : vector<2x16x16x128xbf16> to vector<512x128xbf16>
    %c0_12 = arith.constant 0 : index
    %c256 = arith.constant 256 : index
    %8 = vector.load %arg6[%c0_12, %c256] : memref<512x1152xbf16, #tpu.memory_space<vmem>>, vector<512x128xbf16>
    tpu.vector_store %arg6[%c0_12, %c256], %7 {strides = array<i32>} : memref<512x1152xbf16, #tpu.memory_space<vmem>>, vector<512x128xbf16>,
    %c0_13 = arith.constant 0 : index
    %c1_14 = arith.constant 1 : index
    %c0_15 = arith.constant 0 : index
    %c0_16 = arith.constant 0 : index
    %9 = vector.load %arg1[%c0_13, %c1_14, %c0_15, %c0_16] : memref<2x18x18x128xbf16, #tpu.memory_space<vmem>>, vector<2x16x16x128xbf16>
    %10 = vector.shape_cast %9 : vector<2x16x16x128xbf16> to vector<512x128xbf16>
    %c0_17 = arith.constant 0 : index
    %c384 = arith.constant 384 : index
    %11 = vector.load %arg6[%c0_17, %c384] : memref<512x1152xbf16, #tpu.memory_space<vmem>>, vector<512x128xbf16>
    tpu.vector_store %arg6[%c0_17, %c384], %10 {strides = array<i32>} : memref<512x1152xbf16, #tpu.memory_space<vmem>>, vector<512x128xbf16>,
    %c0_18 = arith.constant 0 : index
    %c1_19 = arith.constant 1 : index
    %c1_20 = arith.constant 1 : index
    %c0_21 = arith.constant 0 : index
    %12 = vector.load %arg1[%c0_18, %c1_19, %c1_20, %c0_21] : memref<2x18x18x128xbf16, #tpu.memory_space<vmem>>, vector<2x16x16x128xbf16>
    %13 = vector.shape_cast %12 : vector<2x16x16x128xbf16> to vector<512x128xbf16>
    %c0_22 = arith.constant 0 : index
    %c512 = arith.constant 512 : index
    %14 = vector.load %arg6[%c0_22, %c512] : memref<512x1152xbf16, #tpu.memory_space<vmem>>, vector<512x128xbf16>
    tpu.vector_store %arg6[%c0_22, %c512], %13 {strides = array<i32>} : memref<512x1152xbf16, #tpu.memory_space<vmem>>, vector<512x128xbf16>,
    %c0_23 = arith.constant 0 : index
    %c1_24 = arith.constant 1 : index
    %c2_25 = arith.constant 2 : index
    %c0_26 = arith.constant 0 : index
    %15 = vector.load %arg1[%c0_23, %c1_24, %c2_25, %c0_26] : memref<2x18x18x128xbf16, #tpu.memory_space<vmem>>, vector<2x16x16x128xbf16>
    %16 = vector.shape_cast %15 : vector<2x16x16x128xbf16> to vector<512x128xbf16>
    %c0_27 = arith.constant 0 : index
    %c640 = arith.constant 640 : index
    %17 = vector.load %arg6[%c0_27, %c640] : memref<512x1152xbf16, #tpu.memory_space<vmem>>, vector<512x128xbf16>
    tpu.vector_store %arg6[%c0_27, %c640], %16 {strides = array<i32>} : memref<512x1152xbf16, #tpu.memory_space<vmem>>, vector<512x128xbf16>,
    %c0_28 = arith.constant 0 : index
    %c2_29 = arith.constant 2 : index
    %c0_30 = arith.constant 0 : index
    %c0_31 = arith.constant 0 : index
    %18 = vector.load %arg1[%c0_28, %c2_29, %c0_30, %c0_31] : memref<2x18x18x128xbf16, #tpu.memory_space<vmem>>, vector<2x16x16x128xbf16>
    %19 = vector.shape_cast %18 : vector<2x16x16x128xbf16> to vector<512x128xbf16>
    %c0_32 = arith.constant 0 : index
    %c768 = arith.constant 768 : index
    %20 = vector.load %arg6[%c0_32, %c768] : memref<512x1152xbf16, #tpu.memory_space<vmem>>, vector<512x128xbf16>
    tpu.vector_store %arg6[%c0_32, %c768], %19 {strides = array<i32>} : memref<512x1152xbf16, #tpu.memory_space<vmem>>, vector<512x128xbf16>,
    %c0_33 = arith.constant 0 : index
    %c2_34 = arith.constant 2 : index
    %c1_35 = arith.constant 1 : index
    %c0_36 = arith.constant 0 : index
    %21 = vector.load %arg1[%c0_33, %c2_34, %c1_35, %c0_36] : memref<2x18x18x128xbf16, #tpu.memory_space<vmem>>, vector<2x16x16x128xbf16>
    %22 = vector.shape_cast %21 : vector<2x16x16x128xbf16> to vector<512x128xbf16>
    %c0_37 = arith.constant 0 : index
    %c896 = arith.constant 896 : index
    %23 = vector.load %arg6[%c0_37, %c896] : memref<512x1152xbf16, #tpu.memory_space<vmem>>, vector<512x128xbf16>
    tpu.vector_store %arg6[%c0_37, %c896], %22 {strides = array<i32>} : memref<512x1152xbf16, #tpu.memory_space<vmem>>, vector<512x128xbf16>,
    %c0_38 = arith.constant 0 : index
    %c2_39 = arith.constant 2 : index
    %c2_40 = arith.constant 2 : index
    %c0_41 = arith.constant 0 : index
    %24 = vector.load %arg1[%c0_38, %c2_39, %c2_40, %c0_41] : memref<2x18x18x128xbf16, #tpu.memory_space<vmem>>, vector<2x16x16x128xbf16>
    %25 = vector.shape_cast %24 : vector<2x16x16x128xbf16> to vector<512x128xbf16>
    %c0_42 = arith.constant 0 : index
    %c1024 = arith.constant 1024 : index
    %26 = vector.load %arg6[%c0_42, %c1024] : memref<512x1152xbf16, #tpu.memory_space<vmem>>, vector<512x128xbf16>
    tpu.vector_store %arg6[%c0_42, %c1024], %25 {strides = array<i32>} : memref<512x1152xbf16, #tpu.memory_space<vmem>>, vector<512x128xbf16>,
    %c0_43 = arith.constant 0 : index
    %c0_44 = arith.constant 0 : index
    %27 = vector.load %arg6[%c0_43, %c0_44] : memref<512x1152xbf16, #tpu.memory_space<vmem>>, vector<512x1152xbf16>
    %c0_45 = arith.constant 0 : index
    %c0_46 = arith.constant 0 : index
    %28 = vector.load %arg2[%c0_45, %c0_46] : memref<1152x128xbf16, #tpu.memory_space<vmem>>, vector<1152x128xbf16>
    %cst = arith.constant dense<0.000000e+00> : vector<512x128xf32>
    %29 = tpu.matmul %27, %28, %cst {dimension_numbers = #tpu.dot_dimension_numbers<[1], [0], [0], [1], [0, 0, 1, 1], [], []>} : vector<512x1152xbf16>, vector<1152x128xbf16>, vector<512x128xf32> -> vector<512x128xf32>
    %cst_47 = arith.constant dense<0.000000e+00> : vector<128xf32>
    %30 = vector.multi_reduction <add>, %29, %cst_47 [0] : vector<512x128xf32> to vector<128xf32>
    %31 = vector.shape_cast %30 : vector<128xf32> to vector<1x128xf32>
    %cst_48 = arith.constant 0.001953125 : f32
    %32 = vector.broadcast %cst_48 : f32 to vector<1x128xf32>
    %33 = arith.mulf %31, %32 : vector<1x128xf32>
    %34 = vector.broadcast %33 : vector<1x128xf32> to vector<512x128xf32>
    %35 = arith.subf %29, %34 : vector<512x128xf32>
    %36 = arith.mulf %35, %35 : vector<512x128xf32>
    %cst_49 = arith.constant dense<0.000000e+00> : vector<128xf32>
    %37 = vector.multi_reduction <add>, %36, %cst_49 [0] : vector<512x128xf32> to vector<128xf32>
    %38 = vector.shape_cast %37 : vector<128xf32> to vector<1x128xf32>
    %cst_50 = arith.constant 0.001953125 : f32
    %39 = vector.broadcast %cst_50 : f32 to vector<1x128xf32>
    %40 = arith.mulf %38, %39 : vector<1x128xf32>
    %cst_51 = arith.constant 9.99999974E-6 : f32
    %41 = vector.broadcast %cst_51 : f32 to vector<1x128xf32>
    %42 = arith.addf %40, %41 : vector<1x128xf32>
    %43 = math.rsqrt %42 : vector<1x128xf32>
    %44 = vector.broadcast %43 : vector<1x128xf32> to vector<512x128xf32>
    %45 = arith.mulf %35, %44 : vector<512x128xf32>
    %c0_52 = arith.constant 0 : index
    %c0_53 = arith.constant 0 : index
    %46 = vector.load %arg3[%c0_52, %c0_53] : memref<1x128xf32, #tpu.memory_space<vmem>>, vector<1x128xf32>
    %47 = vector.broadcast %46 : vector<1x128xf32> to vector<512x128xf32>
    %48 = arith.mulf %45, %47 : vector<512x128xf32>
    %c0_54 = arith.constant 0 : index
    %c0_55 = arith.constant 0 : index
    %49 = vector.load %arg4[%c0_54, %c0_55] : memref<1x128xf32, #tpu.memory_space<vmem>>, vector<1x128xf32>
    %50 = vector.broadcast %49 : vector<1x128xf32> to vector<512x128xf32>
    %51 = arith.addf %48, %50 : vector<512x128xf32>
    %cst_56 = arith.constant 0.000000e+00 : bf16
    %52 = vector.broadcast %cst_56 : bf16 to vector<2x1x18x128xbf16>
    %c0_57 = arith.constant 0 : index
    %c0_58 = arith.constant 0 : index
    %c0_59 = arith.constant 0 : index
    %c0_60 = arith.constant 0 : index
    %53 = vector.load %arg5[%c0_57, %c0_58, %c0_59, %c0_60] : memref<2x18x18x128xbf16, #tpu.memory_space<vmem>>, vector<2x1x18x128xbf16>
    tpu.vector_store %arg5[%c0_57, %c0_58, %c0_59, %c0_60], %52 {strides = array<i32>} : memref<2x18x18x128xbf16, #tpu.memory_space<vmem>>, vector<2x1x18x128xbf16>,
    %c0_61 = arith.constant 0 : index
    %c17 = arith.constant 17 : index
    %c0_62 = arith.constant 0 : index
    %c0_63 = arith.constant 0 : index
    %54 = vector.load %arg5[%c0_61, %c17, %c0_62, %c0_63] : memref<2x18x18x128xbf16, #tpu.memory_space<vmem>>, vector<2x1x18x128xbf16>
    tpu.vector_store %arg5[%c0_61, %c17, %c0_62, %c0_63], %52 {strides = array<i32>} : memref<2x18x18x128xbf16, #tpu.memory_space<vmem>>, vector<2x1x18x128xbf16>,
    %cst_64 = arith.constant 0.000000e+00 : bf16
    %55 = vector.broadcast %cst_64 : bf16 to vector<2x18x1x128xbf16>
    %c0_65 = arith.constant 0 : index
    %c0_66 = arith.constant 0 : index
    %c0_67 = arith.constant 0 : index
    %c0_68 = arith.constant 0 : index
    %56 = vector.load %arg5[%c0_65, %c0_66, %c0_67, %c0_68] : memref<2x18x18x128xbf16, #tpu.memory_space<vmem>>, vector<2x18x1x128xbf16>
    tpu.vector_store %arg5[%c0_65, %c0_66, %c0_67, %c0_68], %55 {strides = array<i32>} : memref<2x18x18x128xbf16, #tpu.memory_space<vmem>>, vector<2x18x1x128xbf16>,
    %c0_69 = arith.constant 0 : index
    %c0_70 = arith.constant 0 : index
    %c17_71 = arith.constant 17 : index
    %c0_72 = arith.constant 0 : index
    %57 = vector.load %arg5[%c0_69, %c0_70, %c17_71, %c0_72] : memref<2x18x18x128xbf16, #tpu.memory_space<vmem>>, vector<2x18x1x128xbf16>
    tpu.vector_store %arg5[%c0_69, %c0_70, %c17_71, %c0_72], %55 {strides = array<i32>} : memref<2x18x18x128xbf16, #tpu.memory_space<vmem>>, vector<2x18x1x128xbf16>,
    %58 = arith.truncf %51 : vector<512x128xf32> to vector<512x128xbf16>
    %59 = vector.shape_cast %58 : vector<512x128xbf16> to vector<2x16x16x128xbf16>
    %c0_73 = arith.constant 0 : index
    %c1_74 = arith.constant 1 : index
    %c1_75 = arith.constant 1 : index
    %c0_76 = arith.constant 0 : index
    %60 = vector.load %arg5[%c0_73, %c1_74, %c1_75, %c0_76] : memref<2x18x18x128xbf16, #tpu.memory_space<vmem>>, vector<2x16x16x128xbf16>
    tpu.vector_store %arg5[%c0_73, %c1_74, %c1_75, %c0_76], %59 {strides = array<i32>} : memref<2x18x18x128xbf16, #tpu.memory_space<vmem>>, vector<2x16x16x128xbf16>,
    return
  }
  func.func @transform_0(%arg0: i32) -> (i32, i32, i32, i32) {
    %c0_i32 = arith.constant 0 : i32
    %c0_i32_0 = arith.constant 0 : i32
    %c0_i32_1 = arith.constant 0 : i32
    %c0_i32_2 = arith.constant 0 : i32
    %c0_i32_3 = arith.constant 0 : i32
    return %c0_i32, %c0_i32_0, %c0_i32_1, %c0_i32_2 : i32, i32, i32, i32
  }
  func.func @transform_1(%arg0: i32) -> (i32, i32) {
    %c0_i32 = arith.constant 0 : i32
    %c0_i32_0 = arith.constant 0 : i32
    return %c0_i32, %arg0 : i32, i32
  }
  func.func @transform_2(%arg0: i32) -> (i32, i32) {
    %c0_i32 = arith.constant 0 : i32
    %c0_i32_0 = arith.constant 0 : i32
    return %c0_i32, %arg0 : i32, i32
  }
  func.func @transform_3(%arg0: i32) -> (i32, i32) {
    %c0_i32 = arith.constant 0 : i32
    %c0_i32_0 = arith.constant 0 : i32
    return %c0_i32, %arg0 : i32, i32
  }
  func.func @transform_4(%arg0: i32) -> (i32, i32, i32, i32) {
    %c0_i32 = arith.constant 0 : i32
    %c0_i32_0 = arith.constant 0 : i32
    %c0_i32_1 = arith.constant 0 : i32
    %c0_i32_2 = arith.constant 0 : i32
    return %c0_i32, %c0_i32_0, %c0_i32_1, %arg0 : i32, i32, i32, i32
  }
}

</mosaic_0001>

<llo_original>
// kernel: tpu_custom_call.1
$region0: #{tpu_custom_call.1}
  #allocation0 [shape = 'u32[]', space=smem, size = 0x4, offset = 0x4, fixed_abs, tag = 'smem constant byte address 0x4 - core index']
  #allocation1 [shape = 'u32[144,128]{1,0:T(1,128)}', space=vmem, size = 0x12000, scoped, tag = 'internal scratch']
  #allocation2 [shape = 'bf16[512,1152]{1,0:T(8,128)(2,1)}', space=vmem, size = 0x120000, scoped, tag = 'scratch operand']
  %s0 = inlined_call_operand.vmem [shape: bf16[2,18,18,128], index: 0, kind: input, shape index: {}]
  %s1 = inlined_call_operand.vmem [shape: bf16[1152,128], index: 1, kind: input, shape index: {}]
  %s2 = inlined_call_operand.vmem [shape: f32[1,128], index: 2, kind: input, shape index: {}]
  %s3 = inlined_call_operand.vmem [shape: f32[1,128], index: 3, kind: input, shape index: {}]
  %s4 = inlined_call_operand.vmem [shape: bf16[2,18,18,128], index: 4, kind: output, shape index: {}]
  %s5 = sld [smem:[#allocation0]]
  $region26: #{tpu_custom_call.1} parent=0
    _
  %s7 = ssub.s32 1, %s5
  %s8 = scalar_select 0, %s7, %s5
  // Predicated region
  $region2: #{tpu_custom_call.1} parent=0 // pred_check
    _
  $region3: #{tpu_custom_call.1} parent=0 // pred_check_branch
    %10 = sbr.rel (0) target = $region5
  $region4: #{tpu_custom_call.1} parent=0 // pred_region
    _
  $region5: #{tpu_custom_call.1} parent=0 // pred_fallthru
    _
  // Predicated region
  $region6: #{tpu_custom_call.1} parent=0 // pred_check
    _
  $region7: #{tpu_custom_call.1} parent=0 // pred_check_branch
    %12 = sbr.rel (0) target = $region9
  $region8: #{tpu_custom_call.1} parent=0 // pred_region
    _
  $region9: #{tpu_custom_call.1} parent=0 // pred_fallthru
    _
  // Predicated region
  $region10: #{tpu_custom_call.1} parent=0 // pred_check
    _
  $region11: #{tpu_custom_call.1} parent=0 // pred_check_branch
    %14 = sbr.rel (0) target = $region13
  $region12: #{tpu_custom_call.1} parent=0 // pred_region
    _
  $region13: #{tpu_custom_call.1} parent=0 // pred_fallthru
    _
  // Predicated region
  $region14: #{tpu_custom_call.1} parent=0 // pred_check
    _
  $region15: #{tpu_custom_call.1} parent=0 // pred_check_branch
    %16 = sbr.rel (0) target = $region17
  $region16: #{tpu_custom_call.1} parent=0 // pred_region
    _
  $region17: #{tpu_custom_call.1} parent=0 // pred_fallthru
    _
  %v18 = vld [vmem:[%s0] sm:$0xf]
  %v19 = vld [vmem:[%s0 + $0x4] sm:$0xf]
  %v20 = vld [vmem:[%s0 + $0xc] sm:$0xf]
  %v21 = vld [vmem:[%s0 + $0x10] sm:$0xf]
  %v22 = vld [vmem:[%s0 + $0x18] sm:$0xf]
  %v23 = vld [vmem:[%s0 + $0x1c] sm:$0xf]
  %v24 = vld [vmem:[%s0 + $0x24] sm:$0xf]
  %v25 = vld [vmem:[%s0 + $0x28] sm:$0xf]
  %v26 = vld [vmem:[%s0 + $0x30] sm:$0xf]
  %v27 = vld [vmem:[%s0 + $0x34] sm:$0xf]
  %v28 = vld [vmem:[%s0 + $0x3c] sm:$0xf]
  %v29 = vld [vmem:[%s0 + $0x40] sm:$0xf]
  %v30 = vld [vmem:[%s0 + $0x48] sm:$0xf]
  %v31 = vld [vmem:[%s0 + $0x4c] sm:$0xf]
  %v32 = vld [vmem:[%s0 + $0x54] sm:$0xf]
  %v33 = vld [vmem:[%s0 + $0x58] sm:$0xf]
  %v34 = vld [vmem:[%s0 + $0x60] sm:$0xf]
  %v35 = vld [vmem:[%s0 + $0x64] sm:$0xf]
  %v36 = vld [vmem:[%s0 + $0x6c] sm:$0xf]
  %v37 = vld [vmem:[%s0 + $0x70] sm:$0xf]
  %v38 = vld [vmem:[%s0 + $0x78] sm:$0xf]
  %v39 = vld [vmem:[%s0 + $0x7c] sm:$0xf]
  %v40 = vld [vmem:[%s0 + $0x84] sm:$0xf]
  %v41 = vld [vmem:[%s0 + $0x88] sm:$0xf]
  %v42 = vld [vmem:[%s0 + $0x90] sm:$0xf]
  %v43 = vld [vmem:[%s0 + $0x94] sm:$0xf]
  %v44 = vld [vmem:[%s0 + $0x9c] sm:$0xf]
  %v45 = vld [vmem:[%s0 + $0xa0] sm:$0xf]
  %v46 = vld [vmem:[%s0 + $0xa8] sm:$0xf]
  %v47 = vld [vmem:[%s0 + $0xac] sm:$0xf]
  %v48 = vld [vmem:[%s0 + $0xb4] sm:$0xf]
  %v49 = vld [vmem:[%s0 + $0xb8] sm:$0xf]
  %v50 = vld [vmem:[%s0 + $0xd8] sm:$0xf]
  %v51 = vld [vmem:[%s0 + $0xdc] sm:$0xf]
  %v52 = vld [vmem:[%s0 + $0xe4] sm:$0xf]
  %v53 = vld [vmem:[%s0 + $0xe8] sm:$0xf]
  %v54 = vld [vmem:[%s0 + $0xf0] sm:$0xf]
  %v55 = vld [vmem:[%s0 + $0xf4] sm:$0xf]
  %v56 = vld [vmem:[%s0 + $0xfc] sm:$0xf]
  %v57 = vld [vmem:[%s0 + $0x100] sm:$0xf]
  %v58 = vld [vmem:[%s0 + $0x108] sm:$0xf]
  %v59 = vld [vmem:[%s0 + $0x10c] sm:$0xf]
  %v60 = vld [vmem:[%s0 + $0x114] sm:$0xf]
  %v61 = vld [vmem:[%s0 + $0x118] sm:$0xf]
  %v62 = vld [vmem:[%s0 + $0x120] sm:$0xf]
  %v63 = vld [vmem:[%s0 + $0x124] sm:$0xf]
  %v64 = vld [vmem:[%s0 + $0x12c] sm:$0xf]
  %v65 = vld [vmem:[%s0 + $0x130] sm:$0xf]
  %v66 = vld [vmem:[%s0 + $0x138] sm:$0xf]
  %v67 = vld [vmem:[%s0 + $0x13c] sm:$0xf]
  %v68 = vld [vmem:[%s0 + $0x144] sm:$0xf]
  %v69 = vld [vmem:[%s0 + $0x148] sm:$0xf]
  %v70 = vld [vmem:[%s0 + $0x150] sm:$0xf]
  %v71 = vld [vmem:[%s0 + $0x154] sm:$0xf]
  %v72 = vld [vmem:[%s0 + $0x15c] sm:$0xf]
  %v73 = vld [vmem:[%s0 + $0x160] sm:$0xf]
  %v74 = vld [vmem:[%s0 + $0x168] sm:$0xf]
  %v75 = vld [vmem:[%s0 + $0x16c] sm:$0xf]
  %v76 = vld [vmem:[%s0 + $0x174] sm:$0xf]
  %v77 = vld [vmem:[%s0 + $0x178] sm:$0xf]
  %v78 = vld [vmem:[%s0 + $0x180] sm:$0xf]
  %v79 = vld [vmem:[%s0 + $0x184] sm:$0xf]
  %v80 = vld [vmem:[%s0 + $0x18c] sm:$0xf]
  %v81 = vld [vmem:[%s0 + $0x190] sm:$0xf]
  %82 = vst [vmem:[#allocation2] sm:$0xf] %v18
  %83 = vst [vmem:[#allocation2 + $0x24] sm:$0xf] %v19
  %84 = vst [vmem:[#allocation2 + $0x48] sm:$0xf] %v20
  %85 = vst [vmem:[#allocation2 + $0x6c] sm:$0xf] %v21
  %86 = vst [vmem:[#allocation2 + $0x90] sm:$0xf] %v22
  %87 = vst [vmem:[#allocation2 + $0xb4] sm:$0xf] %v23
  %88 = vst [vmem:[#allocation2 + $0xd8] sm:$0xf] %v24
  %89 = vst [vmem:[#allocation2 + $0xfc] sm:$0xf] %v25
  %90 = vst [vmem:[#allocation2 + $0x120] sm:$0xf] %v26
  %91 = vst [vmem:[#allocation2 + $0x144] sm:$0xf] %v27
  %92 = vst [vmem:[#allocation2 + $0x168] sm:$0xf] %v28
  %93 = vst [vmem:[#allocation2 + $0x18c] sm:$0xf] %v29
  %94 = vst [vmem:[#allocation2 + $0x1b0] sm:$0xf] %v30
  %95 = vst [vmem:[#allocation2 + $0x1d4] sm:$0xf] %v31
  %96 = vst [vmem:[#allocation2 + $0x1f8] sm:$0xf] %v32
  %97 = vst [vmem:[#allocation2 + $0x21c] sm:$0xf] %v33
  %98 = vst [vmem:[#allocation2 + $0x240] sm:$0xf] %v34
  %99 = vst [vmem:[#allocation2 + $0x264] sm:$0xf] %v35
  %100 = vst [vmem:[#allocation2 + $0x288] sm:$0xf] %v36
  %101 = vst [vmem:[#allocation2 + $0x2ac] sm:$0xf] %v37
  %102 = vst [vmem:[#allocation2 + $0x2d0] sm:$0xf] %v38
  %103 = vst [vmem:[#allocation2 + $0x2f4] sm:$0xf] %v39
  %104 = vst [vmem:[#allocation2 + $0x318] sm:$0xf] %v40
  %105 = vst [vmem:[#allocation2 + $0x33c] sm:$0xf] %v41
  %106 = vst [vmem:[#allocation2 + $0x360] sm:$0xf] %v42
  %107 = vst [vmem:[#allocation2 + $0x384] sm:$0xf] %v43
  %108 = vst [vmem:[#allocation2 + $0x3a8] sm:$0xf] %v44
  %109 = vst [vmem:[#allocation2 + $0x3cc] sm:$0xf] %v45
  %110 = vst [vmem:[#allocation2 + $0x3f0] sm:$0xf] %v46
  %111 = vst [vmem:[#allocation2 + $0x414] sm:$0xf] %v47
  %112 = vst [vmem:[#allocation2 + $0x438] sm:$0xf] %v48
  %113 = vst [vmem:[#allocation2 + $0x45c] sm:$0xf] %v49
  %114 = vst [vmem:[#allocation2 + $0x480] sm:$0xf] %v50
  %115 = vst [vmem:[#allocation2 + $0x4a4] sm:$0xf] %v51
  %116 = vst [vmem:[#allocation2 + $0x4c8] sm:$0xf] %v52
  %117 = vst [vmem:[#allocation2 + $0x4ec] sm:$0xf] %v53
  %118 = vst [vmem:[#allocation2 + $0x510] sm:$0xf] %v54
  %119 = vst [vmem:[#allocation2 + $0x534] sm:$0xf] %v55
  %120 = vst [vmem:[#allocation2 + $0x558] sm:$0xf] %v56
  %121 = vst [vmem:[#allocation2 + $0x57c] sm:$0xf] %v57
  %122 = vst [vmem:[#allocation2 + $0x5a0] sm:$0xf] %v58
  %123 = vst [vmem:[#allocation2 + $0x5c4] sm:$0xf] %v59
  %124 = vst [vmem:[#allocation2 + $0x5e8] sm:$0xf] %v60
  %125 = vst [vmem:[#allocation2 + $0x60c] sm:$0xf] %v61
  %126 = vst [vmem:[#allocation2 + $0x630] sm:$0xf] %v62
  %127 = vst [vmem:[#allocation2 + $0x654] sm:$0xf] %v63
  %128 = vst [vmem:[#allocation2 + $0x678] sm:$0xf] %v64
  %129 = vst [vmem:[#allocation2 + $0x69c] sm:$0xf] %v65
  %130 = vst [vmem:[#allocation2 + $0x6c0] sm:$0xf] %v66
  %131 = vst [vmem:[#allocation2 + $0x6e4] sm:$0xf] %v67
  %132 = vst [vmem:[#allocation2 + $0x708] sm:$0xf] %v68
  %133 = vst [vmem:[#allocation2 + $0x72c] sm:$0xf] %v69
  %134 = vst [vmem:[#allocation2 + $0x750] sm:$0xf] %v70
  %135 = vst [vmem:[#allocation2 + $0x774] sm:$0xf] %v71
  %136 = vst [vmem:[#allocation2 + $0x798] sm:$0xf] %v72
  %137 = vst [vmem:[#allocation2 + $0x7bc] sm:$0xf] %v73
  %138 = vst [vmem:[#allocation2 + $0x7e0] sm:$0xf] %v74
  %139 = vst [vmem:[#allocation2 + $0x804] sm:$0xf] %v75
  %140 = vst [vmem:[#allocation2 + $0x828] sm:$0xf] %v76
  %141 = vst [vmem:[#allocation2 + $0x84c] sm:$0xf] %v77
  %142 = vst [vmem:[#allocation2 + $0x870] sm:$0xf] %v78
  %143 = vst [vmem:[#allocation2 + $0x894] sm:$0xf] %v79
  %144 = vst [vmem:[#allocation2 + $0x8b8] sm:$0xf] %v80
  %145 = vst [vmem:[#allocation2 + $0x8dc] sm:$0xf] %v81
  %v146 = vld [vmem:[%s0] sm:$0xf]
  %v147 = vld [vmem:[%s0 + $0x4] sm:$0xf]
  %v148 = vld [vmem:[%s0 + $0x8] sm:$0x1]
  %v149 = vld [vmem:[%s0 + $0xc] sm:$0xf]
  %v150 = vld [vmem:[%s0 + $0x10] sm:$0xf]
  %v151 = vld [vmem:[%s0 + $0x14] sm:$0x1]
  %v152 = vld [vmem:[%s0 + $0x18] sm:$0xf]
  %v153 = vld [vmem:[%s0 + $0x1c] sm:$0xf]
  %v154 = vld [vmem:[%s0 + $0x20] sm:$0x1]
  %v155 = vld [vmem:[%s0 + $0x24] sm:$0xf]
  %v156 = vld [vmem:[%s0 + $0x28] sm:$0xf]
  %v157 = vld [vmem:[%s0 + $0x2c] sm:$0x1]
  %v158 = vld [vmem:[%s0 + $0x30] sm:$0xf]
  %v159 = vld [vmem:[%s0 + $0x34] sm:$0xf]
  %v160 = vld [vmem:[%s0 + $0x38] sm:$0x1]
  %v161 = vld [vmem:[%s0 + $0x3c] sm:$0xf]
  %v162 = vld [vmem:[%s0 + $0x40] sm:$0xf]
  %v163 = vld [vmem:[%s0 + $0x44] sm:$0x1]
  %v164 = vld [vmem:[%s0 + $0x48] sm:$0xf]
  %v165 = vld [vmem:[%s0 + $0x4c] sm:$0xf]
  %v166 = vld [vmem:[%s0 + $0x50] sm:$0x1]
  %v167 = vld [vmem:[%s0 + $0x54] sm:$0xf]
  %v168 = vld [vmem:[%s0 + $0x58] sm:$0xf]
  %v169 = vld [vmem:[%s0 + $0x5c] sm:$0x1]
  %v170 = vld [vmem:[%s0 + $0x60] sm:$0xf]
  %v171 = vld [vmem:[%s0 + $0x64] sm:$0xf]
  %v172 = vld [vmem:[%s0 + $0x68] sm:$0x1]
  %v173 = vld [vmem:[%s0 + $0x6c] sm:$0xf]
  %v174 = vld [vmem:[%s0 + $0x70] sm:$0xf]
  %v175 = vld [vmem:[%s0 + $0x74] sm:$0x1]
  %v176 = vld [vmem:[%s0 + $0x78] sm:$0xf]
  %v177 = vld [vmem:[%s0 + $0x7c] sm:$0xf]
  %v178 = vld [vmem:[%s0 + $0x80] sm:$0x1]
  %v179 = vld [vmem:[%s0 + $0x84] sm:$0xf]
  %v180 = vld [vmem:[%s0 + $0x88] sm:$0xf]
  %v181 = vld [vmem:[%s0 + $0x8c] sm:$0x1]
  %v182 = vld [vmem:[%s0 + $0x90] sm:$0xf]
  %v183 = vld [vmem:[%s0 + $0x94] sm:$0xf]
  %v184 = vld [vmem:[%s0 + $0x98] sm:$0x1]
  %v185 = vld [vmem:[%s0 + $0x9c] sm:$0xf]
  %v186 = vld [vmem:[%s0 + $0xa0] sm:$0xf]
  %v187 = vld [vmem:[%s0 + $0xa4] sm:$0x1]
  %v188 = vld [vmem:[%s0 + $0xa8] sm:$0xf]
  %v189 = vld [vmem:[%s0 + $0xac] sm:$0xf]
  %v190 = vld [vmem:[%s0 + $0xb0] sm:$0x1]
  %v191 = vld [vmem:[%s0 + $0xb4] sm:$0xf]
  %v192 = vld [vmem:[%s0 + $0xb8] sm:$0xf]
  %v193 = vld [vmem:[%s0 + $0xbc] sm:$0x1]
  %v194 = vld [vmem:[%s0 + $0xd8] sm:$0xf]
  %v195 = vld [vmem:[%s0 + $0xdc] sm:$0xf]
  %v196 = vld [vmem:[%s0 + $0xe0] sm:$0x1]
  %v197 = vld [vmem:[%s0 + $0xe4] sm:$0xf]
  %v198 = vld [vmem:[%s0 + $0xe8] sm:$0xf]
  %v199 = vld [vmem:[%s0 + $0xec] sm:$0x1]
  %v200 = vld [vmem:[%s0 + $0xf0] sm:$0xf]
  %v201 = vld [vmem:[%s0 + $0xf4] sm:$0xf]
  %v202 = vld [vmem:[%s0 + $0xf8] sm:$0x1]
  %v203 = vld [vmem:[%s0 + $0xfc] sm:$0xf]
  %v204 = vld [vmem:[%s0 + $0x100] sm:$0xf]
  %v205 = vld [vmem:[%s0 + $0x104] sm:$0x1]
  %v206 = vld [vmem:[%s0 + $0x108] sm:$0xf]
  %v207 = vld [vmem:[%s0 + $0x10c] sm:$0xf]
  %v208 = vld [vmem:[%s0 + $0x110] sm:$0x1]
  %v209 = vld [vmem:[%s0 + $0x114] sm:$0xf]
  %v210 = vld [vmem:[%s0 + $0x118] sm:$0xf]
  %v211 = vld [vmem:[%s0 + $0x11c] sm:$0x1]
  %v212 = vld [vmem:[%s0 + $0x120] sm:$0xf]
  %v213 = vld [vmem:[%s0 + $0x124] sm:$0xf]
  %v214 = vld [vmem:[%s0 + $0x128] sm:$0x1]
  %v215 = vld [vmem:[%s0 + $0x12c] sm:$0xf]
  %v216 = vld [vmem:[%s0 + $0x130] sm:$0xf]
  %v217 = vld [vmem:[%s0 + $0x134] sm:$0x1]
  %v218 = vld [vmem:[%s0 + $0x138] sm:$0xf]
  %v219 = vld [vmem:[%s0 + $0x13c] sm:$0xf]
  %v220 = vld [vmem:[%s0 + $0x140] sm:$0x1]
  %v221 = vld [vmem:[%s0 + $0x144] sm:$0xf]
  %v222 = vld [vmem:[%s0 + $0x148] sm:$0xf]
  %v223 = vld [vmem:[%s0 + $0x14c] sm:$0x1]
  %v224 = vld [vmem:[%s0 + $0x150] sm:$0xf]
  %v225 = vld [vmem:[%s0 + $0x154] sm:$0xf]
  %v226 = vld [vmem:[%s0 + $0x158] sm:$0x1]
  %v227 = vld [vmem:[%s0 + $0x15c] sm:$0xf]
  %v228 = vld [vmem:[%s0 + $0x160] sm:$0xf]
  %v229 = vld [vmem:[%s0 + $0x164] sm:$0x1]
  %v230 = vld [vmem:[%s0 + $0x168] sm:$0xf]
  %v231 = vld [vmem:[%s0 + $0x16c] sm:$0xf]
  %v232 = vld [vmem:[%s0 + $0x170] sm:$0x1]
  %v233 = vld [vmem:[%s0 + $0x174] sm:$0xf]
  %v234 = vld [vmem:[%s0 + $0x178] sm:$0xf]
  %v235 = vld [vmem:[%s0 + $0x17c] sm:$0x1]
  %v236 = vld [vmem:[%s0 + $0x180] sm:$0xf]
  %v237 = vld [vmem:[%s0 + $0x184] sm:$0xf]
  %v238 = vld [vmem:[%s0 + $0x188] sm:$0x1]
  %v239 = vld [vmem:[%s0 + $0x18c] sm:$0xf]
  %v240 = vld [vmem:[%s0 + $0x190] sm:$0xf]
  %v241 = vld [vmem:[%s0 + $0x194] sm:$0x1]
  %vm242 = vsmask.f32 3328
  %vm243 = vsmask.f32 7440
  %vm244 = vmor %vm242, %vm243
  %v246 = vshrl.u32 %v146, 16
  %v248 = vrot.slane %v246, 4
  %v249 = vshll.u32 %v146, 16
  %v251 = vrot.slane %v249, 5
  %v252 = vor.u32 %v248, %v251
  %v253 = vrot.slane %v252, 4
  %v255 = vshll.u32 %v147, 16
  %v257 = vrot.slane %v255, 5
  %v258 = vsel %vm244, %v253, %v257
  %v259 = vshrl.u32 %v147, 16
  %v261 = vrot.slane %v259, 4
  %v262 = vor.u32 %v261, %v257
  %v263 = vrot.slane %v262, 4
  %v265 = vshll.u32 %v148, 16
  %v267 = vrot.slane %v265, 5
  %v268 = vsel %vm244, %v263, %v267
  %v270 = vshrl.u32 %v149, 16
  %v272 = vrot.slane %v270, 4
  %v273 = vshll.u32 %v149, 16
  %v275 = vrot.slane %v273, 5
  %v276 = vor.u32 %v272, %v275
  %v277 = vrot.slane %v276, 4
  %v279 = vshll.u32 %v150, 16
  %v281 = vrot.slane %v279, 5
  %v282 = vsel %vm244, %v277, %v281
  %v283 = vshrl.u32 %v150, 16
  %v285 = vrot.slane %v283, 4
  %v286 = vor.u32 %v285, %v281
  %v287 = vrot.slane %v286, 4
  %v289 = vshll.u32 %v151, 16
  %v291 = vrot.slane %v289, 5
  %v292 = vsel %vm244, %v287, %v291
  %v294 = vshrl.u32 %v152, 16
  %v296 = vrot.slane %v294, 4
  %v297 = vshll.u32 %v152, 16
  %v299 = vrot.slane %v297, 5
  %v300 = vor.u32 %v296, %v299
  %v301 = vrot.slane %v300, 4
  %v303 = vshll.u32 %v153, 16
  %v305 = vrot.slane %v303, 5
  %v306 = vsel %vm244, %v301, %v305
  %v307 = vshrl.u32 %v153, 16
  %v309 = vrot.slane %v307, 4
  %v310 = vor.u32 %v309, %v305
  %v311 = vrot.slane %v310, 4
  %v313 = vshll.u32 %v154, 16
  %v315 = vrot.slane %v313, 5
  %v316 = vsel %vm244, %v311, %v315
  %v318 = vshrl.u32 %v155, 16
  %v320 = vrot.slane %v318, 4
  %v321 = vshll.u32 %v155, 16
  %v323 = vrot.slane %v321, 5
  %v324 = vor.u32 %v320, %v323
  %v325 = vrot.slane %v324, 4
  %v327 = vshll.u32 %v156, 16
  %v329 = vrot.slane %v327, 5
  %v330 = vsel %vm244, %v325, %v329
  %v331 = vshrl.u32 %v156, 16
  %v333 = vrot.slane %v331, 4
  %v334 = vor.u32 %v333, %v329
  %v335 = vrot.slane %v334, 4
  %v337 = vshll.u32 %v157, 16
  %v339 = vrot.slane %v337, 5
  %v340 = vsel %vm244, %v335, %v339
  %v342 = vshrl.u32 %v158, 16
  %v344 = vrot.slane %v342, 4
  %v345 = vshll.u32 %v158, 16
  %v347 = vrot.slane %v345, 5
  %v348 = vor.u32 %v344, %v347
  %v349 = vrot.slane %v348, 4
  %v351 = vshll.u32 %v159, 16
  %v353 = vrot.slane %v351, 5
  %v354 = vsel %vm244, %v349, %v353
  %v355 = vshrl.u32 %v159, 16
  %v357 = vrot.slane %v355, 4
  %v358 = vor.u32 %v357, %v353
  %v359 = vrot.slane %v358, 4
  %v361 = vshll.u32 %v160, 16
  %v363 = vrot.slane %v361, 5
  %v364 = vsel %vm244, %v359, %v363
  %v366 = vshrl.u32 %v161, 16
  %v368 = vrot.slane %v366, 4
  %v369 = vshll.u32 %v161, 16
  %v371 = vrot.slane %v369, 5
  %v372 = vor.u32 %v368, %v371
  %v373 = vrot.slane %v372, 4
  %v375 = vshll.u32 %v162, 16
  %v377 = vrot.slane %v375, 5
  %v378 = vsel %vm244, %v373, %v377
  %v379 = vshrl.u32 %v162, 16
  %v381 = vrot.slane %v379, 4
  %v382 = vor.u32 %v381, %v377
  %v383 = vrot.slane %v382, 4
  %v385 = vshll.u32 %v163, 16
  %v387 = vrot.slane %v385, 5
  %v388 = vsel %vm244, %v383, %v387
  %v390 = vshrl.u32 %v164, 16
  %v392 = vrot.slane %v390, 4
  %v393 = vshll.u32 %v164, 16
  %v395 = vrot.slane %v393, 5
  %v396 = vor.u32 %v392, %v395
  %v397 = vrot.slane %v396, 4
  %v399 = vshll.u32 %v165, 16
  %v401 = vrot.slane %v399, 5
  %v402 = vsel %vm244, %v397, %v401
  %v403 = vshrl.u32 %v165, 16
  %v405 = vrot.slane %v403, 4
  %v406 = vor.u32 %v405, %v401
  %v407 = vrot.slane %v406, 4
  %v409 = vshll.u32 %v166, 16
  %v411 = vrot.slane %v409, 5
  %v412 = vsel %vm244, %v407, %v411
  %v414 = vshrl.u32 %v167, 16
  %v416 = vrot.slane %v414, 4
  %v417 = vshll.u32 %v167, 16
  %v419 = vrot.slane %v417, 5
  %v420 = vor.u32 %v416, %v419
  %v421 = vrot.slane %v420, 4
  %v423 = vshll.u32 %v168, 16
  %v425 = vrot.slane %v423, 5
  %v426 = vsel %vm244, %v421, %v425
  %v427 = vshrl.u32 %v168, 16
  %v429 = vrot.slane %v427, 4
  %v430 = vor.u32 %v429, %v425
  %v431 = vrot.slane %v430, 4
  %v433 = vshll.u32 %v169, 16
  %v435 = vrot.slane %v433, 5
  %v436 = vsel %vm244, %v431, %v435
  %v438 = vshrl.u32 %v170, 16
  %v440 = vrot.slane %v438, 4
  %v441 = vshll.u32 %v170, 16
  %v443 = vrot.slane %v441, 5
  %v444 = vor.u32 %v440, %v443
  %v445 = vrot.slane %v444, 4
  %v447 = vshll.u32 %v171, 16
  %v449 = vrot.slane %v447, 5
  %v450 = vsel %vm244, %v445, %v449
  %v451 = vshrl.u32 %v171, 16
  %v453 = vrot.slane %v451, 4
  %v454 = vor.u32 %v453, %v449
  %v455 = vrot.slane %v454, 4
  %v457 = vshll.u32 %v172, 16
  %v459 = vrot.slane %v457, 5
  %v460 = vsel %vm244, %v455, %v459
  %v462 = vshrl.u32 %v173, 16
  %v464 = vrot.slane %v462, 4
  %v465 = vshll.u32 %v173, 16
  %v467 = vrot.slane %v465, 5
  %v468 = vor.u32 %v464, %v467
  %v469 = vrot.slane %v468, 4
  %v471 = vshll.u32 %v174, 16
  %v473 = vrot.slane %v471, 5
  %v474 = vsel %vm244, %v469, %v473
  %v475 = vshrl.u32 %v174, 16
  %v477 = vrot.slane %v475, 4
  %v478 = vor.u32 %v477, %v473
  %v479 = vrot.slane %v478, 4
  %v481 = vshll.u32 %v175, 16
  %v483 = vrot.slane %v481, 5
  %v484 = vsel %vm244, %v479, %v483
  %v486 = vshrl.u32 %v176, 16
  %v488 = vrot.slane %v486, 4
  %v489 = vshll.u32 %v176, 16
  %v491 = vrot.slane %v489, 5
  %v492 = vor.u32 %v488, %v491
  %v493 = vrot.slane %v492, 4
  %v495 = vshll.u32 %v177, 16
  %v497 = vrot.slane %v495, 5
  %v498 = vsel %vm244, %v493, %v497
  %v499 = vshrl.u32 %v177, 16
  %v501 = vrot.slane %v499, 4
  %v502 = vor.u32 %v501, %v497
  %v503 = vrot.slane %v502, 4
  %v505 = vshll.u32 %v178, 16
  %v507 = vrot.slane %v505, 5
  %v508 = vsel %vm244, %v503, %v507
  %v510 = vshrl.u32 %v179, 16
  %v512 = vrot.slane %v510, 4
  %v513 = vshll.u32 %v179, 16
  %v515 = vrot.slane %v513, 5
  %v516 = vor.u32 %v512, %v515
  %v517 = vrot.slane %v516, 4
  %v519 = vshll.u32 %v180, 16
  %v521 = vrot.slane %v519, 5
  %v522 = vsel %vm244, %v517, %v521
  %v523 = vshrl.u32 %v180, 16
  %v525 = vrot.slane %v523, 4
  %v526 = vor.u32 %v525, %v521
  %v527 = vrot.slane %v526, 4
  %v529 = vshll.u32 %v181, 16
  %v531 = vrot.slane %v529, 5
  %v532 = vsel %vm244, %v527, %v531
  %v534 = vshrl.u32 %v182, 16
  %v536 = vrot.slane %v534, 4
  %v537 = vshll.u32 %v182, 16
  %v539 = vrot.slane %v537, 5
  %v540 = vor.u32 %v536, %v539
  %v541 = vrot.slane %v540, 4
  %v543 = vshll.u32 %v183, 16
  %v545 = vrot.slane %v543, 5
  %v546 = vsel %vm244, %v541, %v545
  %v547 = vshrl.u32 %v183, 16
  %v549 = vrot.slane %v547, 4
  %v550 = vor.u32 %v549, %v545
  %v551 = vrot.slane %v550, 4
  %v553 = vshll.u32 %v184, 16
  %v555 = vrot.slane %v553, 5
  %v556 = vsel %vm244, %v551, %v555
  %v558 = vshrl.u32 %v185, 16
  %v560 = vrot.slane %v558, 4
  %v561 = vshll.u32 %v185, 16
  %v563 = vrot.slane %v561, 5
  %v564 = vor.u32 %v560, %v563
  %v565 = vrot.slane %v564, 4
  %v567 = vshll.u32 %v186, 16
  %v569 = vrot.slane %v567, 5
  %v570 = vsel %vm244, %v565, %v569
  %v571 = vshrl.u32 %v186, 16
  %v573 = vrot.slane %v571, 4
  %v574 = vor.u32 %v573, %v569
  %v575 = vrot.slane %v574, 4
  %v577 = vshll.u32 %v187, 16
  %v579 = vrot.slane %v577, 5
  %v580 = vsel %vm244, %v575, %v579
  %v582 = vshrl.u32 %v188, 16
  %v584 = vrot.slane %v582, 4
  %v585 = vshll.u32 %v188, 16
  %v587 = vrot.slane %v585, 5
  %v588 = vor.u32 %v584, %v587
  %v589 = vrot.slane %v588, 4
  %v591 = vshll.u32 %v189, 16
  %v593 = vrot.slane %v591, 5
  %v594 = vsel %vm244, %v589, %v593
  %v595 = vshrl.u32 %v189, 16
  %v597 = vrot.slane %v595, 4
  %v598 = vor.u32 %v597, %v593
  %v599 = vrot.slane %v598, 4
  %v601 = vshll.u32 %v190, 16
  %v603 = vrot.slane %v601, 5
  %v604 = vsel %vm244, %v599, %v603
  %v606 = vshrl.u32 %v191, 16
  %v608 = vrot.slane %v606, 4
  %v609 = vshll.u32 %v191, 16
  %v611 = vrot.slane %v609, 5
  %v612 = vor.u32 %v608, %v611
  %v613 = vrot.slane %v612, 4
  %v615 = vshll.u32 %v192, 16
  %v617 = vrot.slane %v615, 5
  %v618 = vsel %vm244, %v613, %v617
  %v619 = vshrl.u32 %v192, 16
  %v621 = vrot.slane %v619, 4
  %v622 = vor.u32 %v621, %v617
  %v623 = vrot.slane %v622, 4
  %v625 = vshll.u32 %v193, 16
  %v627 = vrot.slane %v625, 5
  %v628 = vsel %vm244, %v623, %v627
  %v630 = vshrl.u32 %v194, 16
  %v632 = vrot.slane %v630, 4
  %v633 = vshll.u32 %v194, 16
  %v635 = vrot.slane %v633, 5
  %v636 = vor.u32 %v632, %v635
  %v637 = vrot.slane %v636, 4
  %v639 = vshll.u32 %v195, 16
  %v641 = vrot.slane %v639, 5
  %v642 = vsel %vm244, %v637, %v641
  %v643 = vshrl.u32 %v195, 16
  %v645 = vrot.slane %v643, 4
  %v646 = vor.u32 %v645, %v641
  %v647 = vrot.slane %v646, 4
  %v649 = vshll.u32 %v196, 16
  %v651 = vrot.slane %v649, 5
  %v652 = vsel %vm244, %v647, %v651
  %v654 = vshrl.u32 %v197, 16
  %v656 = vrot.slane %v654, 4
  %v657 = vshll.u32 %v197, 16
  %v659 = vrot.slane %v657, 5
  %v660 = vor.u32 %v656, %v659
  %v661 = vrot.slane %v660, 4
  %v663 = vshll.u32 %v198, 16
  %v665 = vrot.slane %v663, 5
  %v666 = vsel %vm244, %v661, %v665
  %v667 = vshrl.u32 %v198, 16
  %v669 = vrot.slane %v667, 4
  %v670 = vor.u32 %v669, %v665
  %v671 = vrot.slane %v670, 4
  %v673 = vshll.u32 %v199, 16
  %v675 = vrot.slane %v673, 5
  %v676 = vsel %vm244, %v671, %v675
  %v678 = vshrl.u32 %v200, 16
  %v680 = vrot.slane %v678, 4
  %v681 = vshll.u32 %v200, 16
  %v683 = vrot.slane %v681, 5
  %v684 = vor.u32 %v680, %v683
  %v685 = vrot.slane %v684, 4
  %v687 = vshll.u32 %v201, 16
  %v689 = vrot.slane %v687, 5
  %v690 = vsel %vm244, %v685, %v689
  %v691 = vshrl.u32 %v201, 16
  %v693 = vrot.slane %v691, 4
  %v694 = vor.u32 %v693, %v689
  %v695 = vrot.slane %v694, 4
  %v697 = vshll.u32 %v202, 16
  %v699 = vrot.slane %v697, 5
  %v700 = vsel %vm244, %v695, %v699
  %v702 = vshrl.u32 %v203, 16
  %v704 = vrot.slane %v702, 4
  %v705 = vshll.u32 %v203, 16
  %v707 = vrot.slane %v705, 5
  %v708 = vor.u32 %v704, %v707
  %v709 = vrot.slane %v708, 4
  %v711 = vshll.u32 %v204, 16
  %v713 = vrot.slane %v711, 5
  %v714 = vsel %vm244, %v709, %v713
  %v715 = vshrl.u32 %v204, 16
  %v717 = vrot.slane %v715, 4
  %v718 = vor.u32 %v717, %v713
  %v719 = vrot.slane %v718, 4
  %v721 = vshll.u32 %v205, 16
  %v723 = vrot.slane %v721, 5
  %v724 = vsel %vm244, %v719, %v723
  %v726 = vshrl.u32 %v206, 16
  %v728 = vrot.slane %v726, 4
  %v729 = vshll.u32 %v206, 16
  %v731 = vrot.slane %v729, 5
  %v732 = vor.u32 %v728, %v731
  %v733 = vrot.slane %v732, 4
  %v735 = vshll.u32 %v207, 16
  %v737 = vrot.slane %v735, 5
  %v738 = vsel %vm244, %v733, %v737
  %v739 = vshrl.u32 %v207, 16
  %v741 = vrot.slane %v739, 4
  %v742 = vor.u32 %v741, %v737
  %v743 = vrot.slane %v742, 4
  %v745 = vshll.u32 %v208, 16
  %v747 = vrot.slane %v745, 5
  %v748 = vsel %vm244, %v743, %v747
  %v750 = vshrl.u32 %v209, 16
  %v752 = vrot.slane %v750, 4
  %v753 = vshll.u32 %v209, 16
  %v755 = vrot.slane %v753, 5
  %v756 = vor.u32 %v752, %v755
  %v757 = vrot.slane %v756, 4
  %v759 = vshll.u32 %v210, 16
  %v761 = vrot.slane %v759, 5
  %v762 = vsel %vm244, %v757, %v761
  %v763 = vshrl.u32 %v210, 16
  %v765 = vrot.slane %v763, 4
  %v766 = vor.u32 %v765, %v761
  %v767 = vrot.slane %v766, 4
  %v769 = vshll.u32 %v211, 16
  %v771 = vrot.slane %v769, 5
  %v772 = vsel %vm244, %v767, %v771
  %v774 = vshrl.u32 %v212, 16
  %v776 = vrot.slane %v774, 4
  %v777 = vshll.u32 %v212, 16
  %v779 = vrot.slane %v777, 5
  %v780 = vor.u32 %v776, %v779
  %v781 = vrot.slane %v780, 4
  %v783 = vshll.u32 %v213, 16
  %v785 = vrot.slane %v783, 5
  %v786 = vsel %vm244, %v781, %v785
  %v787 = vshrl.u32 %v213, 16
  %v789 = vrot.slane %v787, 4
  %v790 = vor.u32 %v789, %v785
  %v791 = vrot.slane %v790, 4
  %v793 = vshll.u32 %v214, 16
  %v795 = vrot.slane %v793, 5
  %v796 = vsel %vm244, %v791, %v795
  %v798 = vshrl.u32 %v215, 16
  %v800 = vrot.slane %v798, 4
  %v801 = vshll.u32 %v215, 16
  %v803 = vrot.slane %v801, 5
  %v804 = vor.u32 %v800, %v803
  %v805 = vrot.slane %v804, 4
  %v807 = vshll.u32 %v216, 16
  %v809 = vrot.slane %v807, 5
  %v810 = vsel %vm244, %v805, %v809
  %v811 = vshrl.u32 %v216, 16
  %v813 = vrot.slane %v811, 4
  %v814 = vor.u32 %v813, %v809
  %v815 = vrot.slane %v814, 4
  %v817 = vshll.u32 %v217, 16
  %v819 = vrot.slane %v817, 5
  %v820 = vsel %vm244, %v815, %v819
  %v822 = vshrl.u32 %v218, 16
  %v824 = vrot.slane %v822, 4
  %v825 = vshll.u32 %v218, 16
  %v827 = vrot.slane %v825, 5
  %v828 = vor.u32 %v824, %v827
  %v829 = vrot.slane %v828, 4
  %v831 = vshll.u32 %v219, 16
  %v833 = vrot.slane %v831, 5
  %v834 = vsel %vm244, %v829, %v833
  %v835 = vshrl.u32 %v219, 16
  %v837 = vrot.slane %v835, 4
  %v838 = vor.u32 %v837, %v833
  %v839 = vrot.slane %v838, 4
  %v841 = vshll.u32 %v220, 16
  %v843 = vrot.slane %v841, 5
  %v844 = vsel %vm244, %v839, %v843
  %v846 = vshrl.u32 %v221, 16
  %v848 = vrot.slane %v846, 4
  %v849 = vshll.u32 %v221, 16
  %v851 = vrot.slane %v849, 5
  %v852 = vor.u32 %v848, %v851
  %v853 = vrot.slane %v852, 4
  %v855 = vshll.u32 %v222, 16
  %v857 = vrot.slane %v855, 5
  %v858 = vsel %vm244, %v853, %v857
  %v859 = vshrl.u32 %v222, 16
  %v861 = vrot.slane %v859, 4
  %v862 = vor.u32 %v861, %v857
  %v863 = vrot.slane %v862, 4
  %v865 = vshll.u32 %v223, 16
  %v867 = vrot.slane %v865, 5
  %v868 = vsel %vm244, %v863, %v867
  %v870 = vshrl.u32 %v224, 16
  %v872 = vrot.slane %v870, 4
  %v873 = vshll.u32 %v224, 16
  %v875 = vrot.slane %v873, 5
  %v876 = vor.u32 %v872, %v875
  %v877 = vrot.slane %v876, 4
  %v879 = vshll.u32 %v225, 16
  %v881 = vrot.slane %v879, 5
  %v882 = vsel %vm244, %v877, %v881
  %v883 = vshrl.u32 %v225, 16
  %v885 = vrot.slane %v883, 4
  %v886 = vor.u32 %v885, %v881
  %v887 = vrot.slane %v886, 4
  %v889 = vshll.u32 %v226, 16
  %v891 = vrot.slane %v889, 5
  %v892 = vsel %vm244, %v887, %v891
  %v894 = vshrl.u32 %v227, 16
  %v896 = vrot.slane %v894, 4
  %v897 = vshll.u32 %v227, 16
  %v899 = vrot.slane %v897, 5
  %v900 = vor.u32 %v896, %v899
  %v901 = vrot.slane %v900, 4
  %v903 = vshll.u32 %v228, 16
  %v905 = vrot.slane %v903, 5
  %v906 = vsel %vm244, %v901, %v905
  %v907 = vshrl.u32 %v228, 16
  %v909 = vrot.slane %v907, 4
  %v910 = vor.u32 %v909, %v905
  %v911 = vrot.slane %v910, 4
  %v913 = vshll.u32 %v229, 16
  %v915 = vrot.slane %v913, 5
  %v916 = vsel %vm244, %v911, %v915
  %v918 = vshrl.u32 %v230, 16
  %v920 = vrot.slane %v918, 4
  %v921 = vshll.u32 %v230, 16
  %v923 = vrot.slane %v921, 5
  %v924 = vor.u32 %v920, %v923
  %v925 = vrot.slane %v924, 4
  %v927 = vshll.u32 %v231, 16
  %v929 = vrot.slane %v927, 5
  %v930 = vsel %vm244, %v925, %v929
  %v931 = vshrl.u32 %v231, 16
  %v933 = vrot.slane %v931, 4
  %v934 = vor.u32 %v933, %v929
  %v935 = vrot.slane %v934, 4
  %v937 = vshll.u32 %v232, 16
  %v939 = vrot.slane %v937, 5
  %v940 = vsel %vm244, %v935, %v939
  %v942 = vshrl.u32 %v233, 16
  %v944 = vrot.slane %v942, 4
  %v945 = vshll.u32 %v233, 16
  %v947 = vrot.slane %v945, 5
  %v948 = vor.u32 %v944, %v947
  %v949 = vrot.slane %v948, 4
  %v951 = vshll.u32 %v234, 16
  %v953 = vrot.slane %v951, 5
  %v954 = vsel %vm244, %v949, %v953
  %v955 = vshrl.u32 %v234, 16
  %v957 = vrot.slane %v955, 4
  %v958 = vor.u32 %v957, %v953
  %v959 = vrot.slane %v958, 4
  %v961 = vshll.u32 %v235, 16
  %v963 = vrot.slane %v961, 5
  %v964 = vsel %vm244, %v959, %v963
  %v966 = vshrl.u32 %v236, 16
  %v968 = vrot.slane %v966, 4
  %v969 = vshll.u32 %v236, 16
  %v971 = vrot.slane %v969, 5
  %v972 = vor.u32 %v968, %v971
  %v973 = vrot.slane %v972, 4
  %v975 = vshll.u32 %v237, 16
  %v977 = vrot.slane %v975, 5
  %v978 = vsel %vm244, %v973, %v977
  %v979 = vshrl.u32 %v237, 16
  %v981 = vrot.slane %v979, 4
  %v982 = vor.u32 %v981, %v977
  %v983 = vrot.slane %v982, 4
  %v985 = vshll.u32 %v238, 16
  %v987 = vrot.slane %v985, 5
  %v988 = vsel %vm244, %v983, %v987
  %v990 = vshrl.u32 %v239, 16
  %v992 = vrot.slane %v990, 4
  %v993 = vshll.u32 %v239, 16
  %v995 = vrot.slane %v993, 5
  %v996 = vor.u32 %v992, %v995
  %v997 = vrot.slane %v996, 4
  %v999 = vshll.u32 %v240, 16
  %v1001 = vrot.slane %v999, 5
  %v1002 = vsel %vm244, %v997, %v1001
  %v1003 = vshrl.u32 %v240, 16
  %v1005 = vrot.slane %v1003, 4
  %v1006 = vor.u32 %v1005, %v1001
  %v1007 = vrot.slane %v1006, 4
  %v1009 = vshll.u32 %v241, 16
  %v1011 = vrot.slane %v1009, 5
  %v1012 = vsel %vm244, %v1007, %v1011
  %1077 = vst [vmem:[#allocation2 + $0x4] sm:$0xf] %v258
  %1078 = vst [vmem:[#allocation2 + $0x28] sm:$0xf] %v268
  %1079 = vst [vmem:[#allocation2 + $0x4c] sm:$0xf] %v282
  %1080 = vst [vmem:[#allocation2 + $0x70] sm:$0xf] %v292
  %1081 = vst [vmem:[#allocation2 + $0x94] sm:$0xf] %v306
  %1082 = vst [vmem:[#allocation2 + $0xb8] sm:$0xf] %v316
  %1083 = vst [vmem:[#allocation2 + $0xdc] sm:$0xf] %v330
  %1084 = vst [vmem:[#allocation2 + $0x100] sm:$0xf] %v340
  %1085 = vst [vmem:[#allocation2 + $0x124] sm:$0xf] %v354
  %1086 = vst [vmem:[#allocation2 + $0x148] sm:$0xf] %v364
  %1087 = vst [vmem:[#allocation2 + $0x16c] sm:$0xf] %v378
  %1088 = vst [vmem:[#allocation2 + $0x190] sm:$0xf] %v388
  %1089 = vst [vmem:[#allocation2 + $0x1b4] sm:$0xf] %v402
  %1090 = vst [vmem:[#allocation2 + $0x1d8] sm:$0xf] %v412
  %1091 = vst [vmem:[#allocation2 + $0x1fc] sm:$0xf] %v426
  %1092 = vst [vmem:[#allocation2 + $0x220] sm:$0xf] %v436
  %1093 = vst [vmem:[#allocation2 + $0x244] sm:$0xf] %v450
  %1094 = vst [vmem:[#allocation2 + $0x268] sm:$0xf] %v460
  %1095 = vst [vmem:[#allocation2 + $0x28c] sm:$0xf] %v474
  %1096 = vst [vmem:[#allocation2 + $0x2b0] sm:$0xf] %v484
  %1097 = vst [vmem:[#allocation2 + $0x2d4] sm:$0xf] %v498
  %1098 = vst [vmem:[#allocation2 + $0x2f8] sm:$0xf] %v508
  %1099 = vst [vmem:[#allocation2 + $0x31c] sm:$0xf] %v522
  %1100 = vst [vmem:[#allocation2 + $0x340] sm:$0xf] %v532
  %1101 = vst [vmem:[#allocation2 + $0x364] sm:$0xf] %v546
  %1102 = vst [vmem:[#allocation2 + $0x388] sm:$0xf] %v556
  %1103 = vst [vmem:[#allocation2 + $0x3ac] sm:$0xf] %v570
  %1104 = vst [vmem:[#allocation2 + $0x3d0] sm:$0xf] %v580
  %1105 = vst [vmem:[#allocation2 + $0x3f4] sm:$0xf] %v594
  %1106 = vst [vmem:[#allocation2 + $0x418] sm:$0xf] %v604
  %1107 = vst [vmem:[#allocation2 + $0x43c] sm:$0xf] %v618
  %1108 = vst [vmem:[#allocation2 + $0x460] sm:$0xf] %v628
  %1109 = vst [vmem:[#allocation2 + $0x484] sm:$0xf] %v642
  %1110 = vst [vmem:[#allocation2 + $0x4a8] sm:$0xf] %v652
  %1111 = vst [vmem:[#allocation2 + $0x4cc] sm:$0xf] %v666
  %1112 = vst [vmem:[#allocation2 + $0x4f0] sm:$0xf] %v676
  %1113 = vst [vmem:[#allocation2 + $0x514] sm:$0xf] %v690
  %1114 = vst [vmem:[#allocation2 + $0x538] sm:$0xf] %v700
  %1115 = vst [vmem:[#allocation2 + $0x55c] sm:$0xf] %v714
  %1116 = vst [vmem:[#allocation2 + $0x580] sm:$0xf] %v724
  %1117 = vst [vmem:[#allocation2 + $0x5a4] sm:$0xf] %v738
  %1118 = vst [vmem:[#allocation2 + $0x5c8] sm:$0xf] %v748
  %1119 = vst [vmem:[#allocation2 + $0x5ec] sm:$0xf] %v762
  %1120 = vst [vmem:[#allocation2 + $0x610] sm:$0xf] %v772
  %1121 = vst [vmem:[#allocation2 + $0x634] sm:$0xf] %v786
  %1122 = vst [vmem:[#allocation2 + $0x658] sm:$0xf] %v796
  %1123 = vst [vmem:[#allocation2 + $0x67c] sm:$0xf] %v810
  %1124 = vst [vmem:[#allocation2 + $0x6a0] sm:$0xf] %v820
  %1125 = vst [vmem:[#allocation2 + $0x6c4] sm:$0xf] %v834
  %1126 = vst [vmem:[#allocation2 + $0x6e8] sm:$0xf] %v844
  %1127 = vst [vmem:[#allocation2 + $0x70c] sm:$0xf] %v858
  %1128 = vst [vmem:[#allocation2 + $0x730] sm:$0xf] %v868
  %1129 = vst [vmem:[#allocation2 + $0x754] sm:$0xf] %v882
  %1130 = vst [vmem:[#allocation2 + $0x778] sm:$0xf] %v892
  %1131 = vst [vmem:[#allocation2 + $0x79c] sm:$0xf] %v906
  %1132 = vst [vmem:[#allocation2 + $0x7c0] sm:$0xf] %v916
  %1133 = vst [vmem:[#allocation2 + $0x7e4] sm:$0xf] %v930
  %1134 = vst [vmem:[#allocation2 + $0x808] sm:$0xf] %v940
  %1135 = vst [vmem:[#allocation2 + $0x82c] sm:$0xf] %v954
  %1136 = vst [vmem:[#allocation2 + $0x850] sm:$0xf] %v964
  %1137 = vst [vmem:[#allocation2 + $0x874] sm:$0xf] %v978
  %1138 = vst [vmem:[#allocation2 + $0x898] sm:$0xf] %v988
  %1139 = vst [vmem:[#allocation2 + $0x8bc] sm:$0xf] %v1002
  %1140 = vst [vmem:[#allocation2 + $0x8e0] sm:$0xf] %v1012
  %v1141 = vld [vmem:[%s0] sm:$0xe]
  %v1142 = vld [vmem:[%s0 + $0x4] sm:$0xf]
  %v1143 = vld [vmem:[%s0 + $0x8] sm:$0x1]
  %v1144 = vld [vmem:[%s0 + $0xc] sm:$0xe]
  %v1145 = vld [vmem:[%s0 + $0x10] sm:$0xf]
  %v1146 = vld [vmem:[%s0 + $0x14] sm:$0x1]
  %v1147 = vld [vmem:[%s0 + $0x18] sm:$0xe]
  %v1148 = vld [vmem:[%s0 + $0x1c] sm:$0xf]
  %v1149 = vld [vmem:[%s0 + $0x20] sm:$0x1]
  %v1150 = vld [vmem:[%s0 + $0x24] sm:$0xe]
  %v1151 = vld [vmem:[%s0 + $0x28] sm:$0xf]
  %v1152 = vld [vmem:[%s0 + $0x2c] sm:$0x1]
  %v1153 = vld [vmem:[%s0 + $0x30] sm:$0xe]
  %v1154 = vld [vmem:[%s0 + $0x34] sm:$0xf]
  %v1155 = vld [vmem:[%s0 + $0x38] sm:$0x1]
  %v1156 = vld [vmem:[%s0 + $0x3c] sm:$0xe]
  %v1157 = vld [vmem:[%s0 + $0x40] sm:$0xf]
  %v1158 = vld [vmem:[%s0 + $0x44] sm:$0x1]
  %v1159 = vld [vmem:[%s0 + $0x48] sm:$0xe]
  %v1160 = vld [vmem:[%s0 + $0x4c] sm:$0xf]
  %v1161 = vld [vmem:[%s0 + $0x50] sm:$0x1]
  %v1162 = vld [vmem:[%s0 + $0x54] sm:$0xe]
  %v1163 = vld [vmem:[%s0 + $0x58] sm:$0xf]
  %v1164 = vld [vmem:[%s0 + $0x5c] sm:$0x1]
  %v1165 = vld [vmem:[%s0 + $0x60] sm:$0xe]
  %v1166 = vld [vmem:[%s0 + $0x64] sm:$0xf]
  %v1167 = vld [vmem:[%s0 + $0x68] sm:$0x1]
  %v1168 = vld [vmem:[%s0 + $0x6c] sm:$0xe]
  %v1169 = vld [vmem:[%s0 + $0x70] sm:$0xf]
  %v1170 = vld [vmem:[%s0 + $0x74] sm:$0x1]
  %v1171 = vld [vmem:[%s0 + $0x78] sm:$0xe]
  %v1172 = vld [vmem:[%s0 + $0x7c] sm:$0xf]
  %v1173 = vld [vmem:[%s0 + $0x80] sm:$0x1]
  %v1174 = vld [vmem:[%s0 + $0x84] sm:$0xe]
  %v1175 = vld [vmem:[%s0 + $0x88] sm:$0xf]
  %v1176 = vld [vmem:[%s0 + $0x8c] sm:$0x1]
  %v1177 = vld [vmem:[%s0 + $0x90] sm:$0xe]
  %v1178 = vld [vmem:[%s0 + $0x94] sm:$0xf]
  %v1179 = vld [vmem:[%s0 + $0x98] sm:$0x1]
  %v1180 = vld [vmem:[%s0 + $0x9c] sm:$0xe]
  %v1181 = vld [vmem:[%s0 + $0xa0] sm:$0xf]
  %v1182 = vld [vmem:[%s0 + $0xa4] sm:$0x1]
  %v1183 = vld [vmem:[%s0 + $0xa8] sm:$0xe]
  %v1184 = vld [vmem:[%s0 + $0xac] sm:$0xf]
  %v1185 = vld [vmem:[%s0 + $0xb0] sm:$0x1]
  %v1186 = vld [vmem:[%s0 + $0xb4] sm:$0xe]
  %v1187 = vld [vmem:[%s0 + $0xb8] sm:$0xf]
  %v1188 = vld [vmem:[%s0 + $0xbc] sm:$0x1]
  %v1189 = vld [vmem:[%s0 + $0xd8] sm:$0xe]
  %v1190 = vld [vmem:[%s0 + $0xdc] sm:$0xf]
  %v1191 = vld [vmem:[%s0 + $0xe0] sm:$0x1]
  %v1192 = vld [vmem:[%s0 + $0xe4] sm:$0xe]
  %v1193 = vld [vmem:[%s0 + $0xe8] sm:$0xf]
  %v1194 = vld [vmem:[%s0 + $0xec] sm:$0x1]
  %v1195 = vld [vmem:[%s0 + $0xf0] sm:$0xe]
  %v1196 = vld [vmem:[%s0 + $0xf4] sm:$0xf]
  %v1197 = vld [vmem:[%s0 + $0xf8] sm:$0x1]
  %v1198 = vld [vmem:[%s0 + $0xfc] sm:$0xe]
  %v1199 = vld [vmem:[%s0 + $0x100] sm:$0xf]
  %v1200 = vld [vmem:[%s0 + $0x104] sm:$0x1]
  %v1201 = vld [vmem:[%s0 + $0x108] sm:$0xe]
  %v1202 = vld [vmem:[%s0 + $0x10c] sm:$0xf]
  %v1203 = vld [vmem:[%s0 + $0x110] sm:$0x1]
  %v1204 = vld [vmem:[%s0 + $0x114] sm:$0xe]
  %v1205 = vld [vmem:[%s0 + $0x118] sm:$0xf]
  %v1206 = vld [vmem:[%s0 + $0x11c] sm:$0x1]
  %v1207 = vld [vmem:[%s0 + $0x120] sm:$0xe]
  %v1208 = vld [vmem:[%s0 + $0x124] sm:$0xf]
  %v1209 = vld [vmem:[%s0 + $0x128] sm:$0x1]
  %v1210 = vld [vmem:[%s0 + $0x12c] sm:$0xe]
  %v1211 = vld [vmem:[%s0 + $0x130] sm:$0xf]
  %v1212 = vld [vmem:[%s0 + $0x134] sm:$0x1]
  %v1213 = vld [vmem:[%s0 + $0x138] sm:$0xe]
  %v1214 = vld [vmem:[%s0 + $0x13c] sm:$0xf]
  %v1215 = vld [vmem:[%s0 + $0x140] sm:$0x1]
  %v1216 = vld [vmem:[%s0 + $0x144] sm:$0xe]
  %v1217 = vld [vmem:[%s0 + $0x148] sm:$0xf]
  %v1218 = vld [vmem:[%s0 + $0x14c] sm:$0x1]
  %v1219 = vld [vmem:[%s0 + $0x150] sm:$0xe]
  %v1220 = vld [vmem:[%s0 + $0x154] sm:$0xf]
  %v1221 = vld [vmem:[%s0 + $0x158] sm:$0x1]
  %v1222 = vld [vmem:[%s0 + $0x15c] sm:$0xe]
  %v1223 = vld [vmem:[%s0 + $0x160] sm:$0xf]
  %v1224 = vld [vmem:[%s0 + $0x164] sm:$0x1]
  %v1225 = vld [vmem:[%s0 + $0x168] sm:$0xe]
  %v1226 = vld [vmem:[%s0 + $0x16c] sm:$0xf]
  %v1227 = vld [vmem:[%s0 + $0x170] sm:$0x1]
  %v1228 = vld [vmem:[%s0 + $0x174] sm:$0xe]
  %v1229 = vld [vmem:[%s0 + $0x178] sm:$0xf]
  %v1230 = vld [vmem:[%s0 + $0x17c] sm:$0x1]
  %v1231 = vld [vmem:[%s0 + $0x180] sm:$0xe]
  %v1232 = vld [vmem:[%s0 + $0x184] sm:$0xf]
  %v1233 = vld [vmem:[%s0 + $0x188] sm:$0x1]
  %v1234 = vld [vmem:[%s0 + $0x18c] sm:$0xe]
  %v1235 = vld [vmem:[%s0 + $0x190] sm:$0xf]
  %v1236 = vld [vmem:[%s0 + $0x194] sm:$0x1]
  %vm1333 = vcmask 1042432
  %vm1334 = vcmask 1046532
  %vm1335 = vmor %vm1333, %vm1334
  %v1336 = vrot.slane %v1141, 5
  %v1337 = vrot.slane %v1336, 4
  %v1338 = vrot.slane %v1142, 5
  %v1339 = vsel %vm1335, %v1337, %v1338
  %v1340 = vrot.slane %v1338, 4
  %v1341 = vrot.slane %v1143, 5
  %v1342 = vsel %vm1335, %v1340, %v1341
  %v1343 = vrot.slane %v1144, 5
  %v1344 = vrot.slane %v1343, 4
  %v1345 = vrot.slane %v1145, 5
  %v1346 = vsel %vm1335, %v1344, %v1345
  %v1347 = vrot.slane %v1345, 4
  %v1348 = vrot.slane %v1146, 5
  %v1349 = vsel %vm1335, %v1347, %v1348
  %v1350 = vrot.slane %v1147, 5
  %v1351 = vrot.slane %v1350, 4
  %v1352 = vrot.slane %v1148, 5
  %v1353 = vsel %vm1335, %v1351, %v1352
  %v1354 = vrot.slane %v1352, 4
  %v1355 = vrot.slane %v1149, 5
  %v1356 = vsel %vm1335, %v1354, %v1355
  %v1357 = vrot.slane %v1150, 5
  %v1358 = vrot.slane %v1357, 4
  %v1359 = vrot.slane %v1151, 5
  %v1360 = vsel %vm1335, %v1358, %v1359
  %v1361 = vrot.slane %v1359, 4
  %v1362 = vrot.slane %v1152, 5
  %v1363 = vsel %vm1335, %v1361, %v1362
  %v1364 = vrot.slane %v1153, 5
  %v1365 = vrot.slane %v1364, 4
  %v1366 = vrot.slane %v1154, 5
  %v1367 = vsel %vm1335, %v1365, %v1366
  %v1368 = vrot.slane %v1366, 4
  %v1369 = vrot.slane %v1155, 5
  %v1370 = vsel %vm1335, %v1368, %v1369
  %v1371 = vrot.slane %v1156, 5
  %v1372 = vrot.slane %v1371, 4
  %v1373 = vrot.slane %v1157, 5
  %v1374 = vsel %vm1335, %v1372, %v1373
  %v1375 = vrot.slane %v1373, 4
  %v1376 = vrot.slane %v1158, 5
  %v1377 = vsel %vm1335, %v1375, %v1376
  %v1378 = vrot.slane %v1159, 5
  %v1379 = vrot.slane %v1378, 4
  %v1380 = vrot.slane %v1160, 5
  %v1381 = vsel %vm1335, %v1379, %v1380
  %v1382 = vrot.slane %v1380, 4
  %v1383 = vrot.slane %v1161, 5
  %v1384 = vsel %vm1335, %v1382, %v1383
  %v1385 = vrot.slane %v1162, 5
  %v1386 = vrot.slane %v1385, 4
  %v1387 = vrot.slane %v1163, 5
  %v1388 = vsel %vm1335, %v1386, %v1387
  %v1389 = vrot.slane %v1387, 4
  %v1390 = vrot.slane %v1164, 5
  %v1391 = vsel %vm1335, %v1389, %v1390
  %v1392 = vrot.slane %v1165, 5
  %v1393 = vrot.slane %v1392, 4
  %v1394 = vrot.slane %v1166, 5
  %v1395 = vsel %vm1335, %v1393, %v1394
  %v1396 = vrot.slane %v1394, 4
  %v1397 = vrot.slane %v1167, 5
  %v1398 = vsel %vm1335, %v1396, %v1397
  %v1399 = vrot.slane %v1168, 5
  %v1400 = vrot.slane %v1399, 4
  %v1401 = vrot.slane %v1169, 5
  %v1402 = vsel %vm1335, %v1400, %v1401
  %v1403 = vrot.slane %v1401, 4
  %v1404 = vrot.slane %v1170, 5
  %v1405 = vsel %vm1335, %v1403, %v1404
  %v1406 = vrot.slane %v1171, 5
  %v1407 = vrot.slane %v1406, 4
  %v1408 = vrot.slane %v1172, 5
  %v1409 = vsel %vm1335, %v1407, %v1408
  %v1410 = vrot.slane %v1408, 4
  %v1411 = vrot.slane %v1173, 5
  %v1412 = vsel %vm1335, %v1410, %v1411
  %v1413 = vrot.slane %v1174, 5
  %v1414 = vrot.slane %v1413, 4
  %v1415 = vrot.slane %v1175, 5
  %v1416 = vsel %vm1335, %v1414, %v1415
  %v1417 = vrot.slane %v1415, 4
  %v1418 = vrot.slane %v1176, 5
  %v1419 = vsel %vm1335, %v1417, %v1418
  %v1420 = vrot.slane %v1177, 5
  %v1421 = vrot.slane %v1420, 4
  %v1422 = vrot.slane %v1178, 5
  %v1423 = vsel %vm1335, %v1421, %v1422
  %v1424 = vrot.slane %v1422, 4
  %v1425 = vrot.slane %v1179, 5
  %v1426 = vsel %vm1335, %v1424, %v1425
  %v1427 = vrot.slane %v1180, 5
  %v1428 = vrot.slane %v1427, 4
  %v1429 = vrot.slane %v1181, 5
  %v1430 = vsel %vm1335, %v1428, %v1429
  %v1431 = vrot.slane %v1429, 4
  %v1432 = vrot.slane %v1182, 5
  %v1433 = vsel %vm1335, %v1431, %v1432
  %v1434 = vrot.slane %v1183, 5
  %v1435 = vrot.slane %v1434, 4
  %v1436 = vrot.slane %v1184, 5
  %v1437 = vsel %vm1335, %v1435, %v1436
  %v1438 = vrot.slane %v1436, 4
  %v1439 = vrot.slane %v1185, 5
  %v1440 = vsel %vm1335, %v1438, %v1439
  %v1441 = vrot.slane %v1186, 5
  %v1442 = vrot.slane %v1441, 4
  %v1443 = vrot.slane %v1187, 5
  %v1444 = vsel %vm1335, %v1442, %v1443
  %v1445 = vrot.slane %v1443, 4
  %v1446 = vrot.slane %v1188, 5
  %v1447 = vsel %vm1335, %v1445, %v1446
  %v1448 = vrot.slane %v1189, 5
  %v1449 = vrot.slane %v1448, 4
  %v1450 = vrot.slane %v1190, 5
  %v1451 = vsel %vm1335, %v1449, %v1450
  %v1452 = vrot.slane %v1450, 4
  %v1453 = vrot.slane %v1191, 5
  %v1454 = vsel %vm1335, %v1452, %v1453
  %v1455 = vrot.slane %v1192, 5
  %v1456 = vrot.slane %v1455, 4
  %v1457 = vrot.slane %v1193, 5
  %v1458 = vsel %vm1335, %v1456, %v1457
  %v1459 = vrot.slane %v1457, 4
  %v1460 = vrot.slane %v1194, 5
  %v1461 = vsel %vm1335, %v1459, %v1460
  %v1462 = vrot.slane %v1195, 5
  %v1463 = vrot.slane %v1462, 4
  %v1464 = vrot.slane %v1196, 5
  %v1465 = vsel %vm1335, %v1463, %v1464
  %v1466 = vrot.slane %v1464, 4
  %v1467 = vrot.slane %v1197, 5
  %v1468 = vsel %vm1335, %v1466, %v1467
  %v1469 = vrot.slane %v1198, 5
  %v1470 = vrot.slane %v1469, 4
  %v1471 = vrot.slane %v1199, 5
  %v1472 = vsel %vm1335, %v1470, %v1471
  %v1473 = vrot.slane %v1471, 4
  %v1474 = vrot.slane %v1200, 5
  %v1475 = vsel %vm1335, %v1473, %v1474
  %v1476 = vrot.slane %v1201, 5
  %v1477 = vrot.slane %v1476, 4
  %v1478 = vrot.slane %v1202, 5
  %v1479 = vsel %vm1335, %v1477, %v1478
  %v1480 = vrot.slane %v1478, 4
  %v1481 = vrot.slane %v1203, 5
  %v1482 = vsel %vm1335, %v1480, %v1481
  %v1483 = vrot.slane %v1204, 5
  %v1484 = vrot.slane %v1483, 4
  %v1485 = vrot.slane %v1205, 5
  %v1486 = vsel %vm1335, %v1484, %v1485
  %v1487 = vrot.slane %v1485, 4
  %v1488 = vrot.slane %v1206, 5
  %v1489 = vsel %vm1335, %v1487, %v1488
  %v1490 = vrot.slane %v1207, 5
  %v1491 = vrot.slane %v1490, 4
  %v1492 = vrot.slane %v1208, 5
  %v1493 = vsel %vm1335, %v1491, %v1492
  %v1494 = vrot.slane %v1492, 4
  %v1495 = vrot.slane %v1209, 5
  %v1496 = vsel %vm1335, %v1494, %v1495
  %v1497 = vrot.slane %v1210, 5
  %v1498 = vrot.slane %v1497, 4
  %v1499 = vrot.slane %v1211, 5
  %v1500 = vsel %vm1335, %v1498, %v1499
  %v1501 = vrot.slane %v1499, 4
  %v1502 = vrot.slane %v1212, 5
  %v1503 = vsel %vm1335, %v1501, %v1502
  %v1504 = vrot.slane %v1213, 5
  %v1505 = vrot.slane %v1504, 4
  %v1506 = vrot.slane %v1214, 5
  %v1507 = vsel %vm1335, %v1505, %v1506
  %v1508 = vrot.slane %v1506, 4
  %v1509 = vrot.slane %v1215, 5
  %v1510 = vsel %vm1335, %v1508, %v1509
  %v1511 = vrot.slane %v1216, 5
  %v1512 = vrot.slane %v1511, 4
  %v1513 = vrot.slane %v1217, 5
  %v1514 = vsel %vm1335, %v1512, %v1513
  %v1515 = vrot.slane %v1513, 4
  %v1516 = vrot.slane %v1218, 5
  %v1517 = vsel %vm1335, %v1515, %v1516
  %v1518 = vrot.slane %v1219, 5
  %v1519 = vrot.slane %v1518, 4
  %v1520 = vrot.slane %v1220, 5
  %v1521 = vsel %vm1335, %v1519, %v1520
  %v1522 = vrot.slane %v1520, 4
  %v1523 = vrot.slane %v1221, 5
  %v1524 = vsel %vm1335, %v1522, %v1523
  %v1525 = vrot.slane %v1222, 5
  %v1526 = vrot.slane %v1525, 4
  %v1527 = vrot.slane %v1223, 5
  %v1528 = vsel %vm1335, %v1526, %v1527
  %v1529 = vrot.slane %v1527, 4
  %v1530 = vrot.slane %v1224, 5
  %v1531 = vsel %vm1335, %v1529, %v1530
  %v1532 = vrot.slane %v1225, 5
  %v1533 = vrot.slane %v1532, 4
  %v1534 = vrot.slane %v1226, 5
  %v1535 = vsel %vm1335, %v1533, %v1534
  %v1536 = vrot.slane %v1534, 4
  %v1537 = vrot.slane %v1227, 5
  %v1538 = vsel %vm1335, %v1536, %v1537
  %v1539 = vrot.slane %v1228, 5
  %v1540 = vrot.slane %v1539, 4
  %v1541 = vrot.slane %v1229, 5
  %v1542 = vsel %vm1335, %v1540, %v1541
  %v1543 = vrot.slane %v1541, 4
  %v1544 = vrot.slane %v1230, 5
  %v1545 = vsel %vm1335, %v1543, %v1544
  %v1546 = vrot.slane %v1231, 5
  %v1547 = vrot.slane %v1546, 4
  %v1548 = vrot.slane %v1232, 5
  %v1549 = vsel %vm1335, %v1547, %v1548
  %v1550 = vrot.slane %v1548, 4
  %v1551 = vrot.slane %v1233, 5
  %v1552 = vsel %vm1335, %v1550, %v1551
  %v1553 = vrot.slane %v1234, 5
  %v1554 = vrot.slane %v1553, 4
  %v1555 = vrot.slane %v1235, 5
  %v1556 = vsel %vm1335, %v1554, %v1555
  %v1557 = vrot.slane %v1555, 4
  %v1558 = vrot.slane %v1236, 5
  %v1559 = vsel %vm1335, %v1557, %v1558
  %1624 = vst [vmem:[#allocation2 + $0x8] sm:$0xf] %v1339
  %1625 = vst [vmem:[#allocation2 + $0x2c] sm:$0xf] %v1342
  %1626 = vst [vmem:[#allocation2 + $0x50] sm:$0xf] %v1346
  %1627 = vst [vmem:[#allocation2 + $0x74] sm:$0xf] %v1349
  %1628 = vst [vmem:[#allocation2 + $0x98] sm:$0xf] %v1353
  %1629 = vst [vmem:[#allocation2 + $0xbc] sm:$0xf] %v1356
  %1630 = vst [vmem:[#allocation2 + $0xe0] sm:$0xf] %v1360
  %1631 = vst [vmem:[#allocation2 + $0x104] sm:$0xf] %v1363
  %1632 = vst [vmem:[#allocation2 + $0x128] sm:$0xf] %v1367
  %1633 = vst [vmem:[#allocation2 + $0x14c] sm:$0xf] %v1370
  %1634 = vst [vmem:[#allocation2 + $0x170] sm:$0xf] %v1374
  %1635 = vst [vmem:[#allocation2 + $0x194] sm:$0xf] %v1377
  %1636 = vst [vmem:[#allocation2 + $0x1b8] sm:$0xf] %v1381
  %1637 = vst [vmem:[#allocation2 + $0x1dc] sm:$0xf] %v1384
  %1638 = vst [vmem:[#allocation2 + $0x200] sm:$0xf] %v1388
  %1639 = vst [vmem:[#allocation2 + $0x224] sm:$0xf] %v1391
  %1640 = vst [vmem:[#allocation2 + $0x248] sm:$0xf] %v1395
  %1641 = vst [vmem:[#allocation2 + $0x26c] sm:$0xf] %v1398
  %1642 = vst [vmem:[#allocation2 + $0x290] sm:$0xf] %v1402
  %1643 = vst [vmem:[#allocation2 + $0x2b4] sm:$0xf] %v1405
  %1644 = vst [vmem:[#allocation2 + $0x2d8] sm:$0xf] %v1409
  %1645 = vst [vmem:[#allocation2 + $0x2fc] sm:$0xf] %v1412
  %1646 = vst [vmem:[#allocation2 + $0x320] sm:$0xf] %v1416
  %1647 = vst [vmem:[#allocation2 + $0x344] sm:$0xf] %v1419
  %1648 = vst [vmem:[#allocation2 + $0x368] sm:$0xf] %v1423
  %1649 = vst [vmem:[#allocation2 + $0x38c] sm:$0xf] %v1426
  %1650 = vst [vmem:[#allocation2 + $0x3b0] sm:$0xf] %v1430
  %1651 = vst [vmem:[#allocation2 + $0x3d4] sm:$0xf] %v1433
  %1652 = vst [vmem:[#allocation2 + $0x3f8] sm:$0xf] %v1437
  %1653 = vst [vmem:[#allocation2 + $0x41c] sm:$0xf] %v1440
  %1654 = vst [vmem:[#allocation2 + $0x440] sm:$0xf] %v1444
  %1655 = vst [vmem:[#allocation2 + $0x464] sm:$0xf] %v1447
  %1656 = vst [vmem:[#allocation2 + $0x488] sm:$0xf] %v1451
  %1657 = vst [vmem:[#allocation2 + $0x4ac] sm:$0xf] %v1454
  %1658 = vst [vmem:[#allocation2 + $0x4d0] sm:$0xf] %v1458
  %1659 = vst [vmem:[#allocation2 + $0x4f4] sm:$0xf] %v1461
  %1660 = vst [vmem:[#allocation2 + $0x518] sm:$0xf] %v1465
  %1661 = vst [vmem:[#allocation2 + $0x53c] sm:$0xf] %v1468
  %1662 = vst [vmem:[#allocation2 + $0x560] sm:$0xf] %v1472
  %1663 = vst [vmem:[#allocation2 + $0x584] sm:$0xf] %v1475
  %1664 = vst [vmem:[#allocation2 + $0x5a8] sm:$0xf] %v1479
  %1665 = vst [vmem:[#allocation2 + $0x5cc] sm:$0xf] %v1482
  %1666 = vst [vmem:[#allocation2 + $0x5f0] sm:$0xf] %v1486
  %1667 = vst [vmem:[#allocation2 + $0x614] sm:$0xf] %v1489
  %1668 = vst [vmem:[#allocation2 + $0x638] sm:$0xf] %v1493
  %1669 = vst [vmem:[#allocation2 + $0x65c] sm:$0xf] %v1496
  %1670 = vst [vmem:[#allocation2 + $0x680] sm:$0xf] %v1500
  %1671 = vst [vmem:[#allocation2 + $0x6a4] sm:$0xf] %v1503
  %1672 = vst [vmem:[#allocation2 + $0x6c8] sm:$0xf] %v1507
  %1673 = vst [vmem:[#allocation2 + $0x6ec] sm:$0xf] %v1510
  %1674 = vst [vmem:[#allocation2 + $0x710] sm:$0xf] %v1514
  %1675 = vst [vmem:[#allocation2 + $0x734] sm:$0xf] %v1517
  %1676 = vst [vmem:[#allocation2 + $0x758] sm:$0xf] %v1521
  %1677 = vst [vmem:[#allocation2 + $0x77c] sm:$0xf] %v1524
  %1678 = vst [vmem:[#allocation2 + $0x7a0] sm:$0xf] %v1528
  %1679 = vst [vmem:[#allocation2 + $0x7c4] sm:$0xf] %v1531
  %1680 = vst [vmem:[#allocation2 + $0x7e8] sm:$0xf] %v1535
  %1681 = vst [vmem:[#allocation2 + $0x80c] sm:$0xf] %v1538
  %1682 = vst [vmem:[#allocation2 + $0x830] sm:$0xf] %v1542
  %1683 = vst [vmem:[#allocation2 + $0x854] sm:$0xf] %v1545
  %1684 = vst [vmem:[#allocation2 + $0x878] sm:$0xf] %v1549
  %1685 = vst [vmem:[#allocation2 + $0x89c] sm:$0xf] %v1552
  %1686 = vst [vmem:[#allocation2 + $0x8c0] sm:$0xf] %v1556
  %1687 = vst [vmem:[#allocation2 + $0x8e4] sm:$0xf] %v1559
  %s1688 = scalar_lea.vmem %s0, 12
  %v1689 = vld [vmem:[%s1688] sm:$0xf]
  %v1690 = vld [vmem:[%s1688 + $0x4] sm:$0xf]
  %v1691 = vld [vmem:[%s1688 + $0xc] sm:$0xf]
  %v1692 = vld [vmem:[%s1688 + $0x10] sm:$0xf]
  %v1693 = vld [vmem:[%s1688 + $0x18] sm:$0xf]
  %v1694 = vld [vmem:[%s1688 + $0x1c] sm:$0xf]
  %v1695 = vld [vmem:[%s1688 + $0x24] sm:$0xf]
  %v1696 = vld [vmem:[%s1688 + $0x28] sm:$0xf]
  %v1697 = vld [vmem:[%s1688 + $0x30] sm:$0xf]
  %v1698 = vld [vmem:[%s1688 + $0x34] sm:$0xf]
  %v1699 = vld [vmem:[%s1688 + $0x3c] sm:$0xf]
  %v1700 = vld [vmem:[%s1688 + $0x40] sm:$0xf]
  %v1701 = vld [vmem:[%s1688 + $0x48] sm:$0xf]
  %v1702 = vld [vmem:[%s1688 + $0x4c] sm:$0xf]
  %v1703 = vld [vmem:[%s1688 + $0x54] sm:$0xf]
  %v1704 = vld [vmem:[%s1688 + $0x58] sm:$0xf]
  %v1705 = vld [vmem:[%s1688 + $0x60] sm:$0xf]
  %v1706 = vld [vmem:[%s1688 + $0x64] sm:$0xf]
  %v1707 = vld [vmem:[%s1688 + $0x6c] sm:$0xf]
  %v1708 = vld [vmem:[%s1688 + $0x70] sm:$0xf]
  %v1709 = vld [vmem:[%s1688 + $0x78] sm:$0xf]
  %v1710 = vld [vmem:[%s1688 + $0x7c] sm:$0xf]
  %v1711 = vld [vmem:[%s1688 + $0x84] sm:$0xf]
  %v1712 = vld [vmem:[%s1688 + $0x88] sm:$0xf]
  %v1713 = vld [vmem:[%s1688 + $0x90] sm:$0xf]
  %v1714 = vld [vmem:[%s1688 + $0x94] sm:$0xf]
  %v1715 = vld [vmem:[%s1688 + $0x9c] sm:$0xf]
  %v1716 = vld [vmem:[%s1688 + $0xa0] sm:$0xf]
  %v1717 = vld [vmem:[%s1688 + $0xa8] sm:$0xf]
  %v1718 = vld [vmem:[%s1688 + $0xac] sm:$0xf]
  %v1719 = vld [vmem:[%s1688 + $0xb4] sm:$0xf]
  %v1720 = vld [vmem:[%s1688 + $0xb8] sm:$0xf]
  %v1721 = vld [vmem:[%s1688 + $0xd8] sm:$0xf]
  %v1722 = vld [vmem:[%s1688 + $0xdc] sm:$0xf]
  %v1723 = vld [vmem:[%s1688 + $0xe4] sm:$0xf]
  %v1724 = vld [vmem:[%s1688 + $0xe8] sm:$0xf]
  %v1725 = vld [vmem:[%s1688 + $0xf0] sm:$0xf]
  %v1726 = vld [vmem:[%s1688 + $0xf4] sm:$0xf]
  %v1727 = vld [vmem:[%s1688 + $0xfc] sm:$0xf]
  %v1728 = vld [vmem:[%s1688 + $0x100] sm:$0xf]
  %v1729 = vld [vmem:[%s1688 + $0x108] sm:$0xf]
  %v1730 = vld [vmem:[%s1688 + $0x10c] sm:$0xf]
  %v1731 = vld [vmem:[%s1688 + $0x114] sm:$0xf]
  %v1732 = vld [vmem:[%s1688 + $0x118] sm:$0xf]
  %v1733 = vld [vmem:[%s1688 + $0x120] sm:$0xf]
  %v1734 = vld [vmem:[%s1688 + $0x124] sm:$0xf]
  %v1735 = vld [vmem:[%s1688 + $0x12c] sm:$0xf]
  %v1736 = vld [vmem:[%s1688 + $0x130] sm:$0xf]
  %v1737 = vld [vmem:[%s1688 + $0x138] sm:$0xf]
  %v1738 = vld [vmem:[%s1688 + $0x13c] sm:$0xf]
  %v1739 = vld [vmem:[%s1688 + $0x144] sm:$0xf]
  %v1740 = vld [vmem:[%s1688 + $0x148] sm:$0xf]
  %v1741 = vld [vmem:[%s1688 + $0x150] sm:$0xf]
  %v1742 = vld [vmem:[%s1688 + $0x154] sm:$0xf]
  %v1743 = vld [vmem:[%s1688 + $0x15c] sm:$0xf]
  %v1744 = vld [vmem:[%s1688 + $0x160] sm:$0xf]
  %v1745 = vld [vmem:[%s1688 + $0x168] sm:$0xf]
  %v1746 = vld [vmem:[%s1688 + $0x16c] sm:$0xf]
  %v1747 = vld [vmem:[%s1688 + $0x174] sm:$0xf]
  %v1748 = vld [vmem:[%s1688 + $0x178] sm:$0xf]
  %v1749 = vld [vmem:[%s1688 + $0x180] sm:$0xf]
  %v1750 = vld [vmem:[%s1688 + $0x184] sm:$0xf]
  %v1751 = vld [vmem:[%s1688 + $0x18c] sm:$0xf]
  %v1752 = vld [vmem:[%s1688 + $0x190] sm:$0xf]
  %1753 = vst [vmem:[#allocation2 + $0xc] sm:$0xf] %v1689
  %1754 = vst [vmem:[#allocation2 + $0x30] sm:$0xf] %v1690
  %1755 = vst [vmem:[#allocation2 + $0x54] sm:$0xf] %v1691
  %1756 = vst [vmem:[#allocation2 + $0x78] sm:$0xf] %v1692
  %1757 = vst [vmem:[#allocation2 + $0x9c] sm:$0xf] %v1693
  %1758 = vst [vmem:[#allocation2 + $0xc0] sm:$0xf] %v1694
  %1759 = vst [vmem:[#allocation2 + $0xe4] sm:$0xf] %v1695
  %1760 = vst [vmem:[#allocation2 + $0x108] sm:$0xf] %v1696
  %1761 = vst [vmem:[#allocation2 + $0x12c] sm:$0xf] %v1697
  %1762 = vst [vmem:[#allocation2 + $0x150] sm:$0xf] %v1698
  %1763 = vst [vmem:[#allocation2 + $0x174] sm:$0xf] %v1699
  %1764 = vst [vmem:[#allocation2 + $0x198] sm:$0xf] %v1700
  %1765 = vst [vmem:[#allocation2 + $0x1bc] sm:$0xf] %v1701
  %1766 = vst [vmem:[#allocation2 + $0x1e0] sm:$0xf] %v1702
  %1767 = vst [vmem:[#allocation2 + $0x204] sm:$0xf] %v1703
  %1768 = vst [vmem:[#allocation2 + $0x228] sm:$0xf] %v1704
  %1769 = vst [vmem:[#allocation2 + $0x24c] sm:$0xf] %v1705
  %1770 = vst [vmem:[#allocation2 + $0x270] sm:$0xf] %v1706
  %1771 = vst [vmem:[#allocation2 + $0x294] sm:$0xf] %v1707
  %1772 = vst [vmem:[#allocation2 + $0x2b8] sm:$0xf] %v1708
  %1773 = vst [vmem:[#allocation2 + $0x2dc] sm:$0xf] %v1709
  %1774 = vst [vmem:[#allocation2 + $0x300] sm:$0xf] %v1710
  %1775 = vst [vmem:[#allocation2 + $0x324] sm:$0xf] %v1711
  %1776 = vst [vmem:[#allocation2 + $0x348] sm:$0xf] %v1712
  %1777 = vst [vmem:[#allocation2 + $0x36c] sm:$0xf] %v1713
  %1778 = vst [vmem:[#allocation2 + $0x390] sm:$0xf] %v1714
  %1779 = vst [vmem:[#allocation2 + $0x3b4] sm:$0xf] %v1715
  %1780 = vst [vmem:[#allocation2 + $0x3d8] sm:$0xf] %v1716
  %1781 = vst [vmem:[#allocation2 + $0x3fc] sm:$0xf] %v1717
  %1782 = vst [vmem:[#allocation2 + $0x420] sm:$0xf] %v1718
  %1783 = vst [vmem:[#allocation2 + $0x444] sm:$0xf] %v1719
  %1784 = vst [vmem:[#allocation2 + $0x468] sm:$0xf] %v1720
  %1785 = vst [vmem:[#allocation2 + $0x48c] sm:$0xf] %v1721
  %1786 = vst [vmem:[#allocation2 + $0x4b0] sm:$0xf] %v1722
  %1787 = vst [vmem:[#allocation2 + $0x4d4] sm:$0xf] %v1723
  %1788 = vst [vmem:[#allocation2 + $0x4f8] sm:$0xf] %v1724
  %1789 = vst [vmem:[#allocation2 + $0x51c] sm:$0xf] %v1725
  %1790 = vst [vmem:[#allocation2 + $0x540] sm:$0xf] %v1726
  %1791 = vst [vmem:[#allocation2 + $0x564] sm:$0xf] %v1727
  %1792 = vst [vmem:[#allocation2 + $0x588] sm:$0xf] %v1728
  %1793 = vst [vmem:[#allocation2 + $0x5ac] sm:$0xf] %v1729
  %1794 = vst [vmem:[#allocation2 + $0x5d0] sm:$0xf] %v1730
  %1795 = vst [vmem:[#allocation2 + $0x5f4] sm:$0xf] %v1731
  %1796 = vst [vmem:[#allocation2 + $0x618] sm:$0xf] %v1732
  %1797 = vst [vmem:[#allocation2 + $0x63c] sm:$0xf] %v1733
  %1798 = vst [vmem:[#allocation2 + $0x660] sm:$0xf] %v1734
  %1799 = vst [vmem:[#allocation2 + $0x684] sm:$0xf] %v1735
  %1800 = vst [vmem:[#allocation2 + $0x6a8] sm:$0xf] %v1736
  %1801 = vst [vmem:[#allocation2 + $0x6cc] sm:$0xf] %v1737
  %1802 = vst [vmem:[#allocation2 + $0x6f0] sm:$0xf] %v1738
  %1803 = vst [vmem:[#allocation2 + $0x714] sm:$0xf] %v1739
  %1804 = vst [vmem:[#allocation2 + $0x738] sm:$0xf] %v1740
  %1805 = vst [vmem:[#allocation2 + $0x75c] sm:$0xf] %v1741
  %1806 = vst [vmem:[#allocation2 + $0x780] sm:$0xf] %v1742
  %1807 = vst [vmem:[#allocation2 + $0x7a4] sm:$0xf] %v1743
  %1808 = vst [vmem:[#allocation2 + $0x7c8] sm:$0xf] %v1744
  %1809 = vst [vmem:[#allocation2 + $0x7ec] sm:$0xf] %v1745
  %1810 = vst [vmem:[#allocation2 + $0x810] sm:$0xf] %v1746
  %1811 = vst [vmem:[#allocation2 + $0x834] sm:$0xf] %v1747
  %1812 = vst [vmem:[#allocation2 + $0x858] sm:$0xf] %v1748
  %1813 = vst [vmem:[#allocation2 + $0x87c] sm:$0xf] %v1749
  %1814 = vst [vmem:[#allocation2 + $0x8a0] sm:$0xf] %v1750
  %1815 = vst [vmem:[#allocation2 + $0x8c4] sm:$0xf] %v1751
  %1816 = vst [vmem:[#allocation2 + $0x8e8] sm:$0xf] %v1752
  %v1817 = vld [vmem:[%s1688] sm:$0xf]
  %v1818 = vld [vmem:[%s1688 + $0x4] sm:$0xf]
  %v1819 = vld [vmem:[%s1688 + $0x8] sm:$0x1]
  %v1820 = vld [vmem:[%s1688 + $0xc] sm:$0xf]
  %v1821 = vld [vmem:[%s1688 + $0x10] sm:$0xf]
  %v1822 = vld [vmem:[%s1688 + $0x14] sm:$0x1]
  %v1823 = vld [vmem:[%s1688 + $0x18] sm:$0xf]
  %v1824 = vld [vmem:[%s1688 + $0x1c] sm:$0xf]
  %v1825 = vld [vmem:[%s1688 + $0x20] sm:$0x1]
  %v1826 = vld [vmem:[%s1688 + $0x24] sm:$0xf]
  %v1827 = vld [vmem:[%s1688 + $0x28] sm:$0xf]
  %v1828 = vld [vmem:[%s1688 + $0x2c] sm:$0x1]
  %v1829 = vld [vmem:[%s1688 + $0x30] sm:$0xf]
  %v1830 = vld [vmem:[%s1688 + $0x34] sm:$0xf]
  %v1831 = vld [vmem:[%s1688 + $0x38] sm:$0x1]
  %v1832 = vld [vmem:[%s1688 + $0x3c] sm:$0xf]
  %v1833 = vld [vmem:[%s1688 + $0x40] sm:$0xf]
  %v1834 = vld [vmem:[%s1688 + $0x44] sm:$0x1]
  %v1835 = vld [vmem:[%s1688 + $0x48] sm:$0xf]
  %v1836 = vld [vmem:[%s1688 + $0x4c] sm:$0xf]
  %v1837 = vld [vmem:[%s1688 + $0x50] sm:$0x1]
  %v1838 = vld [vmem:[%s1688 + $0x54] sm:$0xf]
  %v1839 = vld [vmem:[%s1688 + $0x58] sm:$0xf]
  %v1840 = vld [vmem:[%s1688 + $0x5c] sm:$0x1]
  %v1841 = vld [vmem:[%s1688 + $0x60] sm:$0xf]
  %v1842 = vld [vmem:[%s1688 + $0x64] sm:$0xf]
  %v1843 = vld [vmem:[%s1688 + $0x68] sm:$0x1]
  %v1844 = vld [vmem:[%s1688 + $0x6c] sm:$0xf]
  %v1845 = vld [vmem:[%s1688 + $0x70] sm:$0xf]
  %v1846 = vld [vmem:[%s1688 + $0x74] sm:$0x1]
  %v1847 = vld [vmem:[%s1688 + $0x78] sm:$0xf]
  %v1848 = vld [vmem:[%s1688 + $0x7c] sm:$0xf]
  %v1849 = vld [vmem:[%s1688 + $0x80] sm:$0x1]
  %v1850 = vld [vmem:[%s1688 + $0x84] sm:$0xf]
  %v1851 = vld [vmem:[%s1688 + $0x88] sm:$0xf]
  %v1852 = vld [vmem:[%s1688 + $0x8c] sm:$0x1]
  %v1853 = vld [vmem:[%s1688 + $0x90] sm:$0xf]
  %v1854 = vld [vmem:[%s1688 + $0x94] sm:$0xf]
  %v1855 = vld [vmem:[%s1688 + $0x98] sm:$0x1]
  %v1856 = vld [vmem:[%s1688 + $0x9c] sm:$0xf]
  %v1857 = vld [vmem:[%s1688 + $0xa0] sm:$0xf]
  %v1858 = vld [vmem:[%s1688 + $0xa4] sm:$0x1]
  %v1859 = vld [vmem:[%s1688 + $0xa8] sm:$0xf]
  %v1860 = vld [vmem:[%s1688 + $0xac] sm:$0xf]
  %v1861 = vld [vmem:[%s1688 + $0xb0] sm:$0x1]
  %v1862 = vld [vmem:[%s1688 + $0xb4] sm:$0xf]
  %v1863 = vld [vmem:[%s1688 + $0xb8] sm:$0xf]
  %v1864 = vld [vmem:[%s1688 + $0xbc] sm:$0x1]
  %v1865 = vld [vmem:[%s1688 + $0xd8] sm:$0xf]
  %v1866 = vld [vmem:[%s1688 + $0xdc] sm:$0xf]
  %v1867 = vld [vmem:[%s1688 + $0xe0] sm:$0x1]
  %v1868 = vld [vmem:[%s1688 + $0xe4] sm:$0xf]
  %v1869 = vld [vmem:[%s1688 + $0xe8] sm:$0xf]
  %v1870 = vld [vmem:[%s1688 + $0xec] sm:$0x1]
  %v1871 = vld [vmem:[%s1688 + $0xf0] sm:$0xf]
  %v1872 = vld [vmem:[%s1688 + $0xf4] sm:$0xf]
  %v1873 = vld [vmem:[%s1688 + $0xf8] sm:$0x1]
  %v1874 = vld [vmem:[%s1688 + $0xfc] sm:$0xf]
  %v1875 = vld [vmem:[%s1688 + $0x100] sm:$0xf]
  %v1876 = vld [vmem:[%s1688 + $0x104] sm:$0x1]
  %v1877 = vld [vmem:[%s1688 + $0x108] sm:$0xf]
  %v1878 = vld [vmem:[%s1688 + $0x10c] sm:$0xf]
  %v1879 = vld [vmem:[%s1688 + $0x110] sm:$0x1]
  %v1880 = vld [vmem:[%s1688 + $0x114] sm:$0xf]
  %v1881 = vld [vmem:[%s1688 + $0x118] sm:$0xf]
  %v1882 = vld [vmem:[%s1688 + $0x11c] sm:$0x1]
  %v1883 = vld [vmem:[%s1688 + $0x120] sm:$0xf]
  %v1884 = vld [vmem:[%s1688 + $0x124] sm:$0xf]
  %v1885 = vld [vmem:[%s1688 + $0x128] sm:$0x1]
  %v1886 = vld [vmem:[%s1688 + $0x12c] sm:$0xf]
  %v1887 = vld [vmem:[%s1688 + $0x130] sm:$0xf]
  %v1888 = vld [vmem:[%s1688 + $0x134] sm:$0x1]
  %v1889 = vld [vmem:[%s1688 + $0x138] sm:$0xf]
  %v1890 = vld [vmem:[%s1688 + $0x13c] sm:$0xf]
  %v1891 = vld [vmem:[%s1688 + $0x140] sm:$0x1]
  %v1892 = vld [vmem:[%s1688 + $0x144] sm:$0xf]
  %v1893 = vld [vmem:[%s1688 + $0x148] sm:$0xf]
  %v1894 = vld [vmem:[%s1688 + $0x14c] sm:$0x1]
  %v1895 = vld [vmem:[%s1688 + $0x150] sm:$0xf]
  %v1896 = vld [vmem:[%s1688 + $0x154] sm:$0xf]
  %v1897 = vld [vmem:[%s1688 + $0x158] sm:$0x1]
  %v1898 = vld [vmem:[%s1688 + $0x15c] sm:$0xf]
  %v1899 = vld [vmem:[%s1688 + $0x160] sm:$0xf]
  %v1900 = vld [vmem:[%s1688 + $0x164] sm:$0x1]
  %v1901 = vld [vmem:[%s1688 + $0x168] sm:$0xf]
  %v1902 = vld [vmem:[%s1688 + $0x16c] sm:$0xf]
  %v1903 = vld [vmem:[%s1688 + $0x170] sm:$0x1]
  %v1904 = vld [vmem:[%s1688 + $0x174] sm:$0xf]
  %v1905 = vld [vmem:[%s1688 + $0x178] sm:$0xf]
  %v1906 = vld [vmem:[%s1688 + $0x17c] sm:$0x1]
  %v1907 = vld [vmem:[%s1688 + $0x180] sm:$0xf]
  %v1908 = vld [vmem:[%s1688 + $0x184] sm:$0xf]
  %v1909 = vld [vmem:[%s1688 + $0x188] sm:$0x1]
  %v1910 = vld [vmem:[%s1688 + $0x18c] sm:$0xf]
  %v1911 = vld [vmem:[%s1688 + $0x190] sm:$0xf]
  %v1912 = vld [vmem:[%s1688 + $0x194] sm:$0x1]
  %v1914 = vshrl.u32 %v1817, 16
  %v1916 = vrot.slane %v1914, 4
  %v1917 = vshll.u32 %v1817, 16
  %v1919 = vrot.slane %v1917, 5
  %v1920 = vor.u32 %v1916, %v1919
  %v1921 = vrot.slane %v1920, 4
  %v1923 = vshll.u32 %v1818, 16
  %v1925 = vrot.slane %v1923, 5
  %v1926 = vsel %vm244, %v1921, %v1925
  %v1927 = vshrl.u32 %v1818, 16
  %v1929 = vrot.slane %v1927, 4
  %v1930 = vor.u32 %v1929, %v1925
  %v1931 = vrot.slane %v1930, 4
  %v1933 = vshll.u32 %v1819, 16
  %v1935 = vrot.slane %v1933, 5
  %v1936 = vsel %vm244, %v1931, %v1935
  %v1938 = vshrl.u32 %v1820, 16
  %v1940 = vrot.slane %v1938, 4
  %v1941 = vshll.u32 %v1820, 16
  %v1943 = vrot.slane %v1941, 5
  %v1944 = vor.u32 %v1940, %v1943
  %v1945 = vrot.slane %v1944, 4
  %v1947 = vshll.u32 %v1821, 16
  %v1949 = vrot.slane %v1947, 5
  %v1950 = vsel %vm244, %v1945, %v1949
  %v1951 = vshrl.u32 %v1821, 16
  %v1953 = vrot.slane %v1951, 4
  %v1954 = vor.u32 %v1953, %v1949
  %v1955 = vrot.slane %v1954, 4
  %v1957 = vshll.u32 %v1822, 16
  %v1959 = vrot.slane %v1957, 5
  %v1960 = vsel %vm244, %v1955, %v1959
  %v1962 = vshrl.u32 %v1823, 16
  %v1964 = vrot.slane %v1962, 4
  %v1965 = vshll.u32 %v1823, 16
  %v1967 = vrot.slane %v1965, 5
  %v1968 = vor.u32 %v1964, %v1967
  %v1969 = vrot.slane %v1968, 4
  %v1971 = vshll.u32 %v1824, 16
  %v1973 = vrot.slane %v1971, 5
  %v1974 = vsel %vm244, %v1969, %v1973
  %v1975 = vshrl.u32 %v1824, 16
  %v1977 = vrot.slane %v1975, 4
  %v1978 = vor.u32 %v1977, %v1973
  %v1979 = vrot.slane %v1978, 4
  %v1981 = vshll.u32 %v1825, 16
  %v1983 = vrot.slane %v1981, 5
  %v1984 = vsel %vm244, %v1979, %v1983
  %v1986 = vshrl.u32 %v1826, 16
  %v1988 = vrot.slane %v1986, 4
  %v1989 = vshll.u32 %v1826, 16
  %v1991 = vrot.slane %v1989, 5
  %v1992 = vor.u32 %v1988, %v1991
  %v1993 = vrot.slane %v1992, 4
  %v1995 = vshll.u32 %v1827, 16
  %v1997 = vrot.slane %v1995, 5
  %v1998 = vsel %vm244, %v1993, %v1997
  %v1999 = vshrl.u32 %v1827, 16
  %v2001 = vrot.slane %v1999, 4
  %v2002 = vor.u32 %v2001, %v1997
  %v2003 = vrot.slane %v2002, 4
  %v2005 = vshll.u32 %v1828, 16
  %v2007 = vrot.slane %v2005, 5
  %v2008 = vsel %vm244, %v2003, %v2007
  %v2010 = vshrl.u32 %v1829, 16
  %v2012 = vrot.slane %v2010, 4
  %v2013 = vshll.u32 %v1829, 16
  %v2015 = vrot.slane %v2013, 5
  %v2016 = vor.u32 %v2012, %v2015
  %v2017 = vrot.slane %v2016, 4
  %v2019 = vshll.u32 %v1830, 16
  %v2021 = vrot.slane %v2019, 5
  %v2022 = vsel %vm244, %v2017, %v2021
  %v2023 = vshrl.u32 %v1830, 16
  %v2025 = vrot.slane %v2023, 4
  %v2026 = vor.u32 %v2025, %v2021
  %v2027 = vrot.slane %v2026, 4
  %v2029 = vshll.u32 %v1831, 16
  %v2031 = vrot.slane %v2029, 5
  %v2032 = vsel %vm244, %v2027, %v2031
  %v2034 = vshrl.u32 %v1832, 16
  %v2036 = vrot.slane %v2034, 4
  %v2037 = vshll.u32 %v1832, 16
  %v2039 = vrot.slane %v2037, 5
  %v2040 = vor.u32 %v2036, %v2039
  %v2041 = vrot.slane %v2040, 4
  %v2043 = vshll.u32 %v1833, 16
  %v2045 = vrot.slane %v2043, 5
  %v2046 = vsel %vm244, %v2041, %v2045
  %v2047 = vshrl.u32 %v1833, 16
  %v2049 = vrot.slane %v2047, 4
  %v2050 = vor.u32 %v2049, %v2045
  %v2051 = vrot.slane %v2050, 4
  %v2053 = vshll.u32 %v1834, 16
  %v2055 = vrot.slane %v2053, 5
  %v2056 = vsel %vm244, %v2051, %v2055
  %v2058 = vshrl.u32 %v1835, 16
  %v2060 = vrot.slane %v2058, 4
  %v2061 = vshll.u32 %v1835, 16
  %v2063 = vrot.slane %v2061, 5
  %v2064 = vor.u32 %v2060, %v2063
  %v2065 = vrot.slane %v2064, 4
  %v2067 = vshll.u32 %v1836, 16
  %v2069 = vrot.slane %v2067, 5
  %v2070 = vsel %vm244, %v2065, %v2069
  %v2071 = vshrl.u32 %v1836, 16
  %v2073 = vrot.slane %v2071, 4
  %v2074 = vor.u32 %v2073, %v2069
  %v2075 = vrot.slane %v2074, 4
  %v2077 = vshll.u32 %v1837, 16
  %v2079 = vrot.slane %v2077, 5
  %v2080 = vsel %vm244, %v2075, %v2079
  %v2082 = vshrl.u32 %v1838, 16
  %v2084 = vrot.slane %v2082, 4
  %v2085 = vshll.u32 %v1838, 16
  %v2087 = vrot.slane %v2085, 5
  %v2088 = vor.u32 %v2084, %v2087
  %v2089 = vrot.slane %v2088, 4
  %v2091 = vshll.u32 %v1839, 16
  %v2093 = vrot.slane %v2091, 5
  %v2094 = vsel %vm244, %v2089, %v2093
  %v2095 = vshrl.u32 %v1839, 16
  %v2097 = vrot.slane %v2095, 4
  %v2098 = vor.u32 %v2097, %v2093
  %v2099 = vrot.slane %v2098, 4
  %v2101 = vshll.u32 %v1840, 16
  %v2103 = vrot.slane %v2101, 5
  %v2104 = vsel %vm244, %v2099, %v2103
  %v2106 = vshrl.u32 %v1841, 16
  %v2108 = vrot.slane %v2106, 4
  %v2109 = vshll.u32 %v1841, 16
  %v2111 = vrot.slane %v2109, 5
  %v2112 = vor.u32 %v2108, %v2111
  %v2113 = vrot.slane %v2112, 4
  %v2115 = vshll.u32 %v1842, 16
  %v2117 = vrot.slane %v2115, 5
  %v2118 = vsel %vm244, %v2113, %v2117
  %v2119 = vshrl.u32 %v1842, 16
  %v2121 = vrot.slane %v2119, 4
  %v2122 = vor.u32 %v2121, %v2117
  %v2123 = vrot.slane %v2122, 4
  %v2125 = vshll.u32 %v1843, 16
  %v2127 = vrot.slane %v2125, 5
  %v2128 = vsel %vm244, %v2123, %v2127
  %v2130 = vshrl.u32 %v1844, 16
  %v2132 = vrot.slane %v2130, 4
  %v2133 = vshll.u32 %v1844, 16
  %v2135 = vrot.slane %v2133, 5
  %v2136 = vor.u32 %v2132, %v2135
  %v2137 = vrot.slane %v2136, 4
  %v2139 = vshll.u32 %v1845, 16
  %v2141 = vrot.slane %v2139, 5
  %v2142 = vsel %vm244, %v2137, %v2141
  %v2143 = vshrl.u32 %v1845, 16
  %v2145 = vrot.slane %v2143, 4
  %v2146 = vor.u32 %v2145, %v2141
  %v2147 = vrot.slane %v2146, 4
  %v2149 = vshll.u32 %v1846, 16
  %v2151 = vrot.slane %v2149, 5
  %v2152 = vsel %vm244, %v2147, %v2151
  %v2154 = vshrl.u32 %v1847, 16
  %v2156 = vrot.slane %v2154, 4
  %v2157 = vshll.u32 %v1847, 16
  %v2159 = vrot.slane %v2157, 5
  %v2160 = vor.u32 %v2156, %v2159
  %v2161 = vrot.slane %v2160, 4
  %v2163 = vshll.u32 %v1848, 16
  %v2165 = vrot.slane %v2163, 5
  %v2166 = vsel %vm244, %v2161, %v2165
  %v2167 = vshrl.u32 %v1848, 16
  %v2169 = vrot.slane %v2167, 4
  %v2170 = vor.u32 %v2169, %v2165
  %v2171 = vrot.slane %v2170, 4
  %v2173 = vshll.u32 %v1849, 16
  %v2175 = vrot.slane %v2173, 5
  %v2176 = vsel %vm244, %v2171, %v2175
  %v2178 = vshrl.u32 %v1850, 16
  %v2180 = vrot.slane %v2178, 4
  %v2181 = vshll.u32 %v1850, 16
  %v2183 = vrot.slane %v2181, 5
  %v2184 = vor.u32 %v2180, %v2183
  %v2185 = vrot.slane %v2184, 4
  %v2187 = vshll.u32 %v1851, 16
  %v2189 = vrot.slane %v2187, 5
  %v2190 = vsel %vm244, %v2185, %v2189
  %v2191 = vshrl.u32 %v1851, 16
  %v2193 = vrot.slane %v2191, 4
  %v2194 = vor.u32 %v2193, %v2189
  %v2195 = vrot.slane %v2194, 4
  %v2197 = vshll.u32 %v1852, 16
  %v2199 = vrot.slane %v2197, 5
  %v2200 = vsel %vm244, %v2195, %v2199
  %v2202 = vshrl.u32 %v1853, 16
  %v2204 = vrot.slane %v2202, 4
  %v2205 = vshll.u32 %v1853, 16
  %v2207 = vrot.slane %v2205, 5
  %v2208 = vor.u32 %v2204, %v2207
  %v2209 = vrot.slane %v2208, 4
  %v2211 = vshll.u32 %v1854, 16
  %v2213 = vrot.slane %v2211, 5
  %v2214 = vsel %vm244, %v2209, %v2213
  %v2215 = vshrl.u32 %v1854, 16
  %v2217 = vrot.slane %v2215, 4
  %v2218 = vor.u32 %v2217, %v2213
  %v2219 = vrot.slane %v2218, 4
  %v2221 = vshll.u32 %v1855, 16
  %v2223 = vrot.slane %v2221, 5
  %v2224 = vsel %vm244, %v2219, %v2223
  %v2226 = vshrl.u32 %v1856, 16
  %v2228 = vrot.slane %v2226, 4
  %v2229 = vshll.u32 %v1856, 16
  %v2231 = vrot.slane %v2229, 5
  %v2232 = vor.u32 %v2228, %v2231
  %v2233 = vrot.slane %v2232, 4
  %v2235 = vshll.u32 %v1857, 16
  %v2237 = vrot.slane %v2235, 5
  %v2238 = vsel %vm244, %v2233, %v2237
  %v2239 = vshrl.u32 %v1857, 16
  %v2241 = vrot.slane %v2239, 4
  %v2242 = vor.u32 %v2241, %v2237
  %v2243 = vrot.slane %v2242, 4
  %v2245 = vshll.u32 %v1858, 16
  %v2247 = vrot.slane %v2245, 5
  %v2248 = vsel %vm244, %v2243, %v2247
  %v2250 = vshrl.u32 %v1859, 16
  %v2252 = vrot.slane %v2250, 4
  %v2253 = vshll.u32 %v1859, 16
  %v2255 = vrot.slane %v2253, 5
  %v2256 = vor.u32 %v2252, %v2255
  %v2257 = vrot.slane %v2256, 4
  %v2259 = vshll.u32 %v1860, 16
  %v2261 = vrot.slane %v2259, 5
  %v2262 = vsel %vm244, %v2257, %v2261
  %v2263 = vshrl.u32 %v1860, 16
  %v2265 = vrot.slane %v2263, 4
  %v2266 = vor.u32 %v2265, %v2261
  %v2267 = vrot.slane %v2266, 4
  %v2269 = vshll.u32 %v1861, 16
  %v2271 = vrot.slane %v2269, 5
  %v2272 = vsel %vm244, %v2267, %v2271
  %v2274 = vshrl.u32 %v1862, 16
  %v2276 = vrot.slane %v2274, 4
  %v2277 = vshll.u32 %v1862, 16
  %v2279 = vrot.slane %v2277, 5
  %v2280 = vor.u32 %v2276, %v2279
  %v2281 = vrot.slane %v2280, 4
  %v2283 = vshll.u32 %v1863, 16
  %v2285 = vrot.slane %v2283, 5
  %v2286 = vsel %vm244, %v2281, %v2285
  %v2287 = vshrl.u32 %v1863, 16
  %v2289 = vrot.slane %v2287, 4
  %v2290 = vor.u32 %v2289, %v2285
  %v2291 = vrot.slane %v2290, 4
  %v2293 = vshll.u32 %v1864, 16
  %v2295 = vrot.slane %v2293, 5
  %v2296 = vsel %vm244, %v2291, %v2295
  %v2298 = vshrl.u32 %v1865, 16
  %v2300 = vrot.slane %v2298, 4
  %v2301 = vshll.u32 %v1865, 16
  %v2303 = vrot.slane %v2301, 5
  %v2304 = vor.u32 %v2300, %v2303
  %v2305 = vrot.slane %v2304, 4
  %v2307 = vshll.u32 %v1866, 16
  %v2309 = vrot.slane %v2307, 5
  %v2310 = vsel %vm244, %v2305, %v2309
  %v2311 = vshrl.u32 %v1866, 16
  %v2313 = vrot.slane %v2311, 4
  %v2314 = vor.u32 %v2313, %v2309
  %v2315 = vrot.slane %v2314, 4
  %v2317 = vshll.u32 %v1867, 16
  %v2319 = vrot.slane %v2317, 5
  %v2320 = vsel %vm244, %v2315, %v2319
  %v2322 = vshrl.u32 %v1868, 16
  %v2324 = vrot.slane %v2322, 4
  %v2325 = vshll.u32 %v1868, 16
  %v2327 = vrot.slane %v2325, 5
  %v2328 = vor.u32 %v2324, %v2327
  %v2329 = vrot.slane %v2328, 4
  %v2331 = vshll.u32 %v1869, 16
  %v2333 = vrot.slane %v2331, 5
  %v2334 = vsel %vm244, %v2329, %v2333
  %v2335 = vshrl.u32 %v1869, 16
  %v2337 = vrot.slane %v2335, 4
  %v2338 = vor.u32 %v2337, %v2333
  %v2339 = vrot.slane %v2338, 4
  %v2341 = vshll.u32 %v1870, 16
  %v2343 = vrot.slane %v2341, 5
  %v2344 = vsel %vm244, %v2339, %v2343
  %v2346 = vshrl.u32 %v1871, 16
  %v2348 = vrot.slane %v2346, 4
  %v2349 = vshll.u32 %v1871, 16
  %v2351 = vrot.slane %v2349, 5
  %v2352 = vor.u32 %v2348, %v2351
  %v2353 = vrot.slane %v2352, 4
  %v2355 = vshll.u32 %v1872, 16
  %v2357 = vrot.slane %v2355, 5
  %v2358 = vsel %vm244, %v2353, %v2357
  %v2359 = vshrl.u32 %v1872, 16
  %v2361 = vrot.slane %v2359, 4
  %v2362 = vor.u32 %v2361, %v2357
  %v2363 = vrot.slane %v2362, 4
  %v2365 = vshll.u32 %v1873, 16
  %v2367 = vrot.slane %v2365, 5
  %v2368 = vsel %vm244, %v2363, %v2367
  %v2370 = vshrl.u32 %v1874, 16
  %v2372 = vrot.slane %v2370, 4
  %v2373 = vshll.u32 %v1874, 16
  %v2375 = vrot.slane %v2373, 5
  %v2376 = vor.u32 %v2372, %v2375
  %v2377 = vrot.slane %v2376, 4
  %v2379 = vshll.u32 %v1875, 16
  %v2381 = vrot.slane %v2379, 5
  %v2382 = vsel %vm244, %v2377, %v2381
  %v2383 = vshrl.u32 %v1875, 16
  %v2385 = vrot.slane %v2383, 4
  %v2386 = vor.u32 %v2385, %v2381
  %v2387 = vrot.slane %v2386, 4
  %v2389 = vshll.u32 %v1876, 16
  %v2391 = vrot.slane %v2389, 5
  %v2392 = vsel %vm244, %v2387, %v2391
  %v2394 = vshrl.u32 %v1877, 16
  %v2396 = vrot.slane %v2394, 4
  %v2397 = vshll.u32 %v1877, 16
  %v2399 = vrot.slane %v2397, 5
  %v2400 = vor.u32 %v2396, %v2399
  %v2401 = vrot.slane %v2400, 4
  %v2403 = vshll.u32 %v1878, 16
  %v2405 = vrot.slane %v2403, 5
  %v2406 = vsel %vm244, %v2401, %v2405
  %v2407 = vshrl.u32 %v1878, 16
  %v2409 = vrot.slane %v2407, 4
  %v2410 = vor.u32 %v2409, %v2405
  %v2411 = vrot.slane %v2410, 4
  %v2413 = vshll.u32 %v1879, 16
  %v2415 = vrot.slane %v2413, 5
  %v2416 = vsel %vm244, %v2411, %v2415
  %v2418 = vshrl.u32 %v1880, 16
  %v2420 = vrot.slane %v2418, 4
  %v2421 = vshll.u32 %v1880, 16
  %v2423 = vrot.slane %v2421, 5
  %v2424 = vor.u32 %v2420, %v2423
  %v2425 = vrot.slane %v2424, 4
  %v2427 = vshll.u32 %v1881, 16
  %v2429 = vrot.slane %v2427, 5
  %v2430 = vsel %vm244, %v2425, %v2429
  %v2431 = vshrl.u32 %v1881, 16
  %v2433 = vrot.slane %v2431, 4
  %v2434 = vor.u32 %v2433, %v2429
  %v2435 = vrot.slane %v2434, 4
  %v2437 = vshll.u32 %v1882, 16
  %v2439 = vrot.slane %v2437, 5
  %v2440 = vsel %vm244, %v2435, %v2439
  %v2442 = vshrl.u32 %v1883, 16
  %v2444 = vrot.slane %v2442, 4
  %v2445 = vshll.u32 %v1883, 16
  %v2447 = vrot.slane %v2445, 5
  %v2448 = vor.u32 %v2444, %v2447
  %v2449 = vrot.slane %v2448, 4
  %v2451 = vshll.u32 %v1884, 16
  %v2453 = vrot.slane %v2451, 5
  %v2454 = vsel %vm244, %v2449, %v2453
  %v2455 = vshrl.u32 %v1884, 16
  %v2457 = vrot.slane %v2455, 4
  %v2458 = vor.u32 %v2457, %v2453
  %v2459 = vrot.slane %v2458, 4
  %v2461 = vshll.u32 %v1885, 16
  %v2463 = vrot.slane %v2461, 5
  %v2464 = vsel %vm244, %v2459, %v2463
  %v2466 = vshrl.u32 %v1886, 16
  %v2468 = vrot.slane %v2466, 4
  %v2469 = vshll.u32 %v1886, 16
  %v2471 = vrot.slane %v2469, 5
  %v2472 = vor.u32 %v2468, %v2471
  %v2473 = vrot.slane %v2472, 4
  %v2475 = vshll.u32 %v1887, 16
  %v2477 = vrot.slane %v2475, 5
  %v2478 = vsel %vm244, %v2473, %v2477
  %v2479 = vshrl.u32 %v1887, 16
  %v2481 = vrot.slane %v2479, 4
  %v2482 = vor.u32 %v2481, %v2477
  %v2483 = vrot.slane %v2482, 4
  %v2485 = vshll.u32 %v1888, 16
  %v2487 = vrot.slane %v2485, 5
  %v2488 = vsel %vm244, %v2483, %v2487
  %v2490 = vshrl.u32 %v1889, 16
  %v2492 = vrot.slane %v2490, 4
  %v2493 = vshll.u32 %v1889, 16
  %v2495 = vrot.slane %v2493, 5
  %v2496 = vor.u32 %v2492, %v2495
  %v2497 = vrot.slane %v2496, 4
  %v2499 = vshll.u32 %v1890, 16
  %v2501 = vrot.slane %v2499, 5
  %v2502 = vsel %vm244, %v2497, %v2501
  %v2503 = vshrl.u32 %v1890, 16
  %v2505 = vrot.slane %v2503, 4
  %v2506 = vor.u32 %v2505, %v2501
  %v2507 = vrot.slane %v2506, 4
  %v2509 = vshll.u32 %v1891, 16
  %v2511 = vrot.slane %v2509, 5
  %v2512 = vsel %vm244, %v2507, %v2511
  %v2514 = vshrl.u32 %v1892, 16
  %v2516 = vrot.slane %v2514, 4
  %v2517 = vshll.u32 %v1892, 16
  %v2519 = vrot.slane %v2517, 5
  %v2520 = vor.u32 %v2516, %v2519
  %v2521 = vrot.slane %v2520, 4
  %v2523 = vshll.u32 %v1893, 16
  %v2525 = vrot.slane %v2523, 5
  %v2526 = vsel %vm244, %v2521, %v2525
  %v2527 = vshrl.u32 %v1893, 16
  %v2529 = vrot.slane %v2527, 4
  %v2530 = vor.u32 %v2529, %v2525
  %v2531 = vrot.slane %v2530, 4
  %v2533 = vshll.u32 %v1894, 16
  %v2535 = vrot.slane %v2533, 5
  %v2536 = vsel %vm244, %v2531, %v2535
  %v2538 = vshrl.u32 %v1895, 16
  %v2540 = vrot.slane %v2538, 4
  %v2541 = vshll.u32 %v1895, 16
  %v2543 = vrot.slane %v2541, 5
  %v2544 = vor.u32 %v2540, %v2543
  %v2545 = vrot.slane %v2544, 4
  %v2547 = vshll.u32 %v1896, 16
  %v2549 = vrot.slane %v2547, 5
  %v2550 = vsel %vm244, %v2545, %v2549
  %v2551 = vshrl.u32 %v1896, 16
  %v2553 = vrot.slane %v2551, 4
  %v2554 = vor.u32 %v2553, %v2549
  %v2555 = vrot.slane %v2554, 4
  %v2557 = vshll.u32 %v1897, 16
  %v2559 = vrot.slane %v2557, 5
  %v2560 = vsel %vm244, %v2555, %v2559
  %v2562 = vshrl.u32 %v1898, 16
  %v2564 = vrot.slane %v2562, 4
  %v2565 = vshll.u32 %v1898, 16
  %v2567 = vrot.slane %v2565, 5
  %v2568 = vor.u32 %v2564, %v2567
  %v2569 = vrot.slane %v2568, 4
  %v2571 = vshll.u32 %v1899, 16
  %v2573 = vrot.slane %v2571, 5
  %v2574 = vsel %vm244, %v2569, %v2573
  %v2575 = vshrl.u32 %v1899, 16
  %v2577 = vrot.slane %v2575, 4
  %v2578 = vor.u32 %v2577, %v2573
  %v2579 = vrot.slane %v2578, 4
  %v2581 = vshll.u32 %v1900, 16
  %v2583 = vrot.slane %v2581, 5
  %v2584 = vsel %vm244, %v2579, %v2583
  %v2586 = vshrl.u32 %v1901, 16
  %v2588 = vrot.slane %v2586, 4
  %v2589 = vshll.u32 %v1901, 16
  %v2591 = vrot.slane %v2589, 5
  %v2592 = vor.u32 %v2588, %v2591
  %v2593 = vrot.slane %v2592, 4
  %v2595 = vshll.u32 %v1902, 16
  %v2597 = vrot.slane %v2595, 5
  %v2598 = vsel %vm244, %v2593, %v2597
  %v2599 = vshrl.u32 %v1902, 16
  %v2601 = vrot.slane %v2599, 4
  %v2602 = vor.u32 %v2601, %v2597
  %v2603 = vrot.slane %v2602, 4
  %v2605 = vshll.u32 %v1903, 16
  %v2607 = vrot.slane %v2605, 5
  %v2608 = vsel %vm244, %v2603, %v2607
  %v2610 = vshrl.u32 %v1904, 16
  %v2612 = vrot.slane %v2610, 4
  %v2613 = vshll.u32 %v1904, 16
  %v2615 = vrot.slane %v2613, 5
  %v2616 = vor.u32 %v2612, %v2615
  %v2617 = vrot.slane %v2616, 4
  %v2619 = vshll.u32 %v1905, 16
  %v2621 = vrot.slane %v2619, 5
  %v2622 = vsel %vm244, %v2617, %v2621
  %v2623 = vshrl.u32 %v1905, 16
  %v2625 = vrot.slane %v2623, 4
  %v2626 = vor.u32 %v2625, %v2621
  %v2627 = vrot.slane %v2626, 4
  %v2629 = vshll.u32 %v1906, 16
  %v2631 = vrot.slane %v2629, 5
  %v2632 = vsel %vm244, %v2627, %v2631
  %v2634 = vshrl.u32 %v1907, 16
  %v2636 = vrot.slane %v2634, 4
  %v2637 = vshll.u32 %v1907, 16
  %v2639 = vrot.slane %v2637, 5
  %v2640 = vor.u32 %v2636, %v2639
  %v2641 = vrot.slane %v2640, 4
  %v2643 = vshll.u32 %v1908, 16
  %v2645 = vrot.slane %v2643, 5
  %v2646 = vsel %vm244, %v2641, %v2645
  %v2647 = vshrl.u32 %v1908, 16
  %v2649 = vrot.slane %v2647, 4
  %v2650 = vor.u32 %v2649, %v2645
  %v2651 = vrot.slane %v2650, 4
  %v2653 = vshll.u32 %v1909, 16
  %v2655 = vrot.slane %v2653, 5
  %v2656 = vsel %vm244, %v2651, %v2655
  %v2658 = vshrl.u32 %v1910, 16
  %v2660 = vrot.slane %v2658, 4
  %v2661 = vshll.u32 %v1910, 16
  %v2663 = vrot.slane %v2661, 5
  %v2664 = vor.u32 %v2660, %v2663
  %v2665 = vrot.slane %v2664, 4
  %v2667 = vshll.u32 %v1911, 16
  %v2669 = vrot.slane %v2667, 5
  %v2670 = vsel %vm244, %v2665, %v2669
  %v2671 = vshrl.u32 %v1911, 16
  %v2673 = vrot.slane %v2671, 4
  %v2674 = vor.u32 %v2673, %v2669
  %v2675 = vrot.slane %v2674, 4
  %v2677 = vshll.u32 %v1912, 16
  %v2679 = vrot.slane %v2677, 5
  %v2680 = vsel %vm244, %v2675, %v2679
  %2745 = vst [vmem:[#allocation2 + $0x10] sm:$0xf] %v1926
  %2746 = vst [vmem:[#allocation2 + $0x34] sm:$0xf] %v1936
  %2747 = vst [vmem:[#allocation2 + $0x58] sm:$0xf] %v1950
  %2748 = vst [vmem:[#allocation2 + $0x7c] sm:$0xf] %v1960
  %2749 = vst [vmem:[#allocation2 + $0xa0] sm:$0xf] %v1974
  %2750 = vst [vmem:[#allocation2 + $0xc4] sm:$0xf] %v1984
  %2751 = vst [vmem:[#allocation2 + $0xe8] sm:$0xf] %v1998
  %2752 = vst [vmem:[#allocation2 + $0x10c] sm:$0xf] %v2008
  %2753 = vst [vmem:[#allocation2 + $0x130] sm:$0xf] %v2022
  %2754 = vst [vmem:[#allocation2 + $0x154] sm:$0xf] %v2032
  %2755 = vst [vmem:[#allocation2 + $0x178] sm:$0xf] %v2046
  %2756 = vst [vmem:[#allocation2 + $0x19c] sm:$0xf] %v2056
  %2757 = vst [vmem:[#allocation2 + $0x1c0] sm:$0xf] %v2070
  %2758 = vst [vmem:[#allocation2 + $0x1e4] sm:$0xf] %v2080
  %2759 = vst [vmem:[#allocation2 + $0x208] sm:$0xf] %v2094
  %2760 = vst [vmem:[#allocation2 + $0x22c] sm:$0xf] %v2104
  %2761 = vst [vmem:[#allocation2 + $0x250] sm:$0xf] %v2118
  %2762 = vst [vmem:[#allocation2 + $0x274] sm:$0xf] %v2128
  %2763 = vst [vmem:[#allocation2 + $0x298] sm:$0xf] %v2142
  %2764 = vst [vmem:[#allocation2 + $0x2bc] sm:$0xf] %v2152
  %2765 = vst [vmem:[#allocation2 + $0x2e0] sm:$0xf] %v2166
  %2766 = vst [vmem:[#allocation2 + $0x304] sm:$0xf] %v2176
  %2767 = vst [vmem:[#allocation2 + $0x328] sm:$0xf] %v2190
  %2768 = vst [vmem:[#allocation2 + $0x34c] sm:$0xf] %v2200
  %2769 = vst [vmem:[#allocation2 + $0x370] sm:$0xf] %v2214
  %2770 = vst [vmem:[#allocation2 + $0x394] sm:$0xf] %v2224
  %2771 = vst [vmem:[#allocation2 + $0x3b8] sm:$0xf] %v2238
  %2772 = vst [vmem:[#allocation2 + $0x3dc] sm:$0xf] %v2248
  %2773 = vst [vmem:[#allocation2 + $0x400] sm:$0xf] %v2262
  %2774 = vst [vmem:[#allocation2 + $0x424] sm:$0xf] %v2272
  %2775 = vst [vmem:[#allocation2 + $0x448] sm:$0xf] %v2286
  %2776 = vst [vmem:[#allocation2 + $0x46c] sm:$0xf] %v2296
  %2777 = vst [vmem:[#allocation2 + $0x490] sm:$0xf] %v2310
  %2778 = vst [vmem:[#allocation2 + $0x4b4] sm:$0xf] %v2320
  %2779 = vst [vmem:[#allocation2 + $0x4d8] sm:$0xf] %v2334
  %2780 = vst [vmem:[#allocation2 + $0x4fc] sm:$0xf] %v2344
  %2781 = vst [vmem:[#allocation2 + $0x520] sm:$0xf] %v2358
  %2782 = vst [vmem:[#allocation2 + $0x544] sm:$0xf] %v2368
  %2783 = vst [vmem:[#allocation2 + $0x568] sm:$0xf] %v2382
  %2784 = vst [vmem:[#allocation2 + $0x58c] sm:$0xf] %v2392
  %2785 = vst [vmem:[#allocation2 + $0x5b0] sm:$0xf] %v2406
  %2786 = vst [vmem:[#allocation2 + $0x5d4] sm:$0xf] %v2416
  %2787 = vst [vmem:[#allocation2 + $0x5f8] sm:$0xf] %v2430
  %2788 = vst [vmem:[#allocation2 + $0x61c] sm:$0xf] %v2440
  %2789 = vst [vmem:[#allocation2 + $0x640] sm:$0xf] %v2454
  %2790 = vst [vmem:[#allocation2 + $0x664] sm:$0xf] %v2464
  %2791 = vst [vmem:[#allocation2 + $0x688] sm:$0xf] %v2478
  %2792 = vst [vmem:[#allocation2 + $0x6ac] sm:$0xf] %v2488
  %2793 = vst [vmem:[#allocation2 + $0x6d0] sm:$0xf] %v2502
  %2794 = vst [vmem:[#allocation2 + $0x6f4] sm:$0xf] %v2512
  %2795 = vst [vmem:[#allocation2 + $0x718] sm:$0xf] %v2526
  %2796 = vst [vmem:[#allocation2 + $0x73c] sm:$0xf] %v2536
  %2797 = vst [vmem:[#allocation2 + $0x760] sm:$0xf] %v2550
  %2798 = vst [vmem:[#allocation2 + $0x784] sm:$0xf] %v2560
  %2799 = vst [vmem:[#allocation2 + $0x7a8] sm:$0xf] %v2574
  %2800 = vst [vmem:[#allocation2 + $0x7cc] sm:$0xf] %v2584
  %2801 = vst [vmem:[#allocation2 + $0x7f0] sm:$0xf] %v2598
  %2802 = vst [vmem:[#allocation2 + $0x814] sm:$0xf] %v2608
  %2803 = vst [vmem:[#allocation2 + $0x838] sm:$0xf] %v2622
  %2804 = vst [vmem:[#allocation2 + $0x85c] sm:$0xf] %v2632
  %2805 = vst [vmem:[#allocation2 + $0x880] sm:$0xf] %v2646
  %2806 = vst [vmem:[#allocation2 + $0x8a4] sm:$0xf] %v2656
  %2807 = vst [vmem:[#allocation2 + $0x8c8] sm:$0xf] %v2670
  %2808 = vst [vmem:[#allocation2 + $0x8ec] sm:$0xf] %v2680
  %v2809 = vld [vmem:[%s1688] sm:$0xe]
  %v2810 = vld [vmem:[%s1688 + $0x4] sm:$0xf]
  %v2811 = vld [vmem:[%s1688 + $0x8] sm:$0x1]
  %v2812 = vld [vmem:[%s1688 + $0xc] sm:$0xe]
  %v2813 = vld [vmem:[%s1688 + $0x10] sm:$0xf]
  %v2814 = vld [vmem:[%s1688 + $0x14] sm:$0x1]
  %v2815 = vld [vmem:[%s1688 + $0x18] sm:$0xe]
  %v2816 = vld [vmem:[%s1688 + $0x1c] sm:$0xf]
  %v2817 = vld [vmem:[%s1688 + $0x20] sm:$0x1]
  %v2818 = vld [vmem:[%s1688 + $0x24] sm:$0xe]
  %v2819 = vld [vmem:[%s1688 + $0x28] sm:$0xf]
  %v2820 = vld [vmem:[%s1688 + $0x2c] sm:$0x1]
  %v2821 = vld [vmem:[%s1688 + $0x30] sm:$0xe]
  %v2822 = vld [vmem:[%s1688 + $0x34] sm:$0xf]
  %v2823 = vld [vmem:[%s1688 + $0x38] sm:$0x1]
  %v2824 = vld [vmem:[%s1688 + $0x3c] sm:$0xe]
  %v2825 = vld [vmem:[%s1688 + $0x40] sm:$0xf]
  %v2826 = vld [vmem:[%s1688 + $0x44] sm:$0x1]
  %v2827 = vld [vmem:[%s1688 + $0x48] sm:$0xe]
  %v2828 = vld [vmem:[%s1688 + $0x4c] sm:$0xf]
  %v2829 = vld [vmem:[%s1688 + $0x50] sm:$0x1]
  %v2830 = vld [vmem:[%s1688 + $0x54] sm:$0xe]
  %v2831 = vld [vmem:[%s1688 + $0x58] sm:$0xf]
  %v2832 = vld [vmem:[%s1688 + $0x5c] sm:$0x1]
  %v2833 = vld [vmem:[%s1688 + $0x60] sm:$0xe]
  %v2834 = vld [vmem:[%s1688 + $0x64] sm:$0xf]
  %v2835 = vld [vmem:[%s1688 + $0x68] sm:$0x1]
  %v2836 = vld [vmem:[%s1688 + $0x6c] sm:$0xe]
  %v2837 = vld [vmem:[%s1688 + $0x70] sm:$0xf]
  %v2838 = vld [vmem:[%s1688 + $0x74] sm:$0x1]
  %v2839 = vld [vmem:[%s1688 + $0x78] sm:$0xe]
  %v2840 = vld [vmem:[%s1688 + $0x7c] sm:$0xf]
  %v2841 = vld [vmem:[%s1688 + $0x80] sm:$0x1]
  %v2842 = vld [vmem:[%s1688 + $0x84] sm:$0xe]
  %v2843 = vld [vmem:[%s1688 + $0x88] sm:$0xf]
  %v2844 = vld [vmem:[%s1688 + $0x8c] sm:$0x1]
  %v2845 = vld [vmem:[%s1688 + $0x90] sm:$0xe]
  %v2846 = vld [vmem:[%s1688 + $0x94] sm:$0xf]
  %v2847 = vld [vmem:[%s1688 + $0x98] sm:$0x1]
  %v2848 = vld [vmem:[%s1688 + $0x9c] sm:$0xe]
  %v2849 = vld [vmem:[%s1688 + $0xa0] sm:$0xf]
  %v2850 = vld [vmem:[%s1688 + $0xa4] sm:$0x1]
  %v2851 = vld [vmem:[%s1688 + $0xa8] sm:$0xe]
  %v2852 = vld [vmem:[%s1688 + $0xac] sm:$0xf]
  %v2853 = vld [vmem:[%s1688 + $0xb0] sm:$0x1]
  %v2854 = vld [vmem:[%s1688 + $0xb4] sm:$0xe]
  %v2855 = vld [vmem:[%s1688 + $0xb8] sm:$0xf]
  %v2856 = vld [vmem:[%s1688 + $0xbc] sm:$0x1]
  %v2857 = vld [vmem:[%s1688 + $0xd8] sm:$0xe]
  %v2858 = vld [vmem:[%s1688 + $0xdc] sm:$0xf]
  %v2859 = vld [vmem:[%s1688 + $0xe0] sm:$0x1]
  %v2860 = vld [vmem:[%s1688 + $0xe4] sm:$0xe]
  %v2861 = vld [vmem:[%s1688 + $0xe8] sm:$0xf]
  %v2862 = vld [vmem:[%s1688 + $0xec] sm:$0x1]
  %v2863 = vld [vmem:[%s1688 + $0xf0] sm:$0xe]
  %v2864 = vld [vmem:[%s1688 + $0xf4] sm:$0xf]
  %v2865 = vld [vmem:[%s1688 + $0xf8] sm:$0x1]
  %v2866 = vld [vmem:[%s1688 + $0xfc] sm:$0xe]
  %v2867 = vld [vmem:[%s1688 + $0x100] sm:$0xf]
  %v2868 = vld [vmem:[%s1688 + $0x104] sm:$0x1]
  %v2869 = vld [vmem:[%s1688 + $0x108] sm:$0xe]
  %v2870 = vld [vmem:[%s1688 + $0x10c] sm:$0xf]
  %v2871 = vld [vmem:[%s1688 + $0x110] sm:$0x1]
  %v2872 = vld [vmem:[%s1688 + $0x114] sm:$0xe]
  %v2873 = vld [vmem:[%s1688 + $0x118] sm:$0xf]
  %v2874 = vld [vmem:[%s1688 + $0x11c] sm:$0x1]
  %v2875 = vld [vmem:[%s1688 + $0x120] sm:$0xe]
  %v2876 = vld [vmem:[%s1688 + $0x124] sm:$0xf]
  %v2877 = vld [vmem:[%s1688 + $0x128] sm:$0x1]
  %v2878 = vld [vmem:[%s1688 + $0x12c] sm:$0xe]
  %v2879 = vld [vmem:[%s1688 + $0x130] sm:$0xf]
  %v2880 = vld [vmem:[%s1688 + $0x134] sm:$0x1]
  %v2881 = vld [vmem:[%s1688 + $0x138] sm:$0xe]
  %v2882 = vld [vmem:[%s1688 + $0x13c] sm:$0xf]
  %v2883 = vld [vmem:[%s1688 + $0x140] sm:$0x1]
  %v2884 = vld [vmem:[%s1688 + $0x144] sm:$0xe]
  %v2885 = vld [vmem:[%s1688 + $0x148] sm:$0xf]
  %v2886 = vld [vmem:[%s1688 + $0x14c] sm:$0x1]
  %v2887 = vld [vmem:[%s1688 + $0x150] sm:$0xe]
  %v2888 = vld [vmem:[%s1688 + $0x154] sm:$0xf]
  %v2889 = vld [vmem:[%s1688 + $0x158] sm:$0x1]
  %v2890 = vld [vmem:[%s1688 + $0x15c] sm:$0xe]
  %v2891 = vld [vmem:[%s1688 + $0x160] sm:$0xf]
  %v2892 = vld [vmem:[%s1688 + $0x164] sm:$0x1]
  %v2893 = vld [vmem:[%s1688 + $0x168] sm:$0xe]
  %v2894 = vld [vmem:[%s1688 + $0x16c] sm:$0xf]
  %v2895 = vld [vmem:[%s1688 + $0x170] sm:$0x1]
  %v2896 = vld [vmem:[%s1688 + $0x174] sm:$0xe]
  %v2897 = vld [vmem:[%s1688 + $0x178] sm:$0xf]
  %v2898 = vld [vmem:[%s1688 + $0x17c] sm:$0x1]
  %v2899 = vld [vmem:[%s1688 + $0x180] sm:$0xe]
  %v2900 = vld [vmem:[%s1688 + $0x184] sm:$0xf]
  %v2901 = vld [vmem:[%s1688 + $0x188] sm:$0x1]
  %v2902 = vld [vmem:[%s1688 + $0x18c] sm:$0xe]
  %v2903 = vld [vmem:[%s1688 + $0x190] sm:$0xf]
  %v2904 = vld [vmem:[%s1688 + $0x194] sm:$0x1]
  %v3001 = vrot.slane %v2809, 5
  %v3002 = vrot.slane %v3001, 4
  %v3003 = vrot.slane %v2810, 5
  %v3004 = vsel %vm1335, %v3002, %v3003
  %v3005 = vrot.slane %v3003, 4
  %v3006 = vrot.slane %v2811, 5
  %v3007 = vsel %vm1335, %v3005, %v3006
  %v3008 = vrot.slane %v2812, 5
  %v3009 = vrot.slane %v3008, 4
  %v3010 = vrot.slane %v2813, 5
  %v3011 = vsel %vm1335, %v3009, %v3010
  %v3012 = vrot.slane %v3010, 4
  %v3013 = vrot.slane %v2814, 5
  %v3014 = vsel %vm1335, %v3012, %v3013
  %v3015 = vrot.slane %v2815, 5
  %v3016 = vrot.slane %v3015, 4
  %v3017 = vrot.slane %v2816, 5
  %v3018 = vsel %vm1335, %v3016, %v3017
  %v3019 = vrot.slane %v3017, 4
  %v3020 = vrot.slane %v2817, 5
  %v3021 = vsel %vm1335, %v3019, %v3020
  %v3022 = vrot.slane %v2818, 5
  %v3023 = vrot.slane %v3022, 4
  %v3024 = vrot.slane %v2819, 5
  %v3025 = vsel %vm1335, %v3023, %v3024
  %v3026 = vrot.slane %v3024, 4
  %v3027 = vrot.slane %v2820, 5
  %v3028 = vsel %vm1335, %v3026, %v3027
  %v3029 = vrot.slane %v2821, 5
  %v3030 = vrot.slane %v3029, 4
  %v3031 = vrot.slane %v2822, 5
  %v3032 = vsel %vm1335, %v3030, %v3031
  %v3033 = vrot.slane %v3031, 4
  %v3034 = vrot.slane %v2823, 5
  %v3035 = vsel %vm1335, %v3033, %v3034
  %v3036 = vrot.slane %v2824, 5
  %v3037 = vrot.slane %v3036, 4
  %v3038 = vrot.slane %v2825, 5
  %v3039 = vsel %vm1335, %v3037, %v3038
  %v3040 = vrot.slane %v3038, 4
  %v3041 = vrot.slane %v2826, 5
  %v3042 = vsel %vm1335, %v3040, %v3041
  %v3043 = vrot.slane %v2827, 5
  %v3044 = vrot.slane %v3043, 4
  %v3045 = vrot.slane %v2828, 5
  %v3046 = vsel %vm1335, %v3044, %v3045
  %v3047 = vrot.slane %v3045, 4
  %v3048 = vrot.slane %v2829, 5
  %v3049 = vsel %vm1335, %v3047, %v3048
  %v3050 = vrot.slane %v2830, 5
  %v3051 = vrot.slane %v3050, 4
  %v3052 = vrot.slane %v2831, 5
  %v3053 = vsel %vm1335, %v3051, %v3052
  %v3054 = vrot.slane %v3052, 4
  %v3055 = vrot.slane %v2832, 5
  %v3056 = vsel %vm1335, %v3054, %v3055
  %v3057 = vrot.slane %v2833, 5
  %v3058 = vrot.slane %v3057, 4
  %v3059 = vrot.slane %v2834, 5
  %v3060 = vsel %vm1335, %v3058, %v3059
  %v3061 = vrot.slane %v3059, 4
  %v3062 = vrot.slane %v2835, 5
  %v3063 = vsel %vm1335, %v3061, %v3062
  %v3064 = vrot.slane %v2836, 5
  %v3065 = vrot.slane %v3064, 4
  %v3066 = vrot.slane %v2837, 5
  %v3067 = vsel %vm1335, %v3065, %v3066
  %v3068 = vrot.slane %v3066, 4
  %v3069 = vrot.slane %v2838, 5
  %v3070 = vsel %vm1335, %v3068, %v3069
  %v3071 = vrot.slane %v2839, 5
  %v3072 = vrot.slane %v3071, 4
  %v3073 = vrot.slane %v2840, 5
  %v3074 = vsel %vm1335, %v3072, %v3073
  %v3075 = vrot.slane %v3073, 4
  %v3076 = vrot.slane %v2841, 5
  %v3077 = vsel %vm1335, %v3075, %v3076
  %v3078 = vrot.slane %v2842, 5
  %v3079 = vrot.slane %v3078, 4
  %v3080 = vrot.slane %v2843, 5
  %v3081 = vsel %vm1335, %v3079, %v3080
  %v3082 = vrot.slane %v3080, 4
  %v3083 = vrot.slane %v2844, 5
  %v3084 = vsel %vm1335, %v3082, %v3083
  %v3085 = vrot.slane %v2845, 5
  %v3086 = vrot.slane %v3085, 4
  %v3087 = vrot.slane %v2846, 5
  %v3088 = vsel %vm1335, %v3086, %v3087
  %v3089 = vrot.slane %v3087, 4
  %v3090 = vrot.slane %v2847, 5
  %v3091 = vsel %vm1335, %v3089, %v3090
  %v3092 = vrot.slane %v2848, 5
  %v3093 = vrot.slane %v3092, 4
  %v3094 = vrot.slane %v2849, 5
  %v3095 = vsel %vm1335, %v3093, %v3094
  %v3096 = vrot.slane %v3094, 4
  %v3097 = vrot.slane %v2850, 5
  %v3098 = vsel %vm1335, %v3096, %v3097
  %v3099 = vrot.slane %v2851, 5
  %v3100 = vrot.slane %v3099, 4
  %v3101 = vrot.slane %v2852, 5
  %v3102 = vsel %vm1335, %v3100, %v3101
  %v3103 = vrot.slane %v3101, 4
  %v3104 = vrot.slane %v2853, 5
  %v3105 = vsel %vm1335, %v3103, %v3104
  %v3106 = vrot.slane %v2854, 5
  %v3107 = vrot.slane %v3106, 4
  %v3108 = vrot.slane %v2855, 5
  %v3109 = vsel %vm1335, %v3107, %v3108
  %v3110 = vrot.slane %v3108, 4
  %v3111 = vrot.slane %v2856, 5
  %v3112 = vsel %vm1335, %v3110, %v3111
  %v3113 = vrot.slane %v2857, 5
  %v3114 = vrot.slane %v3113, 4
  %v3115 = vrot.slane %v2858, 5
  %v3116 = vsel %vm1335, %v3114, %v3115
  %v3117 = vrot.slane %v3115, 4
  %v3118 = vrot.slane %v2859, 5
  %v3119 = vsel %vm1335, %v3117, %v3118
  %v3120 = vrot.slane %v2860, 5
  %v3121 = vrot.slane %v3120, 4
  %v3122 = vrot.slane %v2861, 5
  %v3123 = vsel %vm1335, %v3121, %v3122
  %v3124 = vrot.slane %v3122, 4
  %v3125 = vrot.slane %v2862, 5
  %v3126 = vsel %vm1335, %v3124, %v3125
  %v3127 = vrot.slane %v2863, 5
  %v3128 = vrot.slane %v3127, 4
  %v3129 = vrot.slane %v2864, 5
  %v3130 = vsel %vm1335, %v3128, %v3129
  %v3131 = vrot.slane %v3129, 4
  %v3132 = vrot.slane %v2865, 5
  %v3133 = vsel %vm1335, %v3131, %v3132
  %v3134 = vrot.slane %v2866, 5
  %v3135 = vrot.slane %v3134, 4
  %v3136 = vrot.slane %v2867, 5
  %v3137 = vsel %vm1335, %v3135, %v3136
  %v3138 = vrot.slane %v3136, 4
  %v3139 = vrot.slane %v2868, 5
  %v3140 = vsel %vm1335, %v3138, %v3139
  %v3141 = vrot.slane %v2869, 5
  %v3142 = vrot.slane %v3141, 4
  %v3143 = vrot.slane %v2870, 5
  %v3144 = vsel %vm1335, %v3142, %v3143
  %v3145 = vrot.slane %v3143, 4
  %v3146 = vrot.slane %v2871, 5
  %v3147 = vsel %vm1335, %v3145, %v3146
  %v3148 = vrot.slane %v2872, 5
  %v3149 = vrot.slane %v3148, 4
  %v3150 = vrot.slane %v2873, 5
  %v3151 = vsel %vm1335, %v3149, %v3150
  %v3152 = vrot.slane %v3150, 4
  %v3153 = vrot.slane %v2874, 5
  %v3154 = vsel %vm1335, %v3152, %v3153
  %v3155 = vrot.slane %v2875, 5
  %v3156 = vrot.slane %v3155, 4
  %v3157 = vrot.slane %v2876, 5
  %v3158 = vsel %vm1335, %v3156, %v3157
  %v3159 = vrot.slane %v3157, 4
  %v3160 = vrot.slane %v2877, 5
  %v3161 = vsel %vm1335, %v3159, %v3160
  %v3162 = vrot.slane %v2878, 5
  %v3163 = vrot.slane %v3162, 4
  %v3164 = vrot.slane %v2879, 5
  %v3165 = vsel %vm1335, %v3163, %v3164
  %v3166 = vrot.slane %v3164, 4
  %v3167 = vrot.slane %v2880, 5
  %v3168 = vsel %vm1335, %v3166, %v3167
  %v3169 = vrot.slane %v2881, 5
  %v3170 = vrot.slane %v3169, 4
  %v3171 = vrot.slane %v2882, 5
  %v3172 = vsel %vm1335, %v3170, %v3171
  %v3173 = vrot.slane %v3171, 4
  %v3174 = vrot.slane %v2883, 5
  %v3175 = vsel %vm1335, %v3173, %v3174
  %v3176 = vrot.slane %v2884, 5
  %v3177 = vrot.slane %v3176, 4
  %v3178 = vrot.slane %v2885, 5
  %v3179 = vsel %vm1335, %v3177, %v3178
  %v3180 = vrot.slane %v3178, 4
  %v3181 = vrot.slane %v2886, 5
  %v3182 = vsel %vm1335, %v3180, %v3181
  %v3183 = vrot.slane %v2887, 5
  %v3184 = vrot.slane %v3183, 4
  %v3185 = vrot.slane %v2888, 5
  %v3186 = vsel %vm1335, %v3184, %v3185
  %v3187 = vrot.slane %v3185, 4
  %v3188 = vrot.slane %v2889, 5
  %v3189 = vsel %vm1335, %v3187, %v3188
  %v3190 = vrot.slane %v2890, 5
  %v3191 = vrot.slane %v3190, 4
  %v3192 = vrot.slane %v2891, 5
  %v3193 = vsel %vm1335, %v3191, %v3192
  %v3194 = vrot.slane %v3192, 4
  %v3195 = vrot.slane %v2892, 5
  %v3196 = vsel %vm1335, %v3194, %v3195
  %v3197 = vrot.slane %v2893, 5
  %v3198 = vrot.slane %v3197, 4
  %v3199 = vrot.slane %v2894, 5
  %v3200 = vsel %vm1335, %v3198, %v3199
  %v3201 = vrot.slane %v3199, 4
  %v3202 = vrot.slane %v2895, 5
  %v3203 = vsel %vm1335, %v3201, %v3202
  %v3204 = vrot.slane %v2896, 5
  %v3205 = vrot.slane %v3204, 4
  %v3206 = vrot.slane %v2897, 5
  %v3207 = vsel %vm1335, %v3205, %v3206
  %v3208 = vrot.slane %v3206, 4
  %v3209 = vrot.slane %v2898, 5
  %v3210 = vsel %vm1335, %v3208, %v3209
  %v3211 = vrot.slane %v2899, 5
  %v3212 = vrot.slane %v3211, 4
  %v3213 = vrot.slane %v2900, 5
  %v3214 = vsel %vm1335, %v3212, %v3213
  %v3215 = vrot.slane %v3213, 4
  %v3216 = vrot.slane %v2901, 5
  %v3217 = vsel %vm1335, %v3215, %v3216
  %v3218 = vrot.slane %v2902, 5
  %v3219 = vrot.slane %v3218, 4
  %v3220 = vrot.slane %v2903, 5
  %v3221 = vsel %vm1335, %v3219, %v3220
  %v3222 = vrot.slane %v3220, 4
  %v3223 = vrot.slane %v2904, 5
  %v3224 = vsel %vm1335, %v3222, %v3223
  %3289 = vst [vmem:[#allocation2 + $0x14] sm:$0xf] %v3004
  %3290 = vst [vmem:[#allocation2 + $0x38] sm:$0xf] %v3007
  %3291 = vst [vmem:[#allocation2 + $0x5c] sm:$0xf] %v3011
  %3292 = vst [vmem:[#allocation2 + $0x80] sm:$0xf] %v3014
  %3293 = vst [vmem:[#allocation2 + $0xa4] sm:$0xf] %v3018
  %3294 = vst [vmem:[#allocation2 + $0xc8] sm:$0xf] %v3021
  %3295 = vst [vmem:[#allocation2 + $0xec] sm:$0xf] %v3025
  %3296 = vst [vmem:[#allocation2 + $0x110] sm:$0xf] %v3028
  %3297 = vst [vmem:[#allocation2 + $0x134] sm:$0xf] %v3032
  %3298 = vst [vmem:[#allocation2 + $0x158] sm:$0xf] %v3035
  %3299 = vst [vmem:[#allocation2 + $0x17c] sm:$0xf] %v3039
  %3300 = vst [vmem:[#allocation2 + $0x1a0] sm:$0xf] %v3042
  %3301 = vst [vmem:[#allocation2 + $0x1c4] sm:$0xf] %v3046
  %3302 = vst [vmem:[#allocation2 + $0x1e8] sm:$0xf] %v3049
  %3303 = vst [vmem:[#allocation2 + $0x20c] sm:$0xf] %v3053
  %3304 = vst [vmem:[#allocation2 + $0x230] sm:$0xf] %v3056
  %3305 = vst [vmem:[#allocation2 + $0x254] sm:$0xf] %v3060
  %3306 = vst [vmem:[#allocation2 + $0x278] sm:$0xf] %v3063
  %3307 = vst [vmem:[#allocation2 + $0x29c] sm:$0xf] %v3067
  %3308 = vst [vmem:[#allocation2 + $0x2c0] sm:$0xf] %v3070
  %3309 = vst [vmem:[#allocation2 + $0x2e4] sm:$0xf] %v3074
  %3310 = vst [vmem:[#allocation2 + $0x308] sm:$0xf] %v3077
  %3311 = vst [vmem:[#allocation2 + $0x32c] sm:$0xf] %v3081
  %3312 = vst [vmem:[#allocation2 + $0x350] sm:$0xf] %v3084
  %3313 = vst [vmem:[#allocation2 + $0x374] sm:$0xf] %v3088
  %3314 = vst [vmem:[#allocation2 + $0x398] sm:$0xf] %v3091
  %3315 = vst [vmem:[#allocation2 + $0x3bc] sm:$0xf] %v3095
  %3316 = vst [vmem:[#allocation2 + $0x3e0] sm:$0xf] %v3098
  %3317 = vst [vmem:[#allocation2 + $0x404] sm:$0xf] %v3102
  %3318 = vst [vmem:[#allocation2 + $0x428] sm:$0xf] %v3105
  %3319 = vst [vmem:[#allocation2 + $0x44c] sm:$0xf] %v3109
  %3320 = vst [vmem:[#allocation2 + $0x470] sm:$0xf] %v3112
  %3321 = vst [vmem:[#allocation2 + $0x494] sm:$0xf] %v3116
  %3322 = vst [vmem:[#allocation2 + $0x4b8] sm:$0xf] %v3119
  %3323 = vst [vmem:[#allocation2 + $0x4dc] sm:$0xf] %v3123
  %3324 = vst [vmem:[#allocation2 + $0x500] sm:$0xf] %v3126
  %3325 = vst [vmem:[#allocation2 + $0x524] sm:$0xf] %v3130
  %3326 = vst [vmem:[#allocation2 + $0x548] sm:$0xf] %v3133
  %3327 = vst [vmem:[#allocation2 + $0x56c] sm:$0xf] %v3137
  %3328 = vst [vmem:[#allocation2 + $0x590] sm:$0xf] %v3140
  %3329 = vst [vmem:[#allocation2 + $0x5b4] sm:$0xf] %v3144
  %3330 = vst [vmem:[#allocation2 + $0x5d8] sm:$0xf] %v3147
  %3331 = vst [vmem:[#allocation2 + $0x5fc] sm:$0xf] %v3151
  %3332 = vst [vmem:[#allocation2 + $0x620] sm:$0xf] %v3154
  %3333 = vst [vmem:[#allocation2 + $0x644] sm:$0xf] %v3158
  %3334 = vst [vmem:[#allocation2 + $0x668] sm:$0xf] %v3161
  %3335 = vst [vmem:[#allocation2 + $0x68c] sm:$0xf] %v3165
  %3336 = vst [vmem:[#allocation2 + $0x6b0] sm:$0xf] %v3168
  %3337 = vst [vmem:[#allocation2 + $0x6d4] sm:$0xf] %v3172
  %3338 = vst [vmem:[#allocation2 + $0x6f8] sm:$0xf] %v3175
  %3339 = vst [vmem:[#allocation2 + $0x71c] sm:$0xf] %v3179
  %3340 = vst [vmem:[#allocation2 + $0x740] sm:$0xf] %v3182
  %3341 = vst [vmem:[#allocation2 + $0x764] sm:$0xf] %v3186
  %3342 = vst [vmem:[#allocation2 + $0x788] sm:$0xf] %v3189
  %3343 = vst [vmem:[#allocation2 + $0x7ac] sm:$0xf] %v3193
  %3344 = vst [vmem:[#allocation2 + $0x7d0] sm:$0xf] %v3196
  %3345 = vst [vmem:[#allocation2 + $0x7f4] sm:$0xf] %v3200
  %3346 = vst [vmem:[#allocation2 + $0x818] sm:$0xf] %v3203
  %3347 = vst [vmem:[#allocation2 + $0x83c] sm:$0xf] %v3207
  %3348 = vst [vmem:[#allocation2 + $0x860] sm:$0xf] %v3210
  %3349 = vst [vmem:[#allocation2 + $0x884] sm:$0xf] %v3214
  %3350 = vst [vmem:[#allocation2 + $0x8a8] sm:$0xf] %v3217
  %3351 = vst [vmem:[#allocation2 + $0x8cc] sm:$0xf] %v3221
  %3352 = vst [vmem:[#allocation2 + $0x8f0] sm:$0xf] %v3224
  %s3353 = scalar_lea.vmem %s0, 24
  %v3354 = vld [vmem:[%s3353] sm:$0xf]
  %v3355 = vld [vmem:[%s3353 + $0x4] sm:$0xf]
  %v3356 = vld [vmem:[%s3353 + $0xc] sm:$0xf]
  %v3357 = vld [vmem:[%s3353 + $0x10] sm:$0xf]
  %v3358 = vld [vmem:[%s3353 + $0x18] sm:$0xf]
  %v3359 = vld [vmem:[%s3353 + $0x1c] sm:$0xf]
  %v3360 = vld [vmem:[%s3353 + $0x24] sm:$0xf]
  %v3361 = vld [vmem:[%s3353 + $0x28] sm:$0xf]
  %v3362 = vld [vmem:[%s3353 + $0x30] sm:$0xf]
  %v3363 = vld [vmem:[%s3353 + $0x34] sm:$0xf]
  %v3364 = vld [vmem:[%s3353 + $0x3c] sm:$0xf]
  %v3365 = vld [vmem:[%s3353 + $0x40] sm:$0xf]
  %v3366 = vld [vmem:[%s3353 + $0x48] sm:$0xf]
  %v3367 = vld [vmem:[%s3353 + $0x4c] sm:$0xf]
  %v3368 = vld [vmem:[%s3353 + $0x54] sm:$0xf]
  %v3369 = vld [vmem:[%s3353 + $0x58] sm:$0xf]
  %v3370 = vld [vmem:[%s3353 + $0x60] sm:$0xf]
  %v3371 = vld [vmem:[%s3353 + $0x64] sm:$0xf]
  %v3372 = vld [vmem:[%s3353 + $0x6c] sm:$0xf]
  %v3373 = vld [vmem:[%s3353 + $0x70] sm:$0xf]
  %v3374 = vld [vmem:[%s3353 + $0x78] sm:$0xf]
  %v3375 = vld [vmem:[%s3353 + $0x7c] sm:$0xf]
  %v3376 = vld [vmem:[%s3353 + $0x84] sm:$0xf]
  %v3377 = vld [vmem:[%s3353 + $0x88] sm:$0xf]
  %v3378 = vld [vmem:[%s3353 + $0x90] sm:$0xf]
  %v3379 = vld [vmem:[%s3353 + $0x94] sm:$0xf]
  %v3380 = vld [vmem:[%s3353 + $0x9c] sm:$0xf]
  %v3381 = vld [vmem:[%s3353 + $0xa0] sm:$0xf]
  %v3382 = vld [vmem:[%s3353 + $0xa8] sm:$0xf]
  %v3383 = vld [vmem:[%s3353 + $0xac] sm:$0xf]
  %v3384 = vld [vmem:[%s3353 + $0xb4] sm:$0xf]
  %v3385 = vld [vmem:[%s3353 + $0xb8] sm:$0xf]
  %v3386 = vld [vmem:[%s3353 + $0xd8] sm:$0xf]
  %v3387 = vld [vmem:[%s3353 + $0xdc] sm:$0xf]
  %v3388 = vld [vmem:[%s3353 + $0xe4] sm:$0xf]
  %v3389 = vld [vmem:[%s3353 + $0xe8] sm:$0xf]
  %v3390 = vld [vmem:[%s3353 + $0xf0] sm:$0xf]
  %v3391 = vld [vmem:[%s3353 + $0xf4] sm:$0xf]
  %v3392 = vld [vmem:[%s3353 + $0xfc] sm:$0xf]
  %v3393 = vld [vmem:[%s3353 + $0x100] sm:$0xf]
  %v3394 = vld [vmem:[%s3353 + $0x108] sm:$0xf]
  %v3395 = vld [vmem:[%s3353 + $0x10c] sm:$0xf]
  %v3396 = vld [vmem:[%s3353 + $0x114] sm:$0xf]
  %v3397 = vld [vmem:[%s3353 + $0x118] sm:$0xf]
  %v3398 = vld [vmem:[%s3353 + $0x120] sm:$0xf]
  %v3399 = vld [vmem:[%s3353 + $0x124] sm:$0xf]
  %v3400 = vld [vmem:[%s3353 + $0x12c] sm:$0xf]
  %v3401 = vld [vmem:[%s3353 + $0x130] sm:$0xf]
  %v3402 = vld [vmem:[%s3353 + $0x138] sm:$0xf]
  %v3403 = vld [vmem:[%s3353 + $0x13c] sm:$0xf]
  %v3404 = vld [vmem:[%s3353 + $0x144] sm:$0xf]
  %v3405 = vld [vmem:[%s3353 + $0x148] sm:$0xf]
  %v3406 = vld [vmem:[%s3353 + $0x150] sm:$0xf]
  %v3407 = vld [vmem:[%s3353 + $0x154] sm:$0xf]
  %v3408 = vld [vmem:[%s3353 + $0x15c] sm:$0xf]
  %v3409 = vld [vmem:[%s3353 + $0x160] sm:$0xf]
  %v3410 = vld [vmem:[%s3353 + $0x168] sm:$0xf]
  %v3411 = vld [vmem:[%s3353 + $0x16c] sm:$0xf]
  %v3412 = vld [vmem:[%s3353 + $0x174] sm:$0xf]
  %v3413 = vld [vmem:[%s3353 + $0x178] sm:$0xf]
  %v3414 = vld [vmem:[%s3353 + $0x180] sm:$0xf]
  %v3415 = vld [vmem:[%s3353 + $0x184] sm:$0xf]
  %v3416 = vld [vmem:[%s3353 + $0x18c] sm:$0xf]
  %v3417 = vld [vmem:[%s3353 + $0x190] sm:$0xf]
  %3418 = vst [vmem:[#allocation2 + $0x18] sm:$0xf] %v3354
  %3419 = vst [vmem:[#allocation2 + $0x3c] sm:$0xf] %v3355
  %3420 = vst [vmem:[#allocation2 + $0x60] sm:$0xf] %v3356
  %3421 = vst [vmem:[#allocation2 + $0x84] sm:$0xf] %v3357
  %3422 = vst [vmem:[#allocation2 + $0xa8] sm:$0xf] %v3358
  %3423 = vst [vmem:[#allocation2 + $0xcc] sm:$0xf] %v3359
  %3424 = vst [vmem:[#allocation2 + $0xf0] sm:$0xf] %v3360
  %3425 = vst [vmem:[#allocation2 + $0x114] sm:$0xf] %v3361
  %3426 = vst [vmem:[#allocation2 + $0x138] sm:$0xf] %v3362
  %3427 = vst [vmem:[#allocation2 + $0x15c] sm:$0xf] %v3363
  %3428 = vst [vmem:[#allocation2 + $0x180] sm:$0xf] %v3364
  %3429 = vst [vmem:[#allocation2 + $0x1a4] sm:$0xf] %v3365
  %3430 = vst [vmem:[#allocation2 + $0x1c8] sm:$0xf] %v3366
  %3431 = vst [vmem:[#allocation2 + $0x1ec] sm:$0xf] %v3367
  %3432 = vst [vmem:[#allocation2 + $0x210] sm:$0xf] %v3368
  %3433 = vst [vmem:[#allocation2 + $0x234] sm:$0xf] %v3369
  %3434 = vst [vmem:[#allocation2 + $0x258] sm:$0xf] %v3370
  %3435 = vst [vmem:[#allocation2 + $0x27c] sm:$0xf] %v3371
  %3436 = vst [vmem:[#allocation2 + $0x2a0] sm:$0xf] %v3372
  %3437 = vst [vmem:[#allocation2 + $0x2c4] sm:$0xf] %v3373
  %3438 = vst [vmem:[#allocation2 + $0x2e8] sm:$0xf] %v3374
  %3439 = vst [vmem:[#allocation2 + $0x30c] sm:$0xf] %v3375
  %3440 = vst [vmem:[#allocation2 + $0x330] sm:$0xf] %v3376
  %3441 = vst [vmem:[#allocation2 + $0x354] sm:$0xf] %v3377
  %3442 = vst [vmem:[#allocation2 + $0x378] sm:$0xf] %v3378
  %3443 = vst [vmem:[#allocation2 + $0x39c] sm:$0xf] %v3379
  %3444 = vst [vmem:[#allocation2 + $0x3c0] sm:$0xf] %v3380
  %3445 = vst [vmem:[#allocation2 + $0x3e4] sm:$0xf] %v3381
  %3446 = vst [vmem:[#allocation2 + $0x408] sm:$0xf] %v3382
  %3447 = vst [vmem:[#allocation2 + $0x42c] sm:$0xf] %v3383
  %3448 = vst [vmem:[#allocation2 + $0x450] sm:$0xf] %v3384
  %3449 = vst [vmem:[#allocation2 + $0x474] sm:$0xf] %v3385
  %3450 = vst [vmem:[#allocation2 + $0x498] sm:$0xf] %v3386
  %3451 = vst [vmem:[#allocation2 + $0x4bc] sm:$0xf] %v3387
  %3452 = vst [vmem:[#allocation2 + $0x4e0] sm:$0xf] %v3388
  %3453 = vst [vmem:[#allocation2 + $0x504] sm:$0xf] %v3389
  %3454 = vst [vmem:[#allocation2 + $0x528] sm:$0xf] %v3390
  %3455 = vst [vmem:[#allocation2 + $0x54c] sm:$0xf] %v3391
  %3456 = vst [vmem:[#allocation2 + $0x570] sm:$0xf] %v3392
  %3457 = vst [vmem:[#allocation2 + $0x594] sm:$0xf] %v3393
  %3458 = vst [vmem:[#allocation2 + $0x5b8] sm:$0xf] %v3394
  %3459 = vst [vmem:[#allocation2 + $0x5dc] sm:$0xf] %v3395
  %3460 = vst [vmem:[#allocation2 + $0x600] sm:$0xf] %v3396
  %3461 = vst [vmem:[#allocation2 + $0x624] sm:$0xf] %v3397
  %3462 = vst [vmem:[#allocation2 + $0x648] sm:$0xf] %v3398
  %3463 = vst [vmem:[#allocation2 + $0x66c] sm:$0xf] %v3399
  %3464 = vst [vmem:[#allocation2 + $0x690] sm:$0xf] %v3400
  %3465 = vst [vmem:[#allocation2 + $0x6b4] sm:$0xf] %v3401
  %3466 = vst [vmem:[#allocation2 + $0x6d8] sm:$0xf] %v3402
  %3467 = vst [vmem:[#allocation2 + $0x6fc] sm:$0xf] %v3403
  %3468 = vst [vmem:[#allocation2 + $0x720] sm:$0xf] %v3404
  %3469 = vst [vmem:[#allocation2 + $0x744] sm:$0xf] %v3405
  %3470 = vst [vmem:[#allocation2 + $0x768] sm:$0xf] %v3406
  %3471 = vst [vmem:[#allocation2 + $0x78c] sm:$0xf] %v3407
  %3472 = vst [vmem:[#allocation2 + $0x7b0] sm:$0xf] %v3408
  %3473 = vst [vmem:[#allocation2 + $0x7d4] sm:$0xf] %v3409
  %3474 = vst [vmem:[#allocation2 + $0x7f8] sm:$0xf] %v3410
  %3475 = vst [vmem:[#allocation2 + $0x81c] sm:$0xf] %v3411
  %3476 = vst [vmem:[#allocation2 + $0x840] sm:$0xf] %v3412
  %3477 = vst [vmem:[#allocation2 + $0x864] sm:$0xf] %v3413
  %3478 = vst [vmem:[#allocation2 + $0x888] sm:$0xf] %v3414
  %3479 = vst [vmem:[#allocation2 + $0x8ac] sm:$0xf] %v3415
  %3480 = vst [vmem:[#allocation2 + $0x8d0] sm:$0xf] %v3416
  %3481 = vst [vmem:[#allocation2 + $0x8f4] sm:$0xf] %v3417
  %v3482 = vld [vmem:[%s3353] sm:$0xf]
  %v3483 = vld [vmem:[%s3353 + $0x4] sm:$0xf]
  %v3484 = vld [vmem:[%s3353 + $0x8] sm:$0x1]
  %v3485 = vld [vmem:[%s3353 + $0xc] sm:$0xf]
  %v3486 = vld [vmem:[%s3353 + $0x10] sm:$0xf]
  %v3487 = vld [vmem:[%s3353 + $0x14] sm:$0x1]
  %v3488 = vld [vmem:[%s3353 + $0x18] sm:$0xf]
  %v3489 = vld [vmem:[%s3353 + $0x1c] sm:$0xf]
  %v3490 = vld [vmem:[%s3353 + $0x20] sm:$0x1]
  %v3491 = vld [vmem:[%s3353 + $0x24] sm:$0xf]
  %v3492 = vld [vmem:[%s3353 + $0x28] sm:$0xf]
  %v3493 = vld [vmem:[%s3353 + $0x2c] sm:$0x1]
  %v3494 = vld [vmem:[%s3353 + $0x30] sm:$0xf]
  %v3495 = vld [vmem:[%s3353 + $0x34] sm:$0xf]
  %v3496 = vld [vmem:[%s3353 + $0x38] sm:$0x1]
  %v3497 = vld [vmem:[%s3353 + $0x3c] sm:$0xf]
  %v3498 = vld [vmem:[%s3353 + $0x40] sm:$0xf]
  %v3499 = vld [vmem:[%s3353 + $0x44] sm:$0x1]
  %v3500 = vld [vmem:[%s3353 + $0x48] sm:$0xf]
  %v3501 = vld [vmem:[%s3353 + $0x4c] sm:$0xf]
  %v3502 = vld [vmem:[%s3353 + $0x50] sm:$0x1]
  %v3503 = vld [vmem:[%s3353 + $0x54] sm:$0xf]
  %v3504 = vld [vmem:[%s3353 + $0x58] sm:$0xf]
  %v3505 = vld [vmem:[%s3353 + $0x5c] sm:$0x1]
  %v3506 = vld [vmem:[%s3353 + $0x60] sm:$0xf]
  %v3507 = vld [vmem:[%s3353 + $0x64] sm:$0xf]
  %v3508 = vld [vmem:[%s3353 + $0x68] sm:$0x1]
  %v3509 = vld [vmem:[%s3353 + $0x6c] sm:$0xf]
  %v3510 = vld [vmem:[%s3353 + $0x70] sm:$0xf]
  %v3511 = vld [vmem:[%s3353 + $0x74] sm:$0x1]
  %v3512 = vld [vmem:[%s3353 + $0x78] sm:$0xf]
  %v3513 = vld [vmem:[%s3353 + $0x7c] sm:$0xf]
  %v3514 = vld [vmem:[%s3353 + $0x80] sm:$0x1]
  %v3515 = vld [vmem:[%s3353 + $0x84] sm:$0xf]
  %v3516 = vld [vmem:[%s3353 + $0x88] sm:$0xf]
  %v3517 = vld [vmem:[%s3353 + $0x8c] sm:$0x1]
  %v3518 = vld [vmem:[%s3353 + $0x90] sm:$0xf]
  %v3519 = vld [vmem:[%s3353 + $0x94] sm:$0xf]
  %v3520 = vld [vmem:[%s3353 + $0x98] sm:$0x1]
  %v3521 = vld [vmem:[%s3353 + $0x9c] sm:$0xf]
  %v3522 = vld [vmem:[%s3353 + $0xa0] sm:$0xf]
  %v3523 = vld [vmem:[%s3353 + $0xa4] sm:$0x1]
  %v3524 = vld [vmem:[%s3353 + $0xa8] sm:$0xf]
  %v3525 = vld [vmem:[%s3353 + $0xac] sm:$0xf]
  %v3526 = vld [vmem:[%s3353 + $0xb0] sm:$0x1]
  %v3527 = vld [vmem:[%s3353 + $0xb4] sm:$0xf]
  %v3528 = vld [vmem:[%s3353 + $0xb8] sm:$0xf]
  %v3529 = vld [vmem:[%s3353 + $0xbc] sm:$0x1]
  %v3530 = vld [vmem:[%s3353 + $0xd8] sm:$0xf]
  %v3531 = vld [vmem:[%s3353 + $0xdc] sm:$0xf]
  %v3532 = vld [vmem:[%s3353 + $0xe0] sm:$0x1]
  %v3533 = vld [vmem:[%s3353 + $0xe4] sm:$0xf]
  %v3534 = vld [vmem:[%s3353 + $0xe8] sm:$0xf]
  %v3535 = vld [vmem:[%s3353 + $0xec] sm:$0x1]
  %v3536 = vld [vmem:[%s3353 + $0xf0] sm:$0xf]
  %v3537 = vld [vmem:[%s3353 + $0xf4] sm:$0xf]
  %v3538 = vld [vmem:[%s3353 + $0xf8] sm:$0x1]
  %v3539 = vld [vmem:[%s3353 + $0xfc] sm:$0xf]
  %v3540 = vld [vmem:[%s3353 + $0x100] sm:$0xf]
  %v3541 = vld [vmem:[%s3353 + $0x104] sm:$0x1]
  %v3542 = vld [vmem:[%s3353 + $0x108] sm:$0xf]
  %v3543 = vld [vmem:[%s3353 + $0x10c] sm:$0xf]
  %v3544 = vld [vmem:[%s3353 + $0x110] sm:$0x1]
  %v3545 = vld [vmem:[%s3353 + $0x114] sm:$0xf]
  %v3546 = vld [vmem:[%s3353 + $0x118] sm:$0xf]
  %v3547 = vld [vmem:[%s3353 + $0x11c] sm:$0x1]
  %v3548 = vld [vmem:[%s3353 + $0x120] sm:$0xf]
  %v3549 = vld [vmem:[%s3353 + $0x124] sm:$0xf]
  %v3550 = vld [vmem:[%s3353 + $0x128] sm:$0x1]
  %v3551 = vld [vmem:[%s3353 + $0x12c] sm:$0xf]
  %v3552 = vld [vmem:[%s3353 + $0x130] sm:$0xf]
  %v3553 = vld [vmem:[%s3353 + $0x134] sm:$0x1]
  %v3554 = vld [vmem:[%s3353 + $0x138] sm:$0xf]
  %v3555 = vld [vmem:[%s3353 + $0x13c] sm:$0xf]
  %v3556 = vld [vmem:[%s3353 + $0x140] sm:$0x1]
  %v3557 = vld [vmem:[%s3353 + $0x144] sm:$0xf]
  %v3558 = vld [vmem:[%s3353 + $0x148] sm:$0xf]
  %v3559 = vld [vmem:[%s3353 + $0x14c] sm:$0x1]
  %v3560 = vld [vmem:[%s3353 + $0x150] sm:$0xf]
  %v3561 = vld [vmem:[%s3353 + $0x154] sm:$0xf]
  %v3562 = vld [vmem:[%s3353 + $0x158] sm:$0x1]
  %v3563 = vld [vmem:[%s3353 + $0x15c] sm:$0xf]
  %v3564 = vld [vmem:[%s3353 + $0x160] sm:$0xf]
  %v3565 = vld [vmem:[%s3353 + $0x164] sm:$0x1]
  %v3566 = vld [vmem:[%s3353 + $0x168] sm:$0xf]
  %v3567 = vld [vmem:[%s3353 + $0x16c] sm:$0xf]
  %v3568 = vld [vmem:[%s3353 + $0x170] sm:$0x1]
  %v3569 = vld [vmem:[%s3353 + $0x174] sm:$0xf]
  %v3570 = vld [vmem:[%s3353 + $0x178] sm:$0xf]
  %v3571 = vld [vmem:[%s3353 + $0x17c] sm:$0x1]
  %v3572 = vld [vmem:[%s3353 + $0x180] sm:$0xf]
  %v3573 = vld [vmem:[%s3353 + $0x184] sm:$0xf]
  %v3574 = vld [vmem:[%s3353 + $0x188] sm:$0x1]
  %v3575 = vld [vmem:[%s3353 + $0x18c] sm:$0xf]
  %v3576 = vld [vmem:[%s3353 + $0x190] sm:$0xf]
  %v3577 = vld [vmem:[%s3353 + $0x194] sm:$0x1]
  %v3579 = vshrl.u32 %v3482, 16
  %v3581 = vrot.slane %v3579, 4
  %v3582 = vshll.u32 %v3482, 16
  %v3584 = vrot.slane %v3582, 5
  %v3585 = vor.u32 %v3581, %v3584
  %v3586 = vrot.slane %v3585, 4
  %v3588 = vshll.u32 %v3483, 16
  %v3590 = vrot.slane %v3588, 5
  %v3591 = vsel %vm244, %v3586, %v3590
  %v3592 = vshrl.u32 %v3483, 16
  %v3594 = vrot.slane %v3592, 4
  %v3595 = vor.u32 %v3594, %v3590
  %v3596 = vrot.slane %v3595, 4
  %v3598 = vshll.u32 %v3484, 16
  %v3600 = vrot.slane %v3598, 5
  %v3601 = vsel %vm244, %v3596, %v3600
  %v3603 = vshrl.u32 %v3485, 16
  %v3605 = vrot.slane %v3603, 4
  %v3606 = vshll.u32 %v3485, 16
  %v3608 = vrot.slane %v3606, 5
  %v3609 = vor.u32 %v3605, %v3608
  %v3610 = vrot.slane %v3609, 4
  %v3612 = vshll.u32 %v3486, 16
  %v3614 = vrot.slane %v3612, 5
  %v3615 = vsel %vm244, %v3610, %v3614
  %v3616 = vshrl.u32 %v3486, 16
  %v3618 = vrot.slane %v3616, 4
  %v3619 = vor.u32 %v3618, %v3614
  %v3620 = vrot.slane %v3619, 4
  %v3622 = vshll.u32 %v3487, 16
  %v3624 = vrot.slane %v3622, 5
  %v3625 = vsel %vm244, %v3620, %v3624
  %v3627 = vshrl.u32 %v3488, 16
  %v3629 = vrot.slane %v3627, 4
  %v3630 = vshll.u32 %v3488, 16
  %v3632 = vrot.slane %v3630, 5
  %v3633 = vor.u32 %v3629, %v3632
  %v3634 = vrot.slane %v3633, 4
  %v3636 = vshll.u32 %v3489, 16
  %v3638 = vrot.slane %v3636, 5
  %v3639 = vsel %vm244, %v3634, %v3638
  %v3640 = vshrl.u32 %v3489, 16
  %v3642 = vrot.slane %v3640, 4
  %v3643 = vor.u32 %v3642, %v3638
  %v3644 = vrot.slane %v3643, 4
  %v3646 = vshll.u32 %v3490, 16
  %v3648 = vrot.slane %v3646, 5
  %v3649 = vsel %vm244, %v3644, %v3648
  %v3651 = vshrl.u32 %v3491, 16
  %v3653 = vrot.slane %v3651, 4
  %v3654 = vshll.u32 %v3491, 16
  %v3656 = vrot.slane %v3654, 5
  %v3657 = vor.u32 %v3653, %v3656
  %v3658 = vrot.slane %v3657, 4
  %v3660 = vshll.u32 %v3492, 16
  %v3662 = vrot.slane %v3660, 5
  %v3663 = vsel %vm244, %v3658, %v3662
  %v3664 = vshrl.u32 %v3492, 16
  %v3666 = vrot.slane %v3664, 4
  %v3667 = vor.u32 %v3666, %v3662
  %v3668 = vrot.slane %v3667, 4
  %v3670 = vshll.u32 %v3493, 16
  %v3672 = vrot.slane %v3670, 5
  %v3673 = vsel %vm244, %v3668, %v3672
  %v3675 = vshrl.u32 %v3494, 16
  %v3677 = vrot.slane %v3675, 4
  %v3678 = vshll.u32 %v3494, 16
  %v3680 = vrot.slane %v3678, 5
  %v3681 = vor.u32 %v3677, %v3680
  %v3682 = vrot.slane %v3681, 4
  %v3684 = vshll.u32 %v3495, 16
  %v3686 = vrot.slane %v3684, 5
  %v3687 = vsel %vm244, %v3682, %v3686
  %v3688 = vshrl.u32 %v3495, 16
  %v3690 = vrot.slane %v3688, 4
  %v3691 = vor.u32 %v3690, %v3686
  %v3692 = vrot.slane %v3691, 4
  %v3694 = vshll.u32 %v3496, 16
  %v3696 = vrot.slane %v3694, 5
  %v3697 = vsel %vm244, %v3692, %v3696
  %v3699 = vshrl.u32 %v3497, 16
  %v3701 = vrot.slane %v3699, 4
  %v3702 = vshll.u32 %v3497, 16
  %v3704 = vrot.slane %v3702, 5
  %v3705 = vor.u32 %v3701, %v3704
  %v3706 = vrot.slane %v3705, 4
  %v3708 = vshll.u32 %v3498, 16
  %v3710 = vrot.slane %v3708, 5
  %v3711 = vsel %vm244, %v3706, %v3710
  %v3712 = vshrl.u32 %v3498, 16
  %v3714 = vrot.slane %v3712, 4
  %v3715 = vor.u32 %v3714, %v3710
  %v3716 = vrot.slane %v3715, 4
  %v3718 = vshll.u32 %v3499, 16
  %v3720 = vrot.slane %v3718, 5
  %v3721 = vsel %vm244, %v3716, %v3720
  %v3723 = vshrl.u32 %v3500, 16
  %v3725 = vrot.slane %v3723, 4
  %v3726 = vshll.u32 %v3500, 16
  %v3728 = vrot.slane %v3726, 5
  %v3729 = vor.u32 %v3725, %v3728
  %v3730 = vrot.slane %v3729, 4
  %v3732 = vshll.u32 %v3501, 16
  %v3734 = vrot.slane %v3732, 5
  %v3735 = vsel %vm244, %v3730, %v3734
  %v3736 = vshrl.u32 %v3501, 16
  %v3738 = vrot.slane %v3736, 4
  %v3739 = vor.u32 %v3738, %v3734
  %v3740 = vrot.slane %v3739, 4
  %v3742 = vshll.u32 %v3502, 16
  %v3744 = vrot.slane %v3742, 5
  %v3745 = vsel %vm244, %v3740, %v3744
  %v3747 = vshrl.u32 %v3503, 16
  %v3749 = vrot.slane %v3747, 4
  %v3750 = vshll.u32 %v3503, 16
  %v3752 = vrot.slane %v3750, 5
  %v3753 = vor.u32 %v3749, %v3752
  %v3754 = vrot.slane %v3753, 4
  %v3756 = vshll.u32 %v3504, 16
  %v3758 = vrot.slane %v3756, 5
  %v3759 = vsel %vm244, %v3754, %v3758
  %v3760 = vshrl.u32 %v3504, 16
  %v3762 = vrot.slane %v3760, 4
  %v3763 = vor.u32 %v3762, %v3758
  %v3764 = vrot.slane %v3763, 4
  %v3766 = vshll.u32 %v3505, 16
  %v3768 = vrot.slane %v3766, 5
  %v3769 = vsel %vm244, %v3764, %v3768
  %v3771 = vshrl.u32 %v3506, 16
  %v3773 = vrot.slane %v3771, 4
  %v3774 = vshll.u32 %v3506, 16
  %v3776 = vrot.slane %v3774, 5
  %v3777 = vor.u32 %v3773, %v3776
  %v3778 = vrot.slane %v3777, 4
  %v3780 = vshll.u32 %v3507, 16
  %v3782 = vrot.slane %v3780, 5
  %v3783 = vsel %vm244, %v3778, %v3782
  %v3784 = vshrl.u32 %v3507, 16
  %v3786 = vrot.slane %v3784, 4
  %v3787 = vor.u32 %v3786, %v3782
  %v3788 = vrot.slane %v3787, 4
  %v3790 = vshll.u32 %v3508, 16
  %v3792 = vrot.slane %v3790, 5
  %v3793 = vsel %vm244, %v3788, %v3792
  %v3795 = vshrl.u32 %v3509, 16
  %v3797 = vrot.slane %v3795, 4
  %v3798 = vshll.u32 %v3509, 16
  %v3800 = vrot.slane %v3798, 5
  %v3801 = vor.u32 %v3797, %v3800
  %v3802 = vrot.slane %v3801, 4
  %v3804 = vshll.u32 %v3510, 16
  %v3806 = vrot.slane %v3804, 5
  %v3807 = vsel %vm244, %v3802, %v3806
  %v3808 = vshrl.u32 %v3510, 16
  %v3810 = vrot.slane %v3808, 4
  %v3811 = vor.u32 %v3810, %v3806
  %v3812 = vrot.slane %v3811, 4
  %v3814 = vshll.u32 %v3511, 16
  %v3816 = vrot.slane %v3814, 5
  %v3817 = vsel %vm244, %v3812, %v3816
  %v3819 = vshrl.u32 %v3512, 16
  %v3821 = vrot.slane %v3819, 4
  %v3822 = vshll.u32 %v3512, 16
  %v3824 = vrot.slane %v3822, 5
  %v3825 = vor.u32 %v3821, %v3824
  %v3826 = vrot.slane %v3825, 4
  %v3828 = vshll.u32 %v3513, 16
  %v3830 = vrot.slane %v3828, 5
  %v3831 = vsel %vm244, %v3826, %v3830
  %v3832 = vshrl.u32 %v3513, 16
  %v3834 = vrot.slane %v3832, 4
  %v3835 = vor.u32 %v3834, %v3830
  %v3836 = vrot.slane %v3835, 4
  %v3838 = vshll.u32 %v3514, 16
  %v3840 = vrot.slane %v3838, 5
  %v3841 = vsel %vm244, %v3836, %v3840
  %v3843 = vshrl.u32 %v3515, 16
  %v3845 = vrot.slane %v3843, 4
  %v3846 = vshll.u32 %v3515, 16
  %v3848 = vrot.slane %v3846, 5
  %v3849 = vor.u32 %v3845, %v3848
  %v3850 = vrot.slane %v3849, 4
  %v3852 = vshll.u32 %v3516, 16
  %v3854 = vrot.slane %v3852, 5
  %v3855 = vsel %vm244, %v3850, %v3854
  %v3856 = vshrl.u32 %v3516, 16
  %v3858 = vrot.slane %v3856, 4
  %v3859 = vor.u32 %v3858, %v3854
  %v3860 = vrot.slane %v3859, 4
  %v3862 = vshll.u32 %v3517, 16
  %v3864 = vrot.slane %v3862, 5
  %v3865 = vsel %vm244, %v3860, %v3864
  %v3867 = vshrl.u32 %v3518, 16
  %v3869 = vrot.slane %v3867, 4
  %v3870 = vshll.u32 %v3518, 16
  %v3872 = vrot.slane %v3870, 5
  %v3873 = vor.u32 %v3869, %v3872
  %v3874 = vrot.slane %v3873, 4
  %v3876 = vshll.u32 %v3519, 16
  %v3878 = vrot.slane %v3876, 5
  %v3879 = vsel %vm244, %v3874, %v3878
  %v3880 = vshrl.u32 %v3519, 16
  %v3882 = vrot.slane %v3880, 4
  %v3883 = vor.u32 %v3882, %v3878
  %v3884 = vrot.slane %v3883, 4
  %v3886 = vshll.u32 %v3520, 16
  %v3888 = vrot.slane %v3886, 5
  %v3889 = vsel %vm244, %v3884, %v3888
  %v3891 = vshrl.u32 %v3521, 16
  %v3893 = vrot.slane %v3891, 4
  %v3894 = vshll.u32 %v3521, 16
  %v3896 = vrot.slane %v3894, 5
  %v3897 = vor.u32 %v3893, %v3896
  %v3898 = vrot.slane %v3897, 4
  %v3900 = vshll.u32 %v3522, 16
  %v3902 = vrot.slane %v3900, 5
  %v3903 = vsel %vm244, %v3898, %v3902
  %v3904 = vshrl.u32 %v3522, 16
  %v3906 = vrot.slane %v3904, 4
  %v3907 = vor.u32 %v3906, %v3902
  %v3908 = vrot.slane %v3907, 4
  %v3910 = vshll.u32 %v3523, 16
  %v3912 = vrot.slane %v3910, 5
  %v3913 = vsel %vm244, %v3908, %v3912
  %v3915 = vshrl.u32 %v3524, 16
  %v3917 = vrot.slane %v3915, 4
  %v3918 = vshll.u32 %v3524, 16
  %v3920 = vrot.slane %v3918, 5
  %v3921 = vor.u32 %v3917, %v3920
  %v3922 = vrot.slane %v3921, 4
  %v3924 = vshll.u32 %v3525, 16
  %v3926 = vrot.slane %v3924, 5
  %v3927 = vsel %vm244, %v3922, %v3926
  %v3928 = vshrl.u32 %v3525, 16
  %v3930 = vrot.slane %v3928, 4
  %v3931 = vor.u32 %v3930, %v3926
  %v3932 = vrot.slane %v3931, 4
  %v3934 = vshll.u32 %v3526, 16
  %v3936 = vrot.slane %v3934, 5
  %v3937 = vsel %vm244, %v3932, %v3936
  %v3939 = vshrl.u32 %v3527, 16
  %v3941 = vrot.slane %v3939, 4
  %v3942 = vshll.u32 %v3527, 16
  %v3944 = vrot.slane %v3942, 5
  %v3945 = vor.u32 %v3941, %v3944
  %v3946 = vrot.slane %v3945, 4
  %v3948 = vshll.u32 %v3528, 16
  %v3950 = vrot.slane %v3948, 5
  %v3951 = vsel %vm244, %v3946, %v3950
  %v3952 = vshrl.u32 %v3528, 16
  %v3954 = vrot.slane %v3952, 4
  %v3955 = vor.u32 %v3954, %v3950
  %v3956 = vrot.slane %v3955, 4
  %v3958 = vshll.u32 %v3529, 16
  %v3960 = vrot.slane %v3958, 5
  %v3961 = vsel %vm244, %v3956, %v3960
  %v3963 = vshrl.u32 %v3530, 16
  %v3965 = vrot.slane %v3963, 4
  %v3966 = vshll.u32 %v3530, 16
  %v3968 = vrot.slane %v3966, 5
  %v3969 = vor.u32 %v3965, %v3968
  %v3970 = vrot.slane %v3969, 4
  %v3972 = vshll.u32 %v3531, 16
  %v3974 = vrot.slane %v3972, 5
  %v3975 = vsel %vm244, %v3970, %v3974
  %v3976 = vshrl.u32 %v3531, 16
  %v3978 = vrot.slane %v3976, 4
  %v3979 = vor.u32 %v3978, %v3974
  %v3980 = vrot.slane %v3979, 4
  %v3982 = vshll.u32 %v3532, 16
  %v3984 = vrot.slane %v3982, 5
  %v3985 = vsel %vm244, %v3980, %v3984
  %v3987 = vshrl.u32 %v3533, 16
  %v3989 = vrot.slane %v3987, 4
  %v3990 = vshll.u32 %v3533, 16
  %v3992 = vrot.slane %v3990, 5
  %v3993 = vor.u32 %v3989, %v3992
  %v3994 = vrot.slane %v3993, 4
  %v3996 = vshll.u32 %v3534, 16
  %v3998 = vrot.slane %v3996, 5
  %v3999 = vsel %vm244, %v3994, %v3998
  %v4000 = vshrl.u32 %v3534, 16
  %v4002 = vrot.slane %v4000, 4
  %v4003 = vor.u32 %v4002, %v3998
  %v4004 = vrot.slane %v4003, 4
  %v4006 = vshll.u32 %v3535, 16
  %v4008 = vrot.slane %v4006, 5
  %v4009 = vsel %vm244, %v4004, %v4008
  %v4011 = vshrl.u32 %v3536, 16
  %v4013 = vrot.slane %v4011, 4
  %v4014 = vshll.u32 %v3536, 16
  %v4016 = vrot.slane %v4014, 5
  %v4017 = vor.u32 %v4013, %v4016
  %v4018 = vrot.slane %v4017, 4
  %v4020 = vshll.u32 %v3537, 16
  %v4022 = vrot.slane %v4020, 5
  %v4023 = vsel %vm244, %v4018, %v4022
  %v4024 = vshrl.u32 %v3537, 16
  %v4026 = vrot.slane %v4024, 4
  %v4027 = vor.u32 %v4026, %v4022
  %v4028 = vrot.slane %v4027, 4
  %v4030 = vshll.u32 %v3538, 16
  %v4032 = vrot.slane %v4030, 5
  %v4033 = vsel %vm244, %v4028, %v4032
  %v4035 = vshrl.u32 %v3539, 16
  %v4037 = vrot.slane %v4035, 4
  %v4038 = vshll.u32 %v3539, 16
  %v4040 = vrot.slane %v4038, 5
  %v4041 = vor.u32 %v4037, %v4040
  %v4042 = vrot.slane %v4041, 4
  %v4044 = vshll.u32 %v3540, 16
  %v4046 = vrot.slane %v4044, 5
  %v4047 = vsel %vm244, %v4042, %v4046
  %v4048 = vshrl.u32 %v3540, 16
  %v4050 = vrot.slane %v4048, 4
  %v4051 = vor.u32 %v4050, %v4046
  %v4052 = vrot.slane %v4051, 4
  %v4054 = vshll.u32 %v3541, 16
  %v4056 = vrot.slane %v4054, 5
  %v4057 = vsel %vm244, %v4052, %v4056
  %v4059 = vshrl.u32 %v3542, 16
  %v4061 = vrot.slane %v4059, 4
  %v4062 = vshll.u32 %v3542, 16
  %v4064 = vrot.slane %v4062, 5
  %v4065 = vor.u32 %v4061, %v4064
  %v4066 = vrot.slane %v4065, 4
  %v4068 = vshll.u32 %v3543, 16
  %v4070 = vrot.slane %v4068, 5
  %v4071 = vsel %vm244, %v4066, %v4070
  %v4072 = vshrl.u32 %v3543, 16
  %v4074 = vrot.slane %v4072, 4
  %v4075 = vor.u32 %v4074, %v4070
  %v4076 = vrot.slane %v4075, 4
  %v4078 = vshll.u32 %v3544, 16
  %v4080 = vrot.slane %v4078, 5
  %v4081 = vsel %vm244, %v4076, %v4080
  %v4083 = vshrl.u32 %v3545, 16
  %v4085 = vrot.slane %v4083, 4
  %v4086 = vshll.u32 %v3545, 16
  %v4088 = vrot.slane %v4086, 5
  %v4089 = vor.u32 %v4085, %v4088
  %v4090 = vrot.slane %v4089, 4
  %v4092 = vshll.u32 %v3546, 16
  %v4094 = vrot.slane %v4092, 5
  %v4095 = vsel %vm244, %v4090, %v4094
  %v4096 = vshrl.u32 %v3546, 16
  %v4098 = vrot.slane %v4096, 4
  %v4099 = vor.u32 %v4098, %v4094
  %v4100 = vrot.slane %v4099, 4
  %v4102 = vshll.u32 %v3547, 16
  %v4104 = vrot.slane %v4102, 5
  %v4105 = vsel %vm244, %v4100, %v4104
  %v4107 = vshrl.u32 %v3548, 16
  %v4109 = vrot.slane %v4107, 4
  %v4110 = vshll.u32 %v3548, 16
  %v4112 = vrot.slane %v4110, 5
  %v4113 = vor.u32 %v4109, %v4112
  %v4114 = vrot.slane %v4113, 4
  %v4116 = vshll.u32 %v3549, 16
  %v4118 = vrot.slane %v4116, 5
  %v4119 = vsel %vm244, %v4114, %v4118
  %v4120 = vshrl.u32 %v3549, 16
  %v4122 = vrot.slane %v4120, 4
  %v4123 = vor.u32 %v4122, %v4118
  %v4124 = vrot.slane %v4123, 4
  %v4126 = vshll.u32 %v3550, 16
  %v4128 = vrot.slane %v4126, 5
  %v4129 = vsel %vm244, %v4124, %v4128
  %v4131 = vshrl.u32 %v3551, 16
  %v4133 = vrot.slane %v4131, 4
  %v4134 = vshll.u32 %v3551, 16
  %v4136 = vrot.slane %v4134, 5
  %v4137 = vor.u32 %v4133, %v4136
  %v4138 = vrot.slane %v4137, 4
  %v4140 = vshll.u32 %v3552, 16
  %v4142 = vrot.slane %v4140, 5
  %v4143 = vsel %vm244, %v4138, %v4142
  %v4144 = vshrl.u32 %v3552, 16
  %v4146 = vrot.slane %v4144, 4
  %v4147 = vor.u32 %v4146, %v4142
  %v4148 = vrot.slane %v4147, 4
  %v4150 = vshll.u32 %v3553, 16
  %v4152 = vrot.slane %v4150, 5
  %v4153 = vsel %vm244, %v4148, %v4152
  %v4155 = vshrl.u32 %v3554, 16
  %v4157 = vrot.slane %v4155, 4
  %v4158 = vshll.u32 %v3554, 16
  %v4160 = vrot.slane %v4158, 5
  %v4161 = vor.u32 %v4157, %v4160
  %v4162 = vrot.slane %v4161, 4
  %v4164 = vshll.u32 %v3555, 16
  %v4166 = vrot.slane %v4164, 5
  %v4167 = vsel %vm244, %v4162, %v4166
  %v4168 = vshrl.u32 %v3555, 16
  %v4170 = vrot.slane %v4168, 4
  %v4171 = vor.u32 %v4170, %v4166
  %v4172 = vrot.slane %v4171, 4
  %v4174 = vshll.u32 %v3556, 16
  %v4176 = vrot.slane %v4174, 5
  %v4177 = vsel %vm244, %v4172, %v4176
  %v4179 = vshrl.u32 %v3557, 16
  %v4181 = vrot.slane %v4179, 4
  %v4182 = vshll.u32 %v3557, 16
  %v4184 = vrot.slane %v4182, 5
  %v4185 = vor.u32 %v4181, %v4184
  %v4186 = vrot.slane %v4185, 4
  %v4188 = vshll.u32 %v3558, 16
  %v4190 = vrot.slane %v4188, 5
  %v4191 = vsel %vm244, %v4186, %v4190
  %v4192 = vshrl.u32 %v3558, 16
  %v4194 = vrot.slane %v4192, 4
  %v4195 = vor.u32 %v4194, %v4190
  %v4196 = vrot.slane %v4195, 4
  %v4198 = vshll.u32 %v3559, 16
  %v4200 = vrot.slane %v4198, 5
  %v4201 = vsel %vm244, %v4196, %v4200
  %v4203 = vshrl.u32 %v3560, 16
  %v4205 = vrot.slane %v4203, 4
  %v4206 = vshll.u32 %v3560, 16
  %v4208 = vrot.slane %v4206, 5
  %v4209 = vor.u32 %v4205, %v4208
  %v4210 = vrot.slane %v4209, 4
  %v4212 = vshll.u32 %v3561, 16
  %v4214 = vrot.slane %v4212, 5
  %v4215 = vsel %vm244, %v4210, %v4214
  %v4216 = vshrl.u32 %v3561, 16
  %v4218 = vrot.slane %v4216, 4
  %v4219 = vor.u32 %v4218, %v4214
  %v4220 = vrot.slane %v4219, 4
  %v4222 = vshll.u32 %v3562, 16
  %v4224 = vrot.slane %v4222, 5
  %v4225 = vsel %vm244, %v4220, %v4224
  %v4227 = vshrl.u32 %v3563, 16
  %v4229 = vrot.slane %v4227, 4
  %v4230 = vshll.u32 %v3563, 16
  %v4232 = vrot.slane %v4230, 5
  %v4233 = vor.u32 %v4229, %v4232
  %v4234 = vrot.slane %v4233, 4
  %v4236 = vshll.u32 %v3564, 16
  %v4238 = vrot.slane %v4236, 5
  %v4239 = vsel %vm244, %v4234, %v4238
  %v4240 = vshrl.u32 %v3564, 16
  %v4242 = vrot.slane %v4240, 4
  %v4243 = vor.u32 %v4242, %v4238
  %v4244 = vrot.slane %v4243, 4
  %v4246 = vshll.u32 %v3565, 16
  %v4248 = vrot.slane %v4246, 5
  %v4249 = vsel %vm244, %v4244, %v4248
  %v4251 = vshrl.u32 %v3566, 16
  %v4253 = vrot.slane %v4251, 4
  %v4254 = vshll.u32 %v3566, 16
  %v4256 = vrot.slane %v4254, 5
  %v4257 = vor.u32 %v4253, %v4256
  %v4258 = vrot.slane %v4257, 4
  %v4260 = vshll.u32 %v3567, 16
  %v4262 = vrot.slane %v4260, 5
  %v4263 = vsel %vm244, %v4258, %v4262
  %v4264 = vshrl.u32 %v3567, 16
  %v4266 = vrot.slane %v4264, 4
  %v4267 = vor.u32 %v4266, %v4262
  %v4268 = vrot.slane %v4267, 4
  %v4270 = vshll.u32 %v3568, 16
  %v4272 = vrot.slane %v4270, 5
  %v4273 = vsel %vm244, %v4268, %v4272
  %v4275 = vshrl.u32 %v3569, 16
  %v4277 = vrot.slane %v4275, 4
  %v4278 = vshll.u32 %v3569, 16
  %v4280 = vrot.slane %v4278, 5
  %v4281 = vor.u32 %v4277, %v4280
  %v4282 = vrot.slane %v4281, 4
  %v4284 = vshll.u32 %v3570, 16
  %v4286 = vrot.slane %v4284, 5
  %v4287 = vsel %vm244, %v4282, %v4286
  %v4288 = vshrl.u32 %v3570, 16
  %v4290 = vrot.slane %v4288, 4
  %v4291 = vor.u32 %v4290, %v4286
  %v4292 = vrot.slane %v4291, 4
  %v4294 = vshll.u32 %v3571, 16
  %v4296 = vrot.slane %v4294, 5
  %v4297 = vsel %vm244, %v4292, %v4296
  %v4299 = vshrl.u32 %v3572, 16
  %v4301 = vrot.slane %v4299, 4
  %v4302 = vshll.u32 %v3572, 16
  %v4304 = vrot.slane %v4302, 5
  %v4305 = vor.u32 %v4301, %v4304
  %v4306 = vrot.slane %v4305, 4
  %v4308 = vshll.u32 %v3573, 16
  %v4310 = vrot.slane %v4308, 5
  %v4311 = vsel %vm244, %v4306, %v4310
  %v4312 = vshrl.u32 %v3573, 16
  %v4314 = vrot.slane %v4312, 4
  %v4315 = vor.u32 %v4314, %v4310
  %v4316 = vrot.slane %v4315, 4
  %v4318 = vshll.u32 %v3574, 16
  %v4320 = vrot.slane %v4318, 5
  %v4321 = vsel %vm244, %v4316, %v4320
  %v4323 = vshrl.u32 %v3575, 16
  %v4325 = vrot.slane %v4323, 4
  %v4326 = vshll.u32 %v3575, 16
  %v4328 = vrot.slane %v4326, 5
  %v4329 = vor.u32 %v4325, %v4328
  %v4330 = vrot.slane %v4329, 4
  %v4332 = vshll.u32 %v3576, 16
  %v4334 = vrot.slane %v4332, 5
  %v4335 = vsel %vm244, %v4330, %v4334
  %v4336 = vshrl.u32 %v3576, 16
  %v4338 = vrot.slane %v4336, 4
  %v4339 = vor.u32 %v4338, %v4334
  %v4340 = vrot.slane %v4339, 4
  %v4342 = vshll.u32 %v3577, 16
  %v4344 = vrot.slane %v4342, 5
  %v4345 = vsel %vm244, %v4340, %v4344
  %4410 = vst [vmem:[#allocation2 + $0x1c] sm:$0xf] %v3591
  %4411 = vst [vmem:[#allocation2 + $0x40] sm:$0xf] %v3601
  %4412 = vst [vmem:[#allocation2 + $0x64] sm:$0xf] %v3615
  %4413 = vst [vmem:[#allocation2 + $0x88] sm:$0xf] %v3625
  %4414 = vst [vmem:[#allocation2 + $0xac] sm:$0xf] %v3639
  %4415 = vst [vmem:[#allocation2 + $0xd0] sm:$0xf] %v3649
  %4416 = vst [vmem:[#allocation2 + $0xf4] sm:$0xf] %v3663
  %4417 = vst [vmem:[#allocation2 + $0x118] sm:$0xf] %v3673
  %4418 = vst [vmem:[#allocation2 + $0x13c] sm:$0xf] %v3687
  %4419 = vst [vmem:[#allocation2 + $0x160] sm:$0xf] %v3697
  %4420 = vst [vmem:[#allocation2 + $0x184] sm:$0xf] %v3711
  %4421 = vst [vmem:[#allocation2 + $0x1a8] sm:$0xf] %v3721
  %4422 = vst [vmem:[#allocation2 + $0x1cc] sm:$0xf] %v3735
  %4423 = vst [vmem:[#allocation2 + $0x1f0] sm:$0xf] %v3745
  %4424 = vst [vmem:[#allocation2 + $0x214] sm:$0xf] %v3759
  %4425 = vst [vmem:[#allocation2 + $0x238] sm:$0xf] %v3769
  %4426 = vst [vmem:[#allocation2 + $0x25c] sm:$0xf] %v3783
  %4427 = vst [vmem:[#allocation2 + $0x280] sm:$0xf] %v3793
  %4428 = vst [vmem:[#allocation2 + $0x2a4] sm:$0xf] %v3807
  %4429 = vst [vmem:[#allocation2 + $0x2c8] sm:$0xf] %v3817
  %4430 = vst [vmem:[#allocation2 + $0x2ec] sm:$0xf] %v3831
  %4431 = vst [vmem:[#allocation2 + $0x310] sm:$0xf] %v3841
  %4432 = vst [vmem:[#allocation2 + $0x334] sm:$0xf] %v3855
  %4433 = vst [vmem:[#allocation2 + $0x358] sm:$0xf] %v3865
  %4434 = vst [vmem:[#allocation2 + $0x37c] sm:$0xf] %v3879
  %4435 = vst [vmem:[#allocation2 + $0x3a0] sm:$0xf] %v3889
  %4436 = vst [vmem:[#allocation2 + $0x3c4] sm:$0xf] %v3903
  %4437 = vst [vmem:[#allocation2 + $0x3e8] sm:$0xf] %v3913
  %4438 = vst [vmem:[#allocation2 + $0x40c] sm:$0xf] %v3927
  %4439 = vst [vmem:[#allocation2 + $0x430] sm:$0xf] %v3937
  %4440 = vst [vmem:[#allocation2 + $0x454] sm:$0xf] %v3951
  %4441 = vst [vmem:[#allocation2 + $0x478] sm:$0xf] %v3961
  %4442 = vst [vmem:[#allocation2 + $0x49c] sm:$0xf] %v3975
  %4443 = vst [vmem:[#allocation2 + $0x4c0] sm:$0xf] %v3985
  %4444 = vst [vmem:[#allocation2 + $0x4e4] sm:$0xf] %v3999
  %4445 = vst [vmem:[#allocation2 + $0x508] sm:$0xf] %v4009
  %4446 = vst [vmem:[#allocation2 + $0x52c] sm:$0xf] %v4023
  %4447 = vst [vmem:[#allocation2 + $0x550] sm:$0xf] %v4033
  %4448 = vst [vmem:[#allocation2 + $0x574] sm:$0xf] %v4047
  %4449 = vst [vmem:[#allocation2 + $0x598] sm:$0xf] %v4057
  %4450 = vst [vmem:[#allocation2 + $0x5bc] sm:$0xf] %v4071
  %4451 = vst [vmem:[#allocation2 + $0x5e0] sm:$0xf] %v4081
  %4452 = vst [vmem:[#allocation2 + $0x604] sm:$0xf] %v4095
  %4453 = vst [vmem:[#allocation2 + $0x628] sm:$0xf] %v4105
  %4454 = vst [vmem:[#allocation2 + $0x64c] sm:$0xf] %v4119
  %4455 = vst [vmem:[#allocation2 + $0x670] sm:$0xf] %v4129
  %4456 = vst [vmem:[#allocation2 + $0x694] sm:$0xf] %v4143
  %4457 = vst [vmem:[#allocation2 + $0x6b8] sm:$0xf] %v4153
  %4458 = vst [vmem:[#allocation2 + $0x6dc] sm:$0xf] %v4167
  %4459 = vst [vmem:[#allocation2 + $0x700] sm:$0xf] %v4177
  %4460 = vst [vmem:[#allocation2 + $0x724] sm:$0xf] %v4191
  %4461 = vst [vmem:[#allocation2 + $0x748] sm:$0xf] %v4201
  %4462 = vst [vmem:[#allocation2 + $0x76c] sm:$0xf] %v4215
  %4463 = vst [vmem:[#allocation2 + $0x790] sm:$0xf] %v4225
  %4464 = vst [vmem:[#allocation2 + $0x7b4] sm:$0xf] %v4239
  %4465 = vst [vmem:[#allocation2 + $0x7d8] sm:$0xf] %v4249
  %4466 = vst [vmem:[#allocation2 + $0x7fc] sm:$0xf] %v4263
  %4467 = vst [vmem:[#allocation2 + $0x820] sm:$0xf] %v4273
  %4468 = vst [vmem:[#allocation2 + $0x844] sm:$0xf] %v4287
  %4469 = vst [vmem:[#allocation2 + $0x868] sm:$0xf] %v4297
  %4470 = vst [vmem:[#allocation2 + $0x88c] sm:$0xf] %v4311
  %4471 = vst [vmem:[#allocation2 + $0x8b0] sm:$0xf] %v4321
  %4472 = vst [vmem:[#allocation2 + $0x8d4] sm:$0xf] %v4335
  %4473 = vst [vmem:[#allocation2 + $0x8f8] sm:$0xf] %v4345
  %v4474 = vld [vmem:[%s3353] sm:$0xe]
  %v4475 = vld [vmem:[%s3353 + $0x4] sm:$0xf]
  %v4476 = vld [vmem:[%s3353 + $0x8] sm:$0x1]
  %v4477 = vld [vmem:[%s3353 + $0xc] sm:$0xe]
  %v4478 = vld [vmem:[%s3353 + $0x10] sm:$0xf]
  %v4479 = vld [vmem:[%s3353 + $0x14] sm:$0x1]
  %v4480 = vld [vmem:[%s3353 + $0x18] sm:$0xe]
  %v4481 = vld [vmem:[%s3353 + $0x1c] sm:$0xf]
  %v4482 = vld [vmem:[%s3353 + $0x20] sm:$0x1]
  %v4483 = vld [vmem:[%s3353 + $0x24] sm:$0xe]
  %v4484 = vld [vmem:[%s3353 + $0x28] sm:$0xf]
  %v4485 = vld [vmem:[%s3353 + $0x2c] sm:$0x1]
  %v4486 = vld [vmem:[%s3353 + $0x30] sm:$0xe]
  %v4487 = vld [vmem:[%s3353 + $0x34] sm:$0xf]
  %v4488 = vld [vmem:[%s3353 + $0x38] sm:$0x1]
  %v4489 = vld [vmem:[%s3353 + $0x3c] sm:$0xe]
  %v4490 = vld [vmem:[%s3353 + $0x40] sm:$0xf]
  %v4491 = vld [vmem:[%s3353 + $0x44] sm:$0x1]
  %v4492 = vld [vmem:[%s3353 + $0x48] sm:$0xe]
  %v4493 = vld [vmem:[%s3353 + $0x4c] sm:$0xf]
  %v4494 = vld [vmem:[%s3353 + $0x50] sm:$0x1]
  %v4495 = vld [vmem:[%s3353 + $0x54] sm:$0xe]
  %v4496 = vld [vmem:[%s3353 + $0x58] sm:$0xf]
  %v4497 = vld [vmem:[%s3353 + $0x5c] sm:$0x1]
  %v4498 = vld [vmem:[%s3353 + $0x60] sm:$0xe]
  %v4499 = vld [vmem:[%s3353 + $0x64] sm:$0xf]
  %v4500 = vld [vmem:[%s3353 + $0x68] sm:$0x1]
  %v4501 = vld [vmem:[%s3353 + $0x6c] sm:$0xe]
  %v4502 = vld [vmem:[%s3353 + $0x70] sm:$0xf]
  %v4503 = vld [vmem:[%s3353 + $0x74] sm:$0x1]
  %v4504 = vld [vmem:[%s3353 + $0x78] sm:$0xe]
  %v4505 = vld [vmem:[%s3353 + $0x7c] sm:$0xf]
  %v4506 = vld [vmem:[%s3353 + $0x80] sm:$0x1]
  %v4507 = vld [vmem:[%s3353 + $0x84] sm:$0xe]
  %v4508 = vld [vmem:[%s3353 + $0x88] sm:$0xf]
  %v4509 = vld [vmem:[%s3353 + $0x8c] sm:$0x1]
  %v4510 = vld [vmem:[%s3353 + $0x90] sm:$0xe]
  %v4511 = vld [vmem:[%s3353 + $0x94] sm:$0xf]
  %v4512 = vld [vmem:[%s3353 + $0x98] sm:$0x1]
  %v4513 = vld [vmem:[%s3353 + $0x9c] sm:$0xe]
  %v4514 = vld [vmem:[%s3353 + $0xa0] sm:$0xf]
  %v4515 = vld [vmem:[%s3353 + $0xa4] sm:$0x1]
  %v4516 = vld [vmem:[%s3353 + $0xa8] sm:$0xe]
  %v4517 = vld [vmem:[%s3353 + $0xac] sm:$0xf]
  %v4518 = vld [vmem:[%s3353 + $0xb0] sm:$0x1]
  %v4519 = vld [vmem:[%s3353 + $0xb4] sm:$0xe]
  %v4520 = vld [vmem:[%s3353 + $0xb8] sm:$0xf]
  %v4521 = vld [vmem:[%s3353 + $0xbc] sm:$0x1]
  %v4522 = vld [vmem:[%s3353 + $0xd8] sm:$0xe]
  %v4523 = vld [vmem:[%s3353 + $0xdc] sm:$0xf]
  %v4524 = vld [vmem:[%s3353 + $0xe0] sm:$0x1]
  %v4525 = vld [vmem:[%s3353 + $0xe4] sm:$0xe]
  %v4526 = vld [vmem:[%s3353 + $0xe8] sm:$0xf]
  %v4527 = vld [vmem:[%s3353 + $0xec] sm:$0x1]
  %v4528 = vld [vmem:[%s3353 + $0xf0] sm:$0xe]
  %v4529 = vld [vmem:[%s3353 + $0xf4] sm:$0xf]
  %v4530 = vld [vmem:[%s3353 + $0xf8] sm:$0x1]
  %v4531 = vld [vmem:[%s3353 + $0xfc] sm:$0xe]
  %v4532 = vld [vmem:[%s3353 + $0x100] sm:$0xf]
  %v4533 = vld [vmem:[%s3353 + $0x104] sm:$0x1]
  %v4534 = vld [vmem:[%s3353 + $0x108] sm:$0xe]
  %v4535 = vld [vmem:[%s3353 + $0x10c] sm:$0xf]
  %v4536 = vld [vmem:[%s3353 + $0x110] sm:$0x1]
  %v4537 = vld [vmem:[%s3353 + $0x114] sm:$0xe]
  %v4538 = vld [vmem:[%s3353 + $0x118] sm:$0xf]
  %v4539 = vld [vmem:[%s3353 + $0x11c] sm:$0x1]
  %v4540 = vld [vmem:[%s3353 + $0x120] sm:$0xe]
  %v4541 = vld [vmem:[%s3353 + $0x124] sm:$0xf]
  %v4542 = vld [vmem:[%s3353 + $0x128] sm:$0x1]
  %v4543 = vld [vmem:[%s3353 + $0x12c] sm:$0xe]
  %v4544 = vld [vmem:[%s3353 + $0x130] sm:$0xf]
  %v4545 = vld [vmem:[%s3353 + $0x134] sm:$0x1]
  %v4546 = vld [vmem:[%s3353 + $0x138] sm:$0xe]
  %v4547 = vld [vmem:[%s3353 + $0x13c] sm:$0xf]
  %v4548 = vld [vmem:[%s3353 + $0x140] sm:$0x1]
  %v4549 = vld [vmem:[%s3353 + $0x144] sm:$0xe]
  %v4550 = vld [vmem:[%s3353 + $0x148] sm:$0xf]
  %v4551 = vld [vmem:[%s3353 + $0x14c] sm:$0x1]
  %v4552 = vld [vmem:[%s3353 + $0x150] sm:$0xe]
  %v4553 = vld [vmem:[%s3353 + $0x154] sm:$0xf]
  %v4554 = vld [vmem:[%s3353 + $0x158] sm:$0x1]
  %v4555 = vld [vmem:[%s3353 + $0x15c] sm:$0xe]
  %v4556 = vld [vmem:[%s3353 + $0x160] sm:$0xf]
  %v4557 = vld [vmem:[%s3353 + $0x164] sm:$0x1]
  %v4558 = vld [vmem:[%s3353 + $0x168] sm:$0xe]
  %v4559 = vld [vmem:[%s3353 + $0x16c] sm:$0xf]
  %v4560 = vld [vmem:[%s3353 + $0x170] sm:$0x1]
  %v4561 = vld [vmem:[%s3353 + $0x174] sm:$0xe]
  %v4562 = vld [vmem:[%s3353 + $0x178] sm:$0xf]
  %v4563 = vld [vmem:[%s3353 + $0x17c] sm:$0x1]
  %v4564 = vld [vmem:[%s3353 + $0x180] sm:$0xe]
  %v4565 = vld [vmem:[%s3353 + $0x184] sm:$0xf]
  %v4566 = vld [vmem:[%s3353 + $0x188] sm:$0x1]
  %v4567 = vld [vmem:[%s3353 + $0x18c] sm:$0xe]
  %v4568 = vld [vmem:[%s3353 + $0x190] sm:$0xf]
  %v4569 = vld [vmem:[%s3353 + $0x194] sm:$0x1]
  %v4666 = vrot.slane %v4474, 5
  %v4667 = vrot.slane %v4666, 4
  %v4668 = vrot.slane %v4475, 5
  %v4669 = vsel %vm1335, %v4667, %v4668
  %v4670 = vrot.slane %v4668, 4
  %v4671 = vrot.slane %v4476, 5
  %v4672 = vsel %vm1335, %v4670, %v4671
  %v4673 = vrot.slane %v4477, 5
  %v4674 = vrot.slane %v4673, 4
  %v4675 = vrot.slane %v4478, 5
  %v4676 = vsel %vm1335, %v4674, %v4675
  %v4677 = vrot.slane %v4675, 4
  %v4678 = vrot.slane %v4479, 5
  %v4679 = vsel %vm1335, %v4677, %v4678
  %v4680 = vrot.slane %v4480, 5
  %v4681 = vrot.slane %v4680, 4
  %v4682 = vrot.slane %v4481, 5
  %v4683 = vsel %vm1335, %v4681, %v4682
  %v4684 = vrot.slane %v4682, 4
  %v4685 = vrot.slane %v4482, 5
  %v4686 = vsel %vm1335, %v4684, %v4685
  %v4687 = vrot.slane %v4483, 5
  %v4688 = vrot.slane %v4687, 4
  %v4689 = vrot.slane %v4484, 5
  %v4690 = vsel %vm1335, %v4688, %v4689
  %v4691 = vrot.slane %v4689, 4
  %v4692 = vrot.slane %v4485, 5
  %v4693 = vsel %vm1335, %v4691, %v4692
  %v4694 = vrot.slane %v4486, 5
  %v4695 = vrot.slane %v4694, 4
  %v4696 = vrot.slane %v4487, 5
  %v4697 = vsel %vm1335, %v4695, %v4696
  %v4698 = vrot.slane %v4696, 4
  %v4699 = vrot.slane %v4488, 5
  %v4700 = vsel %vm1335, %v4698, %v4699
  %v4701 = vrot.slane %v4489, 5
  %v4702 = vrot.slane %v4701, 4
  %v4703 = vrot.slane %v4490, 5
  %v4704 = vsel %vm1335, %v4702, %v4703
  %v4705 = vrot.slane %v4703, 4
  %v4706 = vrot.slane %v4491, 5
  %v4707 = vsel %vm1335, %v4705, %v4706
  %v4708 = vrot.slane %v4492, 5
  %v4709 = vrot.slane %v4708, 4
  %v4710 = vrot.slane %v4493, 5
  %v4711 = vsel %vm1335, %v4709, %v4710
  %v4712 = vrot.slane %v4710, 4
  %v4713 = vrot.slane %v4494, 5
  %v4714 = vsel %vm1335, %v4712, %v4713
  %v4715 = vrot.slane %v4495, 5
  %v4716 = vrot.slane %v4715, 4
  %v4717 = vrot.slane %v4496, 5
  %v4718 = vsel %vm1335, %v4716, %v4717
  %v4719 = vrot.slane %v4717, 4
  %v4720 = vrot.slane %v4497, 5
  %v4721 = vsel %vm1335, %v4719, %v4720
  %v4722 = vrot.slane %v4498, 5
  %v4723 = vrot.slane %v4722, 4
  %v4724 = vrot.slane %v4499, 5
  %v4725 = vsel %vm1335, %v4723, %v4724
  %v4726 = vrot.slane %v4724, 4
  %v4727 = vrot.slane %v4500, 5
  %v4728 = vsel %vm1335, %v4726, %v4727
  %v4729 = vrot.slane %v4501, 5
  %v4730 = vrot.slane %v4729, 4
  %v4731 = vrot.slane %v4502, 5
  %v4732 = vsel %vm1335, %v4730, %v4731
  %v4733 = vrot.slane %v4731, 4
  %v4734 = vrot.slane %v4503, 5
  %v4735 = vsel %vm1335, %v4733, %v4734
  %v4736 = vrot.slane %v4504, 5
  %v4737 = vrot.slane %v4736, 4
  %v4738 = vrot.slane %v4505, 5
  %v4739 = vsel %vm1335, %v4737, %v4738
  %v4740 = vrot.slane %v4738, 4
  %v4741 = vrot.slane %v4506, 5
  %v4742 = vsel %vm1335, %v4740, %v4741
  %v4743 = vrot.slane %v4507, 5
  %v4744 = vrot.slane %v4743, 4
  %v4745 = vrot.slane %v4508, 5
  %v4746 = vsel %vm1335, %v4744, %v4745
  %v4747 = vrot.slane %v4745, 4
  %v4748 = vrot.slane %v4509, 5
  %v4749 = vsel %vm1335, %v4747, %v4748
  %v4750 = vrot.slane %v4510, 5
  %v4751 = vrot.slane %v4750, 4
  %v4752 = vrot.slane %v4511, 5
  %v4753 = vsel %vm1335, %v4751, %v4752
  %v4754 = vrot.slane %v4752, 4
  %v4755 = vrot.slane %v4512, 5
  %v4756 = vsel %vm1335, %v4754, %v4755
  %v4757 = vrot.slane %v4513, 5
  %v4758 = vrot.slane %v4757, 4
  %v4759 = vrot.slane %v4514, 5
  %v4760 = vsel %vm1335, %v4758, %v4759
  %v4761 = vrot.slane %v4759, 4
  %v4762 = vrot.slane %v4515, 5
  %v4763 = vsel %vm1335, %v4761, %v4762
  %v4764 = vrot.slane %v4516, 5
  %v4765 = vrot.slane %v4764, 4
  %v4766 = vrot.slane %v4517, 5
  %v4767 = vsel %vm1335, %v4765, %v4766
  %v4768 = vrot.slane %v4766, 4
  %v4769 = vrot.slane %v4518, 5
  %v4770 = vsel %vm1335, %v4768, %v4769
  %v4771 = vrot.slane %v4519, 5
  %v4772 = vrot.slane %v4771, 4
  %v4773 = vrot.slane %v4520, 5
  %v4774 = vsel %vm1335, %v4772, %v4773
  %v4775 = vrot.slane %v4773, 4
  %v4776 = vrot.slane %v4521, 5
  %v4777 = vsel %vm1335, %v4775, %v4776
  %v4778 = vrot.slane %v4522, 5
  %v4779 = vrot.slane %v4778, 4
  %v4780 = vrot.slane %v4523, 5
  %v4781 = vsel %vm1335, %v4779, %v4780
  %v4782 = vrot.slane %v4780, 4
  %v4783 = vrot.slane %v4524, 5
  %v4784 = vsel %vm1335, %v4782, %v4783
  %v4785 = vrot.slane %v4525, 5
  %v4786 = vrot.slane %v4785, 4
  %v4787 = vrot.slane %v4526, 5
  %v4788 = vsel %vm1335, %v4786, %v4787
  %v4789 = vrot.slane %v4787, 4
  %v4790 = vrot.slane %v4527, 5
  %v4791 = vsel %vm1335, %v4789, %v4790
  %v4792 = vrot.slane %v4528, 5
  %v4793 = vrot.slane %v4792, 4
  %v4794 = vrot.slane %v4529, 5
  %v4795 = vsel %vm1335, %v4793, %v4794
  %v4796 = vrot.slane %v4794, 4
  %v4797 = vrot.slane %v4530, 5
  %v4798 = vsel %vm1335, %v4796, %v4797
  %v4799 = vrot.slane %v4531, 5
  %v4800 = vrot.slane %v4799, 4
  %v4801 = vrot.slane %v4532, 5
  %v4802 = vsel %vm1335, %v4800, %v4801
  %v4803 = vrot.slane %v4801, 4
  %v4804 = vrot.slane %v4533, 5
  %v4805 = vsel %vm1335, %v4803, %v4804
  %v4806 = vrot.slane %v4534, 5
  %v4807 = vrot.slane %v4806, 4
  %v4808 = vrot.slane %v4535, 5
  %v4809 = vsel %vm1335, %v4807, %v4808
  %v4810 = vrot.slane %v4808, 4
  %v4811 = vrot.slane %v4536, 5
  %v4812 = vsel %vm1335, %v4810, %v4811
  %v4813 = vrot.slane %v4537, 5
  %v4814 = vrot.slane %v4813, 4
  %v4815 = vrot.slane %v4538, 5
  %v4816 = vsel %vm1335, %v4814, %v4815
  %v4817 = vrot.slane %v4815, 4
  %v4818 = vrot.slane %v4539, 5
  %v4819 = vsel %vm1335, %v4817, %v4818
  %v4820 = vrot.slane %v4540, 5
  %v4821 = vrot.slane %v4820, 4
  %v4822 = vrot.slane %v4541, 5
  %v4823 = vsel %vm1335, %v4821, %v4822
  %v4824 = vrot.slane %v4822, 4
  %v4825 = vrot.slane %v4542, 5
  %v4826 = vsel %vm1335, %v4824, %v4825
  %v4827 = vrot.slane %v4543, 5
  %v4828 = vrot.slane %v4827, 4
  %v4829 = vrot.slane %v4544, 5
  %v4830 = vsel %vm1335, %v4828, %v4829
  %v4831 = vrot.slane %v4829, 4
  %v4832 = vrot.slane %v4545, 5
  %v4833 = vsel %vm1335, %v4831, %v4832
  %v4834 = vrot.slane %v4546, 5
  %v4835 = vrot.slane %v4834, 4
  %v4836 = vrot.slane %v4547, 5
  %v4837 = vsel %vm1335, %v4835, %v4836
  %v4838 = vrot.slane %v4836, 4
  %v4839 = vrot.slane %v4548, 5
  %v4840 = vsel %vm1335, %v4838, %v4839
  %v4841 = vrot.slane %v4549, 5
  %v4842 = vrot.slane %v4841, 4
  %v4843 = vrot.slane %v4550, 5
  %v4844 = vsel %vm1335, %v4842, %v4843
  %v4845 = vrot.slane %v4843, 4
  %v4846 = vrot.slane %v4551, 5
  %v4847 = vsel %vm1335, %v4845, %v4846
  %v4848 = vrot.slane %v4552, 5
  %v4849 = vrot.slane %v4848, 4
  %v4850 = vrot.slane %v4553, 5
  %v4851 = vsel %vm1335, %v4849, %v4850
  %v4852 = vrot.slane %v4850, 4
  %v4853 = vrot.slane %v4554, 5
  %v4854 = vsel %vm1335, %v4852, %v4853
  %v4855 = vrot.slane %v4555, 5
  %v4856 = vrot.slane %v4855, 4
  %v4857 = vrot.slane %v4556, 5
  %v4858 = vsel %vm1335, %v4856, %v4857
  %v4859 = vrot.slane %v4857, 4
  %v4860 = vrot.slane %v4557, 5
  %v4861 = vsel %vm1335, %v4859, %v4860
  %v4862 = vrot.slane %v4558, 5
  %v4863 = vrot.slane %v4862, 4
  %v4864 = vrot.slane %v4559, 5
  %v4865 = vsel %vm1335, %v4863, %v4864
  %v4866 = vrot.slane %v4864, 4
  %v4867 = vrot.slane %v4560, 5
  %v4868 = vsel %vm1335, %v4866, %v4867
  %v4869 = vrot.slane %v4561, 5
  %v4870 = vrot.slane %v4869, 4
  %v4871 = vrot.slane %v4562, 5
  %v4872 = vsel %vm1335, %v4870, %v4871
  %v4873 = vrot.slane %v4871, 4
  %v4874 = vrot.slane %v4563, 5
  %v4875 = vsel %vm1335, %v4873, %v4874
  %v4876 = vrot.slane %v4564, 5
  %v4877 = vrot.slane %v4876, 4
  %v4878 = vrot.slane %v4565, 5
  %v4879 = vsel %vm1335, %v4877, %v4878
  %v4880 = vrot.slane %v4878, 4
  %v4881 = vrot.slane %v4566, 5
  %v4882 = vsel %vm1335, %v4880, %v4881
  %v4883 = vrot.slane %v4567, 5
  %v4884 = vrot.slane %v4883, 4
  %v4885 = vrot.slane %v4568, 5
  %v4886 = vsel %vm1335, %v4884, %v4885
  %v4887 = vrot.slane %v4885, 4
  %v4888 = vrot.slane %v4569, 5
  %v4889 = vsel %vm1335, %v4887, %v4888
  %4954 = vst [vmem:[#allocation2 + $0x20] sm:$0xf] %v4669
  %4955 = vst [vmem:[#allocation2 + $0x44] sm:$0xf] %v4672
  %4956 = vst [vmem:[#allocation2 + $0x68] sm:$0xf] %v4676
  %4957 = vst [vmem:[#allocation2 + $0x8c] sm:$0xf] %v4679
  %4958 = vst [vmem:[#allocation2 + $0xb0] sm:$0xf] %v4683
  %4959 = vst [vmem:[#allocation2 + $0xd4] sm:$0xf] %v4686
  %4960 = vst [vmem:[#allocation2 + $0xf8] sm:$0xf] %v4690
  %4961 = vst [vmem:[#allocation2 + $0x11c] sm:$0xf] %v4693
  %4962 = vst [vmem:[#allocation2 + $0x140] sm:$0xf] %v4697
  %4963 = vst [vmem:[#allocation2 + $0x164] sm:$0xf] %v4700
  %4964 = vst [vmem:[#allocation2 + $0x188] sm:$0xf] %v4704
  %4965 = vst [vmem:[#allocation2 + $0x1ac] sm:$0xf] %v4707
  %4966 = vst [vmem:[#allocation2 + $0x1d0] sm:$0xf] %v4711
  %4967 = vst [vmem:[#allocation2 + $0x1f4] sm:$0xf] %v4714
  %4968 = vst [vmem:[#allocation2 + $0x218] sm:$0xf] %v4718
  %4969 = vst [vmem:[#allocation2 + $0x23c] sm:$0xf] %v4721
  %4970 = vst [vmem:[#allocation2 + $0x260] sm:$0xf] %v4725
  %4971 = vst [vmem:[#allocation2 + $0x284] sm:$0xf] %v4728
  %4972 = vst [vmem:[#allocation2 + $0x2a8] sm:$0xf] %v4732
  %4973 = vst [vmem:[#allocation2 + $0x2cc] sm:$0xf] %v4735
  %4974 = vst [vmem:[#allocation2 + $0x2f0] sm:$0xf] %v4739
  %4975 = vst [vmem:[#allocation2 + $0x314] sm:$0xf] %v4742
  %4976 = vst [vmem:[#allocation2 + $0x338] sm:$0xf] %v4746
  %4977 = vst [vmem:[#allocation2 + $0x35c] sm:$0xf] %v4749
  %4978 = vst [vmem:[#allocation2 + $0x380] sm:$0xf] %v4753
  %4979 = vst [vmem:[#allocation2 + $0x3a4] sm:$0xf] %v4756
  %4980 = vst [vmem:[#allocation2 + $0x3c8] sm:$0xf] %v4760
  %4981 = vst [vmem:[#allocation2 + $0x3ec] sm:$0xf] %v4763
  %4982 = vst [vmem:[#allocation2 + $0x410] sm:$0xf] %v4767
  %4983 = vst [vmem:[#allocation2 + $0x434] sm:$0xf] %v4770
  %4984 = vst [vmem:[#allocation2 + $0x458] sm:$0xf] %v4774
  %4985 = vst [vmem:[#allocation2 + $0x47c] sm:$0xf] %v4777
  %4986 = vst [vmem:[#allocation2 + $0x4a0] sm:$0xf] %v4781
  %4987 = vst [vmem:[#allocation2 + $0x4c4] sm:$0xf] %v4784
  %4988 = vst [vmem:[#allocation2 + $0x4e8] sm:$0xf] %v4788
  %4989 = vst [vmem:[#allocation2 + $0x50c] sm:$0xf] %v4791
  %4990 = vst [vmem:[#allocation2 + $0x530] sm:$0xf] %v4795
  %4991 = vst [vmem:[#allocation2 + $0x554] sm:$0xf] %v4798
  %4992 = vst [vmem:[#allocation2 + $0x578] sm:$0xf] %v4802
  %4993 = vst [vmem:[#allocation2 + $0x59c] sm:$0xf] %v4805
  %4994 = vst [vmem:[#allocation2 + $0x5c0] sm:$0xf] %v4809
  %4995 = vst [vmem:[#allocation2 + $0x5e4] sm:$0xf] %v4812
  %4996 = vst [vmem:[#allocation2 + $0x608] sm:$0xf] %v4816
  %4997 = vst [vmem:[#allocation2 + $0x62c] sm:$0xf] %v4819
  %4998 = vst [vmem:[#allocation2 + $0x650] sm:$0xf] %v4823
  %4999 = vst [vmem:[#allocation2 + $0x674] sm:$0xf] %v4826
  %5000 = vst [vmem:[#allocation2 + $0x698] sm:$0xf] %v4830
  %5001 = vst [vmem:[#allocation2 + $0x6bc] sm:$0xf] %v4833
  %5002 = vst [vmem:[#allocation2 + $0x6e0] sm:$0xf] %v4837
  %5003 = vst [vmem:[#allocation2 + $0x704] sm:$0xf] %v4840
  %5004 = vst [vmem:[#allocation2 + $0x728] sm:$0xf] %v4844
  %5005 = vst [vmem:[#allocation2 + $0x74c] sm:$0xf] %v4847
  %5006 = vst [vmem:[#allocation2 + $0x770] sm:$0xf] %v4851
  %5007 = vst [vmem:[#allocation2 + $0x794] sm:$0xf] %v4854
  %5008 = vst [vmem:[#allocation2 + $0x7b8] sm:$0xf] %v4858
  %5009 = vst [vmem:[#allocation2 + $0x7dc] sm:$0xf] %v4861
  %5010 = vst [vmem:[#allocation2 + $0x800] sm:$0xf] %v4865
  %5011 = vst [vmem:[#allocation2 + $0x824] sm:$0xf] %v4868
  %5012 = vst [vmem:[#allocation2 + $0x848] sm:$0xf] %v4872
  %5013 = vst [vmem:[#allocation2 + $0x86c] sm:$0xf] %v4875
  %5014 = vst [vmem:[#allocation2 + $0x890] sm:$0xf] %v4879
  %5015 = vst [vmem:[#allocation2 + $0x8b4] sm:$0xf] %v4882
  %5016 = vst [vmem:[#allocation2 + $0x8d8] sm:$0xf] %v4886
  %5017 = vst [vmem:[#allocation2 + $0x8fc] sm:$0xf] %v4889
  %v5018 = vld [vmem:[#allocation2] sm:$0xff]
  %v5019 = vld [vmem:[#allocation2 + $0x8] sm:$0xff]
  %v5020 = vld [vmem:[#allocation2 + $0x10] sm:$0xff]
  %v5021 = vld [vmem:[#allocation2 + $0x18] sm:$0xff]
  %v5022 = vld [vmem:[#allocation2 + $0x20] sm:$0xf]
  %v5023 = vld [vmem:[#allocation2 + $0x24] sm:$0xff]
  %v5024 = vld [vmem:[#allocation2 + $0x2c] sm:$0xff]
  %v5025 = vld [vmem:[#allocation2 + $0x34] sm:$0xff]
  %v5026 = vld [vmem:[#allocation2 + $0x3c] sm:$0xff]
  %v5027 = vld [vmem:[#allocation2 + $0x44] sm:$0xf]
  %v5028 = vld [vmem:[#allocation2 + $0x48] sm:$0xff]
  %v5029 = vld [vmem:[#allocation2 + $0x50] sm:$0xff]
  %v5030 = vld [vmem:[#allocation2 + $0x58] sm:$0xff]
  %v5031 = vld [vmem:[#allocation2 + $0x60] sm:$0xff]
  %v5032 = vld [vmem:[#allocation2 + $0x68] sm:$0xf]
  %v5033 = vld [vmem:[#allocation2 + $0x6c] sm:$0xff]
  %v5034 = vld [vmem:[#allocation2 + $0x74] sm:$0xff]
  %v5035 = vld [vmem:[#allocation2 + $0x7c] sm:$0xff]
  %v5036 = vld [vmem:[#allocation2 + $0x84] sm:$0xff]
  %v5037 = vld [vmem:[#allocation2 + $0x8c] sm:$0xf]
  %v5038 = vld [vmem:[#allocation2 + $0x90] sm:$0xff]
  %v5039 = vld [vmem:[#allocation2 + $0x98] sm:$0xff]
  %v5040 = vld [vmem:[#allocation2 + $0xa0] sm:$0xff]
  %v5041 = vld [vmem:[#allocation2 + $0xa8] sm:$0xff]
  %v5042 = vld [vmem:[#allocation2 + $0xb0] sm:$0xf]
  %v5043 = vld [vmem:[#allocation2 + $0xb4] sm:$0xff]
  %v5044 = vld [vmem:[#allocation2 + $0xbc] sm:$0xff]
  %v5045 = vld [vmem:[#allocation2 + $0xc4] sm:$0xff]
  %v5046 = vld [vmem:[#allocation2 + $0xcc] sm:$0xff]
  %v5047 = vld [vmem:[#allocation2 + $0xd4] sm:$0xf]
  %v5048 = vld [vmem:[#allocation2 + $0xd8] sm:$0xff]
  %v5049 = vld [vmem:[#allocation2 + $0xe0] sm:$0xff]
  %v5050 = vld [vmem:[#allocation2 + $0xe8] sm:$0xff]
  %v5051 = vld [vmem:[#allocation2 + $0xf0] sm:$0xff]
  %v5052 = vld [vmem:[#allocation2 + $0xf8] sm:$0xf]
  %v5053 = vld [vmem:[#allocation2 + $0xfc] sm:$0xff]
  %v5054 = vld [vmem:[#allocation2 + $0x104] sm:$0xff]
  %v5055 = vld [vmem:[#allocation2 + $0x10c] sm:$0xff]
  %v5056 = vld [vmem:[#allocation2 + $0x114] sm:$0xff]
  %v5057 = vld [vmem:[#allocation2 + $0x11c] sm:$0xf]
  %v5058 = vld [vmem:[#allocation2 + $0x120] sm:$0xff]
  %v5059 = vld [vmem:[#allocation2 + $0x128] sm:$0xff]
  %v5060 = vld [vmem:[#allocation2 + $0x130] sm:$0xff]
  %v5061 = vld [vmem:[#allocation2 + $0x138] sm:$0xff]
  %v5062 = vld [vmem:[#allocation2 + $0x140] sm:$0xf]
  %v5063 = vld [vmem:[#allocation2 + $0x144] sm:$0xff]
  %v5064 = vld [vmem:[#allocation2 + $0x14c] sm:$0xff]
  %v5065 = vld [vmem:[#allocation2 + $0x154] sm:$0xff]
  %v5066 = vld [vmem:[#allocation2 + $0x15c] sm:$0xff]
  %v5067 = vld [vmem:[#allocation2 + $0x164] sm:$0xf]
  %v5068 = vld [vmem:[#allocation2 + $0x168] sm:$0xff]
  %v5069 = vld [vmem:[#allocation2 + $0x170] sm:$0xff]
  %v5070 = vld [vmem:[#allocation2 + $0x178] sm:$0xff]
  %v5071 = vld [vmem:[#allocation2 + $0x180] sm:$0xff]
  %v5072 = vld [vmem:[#allocation2 + $0x188] sm:$0xf]
  %v5073 = vld [vmem:[#allocation2 + $0x18c] sm:$0xff]
  %v5074 = vld [vmem:[#allocation2 + $0x194] sm:$0xff]
  %v5075 = vld [vmem:[#allocation2 + $0x19c] sm:$0xff]
  %v5076 = vld [vmem:[#allocation2 + $0x1a4] sm:$0xff]
  %v5077 = vld [vmem:[#allocation2 + $0x1ac] sm:$0xf]
  %v5078 = vld [vmem:[#allocation2 + $0x1b0] sm:$0xff]
  %v5079 = vld [vmem:[#allocation2 + $0x1b8] sm:$0xff]
  %v5080 = vld [vmem:[#allocation2 + $0x1c0] sm:$0xff]
  %v5081 = vld [vmem:[#allocation2 + $0x1c8] sm:$0xff]
  %v5082 = vld [vmem:[#allocation2 + $0x1d0] sm:$0xf]
  %v5083 = vld [vmem:[#allocation2 + $0x1d4] sm:$0xff]
  %v5084 = vld [vmem:[#allocation2 + $0x1dc] sm:$0xff]
  %v5085 = vld [vmem:[#allocation2 + $0x1e4] sm:$0xff]
  %v5086 = vld [vmem:[#allocation2 + $0x1ec] sm:$0xff]
  %v5087 = vld [vmem:[#allocation2 + $0x1f4] sm:$0xf]
  %v5088 = vld [vmem:[#allocation2 + $0x1f8] sm:$0xff]
  %v5089 = vld [vmem:[#allocation2 + $0x200] sm:$0xff]
  %v5090 = vld [vmem:[#allocation2 + $0x208] sm:$0xff]
  %v5091 = vld [vmem:[#allocation2 + $0x210] sm:$0xff]
  %v5092 = vld [vmem:[#allocation2 + $0x218] sm:$0xf]
  %v5093 = vld [vmem:[#allocation2 + $0x21c] sm:$0xff]
  %v5094 = vld [vmem:[#allocation2 + $0x224] sm:$0xff]
  %v5095 = vld [vmem:[#allocation2 + $0x22c] sm:$0xff]
  %v5096 = vld [vmem:[#allocation2 + $0x234] sm:$0xff]
  %v5097 = vld [vmem:[#allocation2 + $0x23c] sm:$0xf]
  %v5098 = vld [vmem:[#allocation2 + $0x240] sm:$0xff]
  %v5099 = vld [vmem:[#allocation2 + $0x248] sm:$0xff]
  %v5100 = vld [vmem:[#allocation2 + $0x250] sm:$0xff]
  %v5101 = vld [vmem:[#allocation2 + $0x258] sm:$0xff]
  %v5102 = vld [vmem:[#allocation2 + $0x260] sm:$0xf]
  %v5103 = vld [vmem:[#allocation2 + $0x264] sm:$0xff]
  %v5104 = vld [vmem:[#allocation2 + $0x26c] sm:$0xff]
  %v5105 = vld [vmem:[#allocation2 + $0x274] sm:$0xff]
  %v5106 = vld [vmem:[#allocation2 + $0x27c] sm:$0xff]
  %v5107 = vld [vmem:[#allocation2 + $0x284] sm:$0xf]
  %v5108 = vld [vmem:[#allocation2 + $0x288] sm:$0xff]
  %v5109 = vld [vmem:[#allocation2 + $0x290] sm:$0xff]
  %v5110 = vld [vmem:[#allocation2 + $0x298] sm:$0xff]
  %v5111 = vld [vmem:[#allocation2 + $0x2a0] sm:$0xff]
  %v5112 = vld [vmem:[#allocation2 + $0x2a8] sm:$0xf]
  %v5113 = vld [vmem:[#allocation2 + $0x2ac] sm:$0xff]
  %v5114 = vld [vmem:[#allocation2 + $0x2b4] sm:$0xff]
  %v5115 = vld [vmem:[#allocation2 + $0x2bc] sm:$0xff]
  %v5116 = vld [vmem:[#allocation2 + $0x2c4] sm:$0xff]
  %v5117 = vld [vmem:[#allocation2 + $0x2cc] sm:$0xf]
  %v5118 = vld [vmem:[#allocation2 + $0x2d0] sm:$0xff]
  %v5119 = vld [vmem:[#allocation2 + $0x2d8] sm:$0xff]
  %v5120 = vld [vmem:[#allocation2 + $0x2e0] sm:$0xff]
  %v5121 = vld [vmem:[#allocation2 + $0x2e8] sm:$0xff]
  %v5122 = vld [vmem:[#allocation2 + $0x2f0] sm:$0xf]
  %v5123 = vld [vmem:[#allocation2 + $0x2f4] sm:$0xff]
  %v5124 = vld [vmem:[#allocation2 + $0x2fc] sm:$0xff]
  %v5125 = vld [vmem:[#allocation2 + $0x304] sm:$0xff]
  %v5126 = vld [vmem:[#allocation2 + $0x30c] sm:$0xff]
  %v5127 = vld [vmem:[#allocation2 + $0x314] sm:$0xf]
  %v5128 = vld [vmem:[#allocation2 + $0x318] sm:$0xff]
  %v5129 = vld [vmem:[#allocation2 + $0x320] sm:$0xff]
  %v5130 = vld [vmem:[#allocation2 + $0x328] sm:$0xff]
  %v5131 = vld [vmem:[#allocation2 + $0x330] sm:$0xff]
  %v5132 = vld [vmem:[#allocation2 + $0x338] sm:$0xf]
  %v5133 = vld [vmem:[#allocation2 + $0x33c] sm:$0xff]
  %v5134 = vld [vmem:[#allocation2 + $0x344] sm:$0xff]
  %v5135 = vld [vmem:[#allocation2 + $0x34c] sm:$0xff]
  %v5136 = vld [vmem:[#allocation2 + $0x354] sm:$0xff]
  %v5137 = vld [vmem:[#allocation2 + $0x35c] sm:$0xf]
  %v5138 = vld [vmem:[#allocation2 + $0x360] sm:$0xff]
  %v5139 = vld [vmem:[#allocation2 + $0x368] sm:$0xff]
  %v5140 = vld [vmem:[#allocation2 + $0x370] sm:$0xff]
  %v5141 = vld [vmem:[#allocation2 + $0x378] sm:$0xff]
  %v5142 = vld [vmem:[#allocation2 + $0x380] sm:$0xf]
  %v5143 = vld [vmem:[#allocation2 + $0x384] sm:$0xff]
  %v5144 = vld [vmem:[#allocation2 + $0x38c] sm:$0xff]
  %v5145 = vld [vmem:[#allocation2 + $0x394] sm:$0xff]
  %v5146 = vld [vmem:[#allocation2 + $0x39c] sm:$0xff]
  %v5147 = vld [vmem:[#allocation2 + $0x3a4] sm:$0xf]
  %v5148 = vld [vmem:[#allocation2 + $0x3a8] sm:$0xff]
  %v5149 = vld [vmem:[#allocation2 + $0x3b0] sm:$0xff]
  %v5150 = vld [vmem:[#allocation2 + $0x3b8] sm:$0xff]
  %v5151 = vld [vmem:[#allocation2 + $0x3c0] sm:$0xff]
  %v5152 = vld [vmem:[#allocation2 + $0x3c8] sm:$0xf]
  %v5153 = vld [vmem:[#allocation2 + $0x3cc] sm:$0xff]
  %v5154 = vld [vmem:[#allocation2 + $0x3d4] sm:$0xff]
  %v5155 = vld [vmem:[#allocation2 + $0x3dc] sm:$0xff]
  %v5156 = vld [vmem:[#allocation2 + $0x3e4] sm:$0xff]
  %v5157 = vld [vmem:[#allocation2 + $0x3ec] sm:$0xf]
  %v5158 = vld [vmem:[#allocation2 + $0x3f0] sm:$0xff]
  %v5159 = vld [vmem:[#allocation2 + $0x3f8] sm:$0xff]
  %v5160 = vld [vmem:[#allocation2 + $0x400] sm:$0xff]
  %v5161 = vld [vmem:[#allocation2 + $0x408] sm:$0xff]
  %v5162 = vld [vmem:[#allocation2 + $0x410] sm:$0xf]
  %v5163 = vld [vmem:[#allocation2 + $0x414] sm:$0xff]
  %v5164 = vld [vmem:[#allocation2 + $0x41c] sm:$0xff]
  %v5165 = vld [vmem:[#allocation2 + $0x424] sm:$0xff]
  %v5166 = vld [vmem:[#allocation2 + $0x42c] sm:$0xff]
  %v5167 = vld [vmem:[#allocation2 + $0x434] sm:$0xf]
  %v5168 = vld [vmem:[#allocation2 + $0x438] sm:$0xff]
  %v5169 = vld [vmem:[#allocation2 + $0x440] sm:$0xff]
  %v5170 = vld [vmem:[#allocation2 + $0x448] sm:$0xff]
  %v5171 = vld [vmem:[#allocation2 + $0x450] sm:$0xff]
  %v5172 = vld [vmem:[#allocation2 + $0x458] sm:$0xf]
  %v5173 = vld [vmem:[#allocation2 + $0x45c] sm:$0xff]
  %v5174 = vld [vmem:[#allocation2 + $0x464] sm:$0xff]
  %v5175 = vld [vmem:[#allocation2 + $0x46c] sm:$0xff]
  %v5176 = vld [vmem:[#allocation2 + $0x474] sm:$0xff]
  %v5177 = vld [vmem:[#allocation2 + $0x47c] sm:$0xf]
  %v5178 = vld [vmem:[#allocation2 + $0x480] sm:$0xff]
  %v5179 = vld [vmem:[#allocation2 + $0x488] sm:$0xff]
  %v5180 = vld [vmem:[#allocation2 + $0x490] sm:$0xff]
  %v5181 = vld [vmem:[#allocation2 + $0x498] sm:$0xff]
  %v5182 = vld [vmem:[#allocation2 + $0x4a0] sm:$0xf]
  %v5183 = vld [vmem:[#allocation2 + $0x4a4] sm:$0xff]
  %v5184 = vld [vmem:[#allocation2 + $0x4ac] sm:$0xff]
  %v5185 = vld [vmem:[#allocation2 + $0x4b4] sm:$0xff]
  %v5186 = vld [vmem:[#allocation2 + $0x4bc] sm:$0xff]
  %v5187 = vld [vmem:[#allocation2 + $0x4c4] sm:$0xf]
  %v5188 = vld [vmem:[#allocation2 + $0x4c8] sm:$0xff]
  %v5189 = vld [vmem:[#allocation2 + $0x4d0] sm:$0xff]
  %v5190 = vld [vmem:[#allocation2 + $0x4d8] sm:$0xff]
  %v5191 = vld [vmem:[#allocation2 + $0x4e0] sm:$0xff]
  %v5192 = vld [vmem:[#allocation2 + $0x4e8] sm:$0xf]
  %v5193 = vld [vmem:[#allocation2 + $0x4ec] sm:$0xff]
  %v5194 = vld [vmem:[#allocation2 + $0x4f4] sm:$0xff]
  %v5195 = vld [vmem:[#allocation2 + $0x4fc] sm:$0xff]
  %v5196 = vld [vmem:[#allocation2 + $0x504] sm:$0xff]
  %v5197 = vld [vmem:[#allocation2 + $0x50c] sm:$0xf]
  %v5198 = vld [vmem:[#allocation2 + $0x510] sm:$0xff]
  %v5199 = vld [vmem:[#allocation2 + $0x518] sm:$0xff]
  %v5200 = vld [vmem:[#allocation2 + $0x520] sm:$0xff]
  %v5201 = vld [vmem:[#allocation2 + $0x528] sm:$0xff]
  %v5202 = vld [vmem:[#allocation2 + $0x530] sm:$0xf]
  %v5203 = vld [vmem:[#allocation2 + $0x534] sm:$0xff]
  %v5204 = vld [vmem:[#allocation2 + $0x53c] sm:$0xff]
  %v5205 = vld [vmem:[#allocation2 + $0x544] sm:$0xff]
  %v5206 = vld [vmem:[#allocation2 + $0x54c] sm:$0xff]
  %v5207 = vld [vmem:[#allocation2 + $0x554] sm:$0xf]
  %v5208 = vld [vmem:[#allocation2 + $0x558] sm:$0xff]
  %v5209 = vld [vmem:[#allocation2 + $0x560] sm:$0xff]
  %v5210 = vld [vmem:[#allocation2 + $0x568] sm:$0xff]
  %v5211 = vld [vmem:[#allocation2 + $0x570] sm:$0xff]
  %v5212 = vld [vmem:[#allocation2 + $0x578] sm:$0xf]
  %v5213 = vld [vmem:[#allocation2 + $0x57c] sm:$0xff]
  %v5214 = vld [vmem:[#allocation2 + $0x584] sm:$0xff]
  %v5215 = vld [vmem:[#allocation2 + $0x58c] sm:$0xff]
  %v5216 = vld [vmem:[#allocation2 + $0x594] sm:$0xff]
  %v5217 = vld [vmem:[#allocation2 + $0x59c] sm:$0xf]
  %v5218 = vld [vmem:[#allocation2 + $0x5a0] sm:$0xff]
  %v5219 = vld [vmem:[#allocation2 + $0x5a8] sm:$0xff]
  %v5220 = vld [vmem:[#allocation2 + $0x5b0] sm:$0xff]
  %v5221 = vld [vmem:[#allocation2 + $0x5b8] sm:$0xff]
  %v5222 = vld [vmem:[#allocation2 + $0x5c0] sm:$0xf]
  %v5223 = vld [vmem:[#allocation2 + $0x5c4] sm:$0xff]
  %v5224 = vld [vmem:[#allocation2 + $0x5cc] sm:$0xff]
  %v5225 = vld [vmem:[#allocation2 + $0x5d4] sm:$0xff]
  %v5226 = vld [vmem:[#allocation2 + $0x5dc] sm:$0xff]
  %v5227 = vld [vmem:[#allocation2 + $0x5e4] sm:$0xf]
  %v5228 = vld [vmem:[#allocation2 + $0x5e8] sm:$0xff]
  %v5229 = vld [vmem:[#allocation2 + $0x5f0] sm:$0xff]
  %v5230 = vld [vmem:[#allocation2 + $0x5f8] sm:$0xff]
  %v5231 = vld [vmem:[#allocation2 + $0x600] sm:$0xff]
  %v5232 = vld [vmem:[#allocation2 + $0x608] sm:$0xf]
  %v5233 = vld [vmem:[#allocation2 + $0x60c] sm:$0xff]
  %v5234 = vld [vmem:[#allocation2 + $0x614] sm:$0xff]
  %v5235 = vld [vmem:[#allocation2 + $0x61c] sm:$0xff]
  %v5236 = vld [vmem:[#allocation2 + $0x624] sm:$0xff]
  %v5237 = vld [vmem:[#allocation2 + $0x62c] sm:$0xf]
  %v5238 = vld [vmem:[#allocation2 + $0x630] sm:$0xff]
  %v5239 = vld [vmem:[#allocation2 + $0x638] sm:$0xff]
  %v5240 = vld [vmem:[#allocation2 + $0x640] sm:$0xff]
  %v5241 = vld [vmem:[#allocation2 + $0x648] sm:$0xff]
  %v5242 = vld [vmem:[#allocation2 + $0x650] sm:$0xf]
  %v5243 = vld [vmem:[#allocation2 + $0x654] sm:$0xff]
  %v5244 = vld [vmem:[#allocation2 + $0x65c] sm:$0xff]
  %v5245 = vld [vmem:[#allocation2 + $0x664] sm:$0xff]
  %v5246 = vld [vmem:[#allocation2 + $0x66c] sm:$0xff]
  %v5247 = vld [vmem:[#allocation2 + $0x674] sm:$0xf]
  %v5248 = vld [vmem:[#allocation2 + $0x678] sm:$0xff]
  %v5249 = vld [vmem:[#allocation2 + $0x680] sm:$0xff]
  %v5250 = vld [vmem:[#allocation2 + $0x688] sm:$0xff]
  %v5251 = vld [vmem:[#allocation2 + $0x690] sm:$0xff]
  %v5252 = vld [vmem:[#allocation2 + $0x698] sm:$0xf]
  %v5253 = vld [vmem:[#allocation2 + $0x69c] sm:$0xff]
  %v5254 = vld [vmem:[#allocation2 + $0x6a4] sm:$0xff]
  %v5255 = vld [vmem:[#allocation2 + $0x6ac] sm:$0xff]
  %v5256 = vld [vmem:[#allocation2 + $0x6b4] sm:$0xff]
  %v5257 = vld [vmem:[#allocation2 + $0x6bc] sm:$0xf]
  %v5258 = vld [vmem:[#allocation2 + $0x6c0] sm:$0xff]
  %v5259 = vld [vmem:[#allocation2 + $0x6c8] sm:$0xff]
  %v5260 = vld [vmem:[#allocation2 + $0x6d0] sm:$0xff]
  %v5261 = vld [vmem:[#allocation2 + $0x6d8] sm:$0xff]
  %v5262 = vld [vmem:[#allocation2 + $0x6e0] sm:$0xf]
  %v5263 = vld [vmem:[#allocation2 + $0x6e4] sm:$0xff]
  %v5264 = vld [vmem:[#allocation2 + $0x6ec] sm:$0xff]
  %v5265 = vld [vmem:[#allocation2 + $0x6f4] sm:$0xff]
  %v5266 = vld [vmem:[#allocation2 + $0x6fc] sm:$0xff]
  %v5267 = vld [vmem:[#allocation2 + $0x704] sm:$0xf]
  %v5268 = vld [vmem:[#allocation2 + $0x708] sm:$0xff]
  %v5269 = vld [vmem:[#allocation2 + $0x710] sm:$0xff]
  %v5270 = vld [vmem:[#allocation2 + $0x718] sm:$0xff]
  %v5271 = vld [vmem:[#allocation2 + $0x720] sm:$0xff]
  %v5272 = vld [vmem:[#allocation2 + $0x728] sm:$0xf]
  %v5273 = vld [vmem:[#allocation2 + $0x72c] sm:$0xff]
  %v5274 = vld [vmem:[#allocation2 + $0x734] sm:$0xff]
  %v5275 = vld [vmem:[#allocation2 + $0x73c] sm:$0xff]
  %v5276 = vld [vmem:[#allocation2 + $0x744] sm:$0xff]
  %v5277 = vld [vmem:[#allocation2 + $0x74c] sm:$0xf]
  %v5278 = vld [vmem:[#allocation2 + $0x750] sm:$0xff]
  %v5279 = vld [vmem:[#allocation2 + $0x758] sm:$0xff]
  %v5280 = vld [vmem:[#allocation2 + $0x760] sm:$0xff]
  %v5281 = vld [vmem:[#allocation2 + $0x768] sm:$0xff]
  %v5282 = vld [vmem:[#allocation2 + $0x770] sm:$0xf]
  %v5283 = vld [vmem:[#allocation2 + $0x774] sm:$0xff]
  %v5284 = vld [vmem:[#allocation2 + $0x77c] sm:$0xff]
  %v5285 = vld [vmem:[#allocation2 + $0x784] sm:$0xff]
  %v5286 = vld [vmem:[#allocation2 + $0x78c] sm:$0xff]
  %v5287 = vld [vmem:[#allocation2 + $0x794] sm:$0xf]
  %v5288 = vld [vmem:[#allocation2 + $0x798] sm:$0xff]
  %v5289 = vld [vmem:[#allocation2 + $0x7a0] sm:$0xff]
  %v5290 = vld [vmem:[#allocation2 + $0x7a8] sm:$0xff]
  %v5291 = vld [vmem:[#allocation2 + $0x7b0] sm:$0xff]
  %v5292 = vld [vmem:[#allocation2 + $0x7b8] sm:$0xf]
  %v5293 = vld [vmem:[#allocation2 + $0x7bc] sm:$0xff]
  %v5294 = vld [vmem:[#allocation2 + $0x7c4] sm:$0xff]
  %v5295 = vld [vmem:[#allocation2 + $0x7cc] sm:$0xff]
  %v5296 = vld [vmem:[#allocation2 + $0x7d4] sm:$0xff]
  %v5297 = vld [vmem:[#allocation2 + $0x7dc] sm:$0xf]
  %v5298 = vld [vmem:[#allocation2 + $0x7e0] sm:$0xff]
  %v5299 = vld [vmem:[#allocation2 + $0x7e8] sm:$0xff]
  %v5300 = vld [vmem:[#allocation2 + $0x7f0] sm:$0xff]
  %v5301 = vld [vmem:[#allocation2 + $0x7f8] sm:$0xff]
  %v5302 = vld [vmem:[#allocation2 + $0x800] sm:$0xf]
  %v5303 = vld [vmem:[#allocation2 + $0x804] sm:$0xff]
  %v5304 = vld [vmem:[#allocation2 + $0x80c] sm:$0xff]
  %v5305 = vld [vmem:[#allocation2 + $0x814] sm:$0xff]
  %v5306 = vld [vmem:[#allocation2 + $0x81c] sm:$0xff]
  %v5307 = vld [vmem:[#allocation2 + $0x824] sm:$0xf]
  %v5308 = vld [vmem:[#allocation2 + $0x828] sm:$0xff]
  %v5309 = vld [vmem:[#allocation2 + $0x830] sm:$0xff]
  %v5310 = vld [vmem:[#allocation2 + $0x838] sm:$0xff]
  %v5311 = vld [vmem:[#allocation2 + $0x840] sm:$0xff]
  %v5312 = vld [vmem:[#allocation2 + $0x848] sm:$0xf]
  %v5313 = vld [vmem:[#allocation2 + $0x84c] sm:$0xff]
  %v5314 = vld [vmem:[#allocation2 + $0x854] sm:$0xff]
  %v5315 = vld [vmem:[#allocation2 + $0x85c] sm:$0xff]
  %v5316 = vld [vmem:[#allocation2 + $0x864] sm:$0xff]
  %v5317 = vld [vmem:[#allocation2 + $0x86c] sm:$0xf]
  %v5318 = vld [vmem:[#allocation2 + $0x870] sm:$0xff]
  %v5319 = vld [vmem:[#allocation2 + $0x878] sm:$0xff]
  %v5320 = vld [vmem:[#allocation2 + $0x880] sm:$0xff]
  %v5321 = vld [vmem:[#allocation2 + $0x888] sm:$0xff]
  %v5322 = vld [vmem:[#allocation2 + $0x890] sm:$0xf]
  %v5323 = vld [vmem:[#allocation2 + $0x894] sm:$0xff]
  %v5324 = vld [vmem:[#allocation2 + $0x89c] sm:$0xff]
  %v5325 = vld [vmem:[#allocation2 + $0x8a4] sm:$0xff]
  %v5326 = vld [vmem:[#allocation2 + $0x8ac] sm:$0xff]
  %v5327 = vld [vmem:[#allocation2 + $0x8b4] sm:$0xf]
  %v5328 = vld [vmem:[#allocation2 + $0x8b8] sm:$0xff]
  %v5329 = vld [vmem:[#allocation2 + $0x8c0] sm:$0xff]
  %v5330 = vld [vmem:[#allocation2 + $0x8c8] sm:$0xff]
  %v5331 = vld [vmem:[#allocation2 + $0x8d0] sm:$0xff]
  %v5332 = vld [vmem:[#allocation2 + $0x8d8] sm:$0xf]
  %v5333 = vld [vmem:[#allocation2 + $0x8dc] sm:$0xff]
  %v5334 = vld [vmem:[#allocation2 + $0x8e4] sm:$0xff]
  %v5335 = vld [vmem:[#allocation2 + $0x8ec] sm:$0xff]
  %v5336 = vld [vmem:[#allocation2 + $0x8f4] sm:$0xff]
  %v5337 = vld [vmem:[#allocation2 + $0x8fc] sm:$0xf]
  %v5338 = vld [vmem:[%s1] sm:$0xf]
  %v5339 = vld [vmem:[%s1 + $0x4] sm:$0xf]
  %v5340 = vld [vmem:[%s1 + $0x8] sm:$0xf]
  %v5341 = vld [vmem:[%s1 + $0xc] sm:$0xf]
  %v5342 = vld [vmem:[%s1 + $0x10] sm:$0xf]
  %v5343 = vld [vmem:[%s1 + $0x14] sm:$0xf]
  %v5344 = vld [vmem:[%s1 + $0x18] sm:$0xf]
  %v5345 = vld [vmem:[%s1 + $0x1c] sm:$0xf]
  %v5346 = vld [vmem:[%s1 + $0x20] sm:$0xf]
  %v5347 = vld [vmem:[%s1 + $0x24] sm:$0xf]
  %v5348 = vld [vmem:[%s1 + $0x28] sm:$0xf]
  %v5349 = vld [vmem:[%s1 + $0x2c] sm:$0xf]
  %v5350 = vld [vmem:[%s1 + $0x30] sm:$0xf]
  %v5351 = vld [vmem:[%s1 + $0x34] sm:$0xf]
  %v5352 = vld [vmem:[%s1 + $0x38] sm:$0xf]
  %v5353 = vld [vmem:[%s1 + $0x3c] sm:$0xf]
  %v5354 = vld [vmem:[%s1 + $0x40] sm:$0xf]
  %v5355 = vld [vmem:[%s1 + $0x44] sm:$0xf]
  %v5356 = vld [vmem:[%s1 + $0x48] sm:$0xf]
  %v5357 = vld [vmem:[%s1 + $0x4c] sm:$0xf]
  %v5358 = vld [vmem:[%s1 + $0x50] sm:$0xf]
  %v5359 = vld [vmem:[%s1 + $0x54] sm:$0xf]
  %v5360 = vld [vmem:[%s1 + $0x58] sm:$0xf]
  %v5361 = vld [vmem:[%s1 + $0x5c] sm:$0xf]
  %v5362 = vld [vmem:[%s1 + $0x60] sm:$0xf]
  %v5363 = vld [vmem:[%s1 + $0x64] sm:$0xf]
  %v5364 = vld [vmem:[%s1 + $0x68] sm:$0xf]
  %v5365 = vld [vmem:[%s1 + $0x6c] sm:$0xf]
  %v5366 = vld [vmem:[%s1 + $0x70] sm:$0xf]
  %v5367 = vld [vmem:[%s1 + $0x74] sm:$0xf]
  %v5368 = vld [vmem:[%s1 + $0x78] sm:$0xf]
  %v5369 = vld [vmem:[%s1 + $0x7c] sm:$0xf]
  %v5370 = vld [vmem:[%s1 + $0x80] sm:$0xf]
  %v5371 = vld [vmem:[%s1 + $0x84] sm:$0xf]
  %v5372 = vld [vmem:[%s1 + $0x88] sm:$0xf]
  %v5373 = vld [vmem:[%s1 + $0x8c] sm:$0xf]
  %v5374 = vld [vmem:[%s1 + $0x90] sm:$0xf]
  %v5375 = vld [vmem:[%s1 + $0x94] sm:$0xf]
  %v5376 = vld [vmem:[%s1 + $0x98] sm:$0xf]
  %v5377 = vld [vmem:[%s1 + $0x9c] sm:$0xf]
  %v5378 = vld [vmem:[%s1 + $0xa0] sm:$0xf]
  %v5379 = vld [vmem:[%s1 + $0xa4] sm:$0xf]
  %v5380 = vld [vmem:[%s1 + $0xa8] sm:$0xf]
  %v5381 = vld [vmem:[%s1 + $0xac] sm:$0xf]
  %v5382 = vld [vmem:[%s1 + $0xb0] sm:$0xf]
  %v5383 = vld [vmem:[%s1 + $0xb4] sm:$0xf]
  %v5384 = vld [vmem:[%s1 + $0xb8] sm:$0xf]
  %v5385 = vld [vmem:[%s1 + $0xbc] sm:$0xf]
  %v5386 = vld [vmem:[%s1 + $0xc0] sm:$0xf]
  %v5387 = vld [vmem:[%s1 + $0xc4] sm:$0xf]
  %v5388 = vld [vmem:[%s1 + $0xc8] sm:$0xf]
  %v5389 = vld [vmem:[%s1 + $0xcc] sm:$0xf]
  %v5390 = vld [vmem:[%s1 + $0xd0] sm:$0xf]
  %v5391 = vld [vmem:[%s1 + $0xd4] sm:$0xf]
  %v5392 = vld [vmem:[%s1 + $0xd8] sm:$0xf]
  %v5393 = vld [vmem:[%s1 + $0xdc] sm:$0xf]
  %v5394 = vld [vmem:[%s1 + $0xe0] sm:$0xf]
  %v5395 = vld [vmem:[%s1 + $0xe4] sm:$0xf]
  %v5396 = vld [vmem:[%s1 + $0xe8] sm:$0xf]
  %v5397 = vld [vmem:[%s1 + $0xec] sm:$0xf]
  %v5398 = vld [vmem:[%s1 + $0xf0] sm:$0xf]
  %v5399 = vld [vmem:[%s1 + $0xf4] sm:$0xf]
  %v5400 = vld [vmem:[%s1 + $0xf8] sm:$0xf]
  %v5401 = vld [vmem:[%s1 + $0xfc] sm:$0xf]
  %v5402 = vld [vmem:[%s1 + $0x100] sm:$0xf]
  %v5403 = vld [vmem:[%s1 + $0x104] sm:$0xf]
  %v5404 = vld [vmem:[%s1 + $0x108] sm:$0xf]
  %v5405 = vld [vmem:[%s1 + $0x10c] sm:$0xf]
  %v5406 = vld [vmem:[%s1 + $0x110] sm:$0xf]
  %v5407 = vld [vmem:[%s1 + $0x114] sm:$0xf]
  %v5408 = vld [vmem:[%s1 + $0x118] sm:$0xf]
  %v5409 = vld [vmem:[%s1 + $0x11c] sm:$0xf]
  %v5410 = vld [vmem:[%s1 + $0x120] sm:$0xf]
  %v5411 = vld [vmem:[%s1 + $0x124] sm:$0xf]
  %v5412 = vld [vmem:[%s1 + $0x128] sm:$0xf]
  %v5413 = vld [vmem:[%s1 + $0x12c] sm:$0xf]
  %v5414 = vld [vmem:[%s1 + $0x130] sm:$0xf]
  %v5415 = vld [vmem:[%s1 + $0x134] sm:$0xf]
  %v5416 = vld [vmem:[%s1 + $0x138] sm:$0xf]
  %v5417 = vld [vmem:[%s1 + $0x13c] sm:$0xf]
  %v5418 = vld [vmem:[%s1 + $0x140] sm:$0xf]
  %v5419 = vld [vmem:[%s1 + $0x144] sm:$0xf]
  %v5420 = vld [vmem:[%s1 + $0x148] sm:$0xf]
  %v5421 = vld [vmem:[%s1 + $0x14c] sm:$0xf]
  %v5422 = vld [vmem:[%s1 + $0x150] sm:$0xf]
  %v5423 = vld [vmem:[%s1 + $0x154] sm:$0xf]
  %v5424 = vld [vmem:[%s1 + $0x158] sm:$0xf]
  %v5425 = vld [vmem:[%s1 + $0x15c] sm:$0xf]
  %v5426 = vld [vmem:[%s1 + $0x160] sm:$0xf]
  %v5427 = vld [vmem:[%s1 + $0x164] sm:$0xf]
  %v5428 = vld [vmem:[%s1 + $0x168] sm:$0xf]
  %v5429 = vld [vmem:[%s1 + $0x16c] sm:$0xf]
  %v5430 = vld [vmem:[%s1 + $0x170] sm:$0xf]
  %v5431 = vld [vmem:[%s1 + $0x174] sm:$0xf]
  %v5432 = vld [vmem:[%s1 + $0x178] sm:$0xf]
  %v5433 = vld [vmem:[%s1 + $0x17c] sm:$0xf]
  %v5434 = vld [vmem:[%s1 + $0x180] sm:$0xf]
  %v5435 = vld [vmem:[%s1 + $0x184] sm:$0xf]
  %v5436 = vld [vmem:[%s1 + $0x188] sm:$0xf]
  %v5437 = vld [vmem:[%s1 + $0x18c] sm:$0xf]
  %v5438 = vld [vmem:[%s1 + $0x190] sm:$0xf]
  %v5439 = vld [vmem:[%s1 + $0x194] sm:$0xf]
  %v5440 = vld [vmem:[%s1 + $0x198] sm:$0xf]
  %v5441 = vld [vmem:[%s1 + $0x19c] sm:$0xf]
  %v5442 = vld [vmem:[%s1 + $0x1a0] sm:$0xf]
  %v5443 = vld [vmem:[%s1 + $0x1a4] sm:$0xf]
  %v5444 = vld [vmem:[%s1 + $0x1a8] sm:$0xf]
  %v5445 = vld [vmem:[%s1 + $0x1ac] sm:$0xf]
  %v5446 = vld [vmem:[%s1 + $0x1b0] sm:$0xf]
  %v5447 = vld [vmem:[%s1 + $0x1b4] sm:$0xf]
  %v5448 = vld [vmem:[%s1 + $0x1b8] sm:$0xf]
  %v5449 = vld [vmem:[%s1 + $0x1bc] sm:$0xf]
  %v5450 = vld [vmem:[%s1 + $0x1c0] sm:$0xf]
  %v5451 = vld [vmem:[%s1 + $0x1c4] sm:$0xf]
  %v5452 = vld [vmem:[%s1 + $0x1c8] sm:$0xf]
  %v5453 = vld [vmem:[%s1 + $0x1cc] sm:$0xf]
  %v5454 = vld [vmem:[%s1 + $0x1d0] sm:$0xf]
  %v5455 = vld [vmem:[%s1 + $0x1d4] sm:$0xf]
  %v5456 = vld [vmem:[%s1 + $0x1d8] sm:$0xf]
  %v5457 = vld [vmem:[%s1 + $0x1dc] sm:$0xf]
  %v5458 = vld [vmem:[%s1 + $0x1e0] sm:$0xf]
  %v5459 = vld [vmem:[%s1 + $0x1e4] sm:$0xf]
  %v5460 = vld [vmem:[%s1 + $0x1e8] sm:$0xf]
  %v5461 = vld [vmem:[%s1 + $0x1ec] sm:$0xf]
  %v5462 = vld [vmem:[%s1 + $0x1f0] sm:$0xf]
  %v5463 = vld [vmem:[%s1 + $0x1f4] sm:$0xf]
  %v5464 = vld [vmem:[%s1 + $0x1f8] sm:$0xf]
  %v5465 = vld [vmem:[%s1 + $0x1fc] sm:$0xf]
  %v5466 = vld [vmem:[%s1 + $0x200] sm:$0xf]
  %v5467 = vld [vmem:[%s1 + $0x204] sm:$0xf]
  %v5468 = vld [vmem:[%s1 + $0x208] sm:$0xf]
  %v5469 = vld [vmem:[%s1 + $0x20c] sm:$0xf]
  %v5470 = vld [vmem:[%s1 + $0x210] sm:$0xf]
  %v5471 = vld [vmem:[%s1 + $0x214] sm:$0xf]
  %v5472 = vld [vmem:[%s1 + $0x218] sm:$0xf]
  %v5473 = vld [vmem:[%s1 + $0x21c] sm:$0xf]
  %v5474 = vld [vmem:[%s1 + $0x220] sm:$0xf]
  %v5475 = vld [vmem:[%s1 + $0x224] sm:$0xf]
  %v5476 = vld [vmem:[%s1 + $0x228] sm:$0xf]
  %v5477 = vld [vmem:[%s1 + $0x22c] sm:$0xf]
  %v5478 = vld [vmem:[%s1 + $0x230] sm:$0xf]
  %v5479 = vld [vmem:[%s1 + $0x234] sm:$0xf]
  %v5480 = vld [vmem:[%s1 + $0x238] sm:$0xf]
  %v5481 = vld [vmem:[%s1 + $0x23c] sm:$0xf]
  %v5802 = vunpack.c.l.b16 %v5018
  %v5803 = vunpack.c.h.b16 %v5018
  %v5804 = vunpack.c.l.b16 %v5019
  %v5805 = vunpack.c.h.b16 %v5019
  %v5806 = vunpack.c.l.b16 %v5020
  %v5807 = vunpack.c.h.b16 %v5020
  %v5808 = vunpack.c.l.b16 %v5021
  %v5809 = vunpack.c.h.b16 %v5021
  %v5810 = vunpack.c.l.b16 %v5022
  %v5811 = vunpack.c.l.b16 %v5023
  %v5812 = vunpack.c.h.b16 %v5023
  %v5813 = vunpack.c.l.b16 %v5024
  %v5814 = vunpack.c.h.b16 %v5024
  %v5815 = vunpack.c.l.b16 %v5025
  %v5816 = vunpack.c.h.b16 %v5025
  %v5817 = vunpack.c.l.b16 %v5026
  %v5818 = vunpack.c.h.b16 %v5026
  %v5819 = vunpack.c.l.b16 %v5027
  %v5820 = vunpack.c.l.b16 %v5028
  %v5821 = vunpack.c.h.b16 %v5028
  %v5822 = vunpack.c.l.b16 %v5029
  %v5823 = vunpack.c.h.b16 %v5029
  %v5824 = vunpack.c.l.b16 %v5030
  %v5825 = vunpack.c.h.b16 %v5030
  %v5826 = vunpack.c.l.b16 %v5031
  %v5827 = vunpack.c.h.b16 %v5031
  %v5828 = vunpack.c.l.b16 %v5032
  %v5829 = vunpack.c.l.b16 %v5033
  %v5830 = vunpack.c.h.b16 %v5033
  %v5831 = vunpack.c.l.b16 %v5034
  %v5832 = vunpack.c.h.b16 %v5034
  %v5833 = vunpack.c.l.b16 %v5035
  %v5834 = vunpack.c.h.b16 %v5035
  %v5835 = vunpack.c.l.b16 %v5036
  %v5836 = vunpack.c.h.b16 %v5036
  %v5837 = vunpack.c.l.b16 %v5037
  %v5838 = vunpack.c.l.b16 %v5038
  %v5839 = vunpack.c.h.b16 %v5038
  %v5840 = vunpack.c.l.b16 %v5039
  %v5841 = vunpack.c.h.b16 %v5039
  %v5842 = vunpack.c.l.b16 %v5040
  %v5843 = vunpack.c.h.b16 %v5040
  %v5844 = vunpack.c.l.b16 %v5041
  %v5845 = vunpack.c.h.b16 %v5041
  %v5846 = vunpack.c.l.b16 %v5042
  %v5847 = vunpack.c.l.b16 %v5043
  %v5848 = vunpack.c.h.b16 %v5043
  %v5849 = vunpack.c.l.b16 %v5044
  %v5850 = vunpack.c.h.b16 %v5044
  %v5851 = vunpack.c.l.b16 %v5045
  %v5852 = vunpack.c.h.b16 %v5045
  %v5853 = vunpack.c.l.b16 %v5046
  %v5854 = vunpack.c.h.b16 %v5046
  %v5855 = vunpack.c.l.b16 %v5047
  %v5856 = vunpack.c.l.b16 %v5048
  %v5857 = vunpack.c.h.b16 %v5048
  %v5858 = vunpack.c.l.b16 %v5049
  %v5859 = vunpack.c.h.b16 %v5049
  %v5860 = vunpack.c.l.b16 %v5050
  %v5861 = vunpack.c.h.b16 %v5050
  %v5862 = vunpack.c.l.b16 %v5051
  %v5863 = vunpack.c.h.b16 %v5051
  %v5864 = vunpack.c.l.b16 %v5052
  %v5865 = vunpack.c.l.b16 %v5053
  %v5866 = vunpack.c.h.b16 %v5053
  %v5867 = vunpack.c.l.b16 %v5054
  %v5868 = vunpack.c.h.b16 %v5054
  %v5869 = vunpack.c.l.b16 %v5055
  %v5870 = vunpack.c.h.b16 %v5055
  %v5871 = vunpack.c.l.b16 %v5056
  %v5872 = vunpack.c.h.b16 %v5056
  %v5873 = vunpack.c.l.b16 %v5057
  %v5874 = vunpack.c.l.b16 %v5058
  %v5875 = vunpack.c.h.b16 %v5058
  %v5876 = vunpack.c.l.b16 %v5059
  %v5877 = vunpack.c.h.b16 %v5059
  %v5878 = vunpack.c.l.b16 %v5060
  %v5879 = vunpack.c.h.b16 %v5060
  %v5880 = vunpack.c.l.b16 %v5061
  %v5881 = vunpack.c.h.b16 %v5061
  %v5882 = vunpack.c.l.b16 %v5062
  %v5883 = vunpack.c.l.b16 %v5063
  %v5884 = vunpack.c.h.b16 %v5063
  %v5885 = vunpack.c.l.b16 %v5064
  %v5886 = vunpack.c.h.b16 %v5064
  %v5887 = vunpack.c.l.b16 %v5065
  %v5888 = vunpack.c.h.b16 %v5065
  %v5889 = vunpack.c.l.b16 %v5066
  %v5890 = vunpack.c.h.b16 %v5066
  %v5891 = vunpack.c.l.b16 %v5067
  %v5892 = vunpack.c.l.b16 %v5068
  %v5893 = vunpack.c.h.b16 %v5068
  %v5894 = vunpack.c.l.b16 %v5069
  %v5895 = vunpack.c.h.b16 %v5069
  %v5896 = vunpack.c.l.b16 %v5070
  %v5897 = vunpack.c.h.b16 %v5070
  %v5898 = vunpack.c.l.b16 %v5071
  %v5899 = vunpack.c.h.b16 %v5071
  %v5900 = vunpack.c.l.b16 %v5072
  %v5901 = vunpack.c.l.b16 %v5073
  %v5902 = vunpack.c.h.b16 %v5073
  %v5903 = vunpack.c.l.b16 %v5074
  %v5904 = vunpack.c.h.b16 %v5074
  %v5905 = vunpack.c.l.b16 %v5075
  %v5906 = vunpack.c.h.b16 %v5075
  %v5907 = vunpack.c.l.b16 %v5076
  %v5908 = vunpack.c.h.b16 %v5076
  %v5909 = vunpack.c.l.b16 %v5077
  %v5910 = vunpack.c.l.b16 %v5078
  %v5911 = vunpack.c.h.b16 %v5078
  %v5912 = vunpack.c.l.b16 %v5079
  %v5913 = vunpack.c.h.b16 %v5079
  %v5914 = vunpack.c.l.b16 %v5080
  %v5915 = vunpack.c.h.b16 %v5080
  %v5916 = vunpack.c.l.b16 %v5081
  %v5917 = vunpack.c.h.b16 %v5081
  %v5918 = vunpack.c.l.b16 %v5082
  %v5919 = vunpack.c.l.b16 %v5083
  %v5920 = vunpack.c.h.b16 %v5083
  %v5921 = vunpack.c.l.b16 %v5084
  %v5922 = vunpack.c.h.b16 %v5084
  %v5923 = vunpack.c.l.b16 %v5085
  %v5924 = vunpack.c.h.b16 %v5085
  %v5925 = vunpack.c.l.b16 %v5086
  %v5926 = vunpack.c.h.b16 %v5086
  %v5927 = vunpack.c.l.b16 %v5087
  %v5928 = vunpack.c.l.b16 %v5088
  %v5929 = vunpack.c.h.b16 %v5088
  %v5930 = vunpack.c.l.b16 %v5089
  %v5931 = vunpack.c.h.b16 %v5089
  %v5932 = vunpack.c.l.b16 %v5090
  %v5933 = vunpack.c.h.b16 %v5090
  %v5934 = vunpack.c.l.b16 %v5091
  %v5935 = vunpack.c.h.b16 %v5091
  %v5936 = vunpack.c.l.b16 %v5092
  %v5937 = vunpack.c.l.b16 %v5093
  %v5938 = vunpack.c.h.b16 %v5093
  %v5939 = vunpack.c.l.b16 %v5094
  %v5940 = vunpack.c.h.b16 %v5094
  %v5941 = vunpack.c.l.b16 %v5095
  %v5942 = vunpack.c.h.b16 %v5095
  %v5943 = vunpack.c.l.b16 %v5096
  %v5944 = vunpack.c.h.b16 %v5096
  %v5945 = vunpack.c.l.b16 %v5097
  %v5946 = vunpack.c.l.b16 %v5098
  %v5947 = vunpack.c.h.b16 %v5098
  %v5948 = vunpack.c.l.b16 %v5099
  %v5949 = vunpack.c.h.b16 %v5099
  %v5950 = vunpack.c.l.b16 %v5100
  %v5951 = vunpack.c.h.b16 %v5100
  %v5952 = vunpack.c.l.b16 %v5101
  %v5953 = vunpack.c.h.b16 %v5101
  %v5954 = vunpack.c.l.b16 %v5102
  %v5955 = vunpack.c.l.b16 %v5103
  %v5956 = vunpack.c.h.b16 %v5103
  %v5957 = vunpack.c.l.b16 %v5104
  %v5958 = vunpack.c.h.b16 %v5104
  %v5959 = vunpack.c.l.b16 %v5105
  %v5960 = vunpack.c.h.b16 %v5105
  %v5961 = vunpack.c.l.b16 %v5106
  %v5962 = vunpack.c.h.b16 %v5106
  %v5963 = vunpack.c.l.b16 %v5107
  %v5964 = vunpack.c.l.b16 %v5108
  %v5965 = vunpack.c.h.b16 %v5108
  %v5966 = vunpack.c.l.b16 %v5109
  %v5967 = vunpack.c.h.b16 %v5109
  %v5968 = vunpack.c.l.b16 %v5110
  %v5969 = vunpack.c.h.b16 %v5110
  %v5970 = vunpack.c.l.b16 %v5111
  %v5971 = vunpack.c.h.b16 %v5111
  %v5972 = vunpack.c.l.b16 %v5112
  %v5973 = vunpack.c.l.b16 %v5113
  %v5974 = vunpack.c.h.b16 %v5113
  %v5975 = vunpack.c.l.b16 %v5114
  %v5976 = vunpack.c.h.b16 %v5114
  %v5977 = vunpack.c.l.b16 %v5115
  %v5978 = vunpack.c.h.b16 %v5115
  %v5979 = vunpack.c.l.b16 %v5116
  %v5980 = vunpack.c.h.b16 %v5116
  %v5981 = vunpack.c.l.b16 %v5117
  %v5982 = vunpack.c.l.b16 %v5118
  %v5983 = vunpack.c.h.b16 %v5118
  %v5984 = vunpack.c.l.b16 %v5119
  %v5985 = vunpack.c.h.b16 %v5119
  %v5986 = vunpack.c.l.b16 %v5120
  %v5987 = vunpack.c.h.b16 %v5120
  %v5988 = vunpack.c.l.b16 %v5121
  %v5989 = vunpack.c.h.b16 %v5121
  %v5990 = vunpack.c.l.b16 %v5122
  %v5991 = vunpack.c.l.b16 %v5123
  %v5992 = vunpack.c.h.b16 %v5123
  %v5993 = vunpack.c.l.b16 %v5124
  %v5994 = vunpack.c.h.b16 %v5124
  %v5995 = vunpack.c.l.b16 %v5125
  %v5996 = vunpack.c.h.b16 %v5125
  %v5997 = vunpack.c.l.b16 %v5126
  %v5998 = vunpack.c.h.b16 %v5126
  %v5999 = vunpack.c.l.b16 %v5127
  %v6000 = vunpack.c.l.b16 %v5128
  %v6001 = vunpack.c.h.b16 %v5128
  %v6002 = vunpack.c.l.b16 %v5129
  %v6003 = vunpack.c.h.b16 %v5129
  %v6004 = vunpack.c.l.b16 %v5130
  %v6005 = vunpack.c.h.b16 %v5130
  %v6006 = vunpack.c.l.b16 %v5131
  %v6007 = vunpack.c.h.b16 %v5131
  %v6008 = vunpack.c.l.b16 %v5132
  %v6009 = vunpack.c.l.b16 %v5133
  %v6010 = vunpack.c.h.b16 %v5133
  %v6011 = vunpack.c.l.b16 %v5134
  %v6012 = vunpack.c.h.b16 %v5134
  %v6013 = vunpack.c.l.b16 %v5135
  %v6014 = vunpack.c.h.b16 %v5135
  %v6015 = vunpack.c.l.b16 %v5136
  %v6016 = vunpack.c.h.b16 %v5136
  %v6017 = vunpack.c.l.b16 %v5137
  %v6018 = vunpack.c.l.b16 %v5138
  %v6019 = vunpack.c.h.b16 %v5138
  %v6020 = vunpack.c.l.b16 %v5139
  %v6021 = vunpack.c.h.b16 %v5139
  %v6022 = vunpack.c.l.b16 %v5140
  %v6023 = vunpack.c.h.b16 %v5140
  %v6024 = vunpack.c.l.b16 %v5141
  %v6025 = vunpack.c.h.b16 %v5141
  %v6026 = vunpack.c.l.b16 %v5142
  %v6027 = vunpack.c.l.b16 %v5143
  %v6028 = vunpack.c.h.b16 %v5143
  %v6029 = vunpack.c.l.b16 %v5144
  %v6030 = vunpack.c.h.b16 %v5144
  %v6031 = vunpack.c.l.b16 %v5145
  %v6032 = vunpack.c.h.b16 %v5145
  %v6033 = vunpack.c.l.b16 %v5146
  %v6034 = vunpack.c.h.b16 %v5146
  %v6035 = vunpack.c.l.b16 %v5147
  %v6036 = vunpack.c.l.b16 %v5148
  %v6037 = vunpack.c.h.b16 %v5148
  %v6038 = vunpack.c.l.b16 %v5149
  %v6039 = vunpack.c.h.b16 %v5149
  %v6040 = vunpack.c.l.b16 %v5150
  %v6041 = vunpack.c.h.b16 %v5150
  %v6042 = vunpack.c.l.b16 %v5151
  %v6043 = vunpack.c.h.b16 %v5151
  %v6044 = vunpack.c.l.b16 %v5152
  %v6045 = vunpack.c.l.b16 %v5153
  %v6046 = vunpack.c.h.b16 %v5153
  %v6047 = vunpack.c.l.b16 %v5154
  %v6048 = vunpack.c.h.b16 %v5154
  %v6049 = vunpack.c.l.b16 %v5155
  %v6050 = vunpack.c.h.b16 %v5155
  %v6051 = vunpack.c.l.b16 %v5156
  %v6052 = vunpack.c.h.b16 %v5156
  %v6053 = vunpack.c.l.b16 %v5157
  %v6054 = vunpack.c.l.b16 %v5158
  %v6055 = vunpack.c.h.b16 %v5158
  %v6056 = vunpack.c.l.b16 %v5159
  %v6057 = vunpack.c.h.b16 %v5159
  %v6058 = vunpack.c.l.b16 %v5160
  %v6059 = vunpack.c.h.b16 %v5160
  %v6060 = vunpack.c.l.b16 %v5161
  %v6061 = vunpack.c.h.b16 %v5161
  %v6062 = vunpack.c.l.b16 %v5162
  %v6063 = vunpack.c.l.b16 %v5163
  %v6064 = vunpack.c.h.b16 %v5163
  %v6065 = vunpack.c.l.b16 %v5164
  %v6066 = vunpack.c.h.b16 %v5164
  %v6067 = vunpack.c.l.b16 %v5165
  %v6068 = vunpack.c.h.b16 %v5165
  %v6069 = vunpack.c.l.b16 %v5166
  %v6070 = vunpack.c.h.b16 %v5166
  %v6071 = vunpack.c.l.b16 %v5167
  %v6072 = vunpack.c.l.b16 %v5168
  %v6073 = vunpack.c.h.b16 %v5168
  %v6074 = vunpack.c.l.b16 %v5169
  %v6075 = vunpack.c.h.b16 %v5169
  %v6076 = vunpack.c.l.b16 %v5170
  %v6077 = vunpack.c.h.b16 %v5170
  %v6078 = vunpack.c.l.b16 %v5171
  %v6079 = vunpack.c.h.b16 %v5171
  %v6080 = vunpack.c.l.b16 %v5172
  %v6081 = vunpack.c.l.b16 %v5173
  %v6082 = vunpack.c.h.b16 %v5173
  %v6083 = vunpack.c.l.b16 %v5174
  %v6084 = vunpack.c.h.b16 %v5174
  %v6085 = vunpack.c.l.b16 %v5175
  %v6086 = vunpack.c.h.b16 %v5175
  %v6087 = vunpack.c.l.b16 %v5176
  %v6088 = vunpack.c.h.b16 %v5176
  %v6089 = vunpack.c.l.b16 %v5177
  %v6090 = vunpack.c.l.b16 %v5178
  %v6091 = vunpack.c.h.b16 %v5178
  %v6092 = vunpack.c.l.b16 %v5179
  %v6093 = vunpack.c.h.b16 %v5179
  %v6094 = vunpack.c.l.b16 %v5180
  %v6095 = vunpack.c.h.b16 %v5180
  %v6096 = vunpack.c.l.b16 %v5181
  %v6097 = vunpack.c.h.b16 %v5181
  %v6098 = vunpack.c.l.b16 %v5182
  %v6099 = vunpack.c.l.b16 %v5183
  %v6100 = vunpack.c.h.b16 %v5183
  %v6101 = vunpack.c.l.b16 %v5184
  %v6102 = vunpack.c.h.b16 %v5184
  %v6103 = vunpack.c.l.b16 %v5185
  %v6104 = vunpack.c.h.b16 %v5185
  %v6105 = vunpack.c.l.b16 %v5186
  %v6106 = vunpack.c.h.b16 %v5186
  %v6107 = vunpack.c.l.b16 %v5187
  %v6108 = vunpack.c.l.b16 %v5188
  %v6109 = vunpack.c.h.b16 %v5188
  %v6110 = vunpack.c.l.b16 %v5189
  %v6111 = vunpack.c.h.b16 %v5189
  %v6112 = vunpack.c.l.b16 %v5190
  %v6113 = vunpack.c.h.b16 %v5190
  %v6114 = vunpack.c.l.b16 %v5191
  %v6115 = vunpack.c.h.b16 %v5191
  %v6116 = vunpack.c.l.b16 %v5192
  %v6117 = vunpack.c.l.b16 %v5193
  %v6118 = vunpack.c.h.b16 %v5193
  %v6119 = vunpack.c.l.b16 %v5194
  %v6120 = vunpack.c.h.b16 %v5194
  %v6121 = vunpack.c.l.b16 %v5195
  %v6122 = vunpack.c.h.b16 %v5195
  %v6123 = vunpack.c.l.b16 %v5196
  %v6124 = vunpack.c.h.b16 %v5196
  %v6125 = vunpack.c.l.b16 %v5197
  %v6126 = vunpack.c.l.b16 %v5198
  %v6127 = vunpack.c.h.b16 %v5198
  %v6128 = vunpack.c.l.b16 %v5199
  %v6129 = vunpack.c.h.b16 %v5199
  %v6130 = vunpack.c.l.b16 %v5200
  %v6131 = vunpack.c.h.b16 %v5200
  %v6132 = vunpack.c.l.b16 %v5201
  %v6133 = vunpack.c.h.b16 %v5201
  %v6134 = vunpack.c.l.b16 %v5202
  %v6135 = vunpack.c.l.b16 %v5203
  %v6136 = vunpack.c.h.b16 %v5203
  %v6137 = vunpack.c.l.b16 %v5204
  %v6138 = vunpack.c.h.b16 %v5204
  %v6139 = vunpack.c.l.b16 %v5205
  %v6140 = vunpack.c.h.b16 %v5205
  %v6141 = vunpack.c.l.b16 %v5206
  %v6142 = vunpack.c.h.b16 %v5206
  %v6143 = vunpack.c.l.b16 %v5207
  %v6144 = vunpack.c.l.b16 %v5208
  %v6145 = vunpack.c.h.b16 %v5208
  %v6146 = vunpack.c.l.b16 %v5209
  %v6147 = vunpack.c.h.b16 %v5209
  %v6148 = vunpack.c.l.b16 %v5210
  %v6149 = vunpack.c.h.b16 %v5210
  %v6150 = vunpack.c.l.b16 %v5211
  %v6151 = vunpack.c.h.b16 %v5211
  %v6152 = vunpack.c.l.b16 %v5212
  %v6153 = vunpack.c.l.b16 %v5213
  %v6154 = vunpack.c.h.b16 %v5213
  %v6155 = vunpack.c.l.b16 %v5214
  %v6156 = vunpack.c.h.b16 %v5214
  %v6157 = vunpack.c.l.b16 %v5215
  %v6158 = vunpack.c.h.b16 %v5215
  %v6159 = vunpack.c.l.b16 %v5216
  %v6160 = vunpack.c.h.b16 %v5216
  %v6161 = vunpack.c.l.b16 %v5217
  %v6162 = vunpack.c.l.b16 %v5218
  %v6163 = vunpack.c.h.b16 %v5218
  %v6164 = vunpack.c.l.b16 %v5219
  %v6165 = vunpack.c.h.b16 %v5219
  %v6166 = vunpack.c.l.b16 %v5220
  %v6167 = vunpack.c.h.b16 %v5220
  %v6168 = vunpack.c.l.b16 %v5221
  %v6169 = vunpack.c.h.b16 %v5221
  %v6170 = vunpack.c.l.b16 %v5222
  %v6171 = vunpack.c.l.b16 %v5223
  %v6172 = vunpack.c.h.b16 %v5223
  %v6173 = vunpack.c.l.b16 %v5224
  %v6174 = vunpack.c.h.b16 %v5224
  %v6175 = vunpack.c.l.b16 %v5225
  %v6176 = vunpack.c.h.b16 %v5225
  %v6177 = vunpack.c.l.b16 %v5226
  %v6178 = vunpack.c.h.b16 %v5226
  %v6179 = vunpack.c.l.b16 %v5227
  %v6180 = vunpack.c.l.b16 %v5228
  %v6181 = vunpack.c.h.b16 %v5228
  %v6182 = vunpack.c.l.b16 %v5229
  %v6183 = vunpack.c.h.b16 %v5229
  %v6184 = vunpack.c.l.b16 %v5230
  %v6185 = vunpack.c.h.b16 %v5230
  %v6186 = vunpack.c.l.b16 %v5231
  %v6187 = vunpack.c.h.b16 %v5231
  %v6188 = vunpack.c.l.b16 %v5232
  %v6189 = vunpack.c.l.b16 %v5233
  %v6190 = vunpack.c.h.b16 %v5233
  %v6191 = vunpack.c.l.b16 %v5234
  %v6192 = vunpack.c.h.b16 %v5234
  %v6193 = vunpack.c.l.b16 %v5235
  %v6194 = vunpack.c.h.b16 %v5235
  %v6195 = vunpack.c.l.b16 %v5236
  %v6196 = vunpack.c.h.b16 %v5236
  %v6197 = vunpack.c.l.b16 %v5237
  %v6198 = vunpack.c.l.b16 %v5238
  %v6199 = vunpack.c.h.b16 %v5238
  %v6200 = vunpack.c.l.b16 %v5239
  %v6201 = vunpack.c.h.b16 %v5239
  %v6202 = vunpack.c.l.b16 %v5240
  %v6203 = vunpack.c.h.b16 %v5240
  %v6204 = vunpack.c.l.b16 %v5241
  %v6205 = vunpack.c.h.b16 %v5241
  %v6206 = vunpack.c.l.b16 %v5242
  %v6207 = vunpack.c.l.b16 %v5243
  %v6208 = vunpack.c.h.b16 %v5243
  %v6209 = vunpack.c.l.b16 %v5244
  %v6210 = vunpack.c.h.b16 %v5244
  %v6211 = vunpack.c.l.b16 %v5245
  %v6212 = vunpack.c.h.b16 %v5245
  %v6213 = vunpack.c.l.b16 %v5246
  %v6214 = vunpack.c.h.b16 %v5246
  %v6215 = vunpack.c.l.b16 %v5247
  %v6216 = vunpack.c.l.b16 %v5248
  %v6217 = vunpack.c.h.b16 %v5248
  %v6218 = vunpack.c.l.b16 %v5249
  %v6219 = vunpack.c.h.b16 %v5249
  %v6220 = vunpack.c.l.b16 %v5250
  %v6221 = vunpack.c.h.b16 %v5250
  %v6222 = vunpack.c.l.b16 %v5251
  %v6223 = vunpack.c.h.b16 %v5251
  %v6224 = vunpack.c.l.b16 %v5252
  %v6225 = vunpack.c.l.b16 %v5253
  %v6226 = vunpack.c.h.b16 %v5253
  %v6227 = vunpack.c.l.b16 %v5254
  %v6228 = vunpack.c.h.b16 %v5254
  %v6229 = vunpack.c.l.b16 %v5255
  %v6230 = vunpack.c.h.b16 %v5255
  %v6231 = vunpack.c.l.b16 %v5256
  %v6232 = vunpack.c.h.b16 %v5256
  %v6233 = vunpack.c.l.b16 %v5257
  %v6234 = vunpack.c.l.b16 %v5258
  %v6235 = vunpack.c.h.b16 %v5258
  %v6236 = vunpack.c.l.b16 %v5259
  %v6237 = vunpack.c.h.b16 %v5259
  %v6238 = vunpack.c.l.b16 %v5260
  %v6239 = vunpack.c.h.b16 %v5260
  %v6240 = vunpack.c.l.b16 %v5261
  %v6241 = vunpack.c.h.b16 %v5261
  %v6242 = vunpack.c.l.b16 %v5262
  %v6243 = vunpack.c.l.b16 %v5263
  %v6244 = vunpack.c.h.b16 %v5263
  %v6245 = vunpack.c.l.b16 %v5264
  %v6246 = vunpack.c.h.b16 %v5264
  %v6247 = vunpack.c.l.b16 %v5265
  %v6248 = vunpack.c.h.b16 %v5265
  %v6249 = vunpack.c.l.b16 %v5266
  %v6250 = vunpack.c.h.b16 %v5266
  %v6251 = vunpack.c.l.b16 %v5267
  %v6252 = vunpack.c.l.b16 %v5268
  %v6253 = vunpack.c.h.b16 %v5268
  %v6254 = vunpack.c.l.b16 %v5269
  %v6255 = vunpack.c.h.b16 %v5269
  %v6256 = vunpack.c.l.b16 %v5270
  %v6257 = vunpack.c.h.b16 %v5270
  %v6258 = vunpack.c.l.b16 %v5271
  %v6259 = vunpack.c.h.b16 %v5271
  %v6260 = vunpack.c.l.b16 %v5272
  %v6261 = vunpack.c.l.b16 %v5273
  %v6262 = vunpack.c.h.b16 %v5273
  %v6263 = vunpack.c.l.b16 %v5274
  %v6264 = vunpack.c.h.b16 %v5274
  %v6265 = vunpack.c.l.b16 %v5275
  %v6266 = vunpack.c.h.b16 %v5275
  %v6267 = vunpack.c.l.b16 %v5276
  %v6268 = vunpack.c.h.b16 %v5276
  %v6269 = vunpack.c.l.b16 %v5277
  %v6270 = vunpack.c.l.b16 %v5278
  %v6271 = vunpack.c.h.b16 %v5278
  %v6272 = vunpack.c.l.b16 %v5279
  %v6273 = vunpack.c.h.b16 %v5279
  %v6274 = vunpack.c.l.b16 %v5280
  %v6275 = vunpack.c.h.b16 %v5280
  %v6276 = vunpack.c.l.b16 %v5281
  %v6277 = vunpack.c.h.b16 %v5281
  %v6278 = vunpack.c.l.b16 %v5282
  %v6279 = vunpack.c.l.b16 %v5283
  %v6280 = vunpack.c.h.b16 %v5283
  %v6281 = vunpack.c.l.b16 %v5284
  %v6282 = vunpack.c.h.b16 %v5284
  %v6283 = vunpack.c.l.b16 %v5285
  %v6284 = vunpack.c.h.b16 %v5285
  %v6285 = vunpack.c.l.b16 %v5286
  %v6286 = vunpack.c.h.b16 %v5286
  %v6287 = vunpack.c.l.b16 %v5287
  %v6288 = vunpack.c.l.b16 %v5288
  %v6289 = vunpack.c.h.b16 %v5288
  %v6290 = vunpack.c.l.b16 %v5289
  %v6291 = vunpack.c.h.b16 %v5289
  %v6292 = vunpack.c.l.b16 %v5290
  %v6293 = vunpack.c.h.b16 %v5290
  %v6294 = vunpack.c.l.b16 %v5291
  %v6295 = vunpack.c.h.b16 %v5291
  %v6296 = vunpack.c.l.b16 %v5292
  %v6297 = vunpack.c.l.b16 %v5293
  %v6298 = vunpack.c.h.b16 %v5293
  %v6299 = vunpack.c.l.b16 %v5294
  %v6300 = vunpack.c.h.b16 %v5294
  %v6301 = vunpack.c.l.b16 %v5295
  %v6302 = vunpack.c.h.b16 %v5295
  %v6303 = vunpack.c.l.b16 %v5296
  %v6304 = vunpack.c.h.b16 %v5296
  %v6305 = vunpack.c.l.b16 %v5297
  %v6306 = vunpack.c.l.b16 %v5298
  %v6307 = vunpack.c.h.b16 %v5298
  %v6308 = vunpack.c.l.b16 %v5299
  %v6309 = vunpack.c.h.b16 %v5299
  %v6310 = vunpack.c.l.b16 %v5300
  %v6311 = vunpack.c.h.b16 %v5300
  %v6312 = vunpack.c.l.b16 %v5301
  %v6313 = vunpack.c.h.b16 %v5301
  %v6314 = vunpack.c.l.b16 %v5302
  %v6315 = vunpack.c.l.b16 %v5303
  %v6316 = vunpack.c.h.b16 %v5303
  %v6317 = vunpack.c.l.b16 %v5304
  %v6318 = vunpack.c.h.b16 %v5304
  %v6319 = vunpack.c.l.b16 %v5305
  %v6320 = vunpack.c.h.b16 %v5305
  %v6321 = vunpack.c.l.b16 %v5306
  %v6322 = vunpack.c.h.b16 %v5306
  %v6323 = vunpack.c.l.b16 %v5307
  %v6324 = vunpack.c.l.b16 %v5308
  %v6325 = vunpack.c.h.b16 %v5308
  %v6326 = vunpack.c.l.b16 %v5309
  %v6327 = vunpack.c.h.b16 %v5309
  %v6328 = vunpack.c.l.b16 %v5310
  %v6329 = vunpack.c.h.b16 %v5310
  %v6330 = vunpack.c.l.b16 %v5311
  %v6331 = vunpack.c.h.b16 %v5311
  %v6332 = vunpack.c.l.b16 %v5312
  %v6333 = vunpack.c.l.b16 %v5313
  %v6334 = vunpack.c.h.b16 %v5313
  %v6335 = vunpack.c.l.b16 %v5314
  %v6336 = vunpack.c.h.b16 %v5314
  %v6337 = vunpack.c.l.b16 %v5315
  %v6338 = vunpack.c.h.b16 %v5315
  %v6339 = vunpack.c.l.b16 %v5316
  %v6340 = vunpack.c.h.b16 %v5316
  %v6341 = vunpack.c.l.b16 %v5317
  %v6342 = vunpack.c.l.b16 %v5318
  %v6343 = vunpack.c.h.b16 %v5318
  %v6344 = vunpack.c.l.b16 %v5319
  %v6345 = vunpack.c.h.b16 %v5319
  %v6346 = vunpack.c.l.b16 %v5320
  %v6347 = vunpack.c.h.b16 %v5320
  %v6348 = vunpack.c.l.b16 %v5321
  %v6349 = vunpack.c.h.b16 %v5321
  %v6350 = vunpack.c.l.b16 %v5322
  %v6351 = vunpack.c.l.b16 %v5323
  %v6352 = vunpack.c.h.b16 %v5323
  %v6353 = vunpack.c.l.b16 %v5324
  %v6354 = vunpack.c.h.b16 %v5324
  %v6355 = vunpack.c.l.b16 %v5325
  %v6356 = vunpack.c.h.b16 %v5325
  %v6357 = vunpack.c.l.b16 %v5326
  %v6358 = vunpack.c.h.b16 %v5326
  %v6359 = vunpack.c.l.b16 %v5327
  %v6360 = vunpack.c.l.b16 %v5328
  %v6361 = vunpack.c.h.b16 %v5328
  %v6362 = vunpack.c.l.b16 %v5329
  %v6363 = vunpack.c.h.b16 %v5329
  %v6364 = vunpack.c.l.b16 %v5330
  %v6365 = vunpack.c.h.b16 %v5330
  %v6366 = vunpack.c.l.b16 %v5331
  %v6367 = vunpack.c.h.b16 %v5331
  %v6368 = vunpack.c.l.b16 %v5332
  %v6369 = vunpack.c.l.b16 %v5333
  %v6370 = vunpack.c.h.b16 %v5333
  %v6371 = vunpack.c.l.b16 %v5334
  %v6372 = vunpack.c.h.b16 %v5334
  %v6373 = vunpack.c.l.b16 %v5335
  %v6374 = vunpack.c.h.b16 %v5335
  %v6375 = vunpack.c.l.b16 %v5336
  %v6376 = vunpack.c.h.b16 %v5336
  %v6377 = vunpack.c.l.b16 %v5337
  %v6378 = vpack.c.b16 %v5811, %v5802
  %v6379 = vpack.c.b16 %v5812, %v5803
  %v6380 = vpack.c.b16 %v5813, %v5804
  %v6381 = vpack.c.b16 %v5814, %v5805
  %v6382 = vpack.c.b16 %v5815, %v5806
  %v6383 = vpack.c.b16 %v5816, %v5807
  %v6384 = vpack.c.b16 %v5817, %v5808
  %v6385 = vpack.c.b16 %v5818, %v5809
  %v6386 = vpack.c.b16 %v5819, %v5810
  %v6387 = vpack.c.b16 %v5829, %v5820
  %v6388 = vpack.c.b16 %v5830, %v5821
  %v6389 = vpack.c.b16 %v5831, %v5822
  %v6390 = vpack.c.b16 %v5832, %v5823
  %v6391 = vpack.c.b16 %v5833, %v5824
  %v6392 = vpack.c.b16 %v5834, %v5825
  %v6393 = vpack.c.b16 %v5835, %v5826
  %v6394 = vpack.c.b16 %v5836, %v5827
  %v6395 = vpack.c.b16 %v5837, %v5828
  %v6396 = vpack.c.b16 %v5847, %v5838
  %v6397 = vpack.c.b16 %v5848, %v5839
  %v6398 = vpack.c.b16 %v5849, %v5840
  %v6399 = vpack.c.b16 %v5850, %v5841
  %v6400 = vpack.c.b16 %v5851, %v5842
  %v6401 = vpack.c.b16 %v5852, %v5843
  %v6402 = vpack.c.b16 %v5853, %v5844
  %v6403 = vpack.c.b16 %v5854, %v5845
  %v6404 = vpack.c.b16 %v5855, %v5846
  %v6405 = vpack.c.b16 %v5865, %v5856
  %v6406 = vpack.c.b16 %v5866, %v5857
  %v6407 = vpack.c.b16 %v5867, %v5858
  %v6408 = vpack.c.b16 %v5868, %v5859
  %v6409 = vpack.c.b16 %v5869, %v5860
  %v6410 = vpack.c.b16 %v5870, %v5861
  %v6411 = vpack.c.b16 %v5871, %v5862
  %v6412 = vpack.c.b16 %v5872, %v5863
  %v6413 = vpack.c.b16 %v5873, %v5864
  %v6414 = vpack.c.b16 %v5883, %v5874
  %v6415 = vpack.c.b16 %v5884, %v5875
  %v6416 = vpack.c.b16 %v5885, %v5876
  %v6417 = vpack.c.b16 %v5886, %v5877
  %v6418 = vpack.c.b16 %v5887, %v5878
  %v6419 = vpack.c.b16 %v5888, %v5879
  %v6420 = vpack.c.b16 %v5889, %v5880
  %v6421 = vpack.c.b16 %v5890, %v5881
  %v6422 = vpack.c.b16 %v5891, %v5882
  %v6423 = vpack.c.b16 %v5901, %v5892
  %v6424 = vpack.c.b16 %v5902, %v5893
  %v6425 = vpack.c.b16 %v5903, %v5894
  %v6426 = vpack.c.b16 %v5904, %v5895
  %v6427 = vpack.c.b16 %v5905, %v5896
  %v6428 = vpack.c.b16 %v5906, %v5897
  %v6429 = vpack.c.b16 %v5907, %v5898
  %v6430 = vpack.c.b16 %v5908, %v5899
  %v6431 = vpack.c.b16 %v5909, %v5900
  %v6432 = vpack.c.b16 %v5919, %v5910
  %v6433 = vpack.c.b16 %v5920, %v5911
  %v6434 = vpack.c.b16 %v5921, %v5912
  %v6435 = vpack.c.b16 %v5922, %v5913
  %v6436 = vpack.c.b16 %v5923, %v5914
  %v6437 = vpack.c.b16 %v5924, %v5915
  %v6438 = vpack.c.b16 %v5925, %v5916
  %v6439 = vpack.c.b16 %v5926, %v5917
  %v6440 = vpack.c.b16 %v5927, %v5918
  %v6441 = vpack.c.b16 %v5937, %v5928
  %v6442 = vpack.c.b16 %v5938, %v5929
  %v6443 = vpack.c.b16 %v5939, %v5930
  %v6444 = vpack.c.b16 %v5940, %v5931
  %v6445 = vpack.c.b16 %v5941, %v5932
  %v6446 = vpack.c.b16 %v5942, %v5933
  %v6447 = vpack.c.b16 %v5943, %v5934
  %v6448 = vpack.c.b16 %v5944, %v5935
  %v6449 = vpack.c.b16 %v5945, %v5936
  %v6450 = vpack.c.b16 %v5955, %v5946
  %v6451 = vpack.c.b16 %v5956, %v5947
  %v6452 = vpack.c.b16 %v5957, %v5948
  %v6453 = vpack.c.b16 %v5958, %v5949
  %v6454 = vpack.c.b16 %v5959, %v5950
  %v6455 = vpack.c.b16 %v5960, %v5951
  %v6456 = vpack.c.b16 %v5961, %v5952
  %v6457 = vpack.c.b16 %v5962, %v5953
  %v6458 = vpack.c.b16 %v5963, %v5954
  %v6459 = vpack.c.b16 %v5973, %v5964
  %v6460 = vpack.c.b16 %v5974, %v5965
  %v6461 = vpack.c.b16 %v5975, %v5966
  %v6462 = vpack.c.b16 %v5976, %v5967
  %v6463 = vpack.c.b16 %v5977, %v5968
  %v6464 = vpack.c.b16 %v5978, %v5969
  %v6465 = vpack.c.b16 %v5979, %v5970
  %v6466 = vpack.c.b16 %v5980, %v5971
  %v6467 = vpack.c.b16 %v5981, %v5972
  %v6468 = vpack.c.b16 %v5991, %v5982
  %v6469 = vpack.c.b16 %v5992, %v5983
  %v6470 = vpack.c.b16 %v5993, %v5984
  %v6471 = vpack.c.b16 %v5994, %v5985
  %v6472 = vpack.c.b16 %v5995, %v5986
  %v6473 = vpack.c.b16 %v5996, %v5987
  %v6474 = vpack.c.b16 %v5997, %v5988
  %v6475 = vpack.c.b16 %v5998, %v5989
  %v6476 = vpack.c.b16 %v5999, %v5990
  %v6477 = vpack.c.b16 %v6009, %v6000
  %v6478 = vpack.c.b16 %v6010, %v6001
  %v6479 = vpack.c.b16 %v6011, %v6002
  %v6480 = vpack.c.b16 %v6012, %v6003
  %v6481 = vpack.c.b16 %v6013, %v6004
  %v6482 = vpack.c.b16 %v6014, %v6005
  %v6483 = vpack.c.b16 %v6015, %v6006
  %v6484 = vpack.c.b16 %v6016, %v6007
  %v6485 = vpack.c.b16 %v6017, %v6008
  %v6486 = vpack.c.b16 %v6027, %v6018
  %v6487 = vpack.c.b16 %v6028, %v6019
  %v6488 = vpack.c.b16 %v6029, %v6020
  %v6489 = vpack.c.b16 %v6030, %v6021
  %v6490 = vpack.c.b16 %v6031, %v6022
  %v6491 = vpack.c.b16 %v6032, %v6023
  %v6492 = vpack.c.b16 %v6033, %v6024
  %v6493 = vpack.c.b16 %v6034, %v6025
  %v6494 = vpack.c.b16 %v6035, %v6026
  %v6495 = vpack.c.b16 %v6045, %v6036
  %v6496 = vpack.c.b16 %v6046, %v6037
  %v6497 = vpack.c.b16 %v6047, %v6038
  %v6498 = vpack.c.b16 %v6048, %v6039
  %v6499 = vpack.c.b16 %v6049, %v6040
  %v6500 = vpack.c.b16 %v6050, %v6041
  %v6501 = vpack.c.b16 %v6051, %v6042
  %v6502 = vpack.c.b16 %v6052, %v6043
  %v6503 = vpack.c.b16 %v6053, %v6044
  %v6504 = vpack.c.b16 %v6063, %v6054
  %v6505 = vpack.c.b16 %v6064, %v6055
  %v6506 = vpack.c.b16 %v6065, %v6056
  %v6507 = vpack.c.b16 %v6066, %v6057
  %v6508 = vpack.c.b16 %v6067, %v6058
  %v6509 = vpack.c.b16 %v6068, %v6059
  %v6510 = vpack.c.b16 %v6069, %v6060
  %v6511 = vpack.c.b16 %v6070, %v6061
  %v6512 = vpack.c.b16 %v6071, %v6062
  %v6513 = vpack.c.b16 %v6081, %v6072
  %v6514 = vpack.c.b16 %v6082, %v6073
  %v6515 = vpack.c.b16 %v6083, %v6074
  %v6516 = vpack.c.b16 %v6084, %v6075
  %v6517 = vpack.c.b16 %v6085, %v6076
  %v6518 = vpack.c.b16 %v6086, %v6077
  %v6519 = vpack.c.b16 %v6087, %v6078
  %v6520 = vpack.c.b16 %v6088, %v6079
  %v6521 = vpack.c.b16 %v6089, %v6080
  %v6522 = vpack.c.b16 %v6099, %v6090
  %v6523 = vpack.c.b16 %v6100, %v6091
  %v6524 = vpack.c.b16 %v6101, %v6092
  %v6525 = vpack.c.b16 %v6102, %v6093
  %v6526 = vpack.c.b16 %v6103, %v6094
  %v6527 = vpack.c.b16 %v6104, %v6095
  %v6528 = vpack.c.b16 %v6105, %v6096
  %v6529 = vpack.c.b16 %v6106, %v6097
  %v6530 = vpack.c.b16 %v6107, %v6098
  %v6531 = vpack.c.b16 %v6117, %v6108
  %v6532 = vpack.c.b16 %v6118, %v6109
  %v6533 = vpack.c.b16 %v6119, %v6110
  %v6534 = vpack.c.b16 %v6120, %v6111
  %v6535 = vpack.c.b16 %v6121, %v6112
  %v6536 = vpack.c.b16 %v6122, %v6113
  %v6537 = vpack.c.b16 %v6123, %v6114
  %v6538 = vpack.c.b16 %v6124, %v6115
  %v6539 = vpack.c.b16 %v6125, %v6116
  %v6540 = vpack.c.b16 %v6135, %v6126
  %v6541 = vpack.c.b16 %v6136, %v6127
  %v6542 = vpack.c.b16 %v6137, %v6128
  %v6543 = vpack.c.b16 %v6138, %v6129
  %v6544 = vpack.c.b16 %v6139, %v6130
  %v6545 = vpack.c.b16 %v6140, %v6131
  %v6546 = vpack.c.b16 %v6141, %v6132
  %v6547 = vpack.c.b16 %v6142, %v6133
  %v6548 = vpack.c.b16 %v6143, %v6134
  %v6549 = vpack.c.b16 %v6153, %v6144
  %v6550 = vpack.c.b16 %v6154, %v6145
  %v6551 = vpack.c.b16 %v6155, %v6146
  %v6552 = vpack.c.b16 %v6156, %v6147
  %v6553 = vpack.c.b16 %v6157, %v6148
  %v6554 = vpack.c.b16 %v6158, %v6149
  %v6555 = vpack.c.b16 %v6159, %v6150
  %v6556 = vpack.c.b16 %v6160, %v6151
  %v6557 = vpack.c.b16 %v6161, %v6152
  %v6558 = vpack.c.b16 %v6171, %v6162
  %v6559 = vpack.c.b16 %v6172, %v6163
  %v6560 = vpack.c.b16 %v6173, %v6164
  %v6561 = vpack.c.b16 %v6174, %v6165
  %v6562 = vpack.c.b16 %v6175, %v6166
  %v6563 = vpack.c.b16 %v6176, %v6167
  %v6564 = vpack.c.b16 %v6177, %v6168
  %v6565 = vpack.c.b16 %v6178, %v6169
  %v6566 = vpack.c.b16 %v6179, %v6170
  %v6567 = vpack.c.b16 %v6189, %v6180
  %v6568 = vpack.c.b16 %v6190, %v6181
  %v6569 = vpack.c.b16 %v6191, %v6182
  %v6570 = vpack.c.b16 %v6192, %v6183
  %v6571 = vpack.c.b16 %v6193, %v6184
  %v6572 = vpack.c.b16 %v6194, %v6185
  %v6573 = vpack.c.b16 %v6195, %v6186
  %v6574 = vpack.c.b16 %v6196, %v6187
  %v6575 = vpack.c.b16 %v6197, %v6188
  %v6576 = vpack.c.b16 %v6207, %v6198
  %v6577 = vpack.c.b16 %v6208, %v6199
  %v6578 = vpack.c.b16 %v6209, %v6200
  %v6579 = vpack.c.b16 %v6210, %v6201
  %v6580 = vpack.c.b16 %v6211, %v6202
  %v6581 = vpack.c.b16 %v6212, %v6203
  %v6582 = vpack.c.b16 %v6213, %v6204
  %v6583 = vpack.c.b16 %v6214, %v6205
  %v6584 = vpack.c.b16 %v6215, %v6206
  %v6585 = vpack.c.b16 %v6225, %v6216
  %v6586 = vpack.c.b16 %v6226, %v6217
  %v6587 = vpack.c.b16 %v6227, %v6218
  %v6588 = vpack.c.b16 %v6228, %v6219
  %v6589 = vpack.c.b16 %v6229, %v6220
  %v6590 = vpack.c.b16 %v6230, %v6221
  %v6591 = vpack.c.b16 %v6231, %v6222
  %v6592 = vpack.c.b16 %v6232, %v6223
  %v6593 = vpack.c.b16 %v6233, %v6224
  %v6594 = vpack.c.b16 %v6243, %v6234
  %v6595 = vpack.c.b16 %v6244, %v6235
  %v6596 = vpack.c.b16 %v6245, %v6236
  %v6597 = vpack.c.b16 %v6246, %v6237
  %v6598 = vpack.c.b16 %v6247, %v6238
  %v6599 = vpack.c.b16 %v6248, %v6239
  %v6600 = vpack.c.b16 %v6249, %v6240
  %v6601 = vpack.c.b16 %v6250, %v6241
  %v6602 = vpack.c.b16 %v6251, %v6242
  %v6603 = vpack.c.b16 %v6261, %v6252
  %v6604 = vpack.c.b16 %v6262, %v6253
  %v6605 = vpack.c.b16 %v6263, %v6254
  %v6606 = vpack.c.b16 %v6264, %v6255
  %v6607 = vpack.c.b16 %v6265, %v6256
  %v6608 = vpack.c.b16 %v6266, %v6257
  %v6609 = vpack.c.b16 %v6267, %v6258
  %v6610 = vpack.c.b16 %v6268, %v6259
  %v6611 = vpack.c.b16 %v6269, %v6260
  %v6612 = vpack.c.b16 %v6279, %v6270
  %v6613 = vpack.c.b16 %v6280, %v6271
  %v6614 = vpack.c.b16 %v6281, %v6272
  %v6615 = vpack.c.b16 %v6282, %v6273
  %v6616 = vpack.c.b16 %v6283, %v6274
  %v6617 = vpack.c.b16 %v6284, %v6275
  %v6618 = vpack.c.b16 %v6285, %v6276
  %v6619 = vpack.c.b16 %v6286, %v6277
  %v6620 = vpack.c.b16 %v6287, %v6278
  %v6621 = vpack.c.b16 %v6297, %v6288
  %v6622 = vpack.c.b16 %v6298, %v6289
  %v6623 = vpack.c.b16 %v6299, %v6290
  %v6624 = vpack.c.b16 %v6300, %v6291
  %v6625 = vpack.c.b16 %v6301, %v6292
  %v6626 = vpack.c.b16 %v6302, %v6293
  %v6627 = vpack.c.b16 %v6303, %v6294
  %v6628 = vpack.c.b16 %v6304, %v6295
  %v6629 = vpack.c.b16 %v6305, %v6296
  %v6630 = vpack.c.b16 %v6315, %v6306
  %v6631 = vpack.c.b16 %v6316, %v6307
  %v6632 = vpack.c.b16 %v6317, %v6308
  %v6633 = vpack.c.b16 %v6318, %v6309
  %v6634 = vpack.c.b16 %v6319, %v6310
  %v6635 = vpack.c.b16 %v6320, %v6311
  %v6636 = vpack.c.b16 %v6321, %v6312
  %v6637 = vpack.c.b16 %v6322, %v6313
  %v6638 = vpack.c.b16 %v6323, %v6314
  %v6639 = vpack.c.b16 %v6333, %v6324
  %v6640 = vpack.c.b16 %v6334, %v6325
  %v6641 = vpack.c.b16 %v6335, %v6326
  %v6642 = vpack.c.b16 %v6336, %v6327
  %v6643 = vpack.c.b16 %v6337, %v6328
  %v6644 = vpack.c.b16 %v6338, %v6329
  %v6645 = vpack.c.b16 %v6339, %v6330
  %v6646 = vpack.c.b16 %v6340, %v6331
  %v6647 = vpack.c.b16 %v6341, %v6332
  %v6648 = vpack.c.b16 %v6351, %v6342
  %v6649 = vpack.c.b16 %v6352, %v6343
  %v6650 = vpack.c.b16 %v6353, %v6344
  %v6651 = vpack.c.b16 %v6354, %v6345
  %v6652 = vpack.c.b16 %v6355, %v6346
  %v6653 = vpack.c.b16 %v6356, %v6347
  %v6654 = vpack.c.b16 %v6357, %v6348
  %v6655 = vpack.c.b16 %v6358, %v6349
  %v6656 = vpack.c.b16 %v6359, %v6350
  %v6657 = vpack.c.b16 %v6369, %v6360
  %v6658 = vpack.c.b16 %v6370, %v6361
  %v6659 = vpack.c.b16 %v6371, %v6362
  %v6660 = vpack.c.b16 %v6372, %v6363
  %v6661 = vpack.c.b16 %v6373, %v6364
  %v6662 = vpack.c.b16 %v6374, %v6365
  %v6663 = vpack.c.b16 %v6375, %v6366
  %v6664 = vpack.c.b16 %v6376, %v6367
  %v6665 = vpack.c.b16 %v6377, %v6368
  %v7098 = vunpack.c.l.b16 %v5338
  %v7099 = vunpack.c.l.b16 %v5339
  %v7100 = vunpack.c.l.b16 %v5340
  %v7101 = vunpack.c.l.b16 %v5341
  %v7102 = vunpack.c.l.b16 %v5342
  %v7103 = vunpack.c.l.b16 %v5343
  %v7104 = vunpack.c.l.b16 %v5344
  %v7105 = vunpack.c.l.b16 %v5345
  %v7106 = vunpack.c.l.b16 %v5346
  %v7107 = vunpack.c.l.b16 %v5347
  %v7108 = vunpack.c.l.b16 %v5348
  %v7109 = vunpack.c.l.b16 %v5349
  %v7110 = vunpack.c.l.b16 %v5350
  %v7111 = vunpack.c.l.b16 %v5351
  %v7112 = vunpack.c.l.b16 %v5352
  %v7113 = vunpack.c.l.b16 %v5353
  %v7114 = vunpack.c.l.b16 %v5354
  %v7115 = vunpack.c.l.b16 %v5355
  %v7116 = vunpack.c.l.b16 %v5356
  %v7117 = vunpack.c.l.b16 %v5357
  %v7118 = vunpack.c.l.b16 %v5358
  %v7119 = vunpack.c.l.b16 %v5359
  %v7120 = vunpack.c.l.b16 %v5360
  %v7121 = vunpack.c.l.b16 %v5361
  %v7122 = vunpack.c.l.b16 %v5362
  %v7123 = vunpack.c.l.b16 %v5363
  %v7124 = vunpack.c.l.b16 %v5364
  %v7125 = vunpack.c.l.b16 %v5365
  %v7126 = vunpack.c.l.b16 %v5366
  %v7127 = vunpack.c.l.b16 %v5367
  %v7128 = vunpack.c.l.b16 %v5368
  %v7129 = vunpack.c.l.b16 %v5369
  %v7130 = vunpack.c.l.b16 %v5370
  %v7131 = vunpack.c.l.b16 %v5371
  %v7132 = vunpack.c.l.b16 %v5372
  %v7133 = vunpack.c.l.b16 %v5373
  %v7134 = vunpack.c.l.b16 %v5374
  %v7135 = vunpack.c.l.b16 %v5375
  %v7136 = vunpack.c.l.b16 %v5376
  %v7137 = vunpack.c.l.b16 %v5377
  %v7138 = vunpack.c.l.b16 %v5378
  %v7139 = vunpack.c.l.b16 %v5379
  %v7140 = vunpack.c.l.b16 %v5380
  %v7141 = vunpack.c.l.b16 %v5381
  %v7142 = vunpack.c.l.b16 %v5382
  %v7143 = vunpack.c.l.b16 %v5383
  %v7144 = vunpack.c.l.b16 %v5384
  %v7145 = vunpack.c.l.b16 %v5385
  %v7146 = vunpack.c.l.b16 %v5386
  %v7147 = vunpack.c.l.b16 %v5387
  %v7148 = vunpack.c.l.b16 %v5388
  %v7149 = vunpack.c.l.b16 %v5389
  %v7150 = vunpack.c.l.b16 %v5390
  %v7151 = vunpack.c.l.b16 %v5391
  %v7152 = vunpack.c.l.b16 %v5392
  %v7153 = vunpack.c.l.b16 %v5393
  %v7154 = vunpack.c.l.b16 %v5394
  %v7155 = vunpack.c.l.b16 %v5395
  %v7156 = vunpack.c.l.b16 %v5396
  %v7157 = vunpack.c.l.b16 %v5397
  %v7158 = vunpack.c.l.b16 %v5398
  %v7159 = vunpack.c.l.b16 %v5399
  %v7160 = vunpack.c.l.b16 %v5400
  %v7161 = vunpack.c.l.b16 %v5401
  %v7162 = vunpack.c.l.b16 %v5402
  %v7163 = vunpack.c.l.b16 %v5403
  %v7164 = vunpack.c.l.b16 %v5404
  %v7165 = vunpack.c.l.b16 %v5405
  %v7166 = vunpack.c.l.b16 %v5406
  %v7167 = vunpack.c.l.b16 %v5407
  %v7168 = vunpack.c.l.b16 %v5408
  %v7169 = vunpack.c.l.b16 %v5409
  %v7170 = vunpack.c.l.b16 %v5410
  %v7171 = vunpack.c.l.b16 %v5411
  %v7172 = vunpack.c.l.b16 %v5412
  %v7173 = vunpack.c.l.b16 %v5413
  %v7174 = vunpack.c.l.b16 %v5414
  %v7175 = vunpack.c.l.b16 %v5415
  %v7176 = vunpack.c.l.b16 %v5416
  %v7177 = vunpack.c.l.b16 %v5417
  %v7178 = vunpack.c.l.b16 %v5418
  %v7179 = vunpack.c.l.b16 %v5419
  %v7180 = vunpack.c.l.b16 %v5420
  %v7181 = vunpack.c.l.b16 %v5421
  %v7182 = vunpack.c.l.b16 %v5422
  %v7183 = vunpack.c.l.b16 %v5423
  %v7184 = vunpack.c.l.b16 %v5424
  %v7185 = vunpack.c.l.b16 %v5425
  %v7186 = vunpack.c.l.b16 %v5426
  %v7187 = vunpack.c.l.b16 %v5427
  %v7188 = vunpack.c.l.b16 %v5428
  %v7189 = vunpack.c.l.b16 %v5429
  %v7190 = vunpack.c.l.b16 %v5430
  %v7191 = vunpack.c.l.b16 %v5431
  %v7192 = vunpack.c.l.b16 %v5432
  %v7193 = vunpack.c.l.b16 %v5433
  %v7194 = vunpack.c.l.b16 %v5434
  %v7195 = vunpack.c.l.b16 %v5435
  %v7196 = vunpack.c.l.b16 %v5436
  %v7197 = vunpack.c.l.b16 %v5437
  %v7198 = vunpack.c.l.b16 %v5438
  %v7199 = vunpack.c.l.b16 %v5439
  %v7200 = vunpack.c.l.b16 %v5440
  %v7201 = vunpack.c.l.b16 %v5441
  %v7202 = vunpack.c.l.b16 %v5442
  %v7203 = vunpack.c.l.b16 %v5443
  %v7204 = vunpack.c.l.b16 %v5444
  %v7205 = vunpack.c.l.b16 %v5445
  %v7206 = vunpack.c.l.b16 %v5446
  %v7207 = vunpack.c.l.b16 %v5447
  %v7208 = vunpack.c.l.b16 %v5448
  %v7209 = vunpack.c.l.b16 %v5449
  %v7210 = vunpack.c.l.b16 %v5450
  %v7211 = vunpack.c.l.b16 %v5451
  %v7212 = vunpack.c.l.b16 %v5452
  %v7213 = vunpack.c.l.b16 %v5453
  %v7214 = vunpack.c.l.b16 %v5454
  %v7215 = vunpack.c.l.b16 %v5455
  %v7216 = vunpack.c.l.b16 %v5456
  %v7217 = vunpack.c.l.b16 %v5457
  %v7218 = vunpack.c.l.b16 %v5458
  %v7219 = vunpack.c.l.b16 %v5459
  %v7220 = vunpack.c.l.b16 %v5460
  %v7221 = vunpack.c.l.b16 %v5461
  %v7222 = vunpack.c.l.b16 %v5462
  %v7223 = vunpack.c.l.b16 %v5463
  %v7224 = vunpack.c.l.b16 %v5464
  %v7225 = vunpack.c.l.b16 %v5465
  %v7226 = vunpack.c.l.b16 %v5466
  %v7227 = vunpack.c.l.b16 %v5467
  %v7228 = vunpack.c.l.b16 %v5468
  %v7229 = vunpack.c.l.b16 %v5469
  %v7230 = vunpack.c.l.b16 %v5470
  %v7231 = vunpack.c.l.b16 %v5471
  %v7232 = vunpack.c.l.b16 %v5472
  %v7233 = vunpack.c.l.b16 %v5473
  %v7234 = vunpack.c.l.b16 %v5474
  %v7235 = vunpack.c.l.b16 %v5475
  %v7236 = vunpack.c.l.b16 %v5476
  %v7237 = vunpack.c.l.b16 %v5477
  %v7238 = vunpack.c.l.b16 %v5478
  %v7239 = vunpack.c.l.b16 %v5479
  %v7240 = vunpack.c.l.b16 %v5480
  %v7241 = vunpack.c.l.b16 %v5481
  %v7242 = vpack.c.b16 %v7099, %v7098
  %v7243 = vpack.c.b16 %v7101, %v7100
  %v7244 = vpack.c.b16 %v7103, %v7102
  %v7245 = vpack.c.b16 %v7105, %v7104
  %v7246 = vpack.c.b16 %v7107, %v7106
  %v7247 = vpack.c.b16 %v7109, %v7108
  %v7248 = vpack.c.b16 %v7111, %v7110
  %v7249 = vpack.c.b16 %v7113, %v7112
  %v7250 = vpack.c.b16 %v7115, %v7114
  %v7251 = vpack.c.b16 %v7117, %v7116
  %v7252 = vpack.c.b16 %v7119, %v7118
  %v7253 = vpack.c.b16 %v7121, %v7120
  %v7254 = vpack.c.b16 %v7123, %v7122
  %v7255 = vpack.c.b16 %v7125, %v7124
  %v7256 = vpack.c.b16 %v7127, %v7126
  %v7257 = vpack.c.b16 %v7129, %v7128
  %v7258 = vpack.c.b16 %v7131, %v7130
  %v7259 = vpack.c.b16 %v7133, %v7132
  %v7260 = vpack.c.b16 %v7135, %v7134
  %v7261 = vpack.c.b16 %v7137, %v7136
  %v7262 = vpack.c.b16 %v7139, %v7138
  %v7263 = vpack.c.b16 %v7141, %v7140
  %v7264 = vpack.c.b16 %v7143, %v7142
  %v7265 = vpack.c.b16 %v7145, %v7144
  %v7266 = vpack.c.b16 %v7147, %v7146
  %v7267 = vpack.c.b16 %v7149, %v7148
  %v7268 = vpack.c.b16 %v7151, %v7150
  %v7269 = vpack.c.b16 %v7153, %v7152
  %v7270 = vpack.c.b16 %v7155, %v7154
  %v7271 = vpack.c.b16 %v7157, %v7156
  %v7272 = vpack.c.b16 %v7159, %v7158
  %v7273 = vpack.c.b16 %v7161, %v7160
  %v7274 = vpack.c.b16 %v7163, %v7162
  %v7275 = vpack.c.b16 %v7165, %v7164
  %v7276 = vpack.c.b16 %v7167, %v7166
  %v7277 = vpack.c.b16 %v7169, %v7168
  %v7278 = vpack.c.b16 %v7171, %v7170
  %v7279 = vpack.c.b16 %v7173, %v7172
  %v7280 = vpack.c.b16 %v7175, %v7174
  %v7281 = vpack.c.b16 %v7177, %v7176
  %v7282 = vpack.c.b16 %v7179, %v7178
  %v7283 = vpack.c.b16 %v7181, %v7180
  %v7284 = vpack.c.b16 %v7183, %v7182
  %v7285 = vpack.c.b16 %v7185, %v7184
  %v7286 = vpack.c.b16 %v7187, %v7186
  %v7287 = vpack.c.b16 %v7189, %v7188
  %v7288 = vpack.c.b16 %v7191, %v7190
  %v7289 = vpack.c.b16 %v7193, %v7192
  %v7290 = vpack.c.b16 %v7195, %v7194
  %v7291 = vpack.c.b16 %v7197, %v7196
  %v7292 = vpack.c.b16 %v7199, %v7198
  %v7293 = vpack.c.b16 %v7201, %v7200
  %v7294 = vpack.c.b16 %v7203, %v7202
  %v7295 = vpack.c.b16 %v7205, %v7204
  %v7296 = vpack.c.b16 %v7207, %v7206
  %v7297 = vpack.c.b16 %v7209, %v7208
  %v7298 = vpack.c.b16 %v7211, %v7210
  %v7299 = vpack.c.b16 %v7213, %v7212
  %v7300 = vpack.c.b16 %v7215, %v7214
  %v7301 = vpack.c.b16 %v7217, %v7216
  %v7302 = vpack.c.b16 %v7219, %v7218
  %v7303 = vpack.c.b16 %v7221, %v7220
  %v7304 = vpack.c.b16 %v7223, %v7222
  %v7305 = vpack.c.b16 %v7225, %v7224
  %v7306 = vpack.c.b16 %v7227, %v7226
  %v7307 = vpack.c.b16 %v7229, %v7228
  %v7308 = vpack.c.b16 %v7231, %v7230
  %v7309 = vpack.c.b16 %v7233, %v7232
  %v7310 = vpack.c.b16 %v7235, %v7234
  %v7311 = vpack.c.b16 %v7237, %v7236
  %v7312 = vpack.c.b16 %v7239, %v7238
  %v7313 = vpack.c.b16 %v7241, %v7240
  %7386 = vmatprep.subr.bf16.mxu0 0
  %7387 = vmatpush1.bf16.msra.mxu0 %v7249
  %7388 = vmatprep.subr.bf16.mxu0 0
  %7389 = vmatpush1.bf16.msra.mxu0 %v7248
  %7390 = vmatprep.subr.bf16.mxu0 0
  %7391 = vmatpush1.bf16.msra.mxu0 %v7247
  %7392 = vmatprep.subr.bf16.mxu0 0
  %7393 = vmatpush1.bf16.msra.mxu0 %v7246
  %7394 = vmatprep.subr.bf16.mxu0 0
  %7395 = vmatpush1.bf16.msra.mxu0 %v7245
  %7396 = vmatprep.subr.bf16.mxu0 0
  %7397 = vmatpush1.bf16.msra.mxu0 %v7244
  %7398 = vmatprep.subr.bf16.mxu0 0
  %7399 = vmatpush1.bf16.msra.mxu0 %v7243
  %7400 = vmatprep.subr.bf16.mxu0 0
  %7401 = vmatpush1.bf16.msra.mxu0 %v7242
  %7402 = vmatprep.subr.bf16.mxu0 0
  %7403 = vmatpush2.bf16.msra.mxu0 %v7257
  %7404 = vmatprep.subr.bf16.mxu0 0
  %7405 = vmatpush2.bf16.msra.mxu0 %v7256
  %7406 = vmatprep.subr.bf16.mxu0 0
  %7407 = vmatpush2.bf16.msra.mxu0 %v7255
  %7408 = vmatprep.subr.bf16.mxu0 0
  %7409 = vmatpush2.bf16.msra.mxu0 %v7254
  %7410 = vmatprep.subr.bf16.mxu0 0
  %7411 = vmatpush2.bf16.msra.mxu0 %v7253
  %7412 = vmatprep.subr.bf16.mxu0 0
  %7413 = vmatpush2.bf16.msra.mxu0 %v7252
  %7414 = vmatprep.subr.bf16.mxu0 0
  %7415 = vmatpush2.bf16.msra.mxu0 %v7251
  %7416 = vmatprep.subr.bf16.mxu0 0
  %7417 = vmatpush2.bf16.msra.mxu0 %v7250
  %7418 = vmatprep.mubr.bf16.mxu0 %v6379
  %7419 = vmatmul.mubr.bf16.gmra.mxu0 %v6378
  %v7420 = vpop.f32.mrf.mxu0
  %v7421 = vadd.f32 0.0, %v7420
  %v7422 = vpop.f32.mrf.mxu0
  %v7423 = vpop.f32.mrf.mxu0
  %v7424 = vadd.f32 0.0, %v7423
  %v7425 = vpop.f32.mrf.mxu0
  %7426 = vmatprep.mubr.bf16.mxu0 %v6388
  %7427 = vmatmul.mubr.bf16.gmra.mxu0 %v6387
  %v7428 = vpop.f32.mrf.mxu0
  %v7429 = vadd.f32 0.0, %v7428
  %v7430 = vpop.f32.mrf.mxu0
  %v7431 = vpop.f32.mrf.mxu0
  %v7432 = vadd.f32 0.0, %v7431
  %v7433 = vpop.f32.mrf.mxu0
  %7434 = vmatprep.mubr.bf16.mxu0 %v6397
  %7435 = vmatmul.mubr.bf16.gmra.mxu0 %v6396
  %v7436 = vpop.f32.mrf.mxu0
  %v7437 = vadd.f32 0.0, %v7436
  %v7438 = vpop.f32.mrf.mxu0
  %v7439 = vpop.f32.mrf.mxu0
  %v7440 = vadd.f32 0.0, %v7439
  %v7441 = vpop.f32.mrf.mxu0
  %7442 = vmatprep.mubr.bf16.mxu0 %v6406
  %7443 = vmatmul.mubr.bf16.gmra.mxu0 %v6405
  %v7444 = vpop.f32.mrf.mxu0
  %v7445 = vadd.f32 0.0, %v7444
  %v7446 = vpop.f32.mrf.mxu0
  %v7447 = vpop.f32.mrf.mxu0
  %v7448 = vadd.f32 0.0, %v7447
  %v7449 = vpop.f32.mrf.mxu0
  %7450 = vmatprep.mubr.bf16.mxu0 %v6415
  %7451 = vmatmul.mubr.bf16.gmra.mxu0 %v6414
  %v7452 = vpop.f32.mrf.mxu0
  %v7453 = vadd.f32 0.0, %v7452
  %v7454 = vpop.f32.mrf.mxu0
  %v7455 = vpop.f32.mrf.mxu0
  %v7456 = vadd.f32 0.0, %v7455
  %v7457 = vpop.f32.mrf.mxu0
  %7458 = vmatprep.mubr.bf16.mxu0 %v6424
  %7459 = vmatmul.mubr.bf16.gmra.mxu0 %v6423
  %v7460 = vpop.f32.mrf.mxu0
  %v7461 = vadd.f32 0.0, %v7460
  %v7462 = vpop.f32.mrf.mxu0
  %v7463 = vpop.f32.mrf.mxu0
  %v7464 = vadd.f32 0.0, %v7463
  %v7465 = vpop.f32.mrf.mxu0
  %7466 = vmatprep.mubr.bf16.mxu0 %v6433
  %7467 = vmatmul.mubr.bf16.gmra.mxu0 %v6432
  %v7468 = vpop.f32.mrf.mxu0
  %v7469 = vadd.f32 0.0, %v7468
  %v7470 = vpop.f32.mrf.mxu0
  %v7471 = vpop.f32.mrf.mxu0
  %v7472 = vadd.f32 0.0, %v7471
  %v7473 = vpop.f32.mrf.mxu0
  %7474 = vmatprep.mubr.bf16.mxu0 %v6442
  %7475 = vmatmul.mubr.bf16.gmra.mxu0 %v6441
  %v7476 = vpop.f32.mrf.mxu0
  %v7477 = vadd.f32 0.0, %v7476
  %v7478 = vpop.f32.mrf.mxu0
  %v7479 = vpop.f32.mrf.mxu0
  %v7480 = vadd.f32 0.0, %v7479
  %v7481 = vpop.f32.mrf.mxu0
  %7482 = vmatprep.mubr.bf16.mxu0 %v6451
  %7483 = vmatmul.mubr.bf16.gmra.mxu0 %v6450
  %v7484 = vpop.f32.mrf.mxu0
  %v7485 = vadd.f32 0.0, %v7484
  %v7486 = vpop.f32.mrf.mxu0
  %v7487 = vpop.f32.mrf.mxu0
  %v7488 = vadd.f32 0.0, %v7487
  %v7489 = vpop.f32.mrf.mxu0
  %7490 = vmatprep.mubr.bf16.mxu0 %v6460
  %7491 = vmatmul.mubr.bf16.gmra.mxu0 %v6459
  %v7492 = vpop.f32.mrf.mxu0
  %v7493 = vadd.f32 0.0, %v7492
  %v7494 = vpop.f32.mrf.mxu0
  %v7495 = vpop.f32.mrf.mxu0
  %v7496 = vadd.f32 0.0, %v7495
  %v7497 = vpop.f32.mrf.mxu0
  %7498 = vmatprep.mubr.bf16.mxu0 %v6469
  %7499 = vmatmul.mubr.bf16.gmra.mxu0 %v6468
  %v7500 = vpop.f32.mrf.mxu0
  %v7501 = vadd.f32 0.0, %v7500
  %v7502 = vpop.f32.mrf.mxu0
  %v7503 = vpop.f32.mrf.mxu0
  %v7504 = vadd.f32 0.0, %v7503
  %v7505 = vpop.f32.mrf.mxu0
  %7506 = vmatprep.mubr.bf16.mxu0 %v6478
  %7507 = vmatmul.mubr.bf16.gmra.mxu0 %v6477
  %v7508 = vpop.f32.mrf.mxu0
  %v7509 = vadd.f32 0.0, %v7508
  %v7510 = vpop.f32.mrf.mxu0
  %v7511 = vpop.f32.mrf.mxu0
  %v7512 = vadd.f32 0.0, %v7511
  %v7513 = vpop.f32.mrf.mxu0
  %7514 = vmatprep.mubr.bf16.mxu0 %v6487
  %7515 = vmatmul.mubr.bf16.gmra.mxu0 %v6486
  %v7516 = vpop.f32.mrf.mxu0
  %v7517 = vadd.f32 0.0, %v7516
  %v7518 = vpop.f32.mrf.mxu0
  %v7519 = vpop.f32.mrf.mxu0
  %v7520 = vadd.f32 0.0, %v7519
  %v7521 = vpop.f32.mrf.mxu0
  %7522 = vmatprep.mubr.bf16.mxu0 %v6496
  %7523 = vmatmul.mubr.bf16.gmra.mxu0 %v6495
  %v7524 = vpop.f32.mrf.mxu0
  %v7525 = vadd.f32 0.0, %v7524
  %v7526 = vpop.f32.mrf.mxu0
  %v7527 = vpop.f32.mrf.mxu0
  %v7528 = vadd.f32 0.0, %v7527
  %v7529 = vpop.f32.mrf.mxu0
  %7530 = vmatprep.mubr.bf16.mxu0 %v6505
  %7531 = vmatmul.mubr.bf16.gmra.mxu0 %v6504
  %v7532 = vpop.f32.mrf.mxu0
  %v7533 = vadd.f32 0.0, %v7532
  %v7534 = vpop.f32.mrf.mxu0
  %v7535 = vpop.f32.mrf.mxu0
  %v7536 = vadd.f32 0.0, %v7535
  %v7537 = vpop.f32.mrf.mxu0
  %7538 = vmatprep.mubr.bf16.mxu0 %v6514
  %7539 = vmatmul.mubr.bf16.gmra.mxu0 %v6513
  %v7540 = vpop.f32.mrf.mxu0
  %v7541 = vadd.f32 0.0, %v7540
  %v7542 = vpop.f32.mrf.mxu0
  %v7543 = vpop.f32.mrf.mxu0
  %v7544 = vadd.f32 0.0, %v7543
  %v7545 = vpop.f32.mrf.mxu0
  %7546 = vmatprep.mubr.bf16.mxu0 %v6523
  %7547 = vmatmul.mubr.bf16.gmra.mxu0 %v6522
  %v7548 = vpop.f32.mrf.mxu0
  %v7549 = vadd.f32 0.0, %v7548
  %v7550 = vpop.f32.mrf.mxu0
  %v7551 = vpop.f32.mrf.mxu0
  %v7552 = vadd.f32 0.0, %v7551
  %v7553 = vpop.f32.mrf.mxu0
  %7554 = vmatprep.mubr.bf16.mxu0 %v6532
  %7555 = vmatmul.mubr.bf16.gmra.mxu0 %v6531
  %v7556 = vpop.f32.mrf.mxu0
  %v7557 = vadd.f32 0.0, %v7556
  %v7558 = vpop.f32.mrf.mxu0
  %v7559 = vpop.f32.mrf.mxu0
  %v7560 = vadd.f32 0.0, %v7559
  %v7561 = vpop.f32.mrf.mxu0
  %7562 = vmatprep.mubr.bf16.mxu0 %v6541
  %7563 = vmatmul.mubr.bf16.gmra.mxu0 %v6540
  %v7564 = vpop.f32.mrf.mxu0
  %v7565 = vadd.f32 0.0, %v7564
  %v7566 = vpop.f32.mrf.mxu0
  %v7567 = vpop.f32.mrf.mxu0
  %v7568 = vadd.f32 0.0, %v7567
  %v7569 = vpop.f32.mrf.mxu0
  %7570 = vmatprep.mubr.bf16.mxu0 %v6550
  %7571 = vmatmul.mubr.bf16.gmra.mxu0 %v6549
  %v7572 = vpop.f32.mrf.mxu0
  %v7573 = vadd.f32 0.0, %v7572
  %v7574 = vpop.f32.mrf.mxu0
  %v7575 = vpop.f32.mrf.mxu0
  %v7576 = vadd.f32 0.0, %v7575
  %v7577 = vpop.f32.mrf.mxu0
  %7578 = vmatprep.mubr.bf16.mxu0 %v6559
  %7579 = vmatmul.mubr.bf16.gmra.mxu0 %v6558
  %v7580 = vpop.f32.mrf.mxu0
  %v7581 = vadd.f32 0.0, %v7580
  %v7582 = vpop.f32.mrf.mxu0
  %v7583 = vpop.f32.mrf.mxu0
  %v7584 = vadd.f32 0.0, %v7583
  %v7585 = vpop.f32.mrf.mxu0
  %7586 = vmatprep.mubr.bf16.mxu0 %v6568
  %7587 = vmatmul.mubr.bf16.gmra.mxu0 %v6567
  %v7588 = vpop.f32.mrf.mxu0
  %v7589 = vadd.f32 0.0, %v7588
  %v7590 = vpop.f32.mrf.mxu0
  %v7591 = vpop.f32.mrf.mxu0
  %v7592 = vadd.f32 0.0, %v7591
  %v7593 = vpop.f32.mrf.mxu0
  %7594 = vmatprep.mubr.bf16.mxu0 %v6577
  %7595 = vmatmul.mubr.bf16.gmra.mxu0 %v6576
  %v7596 = vpop.f32.mrf.mxu0
  %v7597 = vadd.f32 0.0, %v7596
  %v7598 = vpop.f32.mrf.mxu0
  %v7599 = vpop.f32.mrf.mxu0
  %v7600 = vadd.f32 0.0, %v7599
  %v7601 = vpop.f32.mrf.mxu0
  %7602 = vmatprep.mubr.bf16.mxu0 %v6586
  %7603 = vmatmul.mubr.bf16.gmra.mxu0 %v6585
  %v7604 = vpop.f32.mrf.mxu0
  %v7605 = vadd.f32 0.0, %v7604
  %v7606 = vpop.f32.mrf.mxu0
  %v7607 = vpop.f32.mrf.mxu0
  %v7608 = vadd.f32 0.0, %v7607
  %v7609 = vpop.f32.mrf.mxu0
  %7610 = vmatprep.mubr.bf16.mxu0 %v6595
  %7611 = vmatmul.mubr.bf16.gmra.mxu0 %v6594
  %v7612 = vpop.f32.mrf.mxu0
  %v7613 = vadd.f32 0.0, %v7612
  %v7614 = vpop.f32.mrf.mxu0
  %v7615 = vpop.f32.mrf.mxu0
  %v7616 = vadd.f32 0.0, %v7615
  %v7617 = vpop.f32.mrf.mxu0
  %7618 = vmatprep.mubr.bf16.mxu0 %v6604
  %7619 = vmatmul.mubr.bf16.gmra.mxu0 %v6603
  %v7620 = vpop.f32.mrf.mxu0
  %v7621 = vadd.f32 0.0, %v7620
  %v7622 = vpop.f32.mrf.mxu0
  %v7623 = vpop.f32.mrf.mxu0
  %v7624 = vadd.f32 0.0, %v7623
  %v7625 = vpop.f32.mrf.mxu0
  %7626 = vmatprep.mubr.bf16.mxu0 %v6613
  %7627 = vmatmul.mubr.bf16.gmra.mxu0 %v6612
  %v7628 = vpop.f32.mrf.mxu0
  %v7629 = vadd.f32 0.0, %v7628
  %v7630 = vpop.f32.mrf.mxu0
  %v7631 = vpop.f32.mrf.mxu0
  %v7632 = vadd.f32 0.0, %v7631
  %v7633 = vpop.f32.mrf.mxu0
  %7634 = vmatprep.mubr.bf16.mxu0 %v6622
  %7635 = vmatmul.mubr.bf16.gmra.mxu0 %v6621
  %v7636 = vpop.f32.mrf.mxu0
  %v7637 = vadd.f32 0.0, %v7636
  %v7638 = vpop.f32.mrf.mxu0
  %v7639 = vpop.f32.mrf.mxu0
  %v7640 = vadd.f32 0.0, %v7639
  %v7641 = vpop.f32.mrf.mxu0
  %7642 = vmatprep.mubr.bf16.mxu0 %v6631
  %7643 = vmatmul.mubr.bf16.gmra.mxu0 %v6630
  %v7644 = vpop.f32.mrf.mxu0
  %v7645 = vadd.f32 0.0, %v7644
  %v7646 = vpop.f32.mrf.mxu0
  %v7647 = vpop.f32.mrf.mxu0
  %v7648 = vadd.f32 0.0, %v7647
  %v7649 = vpop.f32.mrf.mxu0
  %7650 = vmatprep.mubr.bf16.mxu0 %v6640
  %7651 = vmatmul.mubr.bf16.gmra.mxu0 %v6639
  %v7652 = vpop.f32.mrf.mxu0
  %v7653 = vadd.f32 0.0, %v7652
  %v7654 = vpop.f32.mrf.mxu0
  %v7655 = vpop.f32.mrf.mxu0
  %v7656 = vadd.f32 0.0, %v7655
  %v7657 = vpop.f32.mrf.mxu0
  %7658 = vmatprep.mubr.bf16.mxu0 %v6649
  %7659 = vmatmul.mubr.bf16.gmra.mxu0 %v6648
  %v7660 = vpop.f32.mrf.mxu0
  %v7661 = vadd.f32 0.0, %v7660
  %v7662 = vpop.f32.mrf.mxu0
  %v7663 = vpop.f32.mrf.mxu0
  %v7664 = vadd.f32 0.0, %v7663
  %v7665 = vpop.f32.mrf.mxu0
  %7666 = vmatprep.mubr.bf16.mxu0 %v6658
  %7667 = vmatmul.mubr.bf16.gmra.mxu0 %v6657
  %v7668 = vpop.f32.mrf.mxu0
  %v7669 = vadd.f32 0.0, %v7668
  %v7670 = vpop.f32.mrf.mxu0
  %v7671 = vpop.f32.mrf.mxu0
  %v7672 = vadd.f32 0.0, %v7671
  %v7673 = vpop.f32.mrf.mxu0
  %7674 = vdwg.mxu0
  %7675 = vmatprep.subr.bf16.mxu0 0
  %7676 = vmatpush1.bf16.msra.mxu0 %v7265
  %7677 = vmatprep.subr.bf16.mxu0 0
  %7678 = vmatpush1.bf16.msra.mxu0 %v7264
  %7679 = vmatprep.subr.bf16.mxu0 0
  %7680 = vmatpush1.bf16.msra.mxu0 %v7263
  %7681 = vmatprep.subr.bf16.mxu0 0
  %7682 = vmatpush1.bf16.msra.mxu0 %v7262
  %7683 = vmatprep.subr.bf16.mxu0 0
  %7684 = vmatpush1.bf16.msra.mxu0 %v7261
  %7685 = vmatprep.subr.bf16.mxu0 0
  %7686 = vmatpush1.bf16.msra.mxu0 %v7260
  %7687 = vmatprep.subr.bf16.mxu0 0
  %7688 = vmatpush1.bf16.msra.mxu0 %v7259
  %7689 = vmatprep.subr.bf16.mxu0 0
  %7690 = vmatpush1.bf16.msra.mxu0 %v7258
  %7691 = vmatprep.subr.bf16.mxu0 0
  %7692 = vmatpush2.bf16.msra.mxu0 %v7273
  %7693 = vmatprep.subr.bf16.mxu0 0
  %7694 = vmatpush2.bf16.msra.mxu0 %v7272
  %7695 = vmatprep.subr.bf16.mxu0 0
  %7696 = vmatpush2.bf16.msra.mxu0 %v7271
  %7697 = vmatprep.subr.bf16.mxu0 0
  %7698 = vmatpush2.bf16.msra.mxu0 %v7270
  %7699 = vmatprep.subr.bf16.mxu0 0
  %7700 = vmatpush2.bf16.msra.mxu0 %v7269
  %7701 = vmatprep.subr.bf16.mxu0 0
  %7702 = vmatpush2.bf16.msra.mxu0 %v7268
  %7703 = vmatprep.subr.bf16.mxu0 0
  %7704 = vmatpush2.bf16.msra.mxu0 %v7267
  %7705 = vmatprep.subr.bf16.mxu0 0
  %7706 = vmatpush2.bf16.msra.mxu0 %v7266
  %7707 = vmatprep.mubr.bf16.mxu0 %v6381
  %7708 = vmatmul.mubr.bf16.gmra.mxu0 %v6380
  %v7709 = vpop.f32.mrf.mxu0
  %v7710 = vadd.f32 %v7421, %v7709
  %v7711 = vpop.f32.mrf.mxu0
  %v7712 = vpop.f32.mrf.mxu0
  %v7713 = vadd.f32 %v7424, %v7712
  %v7714 = vpop.f32.mrf.mxu0
  %7715 = vmatprep.mubr.bf16.mxu0 %v6390
  %7716 = vmatmul.mubr.bf16.gmra.mxu0 %v6389
  %v7717 = vpop.f32.mrf.mxu0
  %v7718 = vadd.f32 %v7429, %v7717
  %v7719 = vpop.f32.mrf.mxu0
  %v7720 = vpop.f32.mrf.mxu0
  %v7721 = vadd.f32 %v7432, %v7720
  %v7722 = vpop.f32.mrf.mxu0
  %7723 = vmatprep.mubr.bf16.mxu0 %v6399
  %7724 = vmatmul.mubr.bf16.gmra.mxu0 %v6398
  %v7725 = vpop.f32.mrf.mxu0
  %v7726 = vadd.f32 %v7437, %v7725
  %v7727 = vpop.f32.mrf.mxu0
  %v7728 = vpop.f32.mrf.mxu0
  %v7729 = vadd.f32 %v7440, %v7728
  %v7730 = vpop.f32.mrf.mxu0
  %7731 = vmatprep.mubr.bf16.mxu0 %v6408
  %7732 = vmatmul.mubr.bf16.gmra.mxu0 %v6407
  %v7733 = vpop.f32.mrf.mxu0
  %v7734 = vadd.f32 %v7445, %v7733
  %v7735 = vpop.f32.mrf.mxu0
  %v7736 = vpop.f32.mrf.mxu0
  %v7737 = vadd.f32 %v7448, %v7736
  %v7738 = vpop.f32.mrf.mxu0
  %7739 = vmatprep.mubr.bf16.mxu0 %v6417
  %7740 = vmatmul.mubr.bf16.gmra.mxu0 %v6416
  %v7741 = vpop.f32.mrf.mxu0
  %v7742 = vadd.f32 %v7453, %v7741
  %v7743 = vpop.f32.mrf.mxu0
  %v7744 = vpop.f32.mrf.mxu0
  %v7745 = vadd.f32 %v7456, %v7744
  %v7746 = vpop.f32.mrf.mxu0
  %7747 = vmatprep.mubr.bf16.mxu0 %v6426
  %7748 = vmatmul.mubr.bf16.gmra.mxu0 %v6425
  %v7749 = vpop.f32.mrf.mxu0
  %v7750 = vadd.f32 %v7461, %v7749
  %v7751 = vpop.f32.mrf.mxu0
  %v7752 = vpop.f32.mrf.mxu0
  %v7753 = vadd.f32 %v7464, %v7752
  %v7754 = vpop.f32.mrf.mxu0
  %7755 = vmatprep.mubr.bf16.mxu0 %v6435
  %7756 = vmatmul.mubr.bf16.gmra.mxu0 %v6434
  %v7757 = vpop.f32.mrf.mxu0
  %v7758 = vadd.f32 %v7469, %v7757
  %v7759 = vpop.f32.mrf.mxu0
  %v7760 = vpop.f32.mrf.mxu0
  %v7761 = vadd.f32 %v7472, %v7760
  %v7762 = vpop.f32.mrf.mxu0
  %7763 = vmatprep.mubr.bf16.mxu0 %v6444
  %7764 = vmatmul.mubr.bf16.gmra.mxu0 %v6443
  %v7765 = vpop.f32.mrf.mxu0
  %v7766 = vadd.f32 %v7477, %v7765
  %v7767 = vpop.f32.mrf.mxu0
  %v7768 = vpop.f32.mrf.mxu0
  %v7769 = vadd.f32 %v7480, %v7768
  %v7770 = vpop.f32.mrf.mxu0
  %7771 = vmatprep.mubr.bf16.mxu0 %v6453
  %7772 = vmatmul.mubr.bf16.gmra.mxu0 %v6452
  %v7773 = vpop.f32.mrf.mxu0
  %v7774 = vadd.f32 %v7485, %v7773
  %v7775 = vpop.f32.mrf.mxu0
  %v7776 = vpop.f32.mrf.mxu0
  %v7777 = vadd.f32 %v7488, %v7776
  %v7778 = vpop.f32.mrf.mxu0
  %7779 = vmatprep.mubr.bf16.mxu0 %v6462
  %7780 = vmatmul.mubr.bf16.gmra.mxu0 %v6461
  %v7781 = vpop.f32.mrf.mxu0
  %v7782 = vadd.f32 %v7493, %v7781
  %v7783 = vpop.f32.mrf.mxu0
  %v7784 = vpop.f32.mrf.mxu0
  %v7785 = vadd.f32 %v7496, %v7784
  %v7786 = vpop.f32.mrf.mxu0
  %7787 = vmatprep.mubr.bf16.mxu0 %v6471
  %7788 = vmatmul.mubr.bf16.gmra.mxu0 %v6470
  %v7789 = vpop.f32.mrf.mxu0
  %v7790 = vadd.f32 %v7501, %v7789
  %v7791 = vpop.f32.mrf.mxu0
  %v7792 = vpop.f32.mrf.mxu0
  %v7793 = vadd.f32 %v7504, %v7792
  %v7794 = vpop.f32.mrf.mxu0
  %7795 = vmatprep.mubr.bf16.mxu0 %v6480
  %7796 = vmatmul.mubr.bf16.gmra.mxu0 %v6479
  %v7797 = vpop.f32.mrf.mxu0
  %v7798 = vadd.f32 %v7509, %v7797
  %v7799 = vpop.f32.mrf.mxu0
  %v7800 = vpop.f32.mrf.mxu0
  %v7801 = vadd.f32 %v7512, %v7800
  %v7802 = vpop.f32.mrf.mxu0
  %7803 = vmatprep.mubr.bf16.mxu0 %v6489
  %7804 = vmatmul.mubr.bf16.gmra.mxu0 %v6488
  %v7805 = vpop.f32.mrf.mxu0
  %v7806 = vadd.f32 %v7517, %v7805
  %v7807 = vpop.f32.mrf.mxu0
  %v7808 = vpop.f32.mrf.mxu0
  %v7809 = vadd.f32 %v7520, %v7808
  %v7810 = vpop.f32.mrf.mxu0
  %7811 = vmatprep.mubr.bf16.mxu0 %v6498
  %7812 = vmatmul.mubr.bf16.gmra.mxu0 %v6497
  %v7813 = vpop.f32.mrf.mxu0
  %v7814 = vadd.f32 %v7525, %v7813
  %v7815 = vpop.f32.mrf.mxu0
  %v7816 = vpop.f32.mrf.mxu0
  %v7817 = vadd.f32 %v7528, %v7816
  %v7818 = vpop.f32.mrf.mxu0
  %7819 = vmatprep.mubr.bf16.mxu0 %v6507
  %7820 = vmatmul.mubr.bf16.gmra.mxu0 %v6506
  %v7821 = vpop.f32.mrf.mxu0
  %v7822 = vadd.f32 %v7533, %v7821
  %v7823 = vpop.f32.mrf.mxu0
  %v7824 = vpop.f32.mrf.mxu0
  %v7825 = vadd.f32 %v7536, %v7824
  %v7826 = vpop.f32.mrf.mxu0
  %7827 = vmatprep.mubr.bf16.mxu0 %v6516
  %7828 = vmatmul.mubr.bf16.gmra.mxu0 %v6515
  %v7829 = vpop.f32.mrf.mxu0
  %v7830 = vadd.f32 %v7541, %v7829
  %v7831 = vpop.f32.mrf.mxu0
  %v7832 = vpop.f32.mrf.mxu0
  %v7833 = vadd.f32 %v7544, %v7832
  %v7834 = vpop.f32.mrf.mxu0
  %7835 = vmatprep.mubr.bf16.mxu0 %v6525
  %7836 = vmatmul.mubr.bf16.gmra.mxu0 %v6524
  %v7837 = vpop.f32.mrf.mxu0
  %v7838 = vadd.f32 %v7549, %v7837
  %v7839 = vpop.f32.mrf.mxu0
  %v7840 = vpop.f32.mrf.mxu0
  %v7841 = vadd.f32 %v7552, %v7840
  %v7842 = vpop.f32.mrf.mxu0
  %7843 = vmatprep.mubr.bf16.mxu0 %v6534
  %7844 = vmatmul.mubr.bf16.gmra.mxu0 %v6533
  %v7845 = vpop.f32.mrf.mxu0
  %v7846 = vadd.f32 %v7557, %v7845
  %v7847 = vpop.f32.mrf.mxu0
  %v7848 = vpop.f32.mrf.mxu0
  %v7849 = vadd.f32 %v7560, %v7848
  %v7850 = vpop.f32.mrf.mxu0
  %7851 = vmatprep.mubr.bf16.mxu0 %v6543
  %7852 = vmatmul.mubr.bf16.gmra.mxu0 %v6542
  %v7853 = vpop.f32.mrf.mxu0
  %v7854 = vadd.f32 %v7565, %v7853
  %v7855 = vpop.f32.mrf.mxu0
  %v7856 = vpop.f32.mrf.mxu0
  %v7857 = vadd.f32 %v7568, %v7856
  %v7858 = vpop.f32.mrf.mxu0
  %7859 = vmatprep.mubr.bf16.mxu0 %v6552
  %7860 = vmatmul.mubr.bf16.gmra.mxu0 %v6551
  %v7861 = vpop.f32.mrf.mxu0
  %v7862 = vadd.f32 %v7573, %v7861
  %v7863 = vpop.f32.mrf.mxu0
  %v7864 = vpop.f32.mrf.mxu0
  %v7865 = vadd.f32 %v7576, %v7864
  %v7866 = vpop.f32.mrf.mxu0
  %7867 = vmatprep.mubr.bf16.mxu0 %v6561
  %7868 = vmatmul.mubr.bf16.gmra.mxu0 %v6560
  %v7869 = vpop.f32.mrf.mxu0
  %v7870 = vadd.f32 %v7581, %v7869
  %v7871 = vpop.f32.mrf.mxu0
  %v7872 = vpop.f32.mrf.mxu0
  %v7873 = vadd.f32 %v7584, %v7872
  %v7874 = vpop.f32.mrf.mxu0
  %7875 = vmatprep.mubr.bf16.mxu0 %v6570
  %7876 = vmatmul.mubr.bf16.gmra.mxu0 %v6569
  %v7877 = vpop.f32.mrf.mxu0
  %v7878 = vadd.f32 %v7589, %v7877
  %v7879 = vpop.f32.mrf.mxu0
  %v7880 = vpop.f32.mrf.mxu0
  %v7881 = vadd.f32 %v7592, %v7880
  %v7882 = vpop.f32.mrf.mxu0
  %7883 = vmatprep.mubr.bf16.mxu0 %v6579
  %7884 = vmatmul.mubr.bf16.gmra.mxu0 %v6578
  %v7885 = vpop.f32.mrf.mxu0
  %v7886 = vadd.f32 %v7597, %v7885
  %v7887 = vpop.f32.mrf.mxu0
  %v7888 = vpop.f32.mrf.mxu0
  %v7889 = vadd.f32 %v7600, %v7888
  %v7890 = vpop.f32.mrf.mxu0
  %7891 = vmatprep.mubr.bf16.mxu0 %v6588
  %7892 = vmatmul.mubr.bf16.gmra.mxu0 %v6587
  %v7893 = vpop.f32.mrf.mxu0
  %v7894 = vadd.f32 %v7605, %v7893
  %v7895 = vpop.f32.mrf.mxu0
  %v7896 = vpop.f32.mrf.mxu0
  %v7897 = vadd.f32 %v7608, %v7896
  %v7898 = vpop.f32.mrf.mxu0
  %7899 = vmatprep.mubr.bf16.mxu0 %v6597
  %7900 = vmatmul.mubr.bf16.gmra.mxu0 %v6596
  %v7901 = vpop.f32.mrf.mxu0
  %v7902 = vadd.f32 %v7613, %v7901
  %v7903 = vpop.f32.mrf.mxu0
  %v7904 = vpop.f32.mrf.mxu0
  %v7905 = vadd.f32 %v7616, %v7904
  %v7906 = vpop.f32.mrf.mxu0
  %7907 = vmatprep.mubr.bf16.mxu0 %v6606
  %7908 = vmatmul.mubr.bf16.gmra.mxu0 %v6605
  %v7909 = vpop.f32.mrf.mxu0
  %v7910 = vadd.f32 %v7621, %v7909
  %v7911 = vpop.f32.mrf.mxu0
  %v7912 = vpop.f32.mrf.mxu0
  %v7913 = vadd.f32 %v7624, %v7912
  %v7914 = vpop.f32.mrf.mxu0
  %7915 = vmatprep.mubr.bf16.mxu0 %v6615
  %7916 = vmatmul.mubr.bf16.gmra.mxu0 %v6614
  %v7917 = vpop.f32.mrf.mxu0
  %v7918 = vadd.f32 %v7629, %v7917
  %v7919 = vpop.f32.mrf.mxu0
  %v7920 = vpop.f32.mrf.mxu0
  %v7921 = vadd.f32 %v7632, %v7920
  %v7922 = vpop.f32.mrf.mxu0
  %7923 = vmatprep.mubr.bf16.mxu0 %v6624
  %7924 = vmatmul.mubr.bf16.gmra.mxu0 %v6623
  %v7925 = vpop.f32.mrf.mxu0
  %v7926 = vadd.f32 %v7637, %v7925
  %v7927 = vpop.f32.mrf.mxu0
  %v7928 = vpop.f32.mrf.mxu0
  %v7929 = vadd.f32 %v7640, %v7928
  %v7930 = vpop.f32.mrf.mxu0
  %7931 = vmatprep.mubr.bf16.mxu0 %v6633
  %7932 = vmatmul.mubr.bf16.gmra.mxu0 %v6632
  %v7933 = vpop.f32.mrf.mxu0
  %v7934 = vadd.f32 %v7645, %v7933
  %v7935 = vpop.f32.mrf.mxu0
  %v7936 = vpop.f32.mrf.mxu0
  %v7937 = vadd.f32 %v7648, %v7936
  %v7938 = vpop.f32.mrf.mxu0
  %7939 = vmatprep.mubr.bf16.mxu0 %v6642
  %7940 = vmatmul.mubr.bf16.gmra.mxu0 %v6641
  %v7941 = vpop.f32.mrf.mxu0
  %v7942 = vadd.f32 %v7653, %v7941
  %v7943 = vpop.f32.mrf.mxu0
  %v7944 = vpop.f32.mrf.mxu0
  %v7945 = vadd.f32 %v7656, %v7944
  %v7946 = vpop.f32.mrf.mxu0
  %7947 = vmatprep.mubr.bf16.mxu0 %v6651
  %7948 = vmatmul.mubr.bf16.gmra.mxu0 %v6650
  %v7949 = vpop.f32.mrf.mxu0
  %v7950 = vadd.f32 %v7661, %v7949
  %v7951 = vpop.f32.mrf.mxu0
  %v7952 = vpop.f32.mrf.mxu0
  %v7953 = vadd.f32 %v7664, %v7952
  %v7954 = vpop.f32.mrf.mxu0
  %7955 = vmatprep.mubr.bf16.mxu0 %v6660
  %7956 = vmatmul.mubr.bf16.gmra.mxu0 %v6659
  %v7957 = vpop.f32.mrf.mxu0
  %v7958 = vadd.f32 %v7669, %v7957
  %v7959 = vpop.f32.mrf.mxu0
  %v7960 = vpop.f32.mrf.mxu0
  %v7961 = vadd.f32 %v7672, %v7960
  %v7962 = vpop.f32.mrf.mxu0
  %7963 = vdwg.mxu0
  %7964 = vmatprep.subr.bf16.mxu0 0
  %7965 = vmatpush1.bf16.msra.mxu0 %v7281
  %7966 = vmatprep.subr.bf16.mxu0 0
  %7967 = vmatpush1.bf16.msra.mxu0 %v7280
  %7968 = vmatprep.subr.bf16.mxu0 0
  %7969 = vmatpush1.bf16.msra.mxu0 %v7279
  %7970 = vmatprep.subr.bf16.mxu0 0
  %7971 = vmatpush1.bf16.msra.mxu0 %v7278
  %7972 = vmatprep.subr.bf16.mxu0 0
  %7973 = vmatpush1.bf16.msra.mxu0 %v7277
  %7974 = vmatprep.subr.bf16.mxu0 0
  %7975 = vmatpush1.bf16.msra.mxu0 %v7276
  %7976 = vmatprep.subr.bf16.mxu0 0
  %7977 = vmatpush1.bf16.msra.mxu0 %v7275
  %7978 = vmatprep.subr.bf16.mxu0 0
  %7979 = vmatpush1.bf16.msra.mxu0 %v7274
  %7980 = vmatprep.subr.bf16.mxu0 0
  %7981 = vmatpush2.bf16.msra.mxu0 %v7289
  %7982 = vmatprep.subr.bf16.mxu0 0
  %7983 = vmatpush2.bf16.msra.mxu0 %v7288
  %7984 = vmatprep.subr.bf16.mxu0 0
  %7985 = vmatpush2.bf16.msra.mxu0 %v7287
  %7986 = vmatprep.subr.bf16.mxu0 0
  %7987 = vmatpush2.bf16.msra.mxu0 %v7286
  %7988 = vmatprep.subr.bf16.mxu0 0
  %7989 = vmatpush2.bf16.msra.mxu0 %v7285
  %7990 = vmatprep.subr.bf16.mxu0 0
  %7991 = vmatpush2.bf16.msra.mxu0 %v7284
  %7992 = vmatprep.subr.bf16.mxu0 0
  %7993 = vmatpush2.bf16.msra.mxu0 %v7283
  %7994 = vmatprep.subr.bf16.mxu0 0
  %7995 = vmatpush2.bf16.msra.mxu0 %v7282
  %7996 = vmatprep.mubr.bf16.mxu0 %v6383
  %7997 = vmatmul.mubr.bf16.gmra.mxu0 %v6382
  %v7998 = vpop.f32.mrf.mxu0
  %v7999 = vadd.f32 %v7710, %v7998
  %v8000 = vpop.f32.mrf.mxu0
  %v8001 = vpop.f32.mrf.mxu0
  %v8002 = vadd.f32 %v7713, %v8001
  %v8003 = vpop.f32.mrf.mxu0
  %8004 = vmatprep.mubr.bf16.mxu0 %v6392
  %8005 = vmatmul.mubr.bf16.gmra.mxu0 %v6391
  %v8006 = vpop.f32.mrf.mxu0
  %v8007 = vadd.f32 %v7718, %v8006
  %v8008 = vpop.f32.mrf.mxu0
  %v8009 = vpop.f32.mrf.mxu0
  %v8010 = vadd.f32 %v7721, %v8009
  %v8011 = vpop.f32.mrf.mxu0
  %8012 = vmatprep.mubr.bf16.mxu0 %v6401
  %8013 = vmatmul.mubr.bf16.gmra.mxu0 %v6400
  %v8014 = vpop.f32.mrf.mxu0
  %v8015 = vadd.f32 %v7726, %v8014
  %v8016 = vpop.f32.mrf.mxu0
  %v8017 = vpop.f32.mrf.mxu0
  %v8018 = vadd.f32 %v7729, %v8017
  %v8019 = vpop.f32.mrf.mxu0
  %8020 = vmatprep.mubr.bf16.mxu0 %v6410
  %8021 = vmatmul.mubr.bf16.gmra.mxu0 %v6409
  %v8022 = vpop.f32.mrf.mxu0
  %v8023 = vadd.f32 %v7734, %v8022
  %v8024 = vpop.f32.mrf.mxu0
  %v8025 = vpop.f32.mrf.mxu0
  %v8026 = vadd.f32 %v7737, %v8025
  %v8027 = vpop.f32.mrf.mxu0
  %8028 = vmatprep.mubr.bf16.mxu0 %v6419
  %8029 = vmatmul.mubr.bf16.gmra.mxu0 %v6418
  %v8030 = vpop.f32.mrf.mxu0
  %v8031 = vadd.f32 %v7742, %v8030
  %v8032 = vpop.f32.mrf.mxu0
  %v8033 = vpop.f32.mrf.mxu0
  %v8034 = vadd.f32 %v7745, %v8033
  %v8035 = vpop.f32.mrf.mxu0
  %8036 = vmatprep.mubr.bf16.mxu0 %v6428
  %8037 = vmatmul.mubr.bf16.gmra.mxu0 %v6427
  %v8038 = vpop.f32.mrf.mxu0
  %v8039 = vadd.f32 %v7750, %v8038
  %v8040 = vpop.f32.mrf.mxu0
  %v8041 = vpop.f32.mrf.mxu0
  %v8042 = vadd.f32 %v7753, %v8041
  %v8043 = vpop.f32.mrf.mxu0
  %8044 = vmatprep.mubr.bf16.mxu0 %v6437
  %8045 = vmatmul.mubr.bf16.gmra.mxu0 %v6436
  %v8046 = vpop.f32.mrf.mxu0
  %v8047 = vadd.f32 %v7758, %v8046
  %v8048 = vpop.f32.mrf.mxu0
  %v8049 = vpop.f32.mrf.mxu0
  %v8050 = vadd.f32 %v7761, %v8049
  %v8051 = vpop.f32.mrf.mxu0
  %8052 = vmatprep.mubr.bf16.mxu0 %v6446
  %8053 = vmatmul.mubr.bf16.gmra.mxu0 %v6445
  %v8054 = vpop.f32.mrf.mxu0
  %v8055 = vadd.f32 %v7766, %v8054
  %v8056 = vpop.f32.mrf.mxu0
  %v8057 = vpop.f32.mrf.mxu0
  %v8058 = vadd.f32 %v7769, %v8057
  %v8059 = vpop.f32.mrf.mxu0
  %8060 = vmatprep.mubr.bf16.mxu0 %v6455
  %8061 = vmatmul.mubr.bf16.gmra.mxu0 %v6454
  %v8062 = vpop.f32.mrf.mxu0
  %v8063 = vadd.f32 %v7774, %v8062
  %v8064 = vpop.f32.mrf.mxu0
  %v8065 = vpop.f32.mrf.mxu0
  %v8066 = vadd.f32 %v7777, %v8065
  %v8067 = vpop.f32.mrf.mxu0
  %8068 = vmatprep.mubr.bf16.mxu0 %v6464
  %8069 = vmatmul.mubr.bf16.gmra.mxu0 %v6463
  %v8070 = vpop.f32.mrf.mxu0
  %v8071 = vadd.f32 %v7782, %v8070
  %v8072 = vpop.f32.mrf.mxu0
  %v8073 = vpop.f32.mrf.mxu0
  %v8074 = vadd.f32 %v7785, %v8073
  %v8075 = vpop.f32.mrf.mxu0
  %8076 = vmatprep.mubr.bf16.mxu0 %v6473
  %8077 = vmatmul.mubr.bf16.gmra.mxu0 %v6472
  %v8078 = vpop.f32.mrf.mxu0
  %v8079 = vadd.f32 %v7790, %v8078
  %v8080 = vpop.f32.mrf.mxu0
  %v8081 = vpop.f32.mrf.mxu0
  %v8082 = vadd.f32 %v7793, %v8081
  %v8083 = vpop.f32.mrf.mxu0
  %8084 = vmatprep.mubr.bf16.mxu0 %v6482
  %8085 = vmatmul.mubr.bf16.gmra.mxu0 %v6481
  %v8086 = vpop.f32.mrf.mxu0
  %v8087 = vadd.f32 %v7798, %v8086
  %v8088 = vpop.f32.mrf.mxu0
  %v8089 = vpop.f32.mrf.mxu0
  %v8090 = vadd.f32 %v7801, %v8089
  %v8091 = vpop.f32.mrf.mxu0
  %8092 = vmatprep.mubr.bf16.mxu0 %v6491
  %8093 = vmatmul.mubr.bf16.gmra.mxu0 %v6490
  %v8094 = vpop.f32.mrf.mxu0
  %v8095 = vadd.f32 %v7806, %v8094
  %v8096 = vpop.f32.mrf.mxu0
  %v8097 = vpop.f32.mrf.mxu0
  %v8098 = vadd.f32 %v7809, %v8097
  %v8099 = vpop.f32.mrf.mxu0
  %8100 = vmatprep.mubr.bf16.mxu0 %v6500
  %8101 = vmatmul.mubr.bf16.gmra.mxu0 %v6499
  %v8102 = vpop.f32.mrf.mxu0
  %v8103 = vadd.f32 %v7814, %v8102
  %v8104 = vpop.f32.mrf.mxu0
  %v8105 = vpop.f32.mrf.mxu0
  %v8106 = vadd.f32 %v7817, %v8105
  %v8107 = vpop.f32.mrf.mxu0
  %8108 = vmatprep.mubr.bf16.mxu0 %v6509
  %8109 = vmatmul.mubr.bf16.gmra.mxu0 %v6508
  %v8110 = vpop.f32.mrf.mxu0
  %v8111 = vadd.f32 %v7822, %v8110
  %v8112 = vpop.f32.mrf.mxu0
  %v8113 = vpop.f32.mrf.mxu0
  %v8114 = vadd.f32 %v7825, %v8113
  %v8115 = vpop.f32.mrf.mxu0
  %8116 = vmatprep.mubr.bf16.mxu0 %v6518
  %8117 = vmatmul.mubr.bf16.gmra.mxu0 %v6517
  %v8118 = vpop.f32.mrf.mxu0
  %v8119 = vadd.f32 %v7830, %v8118
  %v8120 = vpop.f32.mrf.mxu0
  %v8121 = vpop.f32.mrf.mxu0
  %v8122 = vadd.f32 %v7833, %v8121
  %v8123 = vpop.f32.mrf.mxu0
  %8124 = vmatprep.mubr.bf16.mxu0 %v6527
  %8125 = vmatmul.mubr.bf16.gmra.mxu0 %v6526
  %v8126 = vpop.f32.mrf.mxu0
  %v8127 = vadd.f32 %v7838, %v8126
  %v8128 = vpop.f32.mrf.mxu0
  %v8129 = vpop.f32.mrf.mxu0
  %v8130 = vadd.f32 %v7841, %v8129
  %v8131 = vpop.f32.mrf.mxu0
  %8132 = vmatprep.mubr.bf16.mxu0 %v6536
  %8133 = vmatmul.mubr.bf16.gmra.mxu0 %v6535
  %v8134 = vpop.f32.mrf.mxu0
  %v8135 = vadd.f32 %v7846, %v8134
  %v8136 = vpop.f32.mrf.mxu0
  %v8137 = vpop.f32.mrf.mxu0
  %v8138 = vadd.f32 %v7849, %v8137
  %v8139 = vpop.f32.mrf.mxu0
  %8140 = vmatprep.mubr.bf16.mxu0 %v6545
  %8141 = vmatmul.mubr.bf16.gmra.mxu0 %v6544
  %v8142 = vpop.f32.mrf.mxu0
  %v8143 = vadd.f32 %v7854, %v8142
  %v8144 = vpop.f32.mrf.mxu0
  %v8145 = vpop.f32.mrf.mxu0
  %v8146 = vadd.f32 %v7857, %v8145
  %v8147 = vpop.f32.mrf.mxu0
  %8148 = vmatprep.mubr.bf16.mxu0 %v6554
  %8149 = vmatmul.mubr.bf16.gmra.mxu0 %v6553
  %v8150 = vpop.f32.mrf.mxu0
  %v8151 = vadd.f32 %v7862, %v8150
  %v8152 = vpop.f32.mrf.mxu0
  %v8153 = vpop.f32.mrf.mxu0
  %v8154 = vadd.f32 %v7865, %v8153
  %v8155 = vpop.f32.mrf.mxu0
  %8156 = vmatprep.mubr.bf16.mxu0 %v6563
  %8157 = vmatmul.mubr.bf16.gmra.mxu0 %v6562
  %v8158 = vpop.f32.mrf.mxu0
  %v8159 = vadd.f32 %v7870, %v8158
  %v8160 = vpop.f32.mrf.mxu0
  %v8161 = vpop.f32.mrf.mxu0
  %v8162 = vadd.f32 %v7873, %v8161
  %v8163 = vpop.f32.mrf.mxu0
  %8164 = vmatprep.mubr.bf16.mxu0 %v6572
  %8165 = vmatmul.mubr.bf16.gmra.mxu0 %v6571
  %v8166 = vpop.f32.mrf.mxu0
  %v8167 = vadd.f32 %v7878, %v8166
  %v8168 = vpop.f32.mrf.mxu0
  %v8169 = vpop.f32.mrf.mxu0
  %v8170 = vadd.f32 %v7881, %v8169
  %v8171 = vpop.f32.mrf.mxu0
  %8172 = vmatprep.mubr.bf16.mxu0 %v6581
  %8173 = vmatmul.mubr.bf16.gmra.mxu0 %v6580
  %v8174 = vpop.f32.mrf.mxu0
  %v8175 = vadd.f32 %v7886, %v8174
  %v8176 = vpop.f32.mrf.mxu0
  %v8177 = vpop.f32.mrf.mxu0
  %v8178 = vadd.f32 %v7889, %v8177
  %v8179 = vpop.f32.mrf.mxu0
  %8180 = vmatprep.mubr.bf16.mxu0 %v6590
  %8181 = vmatmul.mubr.bf16.gmra.mxu0 %v6589
  %v8182 = vpop.f32.mrf.mxu0
  %v8183 = vadd.f32 %v7894, %v8182
  %v8184 = vpop.f32.mrf.mxu0
  %v8185 = vpop.f32.mrf.mxu0
  %v8186 = vadd.f32 %v7897, %v8185
  %v8187 = vpop.f32.mrf.mxu0
  %8188 = vmatprep.mubr.bf16.mxu0 %v6599
  %8189 = vmatmul.mubr.bf16.gmra.mxu0 %v6598
  %v8190 = vpop.f32.mrf.mxu0
  %v8191 = vadd.f32 %v7902, %v8190
  %v8192 = vpop.f32.mrf.mxu0
  %v8193 = vpop.f32.mrf.mxu0
  %v8194 = vadd.f32 %v7905, %v8193
  %v8195 = vpop.f32.mrf.mxu0
  %8196 = vmatprep.mubr.bf16.mxu0 %v6608
  %8197 = vmatmul.mubr.bf16.gmra.mxu0 %v6607
  %v8198 = vpop.f32.mrf.mxu0
  %v8199 = vadd.f32 %v7910, %v8198
  %v8200 = vpop.f32.mrf.mxu0
  %v8201 = vpop.f32.mrf.mxu0
  %v8202 = vadd.f32 %v7913, %v8201
  %v8203 = vpop.f32.mrf.mxu0
  %8204 = vmatprep.mubr.bf16.mxu0 %v6617
  %8205 = vmatmul.mubr.bf16.gmra.mxu0 %v6616
  %v8206 = vpop.f32.mrf.mxu0
  %v8207 = vadd.f32 %v7918, %v8206
  %v8208 = vpop.f32.mrf.mxu0
  %v8209 = vpop.f32.mrf.mxu0
  %v8210 = vadd.f32 %v7921, %v8209
  %v8211 = vpop.f32.mrf.mxu0
  %8212 = vmatprep.mubr.bf16.mxu0 %v6626
  %8213 = vmatmul.mubr.bf16.gmra.mxu0 %v6625
  %v8214 = vpop.f32.mrf.mxu0
  %v8215 = vadd.f32 %v7926, %v8214
  %v8216 = vpop.f32.mrf.mxu0
  %v8217 = vpop.f32.mrf.mxu0
  %v8218 = vadd.f32 %v7929, %v8217
  %v8219 = vpop.f32.mrf.mxu0
  %8220 = vmatprep.mubr.bf16.mxu0 %v6635
  %8221 = vmatmul.mubr.bf16.gmra.mxu0 %v6634
  %v8222 = vpop.f32.mrf.mxu0
  %v8223 = vadd.f32 %v7934, %v8222
  %v8224 = vpop.f32.mrf.mxu0
  %v8225 = vpop.f32.mrf.mxu0
  %v8226 = vadd.f32 %v7937, %v8225
  %v8227 = vpop.f32.mrf.mxu0
  %8228 = vmatprep.mubr.bf16.mxu0 %v6644
  %8229 = vmatmul.mubr.bf16.gmra.mxu0 %v6643
  %v8230 = vpop.f32.mrf.mxu0
  %v8231 = vadd.f32 %v7942, %v8230
  %v8232 = vpop.f32.mrf.mxu0
  %v8233 = vpop.f32.mrf.mxu0
  %v8234 = vadd.f32 %v7945, %v8233
  %v8235 = vpop.f32.mrf.mxu0
  %8236 = vmatprep.mubr.bf16.mxu0 %v6653
  %8237 = vmatmul.mubr.bf16.gmra.mxu0 %v6652
  %v8238 = vpop.f32.mrf.mxu0
  %v8239 = vadd.f32 %v7950, %v8238
  %v8240 = vpop.f32.mrf.mxu0
  %v8241 = vpop.f32.mrf.mxu0
  %v8242 = vadd.f32 %v7953, %v8241
  %v8243 = vpop.f32.mrf.mxu0
  %8244 = vmatprep.mubr.bf16.mxu0 %v6662
  %8245 = vmatmul.mubr.bf16.gmra.mxu0 %v6661
  %v8246 = vpop.f32.mrf.mxu0
  %v8247 = vadd.f32 %v7958, %v8246
  %v8248 = vpop.f32.mrf.mxu0
  %v8249 = vpop.f32.mrf.mxu0
  %v8250 = vadd.f32 %v7961, %v8249
  %v8251 = vpop.f32.mrf.mxu0
  %8252 = vdwg.mxu0
  %8253 = vmatprep.subr.bf16.mxu0 0
  %8254 = vmatpush1.bf16.msra.mxu0 %v7297
  %8255 = vmatprep.subr.bf16.mxu0 0
  %8256 = vmatpush1.bf16.msra.mxu0 %v7296
  %8257 = vmatprep.subr.bf16.mxu0 0
  %8258 = vmatpush1.bf16.msra.mxu0 %v7295
  %8259 = vmatprep.subr.bf16.mxu0 0
  %8260 = vmatpush1.bf16.msra.mxu0 %v7294
  %8261 = vmatprep.subr.bf16.mxu0 0
  %8262 = vmatpush1.bf16.msra.mxu0 %v7293
  %8263 = vmatprep.subr.bf16.mxu0 0
  %8264 = vmatpush1.bf16.msra.mxu0 %v7292
  %8265 = vmatprep.subr.bf16.mxu0 0
  %8266 = vmatpush1.bf16.msra.mxu0 %v7291
  %8267 = vmatprep.subr.bf16.mxu0 0
  %8268 = vmatpush1.bf16.msra.mxu0 %v7290
  %8269 = vmatprep.subr.bf16.mxu0 0
  %8270 = vmatpush2.bf16.msra.mxu0 %v7305
  %8271 = vmatprep.subr.bf16.mxu0 0
  %8272 = vmatpush2.bf16.msra.mxu0 %v7304
  %8273 = vmatprep.subr.bf16.mxu0 0
  %8274 = vmatpush2.bf16.msra.mxu0 %v7303
  %8275 = vmatprep.subr.bf16.mxu0 0
  %8276 = vmatpush2.bf16.msra.mxu0 %v7302
  %8277 = vmatprep.subr.bf16.mxu0 0
  %8278 = vmatpush2.bf16.msra.mxu0 %v7301
  %8279 = vmatprep.subr.bf16.mxu0 0
  %8280 = vmatpush2.bf16.msra.mxu0 %v7300
  %8281 = vmatprep.subr.bf16.mxu0 0
  %8282 = vmatpush2.bf16.msra.mxu0 %v7299
  %8283 = vmatprep.subr.bf16.mxu0 0
  %8284 = vmatpush2.bf16.msra.mxu0 %v7298
  %8285 = vmatprep.mubr.bf16.mxu0 %v6385
  %8286 = vmatmul.mubr.bf16.gmra.mxu0 %v6384
  %v8287 = vpop.f32.mrf.mxu0
  %v8288 = vadd.f32 %v7999, %v8287
  %v8289 = vpop.f32.mrf.mxu0
  %v8290 = vpop.f32.mrf.mxu0
  %v8291 = vadd.f32 %v8002, %v8290
  %v8292 = vpop.f32.mrf.mxu0
  %8293 = vmatprep.mubr.bf16.mxu0 %v6394
  %8294 = vmatmul.mubr.bf16.gmra.mxu0 %v6393
  %v8295 = vpop.f32.mrf.mxu0
  %v8296 = vadd.f32 %v8007, %v8295
  %v8297 = vpop.f32.mrf.mxu0
  %v8298 = vpop.f32.mrf.mxu0
  %v8299 = vadd.f32 %v8010, %v8298
  %v8300 = vpop.f32.mrf.mxu0
  %8301 = vmatprep.mubr.bf16.mxu0 %v6403
  %8302 = vmatmul.mubr.bf16.gmra.mxu0 %v6402
  %v8303 = vpop.f32.mrf.mxu0
  %v8304 = vadd.f32 %v8015, %v8303
  %v8305 = vpop.f32.mrf.mxu0
  %v8306 = vpop.f32.mrf.mxu0
  %v8307 = vadd.f32 %v8018, %v8306
  %v8308 = vpop.f32.mrf.mxu0
  %8309 = vmatprep.mubr.bf16.mxu0 %v6412
  %8310 = vmatmul.mubr.bf16.gmra.mxu0 %v6411
  %v8311 = vpop.f32.mrf.mxu0
  %v8312 = vadd.f32 %v8023, %v8311
  %v8313 = vpop.f32.mrf.mxu0
  %v8314 = vpop.f32.mrf.mxu0
  %v8315 = vadd.f32 %v8026, %v8314
  %v8316 = vpop.f32.mrf.mxu0
  %8317 = vmatprep.mubr.bf16.mxu0 %v6421
  %8318 = vmatmul.mubr.bf16.gmra.mxu0 %v6420
  %v8319 = vpop.f32.mrf.mxu0
  %v8320 = vadd.f32 %v8031, %v8319
  %v8321 = vpop.f32.mrf.mxu0
  %v8322 = vpop.f32.mrf.mxu0
  %v8323 = vadd.f32 %v8034, %v8322
  %v8324 = vpop.f32.mrf.mxu0
  %8325 = vmatprep.mubr.bf16.mxu0 %v6430
  %8326 = vmatmul.mubr.bf16.gmra.mxu0 %v6429
  %v8327 = vpop.f32.mrf.mxu0
  %v8328 = vadd.f32 %v8039, %v8327
  %v8329 = vpop.f32.mrf.mxu0
  %v8330 = vpop.f32.mrf.mxu0
  %v8331 = vadd.f32 %v8042, %v8330
  %v8332 = vpop.f32.mrf.mxu0
  %8333 = vmatprep.mubr.bf16.mxu0 %v6439
  %8334 = vmatmul.mubr.bf16.gmra.mxu0 %v6438
  %v8335 = vpop.f32.mrf.mxu0
  %v8336 = vadd.f32 %v8047, %v8335
  %v8337 = vpop.f32.mrf.mxu0
  %v8338 = vpop.f32.mrf.mxu0
  %v8339 = vadd.f32 %v8050, %v8338
  %v8340 = vpop.f32.mrf.mxu0
  %8341 = vmatprep.mubr.bf16.mxu0 %v6448
  %8342 = vmatmul.mubr.bf16.gmra.mxu0 %v6447
  %v8343 = vpop.f32.mrf.mxu0
  %v8344 = vadd.f32 %v8055, %v8343
  %v8345 = vpop.f32.mrf.mxu0
  %v8346 = vpop.f32.mrf.mxu0
  %v8347 = vadd.f32 %v8058, %v8346
  %v8348 = vpop.f32.mrf.mxu0
  %8349 = vmatprep.mubr.bf16.mxu0 %v6457
  %8350 = vmatmul.mubr.bf16.gmra.mxu0 %v6456
  %v8351 = vpop.f32.mrf.mxu0
  %v8352 = vadd.f32 %v8063, %v8351
  %v8353 = vpop.f32.mrf.mxu0
  %v8354 = vpop.f32.mrf.mxu0
  %v8355 = vadd.f32 %v8066, %v8354
  %v8356 = vpop.f32.mrf.mxu0
  %8357 = vmatprep.mubr.bf16.mxu0 %v6466
  %8358 = vmatmul.mubr.bf16.gmra.mxu0 %v6465
  %v8359 = vpop.f32.mrf.mxu0
  %v8360 = vadd.f32 %v8071, %v8359
  %v8361 = vpop.f32.mrf.mxu0
  %v8362 = vpop.f32.mrf.mxu0
  %v8363 = vadd.f32 %v8074, %v8362
  %v8364 = vpop.f32.mrf.mxu0
  %8365 = vmatprep.mubr.bf16.mxu0 %v6475
  %8366 = vmatmul.mubr.bf16.gmra.mxu0 %v6474
  %v8367 = vpop.f32.mrf.mxu0
  %v8368 = vadd.f32 %v8079, %v8367
  %v8369 = vpop.f32.mrf.mxu0
  %v8370 = vpop.f32.mrf.mxu0
  %v8371 = vadd.f32 %v8082, %v8370
  %v8372 = vpop.f32.mrf.mxu0
  %8373 = vmatprep.mubr.bf16.mxu0 %v6484
  %8374 = vmatmul.mubr.bf16.gmra.mxu0 %v6483
  %v8375 = vpop.f32.mrf.mxu0
  %v8376 = vadd.f32 %v8087, %v8375
  %v8377 = vpop.f32.mrf.mxu0
  %v8378 = vpop.f32.mrf.mxu0
  %v8379 = vadd.f32 %v8090, %v8378
  %v8380 = vpop.f32.mrf.mxu0
  %8381 = vmatprep.mubr.bf16.mxu0 %v6493
  %8382 = vmatmul.mubr.bf16.gmra.mxu0 %v6492
  %v8383 = vpop.f32.mrf.mxu0
  %v8384 = vadd.f32 %v8095, %v8383
  %v8385 = vpop.f32.mrf.mxu0
  %v8386 = vpop.f32.mrf.mxu0
  %v8387 = vadd.f32 %v8098, %v8386
  %v8388 = vpop.f32.mrf.mxu0
  %8389 = vmatprep.mubr.bf16.mxu0 %v6502
  %8390 = vmatmul.mubr.bf16.gmra.mxu0 %v6501
  %v8391 = vpop.f32.mrf.mxu0
  %v8392 = vadd.f32 %v8103, %v8391
  %v8393 = vpop.f32.mrf.mxu0
  %v8394 = vpop.f32.mrf.mxu0
  %v8395 = vadd.f32 %v8106, %v8394
  %v8396 = vpop.f32.mrf.mxu0
  %8397 = vmatprep.mubr.bf16.mxu0 %v6511
  %8398 = vmatmul.mubr.bf16.gmra.mxu0 %v6510
  %v8399 = vpop.f32.mrf.mxu0
  %v8400 = vadd.f32 %v8111, %v8399
  %v8401 = vpop.f32.mrf.mxu0
  %v8402 = vpop.f32.mrf.mxu0
  %v8403 = vadd.f32 %v8114, %v8402
  %v8404 = vpop.f32.mrf.mxu0
  %8405 = vmatprep.mubr.bf16.mxu0 %v6520
  %8406 = vmatmul.mubr.bf16.gmra.mxu0 %v6519
  %v8407 = vpop.f32.mrf.mxu0
  %v8408 = vadd.f32 %v8119, %v8407
  %v8409 = vpop.f32.mrf.mxu0
  %v8410 = vpop.f32.mrf.mxu0
  %v8411 = vadd.f32 %v8122, %v8410
  %v8412 = vpop.f32.mrf.mxu0
  %8413 = vmatprep.mubr.bf16.mxu0 %v6529
  %8414 = vmatmul.mubr.bf16.gmra.mxu0 %v6528
  %v8415 = vpop.f32.mrf.mxu0
  %v8416 = vadd.f32 %v8127, %v8415
  %v8417 = vpop.f32.mrf.mxu0
  %v8418 = vpop.f32.mrf.mxu0
  %v8419 = vadd.f32 %v8130, %v8418
  %v8420 = vpop.f32.mrf.mxu0
  %8421 = vmatprep.mubr.bf16.mxu0 %v6538
  %8422 = vmatmul.mubr.bf16.gmra.mxu0 %v6537
  %v8423 = vpop.f32.mrf.mxu0
  %v8424 = vadd.f32 %v8135, %v8423
  %v8425 = vpop.f32.mrf.mxu0
  %v8426 = vpop.f32.mrf.mxu0
  %v8427 = vadd.f32 %v8138, %v8426
  %v8428 = vpop.f32.mrf.mxu0
  %8429 = vmatprep.mubr.bf16.mxu0 %v6547
  %8430 = vmatmul.mubr.bf16.gmra.mxu0 %v6546
  %v8431 = vpop.f32.mrf.mxu0
  %v8432 = vadd.f32 %v8143, %v8431
  %v8433 = vpop.f32.mrf.mxu0
  %v8434 = vpop.f32.mrf.mxu0
  %v8435 = vadd.f32 %v8146, %v8434
  %v8436 = vpop.f32.mrf.mxu0
  %8437 = vmatprep.mubr.bf16.mxu0 %v6556
  %8438 = vmatmul.mubr.bf16.gmra.mxu0 %v6555
  %v8439 = vpop.f32.mrf.mxu0
  %v8440 = vadd.f32 %v8151, %v8439
  %v8441 = vpop.f32.mrf.mxu0
  %v8442 = vpop.f32.mrf.mxu0
  %v8443 = vadd.f32 %v8154, %v8442
  %v8444 = vpop.f32.mrf.mxu0
  %8445 = vmatprep.mubr.bf16.mxu0 %v6565
  %8446 = vmatmul.mubr.bf16.gmra.mxu0 %v6564
  %v8447 = vpop.f32.mrf.mxu0
  %v8448 = vadd.f32 %v8159, %v8447
  %v8449 = vpop.f32.mrf.mxu0
  %v8450 = vpop.f32.mrf.mxu0
  %v8451 = vadd.f32 %v8162, %v8450
  %v8452 = vpop.f32.mrf.mxu0
  %8453 = vmatprep.mubr.bf16.mxu0 %v6574
  %8454 = vmatmul.mubr.bf16.gmra.mxu0 %v6573
  %v8455 = vpop.f32.mrf.mxu0
  %v8456 = vadd.f32 %v8167, %v8455
  %v8457 = vpop.f32.mrf.mxu0
  %v8458 = vpop.f32.mrf.mxu0
  %v8459 = vadd.f32 %v8170, %v8458
  %v8460 = vpop.f32.mrf.mxu0
  %8461 = vmatprep.mubr.bf16.mxu0 %v6583
  %8462 = vmatmul.mubr.bf16.gmra.mxu0 %v6582
  %v8463 = vpop.f32.mrf.mxu0
  %v8464 = vadd.f32 %v8175, %v8463
  %v8465 = vpop.f32.mrf.mxu0
  %v8466 = vpop.f32.mrf.mxu0
  %v8467 = vadd.f32 %v8178, %v8466
  %v8468 = vpop.f32.mrf.mxu0
  %8469 = vmatprep.mubr.bf16.mxu0 %v6592
  %8470 = vmatmul.mubr.bf16.gmra.mxu0 %v6591
  %v8471 = vpop.f32.mrf.mxu0
  %v8472 = vadd.f32 %v8183, %v8471
  %v8473 = vpop.f32.mrf.mxu0
  %v8474 = vpop.f32.mrf.mxu0
  %v8475 = vadd.f32 %v8186, %v8474
  %v8476 = vpop.f32.mrf.mxu0
  %8477 = vmatprep.mubr.bf16.mxu0 %v6601
  %8478 = vmatmul.mubr.bf16.gmra.mxu0 %v6600
  %v8479 = vpop.f32.mrf.mxu0
  %v8480 = vadd.f32 %v8191, %v8479
  %v8481 = vpop.f32.mrf.mxu0
  %v8482 = vpop.f32.mrf.mxu0
  %v8483 = vadd.f32 %v8194, %v8482
  %v8484 = vpop.f32.mrf.mxu0
  %8485 = vmatprep.mubr.bf16.mxu0 %v6610
  %8486 = vmatmul.mubr.bf16.gmra.mxu0 %v6609
  %v8487 = vpop.f32.mrf.mxu0
  %v8488 = vadd.f32 %v8199, %v8487
  %v8489 = vpop.f32.mrf.mxu0
  %v8490 = vpop.f32.mrf.mxu0
  %v8491 = vadd.f32 %v8202, %v8490
  %v8492 = vpop.f32.mrf.mxu0
  %8493 = vmatprep.mubr.bf16.mxu0 %v6619
  %8494 = vmatmul.mubr.bf16.gmra.mxu0 %v6618
  %v8495 = vpop.f32.mrf.mxu0
  %v8496 = vadd.f32 %v8207, %v8495
  %v8497 = vpop.f32.mrf.mxu0
  %v8498 = vpop.f32.mrf.mxu0
  %v8499 = vadd.f32 %v8210, %v8498
  %v8500 = vpop.f32.mrf.mxu0
  %8501 = vmatprep.mubr.bf16.mxu0 %v6628
  %8502 = vmatmul.mubr.bf16.gmra.mxu0 %v6627
  %v8503 = vpop.f32.mrf.mxu0
  %v8504 = vadd.f32 %v8215, %v8503
  %v8505 = vpop.f32.mrf.mxu0
  %v8506 = vpop.f32.mrf.mxu0
  %v8507 = vadd.f32 %v8218, %v8506
  %v8508 = vpop.f32.mrf.mxu0
  %8509 = vmatprep.mubr.bf16.mxu0 %v6637
  %8510 = vmatmul.mubr.bf16.gmra.mxu0 %v6636
  %v8511 = vpop.f32.mrf.mxu0
  %v8512 = vadd.f32 %v8223, %v8511
  %v8513 = vpop.f32.mrf.mxu0
  %v8514 = vpop.f32.mrf.mxu0
  %v8515 = vadd.f32 %v8226, %v8514
  %v8516 = vpop.f32.mrf.mxu0
  %8517 = vmatprep.mubr.bf16.mxu0 %v6646
  %8518 = vmatmul.mubr.bf16.gmra.mxu0 %v6645
  %v8519 = vpop.f32.mrf.mxu0
  %v8520 = vadd.f32 %v8231, %v8519
  %v8521 = vpop.f32.mrf.mxu0
  %v8522 = vpop.f32.mrf.mxu0
  %v8523 = vadd.f32 %v8234, %v8522
  %v8524 = vpop.f32.mrf.mxu0
  %8525 = vmatprep.mubr.bf16.mxu0 %v6655
  %8526 = vmatmul.mubr.bf16.gmra.mxu0 %v6654
  %v8527 = vpop.f32.mrf.mxu0
  %v8528 = vadd.f32 %v8239, %v8527
  %v8529 = vpop.f32.mrf.mxu0
  %v8530 = vpop.f32.mrf.mxu0
  %v8531 = vadd.f32 %v8242, %v8530
  %v8532 = vpop.f32.mrf.mxu0
  %8533 = vmatprep.mubr.bf16.mxu0 %v6664
  %8534 = vmatmul.mubr.bf16.gmra.mxu0 %v6663
  %v8535 = vpop.f32.mrf.mxu0
  %v8536 = vadd.f32 %v8247, %v8535
  %v8537 = vpop.f32.mrf.mxu0
  %v8538 = vpop.f32.mrf.mxu0
  %v8539 = vadd.f32 %v8250, %v8538
  %v8540 = vpop.f32.mrf.mxu0
  %8541 = vdwg.mxu0
  %8542 = vmatprep.subr.bf16.mxu0 0
  %8543 = vmatpush1.bf16.msra.mxu0 %v7313
  %8544 = vmatprep.subr.bf16.mxu0 0
  %8545 = vmatpush1.bf16.msra.mxu0 %v7312
  %8546 = vmatprep.subr.bf16.mxu0 0
  %8547 = vmatpush1.bf16.msra.mxu0 %v7311
  %8548 = vmatprep.subr.bf16.mxu0 0
  %8549 = vmatpush1.bf16.msra.mxu0 %v7310
  %8550 = vmatprep.subr.bf16.mxu0 0
  %8551 = vmatpush1.bf16.msra.mxu0 %v7309
  %8552 = vmatprep.subr.bf16.mxu0 0
  %8553 = vmatpush1.bf16.msra.mxu0 %v7308
  %8554 = vmatprep.subr.bf16.mxu0 0
  %8555 = vmatpush1.bf16.msra.mxu0 %v7307
  %8556 = vmatprep.subr.bf16.mxu0 0
  %8557 = vmatpush1.bf16.msra.mxu0 %v7306
  %8558 = vmatprep.subr.bf16.mxu0 0
  %8559 = vmatpush2.bf16.msra.mxu0 0
  %8560 = vmatprep.subr.bf16.mxu0 0
  %8561 = vmatpush2.bf16.msra.mxu0 0
  %8562 = vmatprep.subr.bf16.mxu0 0
  %8563 = vmatpush2.bf16.msra.mxu0 0
  %8564 = vmatprep.subr.bf16.mxu0 0
  %8565 = vmatpush2.bf16.msra.mxu0 0
  %8566 = vmatprep.subr.bf16.mxu0 0
  %8567 = vmatpush2.bf16.msra.mxu0 0
  %8568 = vmatprep.subr.bf16.mxu0 0
  %8569 = vmatpush2.bf16.msra.mxu0 0
  %8570 = vmatprep.subr.bf16.mxu0 0
  %8571 = vmatpush2.bf16.msra.mxu0 0
  %8572 = vmatprep.subr.bf16.mxu0 0
  %8573 = vmatpush2.bf16.msra.mxu0 0
  %8574 = vmatprep.mubr.bf16.mxu0 0
  %8575 = vmatmul.mubr.bf16.gmra.mxu0 %v6386
  %v8576 = vpop.f32.mrf.mxu0
  %v8577 = vadd.f32 %v8288, %v8576
  %v8578 = vpop.f32.mrf.mxu0
  %v8579 = vpop.f32.mrf.mxu0
  %v8580 = vadd.f32 %v8291, %v8579
  %v8581 = vpop.f32.mrf.mxu0
  %8582 = vmatprep.mubr.bf16.mxu0 0
  %8583 = vmatmul.mubr.bf16.gmra.mxu0 %v6395
  %v8584 = vpop.f32.mrf.mxu0
  %v8585 = vadd.f32 %v8296, %v8584
  %v8586 = vpop.f32.mrf.mxu0
  %v8587 = vpop.f32.mrf.mxu0
  %v8588 = vadd.f32 %v8299, %v8587
  %v8589 = vpop.f32.mrf.mxu0
  %8590 = vmatprep.mubr.bf16.mxu0 0
  %8591 = vmatmul.mubr.bf16.gmra.mxu0 %v6404
  %v8592 = vpop.f32.mrf.mxu0
  %v8593 = vadd.f32 %v8304, %v8592
  %v8594 = vpop.f32.mrf.mxu0
  %v8595 = vpop.f32.mrf.mxu0
  %v8596 = vadd.f32 %v8307, %v8595
  %v8597 = vpop.f32.mrf.mxu0
  %8598 = vmatprep.mubr.bf16.mxu0 0
  %8599 = vmatmul.mubr.bf16.gmra.mxu0 %v6413
  %v8600 = vpop.f32.mrf.mxu0
  %v8601 = vadd.f32 %v8312, %v8600
  %v8602 = vpop.f32.mrf.mxu0
  %v8603 = vpop.f32.mrf.mxu0
  %v8604 = vadd.f32 %v8315, %v8603
  %v8605 = vpop.f32.mrf.mxu0
  %8606 = vmatprep.mubr.bf16.mxu0 0
  %8607 = vmatmul.mubr.bf16.gmra.mxu0 %v6422
  %v8608 = vpop.f32.mrf.mxu0
  %v8609 = vadd.f32 %v8320, %v8608
  %v8610 = vpop.f32.mrf.mxu0
  %v8611 = vpop.f32.mrf.mxu0
  %v8612 = vadd.f32 %v8323, %v8611
  %v8613 = vpop.f32.mrf.mxu0
  %8614 = vmatprep.mubr.bf16.mxu0 0
  %8615 = vmatmul.mubr.bf16.gmra.mxu0 %v6431
  %v8616 = vpop.f32.mrf.mxu0
  %v8617 = vadd.f32 %v8328, %v8616
  %v8618 = vpop.f32.mrf.mxu0
  %v8619 = vpop.f32.mrf.mxu0
  %v8620 = vadd.f32 %v8331, %v8619
  %v8621 = vpop.f32.mrf.mxu0
  %8622 = vmatprep.mubr.bf16.mxu0 0
  %8623 = vmatmul.mubr.bf16.gmra.mxu0 %v6440
  %v8624 = vpop.f32.mrf.mxu0
  %v8625 = vadd.f32 %v8336, %v8624
  %v8626 = vpop.f32.mrf.mxu0
  %v8627 = vpop.f32.mrf.mxu0
  %v8628 = vadd.f32 %v8339, %v8627
  %v8629 = vpop.f32.mrf.mxu0
  %8630 = vmatprep.mubr.bf16.mxu0 0
  %8631 = vmatmul.mubr.bf16.gmra.mxu0 %v6449
  %v8632 = vpop.f32.mrf.mxu0
  %v8633 = vadd.f32 %v8344, %v8632
  %v8634 = vpop.f32.mrf.mxu0
  %v8635 = vpop.f32.mrf.mxu0
  %v8636 = vadd.f32 %v8347, %v8635
  %v8637 = vpop.f32.mrf.mxu0
  %8638 = vmatprep.mubr.bf16.mxu0 0
  %8639 = vmatmul.mubr.bf16.gmra.mxu0 %v6458
  %v8640 = vpop.f32.mrf.mxu0
  %v8641 = vadd.f32 %v8352, %v8640
  %v8642 = vpop.f32.mrf.mxu0
  %v8643 = vpop.f32.mrf.mxu0
  %v8644 = vadd.f32 %v8355, %v8643
  %v8645 = vpop.f32.mrf.mxu0
  %8646 = vmatprep.mubr.bf16.mxu0 0
  %8647 = vmatmul.mubr.bf16.gmra.mxu0 %v6467
  %v8648 = vpop.f32.mrf.mxu0
  %v8649 = vadd.f32 %v8360, %v8648
  %v8650 = vpop.f32.mrf.mxu0
  %v8651 = vpop.f32.mrf.mxu0
  %v8652 = vadd.f32 %v8363, %v8651
  %v8653 = vpop.f32.mrf.mxu0
  %8654 = vmatprep.mubr.bf16.mxu0 0
  %8655 = vmatmul.mubr.bf16.gmra.mxu0 %v6476
  %v8656 = vpop.f32.mrf.mxu0
  %v8657 = vadd.f32 %v8368, %v8656
  %v8658 = vpop.f32.mrf.mxu0
  %v8659 = vpop.f32.mrf.mxu0
  %v8660 = vadd.f32 %v8371, %v8659
  %v8661 = vpop.f32.mrf.mxu0
  %8662 = vmatprep.mubr.bf16.mxu0 0
  %8663 = vmatmul.mubr.bf16.gmra.mxu0 %v6485
  %v8664 = vpop.f32.mrf.mxu0
  %v8665 = vadd.f32 %v8376, %v8664
  %v8666 = vpop.f32.mrf.mxu0
  %v8667 = vpop.f32.mrf.mxu0
  %v8668 = vadd.f32 %v8379, %v8667
  %v8669 = vpop.f32.mrf.mxu0
  %8670 = vmatprep.mubr.bf16.mxu0 0
  %8671 = vmatmul.mubr.bf16.gmra.mxu0 %v6494
  %v8672 = vpop.f32.mrf.mxu0
  %v8673 = vadd.f32 %v8384, %v8672
  %v8674 = vpop.f32.mrf.mxu0
  %v8675 = vpop.f32.mrf.mxu0
  %v8676 = vadd.f32 %v8387, %v8675
  %v8677 = vpop.f32.mrf.mxu0
  %8678 = vmatprep.mubr.bf16.mxu0 0
  %8679 = vmatmul.mubr.bf16.gmra.mxu0 %v6503
  %v8680 = vpop.f32.mrf.mxu0
  %v8681 = vadd.f32 %v8392, %v8680
  %v8682 = vpop.f32.mrf.mxu0
  %v8683 = vpop.f32.mrf.mxu0
  %v8684 = vadd.f32 %v8395, %v8683
  %v8685 = vpop.f32.mrf.mxu0
  %8686 = vmatprep.mubr.bf16.mxu0 0
  %8687 = vmatmul.mubr.bf16.gmra.mxu0 %v6512
  %v8688 = vpop.f32.mrf.mxu0
  %v8689 = vadd.f32 %v8400, %v8688
  %v8690 = vpop.f32.mrf.mxu0
  %v8691 = vpop.f32.mrf.mxu0
  %v8692 = vadd.f32 %v8403, %v8691
  %v8693 = vpop.f32.mrf.mxu0
  %8694 = vmatprep.mubr.bf16.mxu0 0
  %8695 = vmatmul.mubr.bf16.gmra.mxu0 %v6521
  %v8696 = vpop.f32.mrf.mxu0
  %v8697 = vadd.f32 %v8408, %v8696
  %v8698 = vpop.f32.mrf.mxu0
  %v8699 = vpop.f32.mrf.mxu0
  %v8700 = vadd.f32 %v8411, %v8699
  %v8701 = vpop.f32.mrf.mxu0
  %8702 = vmatprep.mubr.bf16.mxu0 0
  %8703 = vmatmul.mubr.bf16.gmra.mxu0 %v6530
  %v8704 = vpop.f32.mrf.mxu0
  %v8705 = vadd.f32 %v8416, %v8704
  %v8706 = vpop.f32.mrf.mxu0
  %v8707 = vpop.f32.mrf.mxu0
  %v8708 = vadd.f32 %v8419, %v8707
  %v8709 = vpop.f32.mrf.mxu0
  %8710 = vmatprep.mubr.bf16.mxu0 0
  %8711 = vmatmul.mubr.bf16.gmra.mxu0 %v6539
  %v8712 = vpop.f32.mrf.mxu0
  %v8713 = vadd.f32 %v8424, %v8712
  %v8714 = vpop.f32.mrf.mxu0
  %v8715 = vpop.f32.mrf.mxu0
  %v8716 = vadd.f32 %v8427, %v8715
  %v8717 = vpop.f32.mrf.mxu0
  %8718 = vmatprep.mubr.bf16.mxu0 0
  %8719 = vmatmul.mubr.bf16.gmra.mxu0 %v6548
  %v8720 = vpop.f32.mrf.mxu0
  %v8721 = vadd.f32 %v8432, %v8720
  %v8722 = vpop.f32.mrf.mxu0
  %v8723 = vpop.f32.mrf.mxu0
  %v8724 = vadd.f32 %v8435, %v8723
  %v8725 = vpop.f32.mrf.mxu0
  %8726 = vmatprep.mubr.bf16.mxu0 0
  %8727 = vmatmul.mubr.bf16.gmra.mxu0 %v6557
  %v8728 = vpop.f32.mrf.mxu0
  %v8729 = vadd.f32 %v8440, %v8728
  %v8730 = vpop.f32.mrf.mxu0
  %v8731 = vpop.f32.mrf.mxu0
  %v8732 = vadd.f32 %v8443, %v8731
  %v8733 = vpop.f32.mrf.mxu0
  %8734 = vmatprep.mubr.bf16.mxu0 0
  %8735 = vmatmul.mubr.bf16.gmra.mxu0 %v6566
  %v8736 = vpop.f32.mrf.mxu0
  %v8737 = vadd.f32 %v8448, %v8736
  %v8738 = vpop.f32.mrf.mxu0
  %v8739 = vpop.f32.mrf.mxu0
  %v8740 = vadd.f32 %v8451, %v8739
  %v8741 = vpop.f32.mrf.mxu0
  %8742 = vmatprep.mubr.bf16.mxu0 0
  %8743 = vmatmul.mubr.bf16.gmra.mxu0 %v6575
  %v8744 = vpop.f32.mrf.mxu0
  %v8745 = vadd.f32 %v8456, %v8744
  %v8746 = vpop.f32.mrf.mxu0
  %v8747 = vpop.f32.mrf.mxu0
  %v8748 = vadd.f32 %v8459, %v8747
  %v8749 = vpop.f32.mrf.mxu0
  %8750 = vmatprep.mubr.bf16.mxu0 0
  %8751 = vmatmul.mubr.bf16.gmra.mxu0 %v6584
  %v8752 = vpop.f32.mrf.mxu0
  %v8753 = vadd.f32 %v8464, %v8752
  %v8754 = vpop.f32.mrf.mxu0
  %v8755 = vpop.f32.mrf.mxu0
  %v8756 = vadd.f32 %v8467, %v8755
  %v8757 = vpop.f32.mrf.mxu0
  %8758 = vmatprep.mubr.bf16.mxu0 0
  %8759 = vmatmul.mubr.bf16.gmra.mxu0 %v6593
  %v8760 = vpop.f32.mrf.mxu0
  %v8761 = vadd.f32 %v8472, %v8760
  %v8762 = vpop.f32.mrf.mxu0
  %v8763 = vpop.f32.mrf.mxu0
  %v8764 = vadd.f32 %v8475, %v8763
  %v8765 = vpop.f32.mrf.mxu0
  %8766 = vmatprep.mubr.bf16.mxu0 0
  %8767 = vmatmul.mubr.bf16.gmra.mxu0 %v6602
  %v8768 = vpop.f32.mrf.mxu0
  %v8769 = vadd.f32 %v8480, %v8768
  %v8770 = vpop.f32.mrf.mxu0
  %v8771 = vpop.f32.mrf.mxu0
  %v8772 = vadd.f32 %v8483, %v8771
  %v8773 = vpop.f32.mrf.mxu0
  %8774 = vmatprep.mubr.bf16.mxu0 0
  %8775 = vmatmul.mubr.bf16.gmra.mxu0 %v6611
  %v8776 = vpop.f32.mrf.mxu0
  %v8777 = vadd.f32 %v8488, %v8776
  %v8778 = vpop.f32.mrf.mxu0
  %v8779 = vpop.f32.mrf.mxu0
  %v8780 = vadd.f32 %v8491, %v8779
  %v8781 = vpop.f32.mrf.mxu0
  %8782 = vmatprep.mubr.bf16.mxu0 0
  %8783 = vmatmul.mubr.bf16.gmra.mxu0 %v6620
  %v8784 = vpop.f32.mrf.mxu0
  %v8785 = vadd.f32 %v8496, %v8784
  %v8786 = vpop.f32.mrf.mxu0
  %v8787 = vpop.f32.mrf.mxu0
  %v8788 = vadd.f32 %v8499, %v8787
  %v8789 = vpop.f32.mrf.mxu0
  %8790 = vmatprep.mubr.bf16.mxu0 0
  %8791 = vmatmul.mubr.bf16.gmra.mxu0 %v6629
  %v8792 = vpop.f32.mrf.mxu0
  %v8793 = vadd.f32 %v8504, %v8792
  %v8794 = vpop.f32.mrf.mxu0
  %v8795 = vpop.f32.mrf.mxu0
  %v8796 = vadd.f32 %v8507, %v8795
  %v8797 = vpop.f32.mrf.mxu0
  %8798 = vmatprep.mubr.bf16.mxu0 0
  %8799 = vmatmul.mubr.bf16.gmra.mxu0 %v6638
  %v8800 = vpop.f32.mrf.mxu0
  %v8801 = vadd.f32 %v8512, %v8800
  %v8802 = vpop.f32.mrf.mxu0
  %v8803 = vpop.f32.mrf.mxu0
  %v8804 = vadd.f32 %v8515, %v8803
  %v8805 = vpop.f32.mrf.mxu0
  %8806 = vmatprep.mubr.bf16.mxu0 0
  %8807 = vmatmul.mubr.bf16.gmra.mxu0 %v6647
  %v8808 = vpop.f32.mrf.mxu0
  %v8809 = vadd.f32 %v8520, %v8808
  %v8810 = vpop.f32.mrf.mxu0
  %v8811 = vpop.f32.mrf.mxu0
  %v8812 = vadd.f32 %v8523, %v8811
  %v8813 = vpop.f32.mrf.mxu0
  %8814 = vmatprep.mubr.bf16.mxu0 0
  %8815 = vmatmul.mubr.bf16.gmra.mxu0 %v6656
  %v8816 = vpop.f32.mrf.mxu0
  %v8817 = vadd.f32 %v8528, %v8816
  %v8818 = vpop.f32.mrf.mxu0
  %v8819 = vpop.f32.mrf.mxu0
  %v8820 = vadd.f32 %v8531, %v8819
  %v8821 = vpop.f32.mrf.mxu0
  %8822 = vmatprep.mubr.bf16.mxu0 0
  %8823 = vmatmul.mubr.bf16.gmra.mxu0 %v6665
  %v8824 = vpop.f32.mrf.mxu0
  %v8825 = vadd.f32 %v8536, %v8824
  %v8826 = vpop.f32.mrf.mxu0
  %v8827 = vpop.f32.mrf.mxu0
  %v8828 = vadd.f32 %v8539, %v8827
  %v8829 = vpop.f32.mrf.mxu0
  %8830 = vdwg.mxu0
  %v8831 = vadd.f32 %v8577, %v8580
  %v8832 = vadd.f32 %v8831, %v8585
  %v8833 = vadd.f32 %v8832, %v8588
  %v8834 = vadd.f32 %v8833, %v8593
  %v8835 = vadd.f32 %v8834, %v8596
  %v8836 = vadd.f32 %v8835, %v8601
  %v8837 = vadd.f32 %v8836, %v8604
  %v8838 = vadd.f32 %v8837, %v8609
  %v8839 = vadd.f32 %v8838, %v8612
  %v8840 = vadd.f32 %v8839, %v8617
  %v8841 = vadd.f32 %v8840, %v8620
  %v8842 = vadd.f32 %v8841, %v8625
  %v8843 = vadd.f32 %v8842, %v8628
  %v8844 = vadd.f32 %v8843, %v8633
  %v8845 = vadd.f32 %v8844, %v8636
  %v8846 = vadd.f32 %v8845, %v8641
  %v8847 = vadd.f32 %v8846, %v8644
  %v8848 = vadd.f32 %v8847, %v8649
  %v8849 = vadd.f32 %v8848, %v8652
  %v8850 = vadd.f32 %v8849, %v8657
  %v8851 = vadd.f32 %v8850, %v8660
  %v8852 = vadd.f32 %v8851, %v8665
  %v8853 = vadd.f32 %v8852, %v8668
  %v8854 = vadd.f32 %v8853, %v8673
  %v8855 = vadd.f32 %v8854, %v8676
  %v8856 = vadd.f32 %v8855, %v8681
  %v8857 = vadd.f32 %v8856, %v8684
  %v8858 = vadd.f32 %v8857, %v8689
  %v8859 = vadd.f32 %v8858, %v8692
  %v8860 = vadd.f32 %v8859, %v8697
  %v8861 = vadd.f32 %v8860, %v8700
  %v8862 = vadd.f32 %v8861, %v8705
  %v8863 = vadd.f32 %v8862, %v8708
  %v8864 = vadd.f32 %v8863, %v8713
  %v8865 = vadd.f32 %v8864, %v8716
  %v8866 = vadd.f32 %v8865, %v8721
  %v8867 = vadd.f32 %v8866, %v8724
  %v8868 = vadd.f32 %v8867, %v8729
  %v8869 = vadd.f32 %v8868, %v8732
  %v8870 = vadd.f32 %v8869, %v8737
  %v8871 = vadd.f32 %v8870, %v8740
  %v8872 = vadd.f32 %v8871, %v8745
  %v8873 = vadd.f32 %v8872, %v8748
  %v8874 = vadd.f32 %v8873, %v8753
  %v8875 = vadd.f32 %v8874, %v8756
  %v8876 = vadd.f32 %v8875, %v8761
  %v8877 = vadd.f32 %v8876, %v8764
  %v8878 = vadd.f32 %v8877, %v8769
  %v8879 = vadd.f32 %v8878, %v8772
  %v8880 = vadd.f32 %v8879, %v8777
  %v8881 = vadd.f32 %v8880, %v8780
  %v8882 = vadd.f32 %v8881, %v8785
  %v8883 = vadd.f32 %v8882, %v8788
  %v8884 = vadd.f32 %v8883, %v8793
  %v8885 = vadd.f32 %v8884, %v8796
  %v8886 = vadd.f32 %v8885, %v8801
  %v8887 = vadd.f32 %v8886, %v8804
  %v8888 = vadd.f32 %v8887, %v8809
  %v8889 = vadd.f32 %v8888, %v8812
  %v8890 = vadd.f32 %v8889, %v8817
  %v8891 = vadd.f32 %v8890, %v8820
  %v8892 = vadd.f32 %v8891, %v8825
  %v8893 = vadd.f32 %v8892, %v8828
  %v8894 = vrot.slane %v8893, 4
  %v8895 = vadd.f32 %v8893, %v8894
  %v8896 = vrot.slane %v8895, 2
  %v8897 = vadd.f32 %v8895, %v8896
  %v8898 = vrot.slane %v8897, 1
  %v8899 = vadd.f32 %v8897, %v8898
  %v8900 = vmul.f32 %v8899, 0.001953125
  %v8901 = vsub.f32 %v8577, %v8900
  %v8902 = vsub.f32 %v8580, %v8900
  %v8903 = vsub.f32 %v8585, %v8900
  %v8904 = vsub.f32 %v8588, %v8900
  %v8905 = vsub.f32 %v8593, %v8900
  %v8906 = vsub.f32 %v8596, %v8900
  %v8907 = vsub.f32 %v8601, %v8900
  %v8908 = vsub.f32 %v8604, %v8900
  %v8909 = vsub.f32 %v8609, %v8900
  %v8910 = vsub.f32 %v8612, %v8900
  %v8911 = vsub.f32 %v8617, %v8900
  %v8912 = vsub.f32 %v8620, %v8900
  %v8913 = vsub.f32 %v8625, %v8900
  %v8914 = vsub.f32 %v8628, %v8900
  %v8915 = vsub.f32 %v8633, %v8900
  %v8916 = vsub.f32 %v8636, %v8900
  %v8917 = vsub.f32 %v8641, %v8900
  %v8918 = vsub.f32 %v8644, %v8900
  %v8919 = vsub.f32 %v8649, %v8900
  %v8920 = vsub.f32 %v8652, %v8900
  %v8921 = vsub.f32 %v8657, %v8900
  %v8922 = vsub.f32 %v8660, %v8900
  %v8923 = vsub.f32 %v8665, %v8900
  %v8924 = vsub.f32 %v8668, %v8900
  %v8925 = vsub.f32 %v8673, %v8900
  %v8926 = vsub.f32 %v8676, %v8900
  %v8927 = vsub.f32 %v8681, %v8900
  %v8928 = vsub.f32 %v8684, %v8900
  %v8929 = vsub.f32 %v8689, %v8900
  %v8930 = vsub.f32 %v8692, %v8900
  %v8931 = vsub.f32 %v8697, %v8900
  %v8932 = vsub.f32 %v8700, %v8900
  %v8933 = vsub.f32 %v8705, %v8900
  %v8934 = vsub.f32 %v8708, %v8900
  %v8935 = vsub.f32 %v8713, %v8900
  %v8936 = vsub.f32 %v8716, %v8900
  %v8937 = vsub.f32 %v8721, %v8900
  %v8938 = vsub.f32 %v8724, %v8900
  %v8939 = vsub.f32 %v8729, %v8900
  %v8940 = vsub.f32 %v8732, %v8900
  %v8941 = vsub.f32 %v8737, %v8900
  %v8942 = vsub.f32 %v8740, %v8900
  %v8943 = vsub.f32 %v8745, %v8900
  %v8944 = vsub.f32 %v8748, %v8900
  %v8945 = vsub.f32 %v8753, %v8900
  %v8946 = vsub.f32 %v8756, %v8900
  %v8947 = vsub.f32 %v8761, %v8900
  %v8948 = vsub.f32 %v8764, %v8900
  %v8949 = vsub.f32 %v8769, %v8900
  %v8950 = vsub.f32 %v8772, %v8900
  %v8951 = vsub.f32 %v8777, %v8900
  %v8952 = vsub.f32 %v8780, %v8900
  %v8953 = vsub.f32 %v8785, %v8900
  %v8954 = vsub.f32 %v8788, %v8900
  %v8955 = vsub.f32 %v8793, %v8900
  %v8956 = vsub.f32 %v8796, %v8900
  %v8957 = vsub.f32 %v8801, %v8900
  %v8958 = vsub.f32 %v8804, %v8900
  %v8959 = vsub.f32 %v8809, %v8900
  %v8960 = vsub.f32 %v8812, %v8900
  %v8961 = vsub.f32 %v8817, %v8900
  %v8962 = vsub.f32 %v8820, %v8900
  %v8963 = vsub.f32 %v8825, %v8900
  %v8964 = vsub.f32 %v8828, %v8900
  %v8965 = vmul.f32 %v8901, %v8901
  %v8966 = vmul.f32 %v8902, %v8902
  %v8967 = vmul.f32 %v8903, %v8903
  %v8968 = vmul.f32 %v8904, %v8904
  %v8969 = vmul.f32 %v8905, %v8905
  %v8970 = vmul.f32 %v8906, %v8906
  %v8971 = vmul.f32 %v8907, %v8907
  %v8972 = vmul.f32 %v8908, %v8908
  %v8973 = vmul.f32 %v8909, %v8909
  %v8974 = vmul.f32 %v8910, %v8910
  %v8975 = vmul.f32 %v8911, %v8911
  %v8976 = vmul.f32 %v8912, %v8912
  %v8977 = vmul.f32 %v8913, %v8913
  %v8978 = vmul.f32 %v8914, %v8914
  %v8979 = vmul.f32 %v8915, %v8915
  %v8980 = vmul.f32 %v8916, %v8916
  %v8981 = vmul.f32 %v8917, %v8917
  %v8982 = vmul.f32 %v8918, %v8918
  %v8983 = vmul.f32 %v8919, %v8919
  %v8984 = vmul.f32 %v8920, %v8920
  %v8985 = vmul.f32 %v8921, %v8921
  %v8986 = vmul.f32 %v8922, %v8922
  %v8987 = vmul.f32 %v8923, %v8923
  %v8988 = vmul.f32 %v8924, %v8924
  %v8989 = vmul.f32 %v8925, %v8925
  %v8990 = vmul.f32 %v8926, %v8926
  %v8991 = vmul.f32 %v8927, %v8927
  %v8992 = vmul.f32 %v8928, %v8928
  %v8993 = vmul.f32 %v8929, %v8929
  %v8994 = vmul.f32 %v8930, %v8930
  %v8995 = vmul.f32 %v8931, %v8931
  %v8996 = vmul.f32 %v8932, %v8932
  %v8997 = vmul.f32 %v8933, %v8933
  %v8998 = vmul.f32 %v8934, %v8934
  %v8999 = vmul.f32 %v8935, %v8935
  %v9000 = vmul.f32 %v8936, %v8936
  %v9001 = vmul.f32 %v8937, %v8937
  %v9002 = vmul.f32 %v8938, %v8938
  %v9003 = vmul.f32 %v8939, %v8939
  %v9004 = vmul.f32 %v8940, %v8940
  %v9005 = vmul.f32 %v8941, %v8941
  %v9006 = vmul.f32 %v8942, %v8942
  %v9007 = vmul.f32 %v8943, %v8943
  %v9008 = vmul.f32 %v8944, %v8944
  %v9009 = vmul.f32 %v8945, %v8945
  %v9010 = vmul.f32 %v8946, %v8946
  %v9011 = vmul.f32 %v8947, %v8947
  %v9012 = vmul.f32 %v8948, %v8948
  %v9013 = vmul.f32 %v8949, %v8949
  %v9014 = vmul.f32 %v8950, %v8950
  %v9015 = vmul.f32 %v8951, %v8951
  %v9016 = vmul.f32 %v8952, %v8952
  %v9017 = vmul.f32 %v8953, %v8953
  %v9018 = vmul.f32 %v8954, %v8954
  %v9019 = vmul.f32 %v8955, %v8955
  %v9020 = vmul.f32 %v8956, %v8956
  %v9021 = vmul.f32 %v8957, %v8957
  %v9022 = vmul.f32 %v8958, %v8958
  %v9023 = vmul.f32 %v8959, %v8959
  %v9024 = vmul.f32 %v8960, %v8960
  %v9025 = vmul.f32 %v8961, %v8961
  %v9026 = vmul.f32 %v8962, %v8962
  %v9027 = vmul.f32 %v8963, %v8963
  %v9028 = vmul.f32 %v8964, %v8964
  %v9029 = vadd.f32 %v8965, %v8966
  %v9030 = vadd.f32 %v9029, %v8967
  %v9031 = vadd.f32 %v9030, %v8968
  %v9032 = vadd.f32 %v9031, %v8969
  %v9033 = vadd.f32 %v9032, %v8970
  %v9034 = vadd.f32 %v9033, %v8971
  %v9035 = vadd.f32 %v9034, %v8972
  %v9036 = vadd.f32 %v9035, %v8973
  %v9037 = vadd.f32 %v9036, %v8974
  %v9038 = vadd.f32 %v9037, %v8975
  %v9039 = vadd.f32 %v9038, %v8976
  %v9040 = vadd.f32 %v9039, %v8977
  %v9041 = vadd.f32 %v9040, %v8978
  %v9042 = vadd.f32 %v9041, %v8979
  %v9043 = vadd.f32 %v9042, %v8980
  %v9044 = vadd.f32 %v9043, %v8981
  %v9045 = vadd.f32 %v9044, %v8982
  %v9046 = vadd.f32 %v9045, %v8983
  %v9047 = vadd.f32 %v9046, %v8984
  %v9048 = vadd.f32 %v9047, %v8985
  %v9049 = vadd.f32 %v9048, %v8986
  %v9050 = vadd.f32 %v9049, %v8987
  %v9051 = vadd.f32 %v9050, %v8988
  %v9052 = vadd.f32 %v9051, %v8989
  %v9053 = vadd.f32 %v9052, %v8990
  %v9054 = vadd.f32 %v9053, %v8991
  %v9055 = vadd.f32 %v9054, %v8992
  %v9056 = vadd.f32 %v9055, %v8993
  %v9057 = vadd.f32 %v9056, %v8994
  %v9058 = vadd.f32 %v9057, %v8995
  %v9059 = vadd.f32 %v9058, %v8996
  %v9060 = vadd.f32 %v9059, %v8997
  %v9061 = vadd.f32 %v9060, %v8998
  %v9062 = vadd.f32 %v9061, %v8999
  %v9063 = vadd.f32 %v9062, %v9000
  %v9064 = vadd.f32 %v9063, %v9001
  %v9065 = vadd.f32 %v9064, %v9002
  %v9066 = vadd.f32 %v9065, %v9003
  %v9067 = vadd.f32 %v9066, %v9004
  %v9068 = vadd.f32 %v9067, %v9005
  %v9069 = vadd.f32 %v9068, %v9006
  %v9070 = vadd.f32 %v9069, %v9007
  %v9071 = vadd.f32 %v9070, %v9008
  %v9072 = vadd.f32 %v9071, %v9009
  %v9073 = vadd.f32 %v9072, %v9010
  %v9074 = vadd.f32 %v9073, %v9011
  %v9075 = vadd.f32 %v9074, %v9012
  %v9076 = vadd.f32 %v9075, %v9013
  %v9077 = vadd.f32 %v9076, %v9014
  %v9078 = vadd.f32 %v9077, %v9015
  %v9079 = vadd.f32 %v9078, %v9016
  %v9080 = vadd.f32 %v9079, %v9017
  %v9081 = vadd.f32 %v9080, %v9018
  %v9082 = vadd.f32 %v9081, %v9019
  %v9083 = vadd.f32 %v9082, %v9020
  %v9084 = vadd.f32 %v9083, %v9021
  %v9085 = vadd.f32 %v9084, %v9022
  %v9086 = vadd.f32 %v9085, %v9023
  %v9087 = vadd.f32 %v9086, %v9024
  %v9088 = vadd.f32 %v9087, %v9025
  %v9089 = vadd.f32 %v9088, %v9026
  %v9090 = vadd.f32 %v9089, %v9027
  %v9091 = vadd.f32 %v9090, %v9028
  %v9092 = vrot.slane %v9091, 4
  %v9093 = vadd.f32 %v9091, %v9092
  %v9094 = vrot.slane %v9093, 2
  %v9095 = vadd.f32 %v9093, %v9094
  %v9096 = vrot.slane %v9095, 1
  %v9097 = vadd.f32 %v9095, %v9096
  %v9098 = vmul.f32 %v9097, 0.001953125
  %v9099 = vadd.f32 %v9098, 1e-05
  %v9100 = vrsqrt.pop %v9099
  %v9101 = vmul.f32 %v8901, %v9100
  %v9102 = vmul.f32 %v8902, %v9100
  %v9103 = vmul.f32 %v8903, %v9100
  %v9104 = vmul.f32 %v8904, %v9100
  %v9105 = vmul.f32 %v8905, %v9100
  %v9106 = vmul.f32 %v8906, %v9100
  %v9107 = vmul.f32 %v8907, %v9100
  %v9108 = vmul.f32 %v8908, %v9100
  %v9109 = vmul.f32 %v8909, %v9100
  %v9110 = vmul.f32 %v8910, %v9100
  %v9111 = vmul.f32 %v8911, %v9100
  %v9112 = vmul.f32 %v8912, %v9100
  %v9113 = vmul.f32 %v8913, %v9100
  %v9114 = vmul.f32 %v8914, %v9100
  %v9115 = vmul.f32 %v8915, %v9100
  %v9116 = vmul.f32 %v8916, %v9100
  %v9117 = vmul.f32 %v8917, %v9100
  %v9118 = vmul.f32 %v8918, %v9100
  %v9119 = vmul.f32 %v8919, %v9100
  %v9120 = vmul.f32 %v8920, %v9100
  %v9121 = vmul.f32 %v8921, %v9100
  %v9122 = vmul.f32 %v8922, %v9100
  %v9123 = vmul.f32 %v8923, %v9100
  %v9124 = vmul.f32 %v8924, %v9100
  %v9125 = vmul.f32 %v8925, %v9100
  %v9126 = vmul.f32 %v8926, %v9100
  %v9127 = vmul.f32 %v8927, %v9100
  %v9128 = vmul.f32 %v8928, %v9100
  %v9129 = vmul.f32 %v8929, %v9100
  %v9130 = vmul.f32 %v8930, %v9100
  %v9131 = vmul.f32 %v8931, %v9100
  %v9132 = vmul.f32 %v8932, %v9100
  %v9133 = vmul.f32 %v8933, %v9100
  %v9134 = vmul.f32 %v8934, %v9100
  %v9135 = vmul.f32 %v8935, %v9100
  %v9136 = vmul.f32 %v8936, %v9100
  %v9137 = vmul.f32 %v8937, %v9100
  %v9138 = vmul.f32 %v8938, %v9100
  %v9139 = vmul.f32 %v8939, %v9100
  %v9140 = vmul.f32 %v8940, %v9100
  %v9141 = vmul.f32 %v8941, %v9100
  %v9142 = vmul.f32 %v8942, %v9100
  %v9143 = vmul.f32 %v8943, %v9100
  %v9144 = vmul.f32 %v8944, %v9100
  %v9145 = vmul.f32 %v8945, %v9100
  %v9146 = vmul.f32 %v8946, %v9100
  %v9147 = vmul.f32 %v8947, %v9100
  %v9148 = vmul.f32 %v8948, %v9100
  %v9149 = vmul.f32 %v8949, %v9100
  %v9150 = vmul.f32 %v8950, %v9100
  %v9151 = vmul.f32 %v8951, %v9100
  %v9152 = vmul.f32 %v8952, %v9100
  %v9153 = vmul.f32 %v8953, %v9100
  %v9154 = vmul.f32 %v8954, %v9100
  %v9155 = vmul.f32 %v8955, %v9100
  %v9156 = vmul.f32 %v8956, %v9100
  %v9157 = vmul.f32 %v8957, %v9100
  %v9158 = vmul.f32 %v8958, %v9100
  %v9159 = vmul.f32 %v8959, %v9100
  %v9160 = vmul.f32 %v8960, %v9100
  %v9161 = vmul.f32 %v8961, %v9100
  %v9162 = vmul.f32 %v8962, %v9100
  %v9163 = vmul.f32 %v8963, %v9100
  %v9164 = vmul.f32 %v8964, %v9100
  %v9165 = vld [vmem:[%s2] sm:$0x1]
  %v9167 = vlaneseq
  %v9168 = vshrl.u32 %v9167, 7
  %v9169 = vsub.s32 0, %v9168
  %v9170 = vrot.slane %v9165, %v9169
  %v9172 = vmul.f32 %v9101, %v9170
  %v9173 = vmul.f32 %v9102, %v9170
  %v9174 = vmul.f32 %v9103, %v9170
  %v9175 = vmul.f32 %v9104, %v9170
  %v9176 = vmul.f32 %v9105, %v9170
  %v9177 = vmul.f32 %v9106, %v9170
  %v9178 = vmul.f32 %v9107, %v9170
  %v9179 = vmul.f32 %v9108, %v9170
  %v9180 = vmul.f32 %v9109, %v9170
  %v9181 = vmul.f32 %v9110, %v9170
  %v9182 = vmul.f32 %v9111, %v9170
  %v9183 = vmul.f32 %v9112, %v9170
  %v9184 = vmul.f32 %v9113, %v9170
  %v9185 = vmul.f32 %v9114, %v9170
  %v9186 = vmul.f32 %v9115, %v9170
  %v9187 = vmul.f32 %v9116, %v9170
  %v9188 = vmul.f32 %v9117, %v9170
  %v9189 = vmul.f32 %v9118, %v9170
  %v9190 = vmul.f32 %v9119, %v9170
  %v9191 = vmul.f32 %v9120, %v9170
  %v9192 = vmul.f32 %v9121, %v9170
  %v9193 = vmul.f32 %v9122, %v9170
  %v9194 = vmul.f32 %v9123, %v9170
  %v9195 = vmul.f32 %v9124, %v9170
  %v9196 = vmul.f32 %v9125, %v9170
  %v9197 = vmul.f32 %v9126, %v9170
  %v9198 = vmul.f32 %v9127, %v9170
  %v9199 = vmul.f32 %v9128, %v9170
  %v9200 = vmul.f32 %v9129, %v9170
  %v9201 = vmul.f32 %v9130, %v9170
  %v9202 = vmul.f32 %v9131, %v9170
  %v9203 = vmul.f32 %v9132, %v9170
  %v9204 = vmul.f32 %v9133, %v9170
  %v9205 = vmul.f32 %v9134, %v9170
  %v9206 = vmul.f32 %v9135, %v9170
  %v9207 = vmul.f32 %v9136, %v9170
  %v9208 = vmul.f32 %v9137, %v9170
  %v9209 = vmul.f32 %v9138, %v9170
  %v9210 = vmul.f32 %v9139, %v9170
  %v9211 = vmul.f32 %v9140, %v9170
  %v9212 = vmul.f32 %v9141, %v9170
  %v9213 = vmul.f32 %v9142, %v9170
  %v9214 = vmul.f32 %v9143, %v9170
  %v9215 = vmul.f32 %v9144, %v9170
  %v9216 = vmul.f32 %v9145, %v9170
  %v9217 = vmul.f32 %v9146, %v9170
  %v9218 = vmul.f32 %v9147, %v9170
  %v9219 = vmul.f32 %v9148, %v9170
  %v9220 = vmul.f32 %v9149, %v9170
  %v9221 = vmul.f32 %v9150, %v9170
  %v9222 = vmul.f32 %v9151, %v9170
  %v9223 = vmul.f32 %v9152, %v9170
  %v9224 = vmul.f32 %v9153, %v9170
  %v9225 = vmul.f32 %v9154, %v9170
  %v9226 = vmul.f32 %v9155, %v9170
  %v9227 = vmul.f32 %v9156, %v9170
  %v9228 = vmul.f32 %v9157, %v9170
  %v9229 = vmul.f32 %v9158, %v9170
  %v9230 = vmul.f32 %v9159, %v9170
  %v9231 = vmul.f32 %v9160, %v9170
  %v9232 = vmul.f32 %v9161, %v9170
  %v9233 = vmul.f32 %v9162, %v9170
  %v9234 = vmul.f32 %v9163, %v9170
  %v9235 = vmul.f32 %v9164, %v9170
  %v9236 = vld [vmem:[%s3] sm:$0x1]
  %v9238 = vlaneseq
  %v9239 = vshrl.u32 %v9238, 7
  %v9240 = vsub.s32 0, %v9239
  %v9241 = vrot.slane %v9236, %v9240
  %v9243 = vadd.f32 %v9172, %v9241
  %v9244 = vadd.f32 %v9173, %v9241
  %v9245 = vadd.f32 %v9174, %v9241
  %v9246 = vadd.f32 %v9175, %v9241
  %v9247 = vadd.f32 %v9176, %v9241
  %v9248 = vadd.f32 %v9177, %v9241
  %v9249 = vadd.f32 %v9178, %v9241
  %v9250 = vadd.f32 %v9179, %v9241
  %v9251 = vadd.f32 %v9180, %v9241
  %v9252 = vadd.f32 %v9181, %v9241
  %v9253 = vadd.f32 %v9182, %v9241
  %v9254 = vadd.f32 %v9183, %v9241
  %v9255 = vadd.f32 %v9184, %v9241
  %v9256 = vadd.f32 %v9185, %v9241
  %v9257 = vadd.f32 %v9186, %v9241
  %v9258 = vadd.f32 %v9187, %v9241
  %v9259 = vadd.f32 %v9188, %v9241
  %v9260 = vadd.f32 %v9189, %v9241
  %v9261 = vadd.f32 %v9190, %v9241
  %v9262 = vadd.f32 %v9191, %v9241
  %v9263 = vadd.f32 %v9192, %v9241
  %v9264 = vadd.f32 %v9193, %v9241
  %v9265 = vadd.f32 %v9194, %v9241
  %v9266 = vadd.f32 %v9195, %v9241
  %v9267 = vadd.f32 %v9196, %v9241
  %v9268 = vadd.f32 %v9197, %v9241
  %v9269 = vadd.f32 %v9198, %v9241
  %v9270 = vadd.f32 %v9199, %v9241
  %v9271 = vadd.f32 %v9200, %v9241
  %v9272 = vadd.f32 %v9201, %v9241
  %v9273 = vadd.f32 %v9202, %v9241
  %v9274 = vadd.f32 %v9203, %v9241
  %v9275 = vadd.f32 %v9204, %v9241
  %v9276 = vadd.f32 %v9205, %v9241
  %v9277 = vadd.f32 %v9206, %v9241
  %v9278 = vadd.f32 %v9207, %v9241
  %v9279 = vadd.f32 %v9208, %v9241
  %v9280 = vadd.f32 %v9209, %v9241
  %v9281 = vadd.f32 %v9210, %v9241
  %v9282 = vadd.f32 %v9211, %v9241
  %v9283 = vadd.f32 %v9212, %v9241
  %v9284 = vadd.f32 %v9213, %v9241
  %v9285 = vadd.f32 %v9214, %v9241
  %v9286 = vadd.f32 %v9215, %v9241
  %v9287 = vadd.f32 %v9216, %v9241
  %v9288 = vadd.f32 %v9217, %v9241
  %v9289 = vadd.f32 %v9218, %v9241
  %v9290 = vadd.f32 %v9219, %v9241
  %v9291 = vadd.f32 %v9220, %v9241
  %v9292 = vadd.f32 %v9221, %v9241
  %v9293 = vadd.f32 %v9222, %v9241
  %v9294 = vadd.f32 %v9223, %v9241
  %v9295 = vadd.f32 %v9224, %v9241
  %v9296 = vadd.f32 %v9225, %v9241
  %v9297 = vadd.f32 %v9226, %v9241
  %v9298 = vadd.f32 %v9227, %v9241
  %v9299 = vadd.f32 %v9228, %v9241
  %v9300 = vadd.f32 %v9229, %v9241
  %v9301 = vadd.f32 %v9230, %v9241
  %v9302 = vadd.f32 %v9231, %v9241
  %v9303 = vadd.f32 %v9232, %v9241
  %v9304 = vadd.f32 %v9233, %v9241
  %v9305 = vadd.f32 %v9234, %v9241
  %v9306 = vadd.f32 %v9235, %v9241
  %9307 = vst [vmem:[%s4] sm:$0xf] 0
  %9308 = vst [vmem:[%s4 + $0x4] sm:$0xf] 0
  %9309 = vst [vmem:[%s4 + $0x8] sm:$0x1] 0
  %9310 = vst [vmem:[%s4 + $0xd8] sm:$0xf] 0
  %9311 = vst [vmem:[%s4 + $0xdc] sm:$0xf] 0
  %9312 = vst [vmem:[%s4 + $0xe0] sm:$0x1] 0
  %s9313 = scalar_lea.vmem %s4, 204
  %9314 = vst [vmem:[%s9313] sm:$0xf] 0
  %9315 = vst [vmem:[%s9313 + $0x4] sm:$0xf] 0
  %9316 = vst [vmem:[%s9313 + $0x8] sm:$0x1] 0
  %9317 = vst [vmem:[%s9313 + $0xd8] sm:$0xf] 0
  %9318 = vst [vmem:[%s9313 + $0xdc] sm:$0xf] 0
  %9319 = vst [vmem:[%s9313 + $0xe0] sm:$0x1] 0
  %vm9320 = vcmask 1040384
  %vm9321 = vsmask.f32 256
  %vm9322 = vmand %vm9320, %vm9321
  %v9323 = vld [vmem:[%s4] sm:$0x1]
  %v9324 = vsel %vm9322, 0, %v9323
  %9325 = vst [vmem:[%s4] sm:$0x1] %v9324
  %v9326 = vld [vmem:[%s4 + $0xc] sm:$0x1]
  %v9327 = vsel %vm9322, 0, %v9326
  %9328 = vst [vmem:[%s4 + $0xc] sm:$0x1] %v9327
  %v9329 = vld [vmem:[%s4 + $0x18] sm:$0x1]
  %v9330 = vsel %vm9322, 0, %v9329
  %9331 = vst [vmem:[%s4 + $0x18] sm:$0x1] %v9330
  %v9332 = vld [vmem:[%s4 + $0x24] sm:$0x1]
  %v9333 = vsel %vm9322, 0, %v9332
  %9334 = vst [vmem:[%s4 + $0x24] sm:$0x1] %v9333
  %v9335 = vld [vmem:[%s4 + $0x30] sm:$0x1]
  %v9336 = vsel %vm9322, 0, %v9335
  %9337 = vst [vmem:[%s4 + $0x30] sm:$0x1] %v9336
  %v9338 = vld [vmem:[%s4 + $0x3c] sm:$0x1]
  %v9339 = vsel %vm9322, 0, %v9338
  %9340 = vst [vmem:[%s4 + $0x3c] sm:$0x1] %v9339
  %v9341 = vld [vmem:[%s4 + $0x48] sm:$0x1]
  %v9342 = vsel %vm9322, 0, %v9341
  %9343 = vst [vmem:[%s4 + $0x48] sm:$0x1] %v9342
  %v9344 = vld [vmem:[%s4 + $0x54] sm:$0x1]
  %v9345 = vsel %vm9322, 0, %v9344
  %9346 = vst [vmem:[%s4 + $0x54] sm:$0x1] %v9345
  %v9347 = vld [vmem:[%s4 + $0x60] sm:$0x1]
  %v9348 = vsel %vm9322, 0, %v9347
  %9349 = vst [vmem:[%s4 + $0x60] sm:$0x1] %v9348
  %v9350 = vld [vmem:[%s4 + $0x6c] sm:$0x1]
  %v9351 = vsel %vm9322, 0, %v9350
  %9352 = vst [vmem:[%s4 + $0x6c] sm:$0x1] %v9351
  %v9353 = vld [vmem:[%s4 + $0x78] sm:$0x1]
  %v9354 = vsel %vm9322, 0, %v9353
  %9355 = vst [vmem:[%s4 + $0x78] sm:$0x1] %v9354
  %v9356 = vld [vmem:[%s4 + $0x84] sm:$0x1]
  %v9357 = vsel %vm9322, 0, %v9356
  %9358 = vst [vmem:[%s4 + $0x84] sm:$0x1] %v9357
  %v9359 = vld [vmem:[%s4 + $0x90] sm:$0x1]
  %v9360 = vsel %vm9322, 0, %v9359
  %9361 = vst [vmem:[%s4 + $0x90] sm:$0x1] %v9360
  %v9362 = vld [vmem:[%s4 + $0x9c] sm:$0x1]
  %v9363 = vsel %vm9322, 0, %v9362
  %9364 = vst [vmem:[%s4 + $0x9c] sm:$0x1] %v9363
  %v9365 = vld [vmem:[%s4 + $0xa8] sm:$0x1]
  %v9366 = vsel %vm9322, 0, %v9365
  %9367 = vst [vmem:[%s4 + $0xa8] sm:$0x1] %v9366
  %v9368 = vld [vmem:[%s4 + $0xb4] sm:$0x1]
  %v9369 = vsel %vm9322, 0, %v9368
  %9370 = vst [vmem:[%s4 + $0xb4] sm:$0x1] %v9369
  %v9371 = vld [vmem:[%s4 + $0xc0] sm:$0x1]
  %v9372 = vsel %vm9322, 0, %v9371
  %9373 = vst [vmem:[%s4 + $0xc0] sm:$0x1] %v9372
  %v9374 = vld [vmem:[%s4 + $0xcc] sm:$0x1]
  %v9375 = vsel %vm9322, 0, %v9374
  %9376 = vst [vmem:[%s4 + $0xcc] sm:$0x1] %v9375
  %v9377 = vld [vmem:[%s4 + $0xd8] sm:$0x1]
  %v9378 = vsel %vm9322, 0, %v9377
  %9379 = vst [vmem:[%s4 + $0xd8] sm:$0x1] %v9378
  %v9380 = vld [vmem:[%s4 + $0xe4] sm:$0x1]
  %v9381 = vsel %vm9322, 0, %v9380
  %9382 = vst [vmem:[%s4 + $0xe4] sm:$0x1] %v9381
  %v9383 = vld [vmem:[%s4 + $0xf0] sm:$0x1]
  %v9384 = vsel %vm9322, 0, %v9383
  %9385 = vst [vmem:[%s4 + $0xf0] sm:$0x1] %v9384
  %v9386 = vld [vmem:[%s4 + $0xfc] sm:$0x1]
  %v9387 = vsel %vm9322, 0, %v9386
  %9388 = vst [vmem:[%s4 + $0xfc] sm:$0x1] %v9387
  %v9389 = vld [vmem:[%s4 + $0x108] sm:$0x1]
  %v9390 = vsel %vm9322, 0, %v9389
  %9391 = vst [vmem:[%s4 + $0x108] sm:$0x1] %v9390
  %v9392 = vld [vmem:[%s4 + $0x114] sm:$0x1]
  %v9393 = vsel %vm9322, 0, %v9392
  %9394 = vst [vmem:[%s4 + $0x114] sm:$0x1] %v9393
  %v9395 = vld [vmem:[%s4 + $0x120] sm:$0x1]
  %v9396 = vsel %vm9322, 0, %v9395
  %9397 = vst [vmem:[%s4 + $0x120] sm:$0x1] %v9396
  %v9398 = vld [vmem:[%s4 + $0x12c] sm:$0x1]
  %v9399 = vsel %vm9322, 0, %v9398
  %9400 = vst [vmem:[%s4 + $0x12c] sm:$0x1] %v9399
  %v9401 = vld [vmem:[%s4 + $0x138] sm:$0x1]
  %v9402 = vsel %vm9322, 0, %v9401
  %9403 = vst [vmem:[%s4 + $0x138] sm:$0x1] %v9402
  %v9404 = vld [vmem:[%s4 + $0x144] sm:$0x1]
  %v9405 = vsel %vm9322, 0, %v9404
  %9406 = vst [vmem:[%s4 + $0x144] sm:$0x1] %v9405
  %v9407 = vld [vmem:[%s4 + $0x150] sm:$0x1]
  %v9408 = vsel %vm9322, 0, %v9407
  %9409 = vst [vmem:[%s4 + $0x150] sm:$0x1] %v9408
  %v9410 = vld [vmem:[%s4 + $0x15c] sm:$0x1]
  %v9411 = vsel %vm9322, 0, %v9410
  %9412 = vst [vmem:[%s4 + $0x15c] sm:$0x1] %v9411
  %v9413 = vld [vmem:[%s4 + $0x168] sm:$0x1]
  %v9414 = vsel %vm9322, 0, %v9413
  %9415 = vst [vmem:[%s4 + $0x168] sm:$0x1] %v9414
  %v9416 = vld [vmem:[%s4 + $0x174] sm:$0x1]
  %v9417 = vsel %vm9322, 0, %v9416
  %9418 = vst [vmem:[%s4 + $0x174] sm:$0x1] %v9417
  %v9419 = vld [vmem:[%s4 + $0x180] sm:$0x1]
  %v9420 = vsel %vm9322, 0, %v9419
  %9421 = vst [vmem:[%s4 + $0x180] sm:$0x1] %v9420
  %v9422 = vld [vmem:[%s4 + $0x18c] sm:$0x1]
  %v9423 = vsel %vm9322, 0, %v9422
  %9424 = vst [vmem:[%s4 + $0x18c] sm:$0x1] %v9423
  %v9425 = vld [vmem:[%s4 + $0x198] sm:$0x1]
  %v9426 = vsel %vm9322, 0, %v9425
  %9427 = vst [vmem:[%s4 + $0x198] sm:$0x1] %v9426
  %v9428 = vld [vmem:[%s4 + $0x1a4] sm:$0x1]
  %v9429 = vsel %vm9322, 0, %v9428
  %9430 = vst [vmem:[%s4 + $0x1a4] sm:$0x1] %v9429
  %vm9431 = vsmask.f32 7938
  %vm9432 = vmand %vm9320, %vm9431
  %v9433 = vld [vmem:[%s4 + $0x8] sm:$0x1]
  %v9434 = vsel %vm9432, 0, %v9433
  %9435 = vst [vmem:[%s4 + $0x8] sm:$0x1] %v9434
  %v9436 = vld [vmem:[%s4 + $0x14] sm:$0x1]
  %v9437 = vsel %vm9432, 0, %v9436
  %9438 = vst [vmem:[%s4 + $0x14] sm:$0x1] %v9437
  %v9439 = vld [vmem:[%s4 + $0x20] sm:$0x1]
  %v9440 = vsel %vm9432, 0, %v9439
  %9441 = vst [vmem:[%s4 + $0x20] sm:$0x1] %v9440
  %v9442 = vld [vmem:[%s4 + $0x2c] sm:$0x1]
  %v9443 = vsel %vm9432, 0, %v9442
  %9444 = vst [vmem:[%s4 + $0x2c] sm:$0x1] %v9443
  %v9445 = vld [vmem:[%s4 + $0x38] sm:$0x1]
  %v9446 = vsel %vm9432, 0, %v9445
  %9447 = vst [vmem:[%s4 + $0x38] sm:$0x1] %v9446
  %v9448 = vld [vmem:[%s4 + $0x44] sm:$0x1]
  %v9449 = vsel %vm9432, 0, %v9448
  %9450 = vst [vmem:[%s4 + $0x44] sm:$0x1] %v9449
  %v9451 = vld [vmem:[%s4 + $0x50] sm:$0x1]
  %v9452 = vsel %vm9432, 0, %v9451
  %9453 = vst [vmem:[%s4 + $0x50] sm:$0x1] %v9452
  %v9454 = vld [vmem:[%s4 + $0x5c] sm:$0x1]
  %v9455 = vsel %vm9432, 0, %v9454
  %9456 = vst [vmem:[%s4 + $0x5c] sm:$0x1] %v9455
  %v9457 = vld [vmem:[%s4 + $0x68] sm:$0x1]
  %v9458 = vsel %vm9432, 0, %v9457
  %9459 = vst [vmem:[%s4 + $0x68] sm:$0x1] %v9458
  %v9460 = vld [vmem:[%s4 + $0x74] sm:$0x1]
  %v9461 = vsel %vm9432, 0, %v9460
  %9462 = vst [vmem:[%s4 + $0x74] sm:$0x1] %v9461
  %v9463 = vld [vmem:[%s4 + $0x80] sm:$0x1]
  %v9464 = vsel %vm9432, 0, %v9463
  %9465 = vst [vmem:[%s4 + $0x80] sm:$0x1] %v9464
  %v9466 = vld [vmem:[%s4 + $0x8c] sm:$0x1]
  %v9467 = vsel %vm9432, 0, %v9466
  %9468 = vst [vmem:[%s4 + $0x8c] sm:$0x1] %v9467
  %v9469 = vld [vmem:[%s4 + $0x98] sm:$0x1]
  %v9470 = vsel %vm9432, 0, %v9469
  %9471 = vst [vmem:[%s4 + $0x98] sm:$0x1] %v9470
  %v9472 = vld [vmem:[%s4 + $0xa4] sm:$0x1]
  %v9473 = vsel %vm9432, 0, %v9472
  %9474 = vst [vmem:[%s4 + $0xa4] sm:$0x1] %v9473
  %v9475 = vld [vmem:[%s4 + $0xb0] sm:$0x1]
  %v9476 = vsel %vm9432, 0, %v9475
  %9477 = vst [vmem:[%s4 + $0xb0] sm:$0x1] %v9476
  %v9478 = vld [vmem:[%s4 + $0xbc] sm:$0x1]
  %v9479 = vsel %vm9432, 0, %v9478
  %9480 = vst [vmem:[%s4 + $0xbc] sm:$0x1] %v9479
  %v9481 = vld [vmem:[%s4 + $0xc8] sm:$0x1]
  %v9482 = vsel %vm9432, 0, %v9481
  %9483 = vst [vmem:[%s4 + $0xc8] sm:$0x1] %v9482
  %v9484 = vld [vmem:[%s4 + $0xd4] sm:$0x1]
  %v9485 = vsel %vm9432, 0, %v9484
  %9486 = vst [vmem:[%s4 + $0xd4] sm:$0x1] %v9485
  %v9487 = vld [vmem:[%s4 + $0xe0] sm:$0x1]
  %v9488 = vsel %vm9432, 0, %v9487
  %9489 = vst [vmem:[%s4 + $0xe0] sm:$0x1] %v9488
  %v9490 = vld [vmem:[%s4 + $0xec] sm:$0x1]
  %v9491 = vsel %vm9432, 0, %v9490
  %9492 = vst [vmem:[%s4 + $0xec] sm:$0x1] %v9491
  %v9493 = vld [vmem:[%s4 + $0xf8] sm:$0x1]
  %v9494 = vsel %vm9432, 0, %v9493
  %9495 = vst [vmem:[%s4 + $0xf8] sm:$0x1] %v9494
  %v9496 = vld [vmem:[%s4 + $0x104] sm:$0x1]
  %v9497 = vsel %vm9432, 0, %v9496
  %9498 = vst [vmem:[%s4 + $0x104] sm:$0x1] %v9497
  %v9499 = vld [vmem:[%s4 + $0x110] sm:$0x1]
  %v9500 = vsel %vm9432, 0, %v9499
  %9501 = vst [vmem:[%s4 + $0x110] sm:$0x1] %v9500
  %v9502 = vld [vmem:[%s4 + $0x11c] sm:$0x1]
  %v9503 = vsel %vm9432, 0, %v9502
  %9504 = vst [vmem:[%s4 + $0x11c] sm:$0x1] %v9503
  %v9505 = vld [vmem:[%s4 + $0x128] sm:$0x1]
  %v9506 = vsel %vm9432, 0, %v9505
  %9507 = vst [vmem:[%s4 + $0x128] sm:$0x1] %v9506
  %v9508 = vld [vmem:[%s4 + $0x134] sm:$0x1]
  %v9509 = vsel %vm9432, 0, %v9508
  %9510 = vst [vmem:[%s4 + $0x134] sm:$0x1] %v9509
  %v9511 = vld [vmem:[%s4 + $0x140] sm:$0x1]
  %v9512 = vsel %vm9432, 0, %v9511
  %9513 = vst [vmem:[%s4 + $0x140] sm:$0x1] %v9512
  %v9514 = vld [vmem:[%s4 + $0x14c] sm:$0x1]
  %v9515 = vsel %vm9432, 0, %v9514
  %9516 = vst [vmem:[%s4 + $0x14c] sm:$0x1] %v9515
  %v9517 = vld [vmem:[%s4 + $0x158] sm:$0x1]
  %v9518 = vsel %vm9432, 0, %v9517
  %9519 = vst [vmem:[%s4 + $0x158] sm:$0x1] %v9518
  %v9520 = vld [vmem:[%s4 + $0x164] sm:$0x1]
  %v9521 = vsel %vm9432, 0, %v9520
  %9522 = vst [vmem:[%s4 + $0x164] sm:$0x1] %v9521
  %v9523 = vld [vmem:[%s4 + $0x170] sm:$0x1]
  %v9524 = vsel %vm9432, 0, %v9523
  %9525 = vst [vmem:[%s4 + $0x170] sm:$0x1] %v9524
  %v9526 = vld [vmem:[%s4 + $0x17c] sm:$0x1]
  %v9527 = vsel %vm9432, 0, %v9526
  %9528 = vst [vmem:[%s4 + $0x17c] sm:$0x1] %v9527
  %v9529 = vld [vmem:[%s4 + $0x188] sm:$0x1]
  %v9530 = vsel %vm9432, 0, %v9529
  %9531 = vst [vmem:[%s4 + $0x188] sm:$0x1] %v9530
  %v9532 = vld [vmem:[%s4 + $0x194] sm:$0x1]
  %v9533 = vsel %vm9432, 0, %v9532
  %9534 = vst [vmem:[%s4 + $0x194] sm:$0x1] %v9533
  %v9535 = vld [vmem:[%s4 + $0x1a0] sm:$0x1]
  %v9536 = vsel %vm9432, 0, %v9535
  %9537 = vst [vmem:[%s4 + $0x1a0] sm:$0x1] %v9536
  %v9538 = vld [vmem:[%s4 + $0x1ac] sm:$0x1]
  %v9539 = vsel %vm9432, 0, %v9538
  %9540 = vst [vmem:[%s4 + $0x1ac] sm:$0x1] %v9539
  %v9541 = vpack.c.bf16 %v9244, %v9243
  %v9542 = vpack.c.bf16 %v9246, %v9245
  %v9543 = vpack.c.bf16 %v9248, %v9247
  %v9544 = vpack.c.bf16 %v9250, %v9249
  %v9545 = vpack.c.bf16 %v9252, %v9251
  %v9546 = vpack.c.bf16 %v9254, %v9253
  %v9547 = vpack.c.bf16 %v9256, %v9255
  %v9548 = vpack.c.bf16 %v9258, %v9257
  %v9549 = vpack.c.bf16 %v9260, %v9259
  %v9550 = vpack.c.bf16 %v9262, %v9261
  %v9551 = vpack.c.bf16 %v9264, %v9263
  %v9552 = vpack.c.bf16 %v9266, %v9265
  %v9553 = vpack.c.bf16 %v9268, %v9267
  %v9554 = vpack.c.bf16 %v9270, %v9269
  %v9555 = vpack.c.bf16 %v9272, %v9271
  %v9556 = vpack.c.bf16 %v9274, %v9273
  %v9557 = vpack.c.bf16 %v9276, %v9275
  %v9558 = vpack.c.bf16 %v9278, %v9277
  %v9559 = vpack.c.bf16 %v9280, %v9279
  %v9560 = vpack.c.bf16 %v9282, %v9281
  %v9561 = vpack.c.bf16 %v9284, %v9283
  %v9562 = vpack.c.bf16 %v9286, %v9285
  %v9563 = vpack.c.bf16 %v9288, %v9287
  %v9564 = vpack.c.bf16 %v9290, %v9289
  %v9565 = vpack.c.bf16 %v9292, %v9291
  %v9566 = vpack.c.bf16 %v9294, %v9293
  %v9567 = vpack.c.bf16 %v9296, %v9295
  %v9568 = vpack.c.bf16 %v9298, %v9297
  %v9569 = vpack.c.bf16 %v9300, %v9299
  %v9570 = vpack.c.bf16 %v9302, %v9301
  %v9571 = vpack.c.bf16 %v9304, %v9303
  %v9572 = vpack.c.bf16 %v9306, %v9305
  %v9605 = vunpack.c.l.b16 %v9541
  %v9606 = vunpack.c.h.b16 %v9541
  %v9607 = vunpack.c.l.b16 %v9542
  %v9608 = vunpack.c.h.b16 %v9542
  %v9609 = vunpack.c.l.b16 %v9543
  %v9610 = vunpack.c.h.b16 %v9543
  %v9611 = vunpack.c.l.b16 %v9544
  %v9612 = vunpack.c.h.b16 %v9544
  %v9613 = vunpack.c.l.b16 %v9545
  %v9614 = vunpack.c.h.b16 %v9545
  %v9615 = vunpack.c.l.b16 %v9546
  %v9616 = vunpack.c.h.b16 %v9546
  %v9617 = vunpack.c.l.b16 %v9547
  %v9618 = vunpack.c.h.b16 %v9547
  %v9619 = vunpack.c.l.b16 %v9548
  %v9620 = vunpack.c.h.b16 %v9548
  %v9621 = vunpack.c.l.b16 %v9549
  %v9622 = vunpack.c.h.b16 %v9549
  %v9623 = vunpack.c.l.b16 %v9550
  %v9624 = vunpack.c.h.b16 %v9550
  %v9625 = vunpack.c.l.b16 %v9551
  %v9626 = vunpack.c.h.b16 %v9551
  %v9627 = vunpack.c.l.b16 %v9552
  %v9628 = vunpack.c.h.b16 %v9552
  %v9629 = vunpack.c.l.b16 %v9553
  %v9630 = vunpack.c.h.b16 %v9553
  %v9631 = vunpack.c.l.b16 %v9554
  %v9632 = vunpack.c.h.b16 %v9554
  %v9633 = vunpack.c.l.b16 %v9555
  %v9634 = vunpack.c.h.b16 %v9555
  %v9635 = vunpack.c.l.b16 %v9556
  %v9636 = vunpack.c.h.b16 %v9556
  %v9637 = vunpack.c.l.b16 %v9557
  %v9638 = vunpack.c.h.b16 %v9557
  %v9639 = vunpack.c.l.b16 %v9558
  %v9640 = vunpack.c.h.b16 %v9558
  %v9641 = vunpack.c.l.b16 %v9559
  %v9642 = vunpack.c.h.b16 %v9559
  %v9643 = vunpack.c.l.b16 %v9560
  %v9644 = vunpack.c.h.b16 %v9560
  %v9645 = vunpack.c.l.b16 %v9561
  %v9646 = vunpack.c.h.b16 %v9561
  %v9647 = vunpack.c.l.b16 %v9562
  %v9648 = vunpack.c.h.b16 %v9562
  %v9649 = vunpack.c.l.b16 %v9563
  %v9650 = vunpack.c.h.b16 %v9563
  %v9651 = vunpack.c.l.b16 %v9564
  %v9652 = vunpack.c.h.b16 %v9564
  %v9653 = vunpack.c.l.b16 %v9565
  %v9654 = vunpack.c.h.b16 %v9565
  %v9655 = vunpack.c.l.b16 %v9566
  %v9656 = vunpack.c.h.b16 %v9566
  %v9657 = vunpack.c.l.b16 %v9567
  %v9658 = vunpack.c.h.b16 %v9567
  %v9659 = vunpack.c.l.b16 %v9568
  %v9660 = vunpack.c.h.b16 %v9568
  %v9661 = vunpack.c.l.b16 %v9569
  %v9662 = vunpack.c.h.b16 %v9569
  %v9663 = vunpack.c.l.b16 %v9570
  %v9664 = vunpack.c.h.b16 %v9570
  %v9665 = vunpack.c.l.b16 %v9571
  %v9666 = vunpack.c.h.b16 %v9571
  %v9667 = vunpack.c.l.b16 %v9572
  %v9668 = vunpack.c.h.b16 %v9572
  %v9669 = vpack.c.b16 %v9605, %v9605
  %v9670 = vpack.c.b16 %v9606, %v9606
  %v9671 = vpack.c.b16 %v9607, %v9607
  %v9672 = vpack.c.b16 %v9608, %v9608
  %v9673 = vpack.c.b16 %v9609, %v9609
  %v9674 = vpack.c.b16 %v9610, %v9610
  %v9675 = vpack.c.b16 %v9611, %v9611
  %v9676 = vpack.c.b16 %v9612, %v9612
  %v9677 = vpack.c.b16 %v9613, %v9613
  %v9678 = vpack.c.b16 %v9614, %v9614
  %v9679 = vpack.c.b16 %v9615, %v9615
  %v9680 = vpack.c.b16 %v9616, %v9616
  %v9681 = vpack.c.b16 %v9617, %v9617
  %v9682 = vpack.c.b16 %v9618, %v9618
  %v9683 = vpack.c.b16 %v9619, %v9619
  %v9684 = vpack.c.b16 %v9620, %v9620
  %v9685 = vpack.c.b16 %v9621, %v9621
  %v9686 = vpack.c.b16 %v9622, %v9622
  %v9687 = vpack.c.b16 %v9623, %v9623
  %v9688 = vpack.c.b16 %v9624, %v9624
  %v9689 = vpack.c.b16 %v9625, %v9625
  %v9690 = vpack.c.b16 %v9626, %v9626
  %v9691 = vpack.c.b16 %v9627, %v9627
  %v9692 = vpack.c.b16 %v9628, %v9628
  %v9693 = vpack.c.b16 %v9629, %v9629
  %v9694 = vpack.c.b16 %v9630, %v9630
  %v9695 = vpack.c.b16 %v9631, %v9631
  %v9696 = vpack.c.b16 %v9632, %v9632
  %v9697 = vpack.c.b16 %v9633, %v9633
  %v9698 = vpack.c.b16 %v9634, %v9634
  %v9699 = vpack.c.b16 %v9635, %v9635
  %v9700 = vpack.c.b16 %v9636, %v9636
  %v9701 = vpack.c.b16 %v9637, %v9637
  %v9702 = vpack.c.b16 %v9638, %v9638
  %v9703 = vpack.c.b16 %v9639, %v9639
  %v9704 = vpack.c.b16 %v9640, %v9640
  %v9705 = vpack.c.b16 %v9641, %v9641
  %v9706 = vpack.c.b16 %v9642, %v9642
  %v9707 = vpack.c.b16 %v9643, %v9643
  %v9708 = vpack.c.b16 %v9644, %v9644
  %v9709 = vpack.c.b16 %v9645, %v9645
  %v9710 = vpack.c.b16 %v9646, %v9646
  %v9711 = vpack.c.b16 %v9647, %v9647
  %v9712 = vpack.c.b16 %v9648, %v9648
  %v9713 = vpack.c.b16 %v9649, %v9649
  %v9714 = vpack.c.b16 %v9650, %v9650
  %v9715 = vpack.c.b16 %v9651, %v9651
  %v9716 = vpack.c.b16 %v9652, %v9652
  %v9717 = vpack.c.b16 %v9653, %v9653
  %v9718 = vpack.c.b16 %v9654, %v9654
  %v9719 = vpack.c.b16 %v9655, %v9655
  %v9720 = vpack.c.b16 %v9656, %v9656
  %v9721 = vpack.c.b16 %v9657, %v9657
  %v9722 = vpack.c.b16 %v9658, %v9658
  %v9723 = vpack.c.b16 %v9659, %v9659
  %v9724 = vpack.c.b16 %v9660, %v9660
  %v9725 = vpack.c.b16 %v9661, %v9661
  %v9726 = vpack.c.b16 %v9662, %v9662
  %v9727 = vpack.c.b16 %v9663, %v9663
  %v9728 = vpack.c.b16 %v9664, %v9664
  %v9729 = vpack.c.b16 %v9665, %v9665
  %v9730 = vpack.c.b16 %v9666, %v9666
  %v9731 = vpack.c.b16 %v9667, %v9667
  %v9732 = vpack.c.b16 %v9668, %v9668
  %vm9733 = vsmask.f32 4368
  %vm9734 = vmor %vm9321, %vm9733
  %v9736 = vshrl.u32 %v9669, 16
  %v9738 = vrot.slane %v9736, 7
  %v9739 = vshll.u32 %v9669, 16
  %v9741 = vor.u32 %v9738, %v9739
  %v9742 = vrot.slane %v9738, 4
  %v9744 = vshrl.u32 %v9670, 16
  %v9746 = vrot.slane %v9744, 7
  %v9747 = vshll.u32 %v9670, 16
  %v9749 = vor.u32 %v9746, %v9747
  %v9750 = vsel %vm9734, %v9742, %v9749
  %v9751 = vrot.slane %v9746, 4
  %v9753 = vshrl.u32 %v9671, 16
  %v9755 = vrot.slane %v9753, 7
  %v9756 = vshll.u32 %v9671, 16
  %v9758 = vor.u32 %v9755, %v9756
  %v9759 = vrot.slane %v9755, 4
  %v9761 = vshrl.u32 %v9672, 16
  %v9763 = vrot.slane %v9761, 7
  %v9764 = vshll.u32 %v9672, 16
  %v9766 = vor.u32 %v9763, %v9764
  %v9767 = vsel %vm9734, %v9759, %v9766
  %v9768 = vrot.slane %v9763, 4
  %v9770 = vshrl.u32 %v9673, 16
  %v9772 = vrot.slane %v9770, 7
  %v9773 = vshll.u32 %v9673, 16
  %v9775 = vor.u32 %v9772, %v9773
  %v9776 = vrot.slane %v9772, 4
  %v9778 = vshrl.u32 %v9674, 16
  %v9780 = vrot.slane %v9778, 7
  %v9781 = vshll.u32 %v9674, 16
  %v9783 = vor.u32 %v9780, %v9781
  %v9784 = vsel %vm9734, %v9776, %v9783
  %v9785 = vrot.slane %v9780, 4
  %v9787 = vshrl.u32 %v9675, 16
  %v9789 = vrot.slane %v9787, 7
  %v9790 = vshll.u32 %v9675, 16
  %v9792 = vor.u32 %v9789, %v9790
  %v9793 = vrot.slane %v9789, 4
  %v9795 = vshrl.u32 %v9676, 16
  %v9797 = vrot.slane %v9795, 7
  %v9798 = vshll.u32 %v9676, 16
  %v9800 = vor.u32 %v9797, %v9798
  %v9801 = vsel %vm9734, %v9793, %v9800
  %v9802 = vrot.slane %v9797, 4
  %v9804 = vshrl.u32 %v9677, 16
  %v9806 = vrot.slane %v9804, 7
  %v9807 = vshll.u32 %v9677, 16
  %v9809 = vor.u32 %v9806, %v9807
  %v9810 = vrot.slane %v9806, 4
  %v9812 = vshrl.u32 %v9678, 16
  %v9814 = vrot.slane %v9812, 7
  %v9815 = vshll.u32 %v9678, 16
  %v9817 = vor.u32 %v9814, %v9815
  %v9818 = vsel %vm9734, %v9810, %v9817
  %v9819 = vrot.slane %v9814, 4
  %v9821 = vshrl.u32 %v9679, 16
  %v9823 = vrot.slane %v9821, 7
  %v9824 = vshll.u32 %v9679, 16
  %v9826 = vor.u32 %v9823, %v9824
  %v9827 = vrot.slane %v9823, 4
  %v9829 = vshrl.u32 %v9680, 16
  %v9831 = vrot.slane %v9829, 7
  %v9832 = vshll.u32 %v9680, 16
  %v9834 = vor.u32 %v9831, %v9832
  %v9835 = vsel %vm9734, %v9827, %v9834
  %v9836 = vrot.slane %v9831, 4
  %v9838 = vshrl.u32 %v9681, 16
  %v9840 = vrot.slane %v9838, 7
  %v9841 = vshll.u32 %v9681, 16
  %v9843 = vor.u32 %v9840, %v9841
  %v9844 = vrot.slane %v9840, 4
  %v9846 = vshrl.u32 %v9682, 16
  %v9848 = vrot.slane %v9846, 7
  %v9849 = vshll.u32 %v9682, 16
  %v9851 = vor.u32 %v9848, %v9849
  %v9852 = vsel %vm9734, %v9844, %v9851
  %v9853 = vrot.slane %v9848, 4
  %v9855 = vshrl.u32 %v9683, 16
  %v9857 = vrot.slane %v9855, 7
  %v9858 = vshll.u32 %v9683, 16
  %v9860 = vor.u32 %v9857, %v9858
  %v9861 = vrot.slane %v9857, 4
  %v9863 = vshrl.u32 %v9684, 16
  %v9865 = vrot.slane %v9863, 7
  %v9866 = vshll.u32 %v9684, 16
  %v9868 = vor.u32 %v9865, %v9866
  %v9869 = vsel %vm9734, %v9861, %v9868
  %v9870 = vrot.slane %v9865, 4
  %v9872 = vshrl.u32 %v9685, 16
  %v9874 = vrot.slane %v9872, 7
  %v9875 = vshll.u32 %v9685, 16
  %v9877 = vor.u32 %v9874, %v9875
  %v9878 = vrot.slane %v9874, 4
  %v9880 = vshrl.u32 %v9686, 16
  %v9882 = vrot.slane %v9880, 7
  %v9883 = vshll.u32 %v9686, 16
  %v9885 = vor.u32 %v9882, %v9883
  %v9886 = vsel %vm9734, %v9878, %v9885
  %v9887 = vrot.slane %v9882, 4
  %v9889 = vshrl.u32 %v9687, 16
  %v9891 = vrot.slane %v9889, 7
  %v9892 = vshll.u32 %v9687, 16
  %v9894 = vor.u32 %v9891, %v9892
  %v9895 = vrot.slane %v9891, 4
  %v9897 = vshrl.u32 %v9688, 16
  %v9899 = vrot.slane %v9897, 7
  %v9900 = vshll.u32 %v9688, 16
  %v9902 = vor.u32 %v9899, %v9900
  %v9903 = vsel %vm9734, %v9895, %v9902
  %v9904 = vrot.slane %v9899, 4
  %v9906 = vshrl.u32 %v9689, 16
  %v9908 = vrot.slane %v9906, 7
  %v9909 = vshll.u32 %v9689, 16
  %v9911 = vor.u32 %v9908, %v9909
  %v9912 = vrot.slane %v9908, 4
  %v9914 = vshrl.u32 %v9690, 16
  %v9916 = vrot.slane %v9914, 7
  %v9917 = vshll.u32 %v9690, 16
  %v9919 = vor.u32 %v9916, %v9917
  %v9920 = vsel %vm9734, %v9912, %v9919
  %v9921 = vrot.slane %v9916, 4
  %v9923 = vshrl.u32 %v9691, 16
  %v9925 = vrot.slane %v9923, 7
  %v9926 = vshll.u32 %v9691, 16
  %v9928 = vor.u32 %v9925, %v9926
  %v9929 = vrot.slane %v9925, 4
  %v9931 = vshrl.u32 %v9692, 16
  %v9933 = vrot.slane %v9931, 7
  %v9934 = vshll.u32 %v9692, 16
  %v9936 = vor.u32 %v9933, %v9934
  %v9937 = vsel %vm9734, %v9929, %v9936
  %v9938 = vrot.slane %v9933, 4
  %v9940 = vshrl.u32 %v9693, 16
  %v9942 = vrot.slane %v9940, 7
  %v9943 = vshll.u32 %v9693, 16
  %v9945 = vor.u32 %v9942, %v9943
  %v9946 = vrot.slane %v9942, 4
  %v9948 = vshrl.u32 %v9694, 16
  %v9950 = vrot.slane %v9948, 7
  %v9951 = vshll.u32 %v9694, 16
  %v9953 = vor.u32 %v9950, %v9951
  %v9954 = vsel %vm9734, %v9946, %v9953
  %v9955 = vrot.slane %v9950, 4
  %v9957 = vshrl.u32 %v9695, 16
  %v9959 = vrot.slane %v9957, 7
  %v9960 = vshll.u32 %v9695, 16
  %v9962 = vor.u32 %v9959, %v9960
  %v9963 = vrot.slane %v9959, 4
  %v9965 = vshrl.u32 %v9696, 16
  %v9967 = vrot.slane %v9965, 7
  %v9968 = vshll.u32 %v9696, 16
  %v9970 = vor.u32 %v9967, %v9968
  %v9971 = vsel %vm9734, %v9963, %v9970
  %v9972 = vrot.slane %v9967, 4
  %v9974 = vshrl.u32 %v9697, 16
  %v9976 = vrot.slane %v9974, 7
  %v9977 = vshll.u32 %v9697, 16
  %v9979 = vor.u32 %v9976, %v9977
  %v9980 = vrot.slane %v9976, 4
  %v9982 = vshrl.u32 %v9698, 16
  %v9984 = vrot.slane %v9982, 7
  %v9985 = vshll.u32 %v9698, 16
  %v9987 = vor.u32 %v9984, %v9985
  %v9988 = vsel %vm9734, %v9980, %v9987
  %v9989 = vrot.slane %v9984, 4
  %v9991 = vshrl.u32 %v9699, 16
  %v9993 = vrot.slane %v9991, 7
  %v9994 = vshll.u32 %v9699, 16
  %v9996 = vor.u32 %v9993, %v9994
  %v9997 = vrot.slane %v9993, 4
  %v9999 = vshrl.u32 %v9700, 16
  %v10001 = vrot.slane %v9999, 7
  %v10002 = vshll.u32 %v9700, 16
  %v10004 = vor.u32 %v10001, %v10002
  %v10005 = vsel %vm9734, %v9997, %v10004
  %v10006 = vrot.slane %v10001, 4
  %v10008 = vshrl.u32 %v9701, 16
  %v10010 = vrot.slane %v10008, 7
  %v10011 = vshll.u32 %v9701, 16
  %v10013 = vor.u32 %v10010, %v10011
  %v10014 = vrot.slane %v10010, 4
  %v10016 = vshrl.u32 %v9702, 16
  %v10018 = vrot.slane %v10016, 7
  %v10019 = vshll.u32 %v9702, 16
  %v10021 = vor.u32 %v10018, %v10019
  %v10022 = vsel %vm9734, %v10014, %v10021
  %v10023 = vrot.slane %v10018, 4
  %v10025 = vshrl.u32 %v9703, 16
  %v10027 = vrot.slane %v10025, 7
  %v10028 = vshll.u32 %v9703, 16
  %v10030 = vor.u32 %v10027, %v10028
  %v10031 = vrot.slane %v10027, 4
  %v10033 = vshrl.u32 %v9704, 16
  %v10035 = vrot.slane %v10033, 7
  %v10036 = vshll.u32 %v9704, 16
  %v10038 = vor.u32 %v10035, %v10036
  %v10039 = vsel %vm9734, %v10031, %v10038
  %v10040 = vrot.slane %v10035, 4
  %v10042 = vshrl.u32 %v9705, 16
  %v10044 = vrot.slane %v10042, 7
  %v10045 = vshll.u32 %v9705, 16
  %v10047 = vor.u32 %v10044, %v10045
  %v10048 = vrot.slane %v10044, 4
  %v10050 = vshrl.u32 %v9706, 16
  %v10052 = vrot.slane %v10050, 7
  %v10053 = vshll.u32 %v9706, 16
  %v10055 = vor.u32 %v10052, %v10053
  %v10056 = vsel %vm9734, %v10048, %v10055
  %v10057 = vrot.slane %v10052, 4
  %v10059 = vshrl.u32 %v9707, 16
  %v10061 = vrot.slane %v10059, 7
  %v10062 = vshll.u32 %v9707, 16
  %v10064 = vor.u32 %v10061, %v10062
  %v10065 = vrot.slane %v10061, 4
  %v10067 = vshrl.u32 %v9708, 16
  %v10069 = vrot.slane %v10067, 7
  %v10070 = vshll.u32 %v9708, 16
  %v10072 = vor.u32 %v10069, %v10070
  %v10073 = vsel %vm9734, %v10065, %v10072
  %v10074 = vrot.slane %v10069, 4
  %v10076 = vshrl.u32 %v9709, 16
  %v10078 = vrot.slane %v10076, 7
  %v10079 = vshll.u32 %v9709, 16
  %v10081 = vor.u32 %v10078, %v10079
  %v10082 = vrot.slane %v10078, 4
  %v10084 = vshrl.u32 %v9710, 16
  %v10086 = vrot.slane %v10084, 7
  %v10087 = vshll.u32 %v9710, 16
  %v10089 = vor.u32 %v10086, %v10087
  %v10090 = vsel %vm9734, %v10082, %v10089
  %v10091 = vrot.slane %v10086, 4
  %v10093 = vshrl.u32 %v9711, 16
  %v10095 = vrot.slane %v10093, 7
  %v10096 = vshll.u32 %v9711, 16
  %v10098 = vor.u32 %v10095, %v10096
  %v10099 = vrot.slane %v10095, 4
  %v10101 = vshrl.u32 %v9712, 16
  %v10103 = vrot.slane %v10101, 7
  %v10104 = vshll.u32 %v9712, 16
  %v10106 = vor.u32 %v10103, %v10104
  %v10107 = vsel %vm9734, %v10099, %v10106
  %v10108 = vrot.slane %v10103, 4
  %v10110 = vshrl.u32 %v9713, 16
  %v10112 = vrot.slane %v10110, 7
  %v10113 = vshll.u32 %v9713, 16
  %v10115 = vor.u32 %v10112, %v10113
  %v10116 = vrot.slane %v10112, 4
  %v10118 = vshrl.u32 %v9714, 16
  %v10120 = vrot.slane %v10118, 7
  %v10121 = vshll.u32 %v9714, 16
  %v10123 = vor.u32 %v10120, %v10121
  %v10124 = vsel %vm9734, %v10116, %v10123
  %v10125 = vrot.slane %v10120, 4
  %v10127 = vshrl.u32 %v9715, 16
  %v10129 = vrot.slane %v10127, 7
  %v10130 = vshll.u32 %v9715, 16
  %v10132 = vor.u32 %v10129, %v10130
  %v10133 = vrot.slane %v10129, 4
  %v10135 = vshrl.u32 %v9716, 16
  %v10137 = vrot.slane %v10135, 7
  %v10138 = vshll.u32 %v9716, 16
  %v10140 = vor.u32 %v10137, %v10138
  %v10141 = vsel %vm9734, %v10133, %v10140
  %v10142 = vrot.slane %v10137, 4
  %v10144 = vshrl.u32 %v9717, 16
  %v10146 = vrot.slane %v10144, 7
  %v10147 = vshll.u32 %v9717, 16
  %v10149 = vor.u32 %v10146, %v10147
  %v10150 = vrot.slane %v10146, 4
  %v10152 = vshrl.u32 %v9718, 16
  %v10154 = vrot.slane %v10152, 7
  %v10155 = vshll.u32 %v9718, 16
  %v10157 = vor.u32 %v10154, %v10155
  %v10158 = vsel %vm9734, %v10150, %v10157
  %v10159 = vrot.slane %v10154, 4
  %v10161 = vshrl.u32 %v9719, 16
  %v10163 = vrot.slane %v10161, 7
  %v10164 = vshll.u32 %v9719, 16
  %v10166 = vor.u32 %v10163, %v10164
  %v10167 = vrot.slane %v10163, 4
  %v10169 = vshrl.u32 %v9720, 16
  %v10171 = vrot.slane %v10169, 7
  %v10172 = vshll.u32 %v9720, 16
  %v10174 = vor.u32 %v10171, %v10172
  %v10175 = vsel %vm9734, %v10167, %v10174
  %v10176 = vrot.slane %v10171, 4
  %v10178 = vshrl.u32 %v9721, 16
  %v10180 = vrot.slane %v10178, 7
  %v10181 = vshll.u32 %v9721, 16
  %v10183 = vor.u32 %v10180, %v10181
  %v10184 = vrot.slane %v10180, 4
  %v10186 = vshrl.u32 %v9722, 16
  %v10188 = vrot.slane %v10186, 7
  %v10189 = vshll.u32 %v9722, 16
  %v10191 = vor.u32 %v10188, %v10189
  %v10192 = vsel %vm9734, %v10184, %v10191
  %v10193 = vrot.slane %v10188, 4
  %v10195 = vshrl.u32 %v9723, 16
  %v10197 = vrot.slane %v10195, 7
  %v10198 = vshll.u32 %v9723, 16
  %v10200 = vor.u32 %v10197, %v10198
  %v10201 = vrot.slane %v10197, 4
  %v10203 = vshrl.u32 %v9724, 16
  %v10205 = vrot.slane %v10203, 7
  %v10206 = vshll.u32 %v9724, 16
  %v10208 = vor.u32 %v10205, %v10206
  %v10209 = vsel %vm9734, %v10201, %v10208
  %v10210 = vrot.slane %v10205, 4
  %v10212 = vshrl.u32 %v9725, 16
  %v10214 = vrot.slane %v10212, 7
  %v10215 = vshll.u32 %v9725, 16
  %v10217 = vor.u32 %v10214, %v10215
  %v10218 = vrot.slane %v10214, 4
  %v10220 = vshrl.u32 %v9726, 16
  %v10222 = vrot.slane %v10220, 7
  %v10223 = vshll.u32 %v9726, 16
  %v10225 = vor.u32 %v10222, %v10223
  %v10226 = vsel %vm9734, %v10218, %v10225
  %v10227 = vrot.slane %v10222, 4
  %v10229 = vshrl.u32 %v9727, 16
  %v10231 = vrot.slane %v10229, 7
  %v10232 = vshll.u32 %v9727, 16
  %v10234 = vor.u32 %v10231, %v10232
  %v10235 = vrot.slane %v10231, 4
  %v10237 = vshrl.u32 %v9728, 16
  %v10239 = vrot.slane %v10237, 7
  %v10240 = vshll.u32 %v9728, 16
  %v10242 = vor.u32 %v10239, %v10240
  %v10243 = vsel %vm9734, %v10235, %v10242
  %v10244 = vrot.slane %v10239, 4
  %v10246 = vshrl.u32 %v9729, 16
  %v10248 = vrot.slane %v10246, 7
  %v10249 = vshll.u32 %v9729, 16
  %v10251 = vor.u32 %v10248, %v10249
  %v10252 = vrot.slane %v10248, 4
  %v10254 = vshrl.u32 %v9730, 16
  %v10256 = vrot.slane %v10254, 7
  %v10257 = vshll.u32 %v9730, 16
  %v10259 = vor.u32 %v10256, %v10257
  %v10260 = vsel %vm9734, %v10252, %v10259
  %v10261 = vrot.slane %v10256, 4
  %v10263 = vshrl.u32 %v9731, 16
  %v10265 = vrot.slane %v10263, 7
  %v10266 = vshll.u32 %v9731, 16
  %v10268 = vor.u32 %v10265, %v10266
  %v10269 = vrot.slane %v10265, 4
  %v10271 = vshrl.u32 %v9732, 16
  %v10273 = vrot.slane %v10271, 7
  %v10274 = vshll.u32 %v9732, 16
  %v10276 = vor.u32 %v10273, %v10274
  %v10277 = vsel %vm9734, %v10269, %v10276
  %v10278 = vrot.slane %v10273, 4
  %s10375 = scalar_lea.vmem %s4, 12
  %vm10376 = vcmask 1043456
  %vm10377 = vmand %vm10376, %vm9431
  %v10378 = vld [vmem:[%s10375] sm:$0xf]
  %v10379 = vsel %vm10377, %v9741, %v10378
  %10380 = vst [vmem:[%s10375] sm:$0xf] %v10379
  %10381 = vst [vmem:[%s10375 + $0x4] sm:$0xf] %v9750
  %v10382 = vld [vmem:[%s10375 + $0x8] sm:$0x1]
  %v10383 = vsel %vm9322, %v9751, %v10382
  %10384 = vst [vmem:[%s10375 + $0x8] sm:$0x1] %v10383
  %v10385 = vld [vmem:[%s10375 + $0xc] sm:$0xf]
  %v10386 = vsel %vm10377, %v9758, %v10385
  %10387 = vst [vmem:[%s10375 + $0xc] sm:$0xf] %v10386
  %10388 = vst [vmem:[%s10375 + $0x10] sm:$0xf] %v9767
  %v10389 = vld [vmem:[%s10375 + $0x14] sm:$0x1]
  %v10390 = vsel %vm9322, %v9768, %v10389
  %10391 = vst [vmem:[%s10375 + $0x14] sm:$0x1] %v10390
  %v10392 = vld [vmem:[%s10375 + $0x18] sm:$0xf]
  %v10393 = vsel %vm10377, %v9775, %v10392
  %10394 = vst [vmem:[%s10375 + $0x18] sm:$0xf] %v10393
  %10395 = vst [vmem:[%s10375 + $0x1c] sm:$0xf] %v9784
  %v10396 = vld [vmem:[%s10375 + $0x20] sm:$0x1]
  %v10397 = vsel %vm9322, %v9785, %v10396
  %10398 = vst [vmem:[%s10375 + $0x20] sm:$0x1] %v10397
  %v10399 = vld [vmem:[%s10375 + $0x24] sm:$0xf]
  %v10400 = vsel %vm10377, %v9792, %v10399
  %10401 = vst [vmem:[%s10375 + $0x24] sm:$0xf] %v10400
  %10402 = vst [vmem:[%s10375 + $0x28] sm:$0xf] %v9801
  %v10403 = vld [vmem:[%s10375 + $0x2c] sm:$0x1]
  %v10404 = vsel %vm9322, %v9802, %v10403
  %10405 = vst [vmem:[%s10375 + $0x2c] sm:$0x1] %v10404
  %v10406 = vld [vmem:[%s10375 + $0x30] sm:$0xf]
  %v10407 = vsel %vm10377, %v9809, %v10406
  %10408 = vst [vmem:[%s10375 + $0x30] sm:$0xf] %v10407
  %10409 = vst [vmem:[%s10375 + $0x34] sm:$0xf] %v9818
  %v10410 = vld [vmem:[%s10375 + $0x38] sm:$0x1]
  %v10411 = vsel %vm9322, %v9819, %v10410
  %10412 = vst [vmem:[%s10375 + $0x38] sm:$0x1] %v10411
  %v10413 = vld [vmem:[%s10375 + $0x3c] sm:$0xf]
  %v10414 = vsel %vm10377, %v9826, %v10413
  %10415 = vst [vmem:[%s10375 + $0x3c] sm:$0xf] %v10414
  %10416 = vst [vmem:[%s10375 + $0x40] sm:$0xf] %v9835
  %v10417 = vld [vmem:[%s10375 + $0x44] sm:$0x1]
  %v10418 = vsel %vm9322, %v9836, %v10417
  %10419 = vst [vmem:[%s10375 + $0x44] sm:$0x1] %v10418
  %v10420 = vld [vmem:[%s10375 + $0x48] sm:$0xf]
  %v10421 = vsel %vm10377, %v9843, %v10420
  %10422 = vst [vmem:[%s10375 + $0x48] sm:$0xf] %v10421
  %10423 = vst [vmem:[%s10375 + $0x4c] sm:$0xf] %v9852
  %v10424 = vld [vmem:[%s10375 + $0x50] sm:$0x1]
  %v10425 = vsel %vm9322, %v9853, %v10424
  %10426 = vst [vmem:[%s10375 + $0x50] sm:$0x1] %v10425
  %v10427 = vld [vmem:[%s10375 + $0x54] sm:$0xf]
  %v10428 = vsel %vm10377, %v9860, %v10427
  %10429 = vst [vmem:[%s10375 + $0x54] sm:$0xf] %v10428
  %10430 = vst [vmem:[%s10375 + $0x58] sm:$0xf] %v9869
  %v10431 = vld [vmem:[%s10375 + $0x5c] sm:$0x1]
  %v10432 = vsel %vm9322, %v9870, %v10431
  %10433 = vst [vmem:[%s10375 + $0x5c] sm:$0x1] %v10432
  %v10434 = vld [vmem:[%s10375 + $0x60] sm:$0xf]
  %v10435 = vsel %vm10377, %v9877, %v10434
  %10436 = vst [vmem:[%s10375 + $0x60] sm:$0xf] %v10435
  %10437 = vst [vmem:[%s10375 + $0x64] sm:$0xf] %v9886
  %v10438 = vld [vmem:[%s10375 + $0x68] sm:$0x1]
  %v10439 = vsel %vm9322, %v9887, %v10438
  %10440 = vst [vmem:[%s10375 + $0x68] sm:$0x1] %v10439
  %v10441 = vld [vmem:[%s10375 + $0x6c] sm:$0xf]
  %v10442 = vsel %vm10377, %v9894, %v10441
  %10443 = vst [vmem:[%s10375 + $0x6c] sm:$0xf] %v10442
  %10444 = vst [vmem:[%s10375 + $0x70] sm:$0xf] %v9903
  %v10445 = vld [vmem:[%s10375 + $0x74] sm:$0x1]
  %v10446 = vsel %vm9322, %v9904, %v10445
  %10447 = vst [vmem:[%s10375 + $0x74] sm:$0x1] %v10446
  %v10448 = vld [vmem:[%s10375 + $0x78] sm:$0xf]
  %v10449 = vsel %vm10377, %v9911, %v10448
  %10450 = vst [vmem:[%s10375 + $0x78] sm:$0xf] %v10449
  %10451 = vst [vmem:[%s10375 + $0x7c] sm:$0xf] %v9920
  %v10452 = vld [vmem:[%s10375 + $0x80] sm:$0x1]
  %v10453 = vsel %vm9322, %v9921, %v10452
  %10454 = vst [vmem:[%s10375 + $0x80] sm:$0x1] %v10453
  %v10455 = vld [vmem:[%s10375 + $0x84] sm:$0xf]
  %v10456 = vsel %vm10377, %v9928, %v10455
  %10457 = vst [vmem:[%s10375 + $0x84] sm:$0xf] %v10456
  %10458 = vst [vmem:[%s10375 + $0x88] sm:$0xf] %v9937
  %v10459 = vld [vmem:[%s10375 + $0x8c] sm:$0x1]
  %v10460 = vsel %vm9322, %v9938, %v10459
  %10461 = vst [vmem:[%s10375 + $0x8c] sm:$0x1] %v10460
  %v10462 = vld [vmem:[%s10375 + $0x90] sm:$0xf]
  %v10463 = vsel %vm10377, %v9945, %v10462
  %10464 = vst [vmem:[%s10375 + $0x90] sm:$0xf] %v10463
  %10465 = vst [vmem:[%s10375 + $0x94] sm:$0xf] %v9954
  %v10466 = vld [vmem:[%s10375 + $0x98] sm:$0x1]
  %v10467 = vsel %vm9322, %v9955, %v10466
  %10468 = vst [vmem:[%s10375 + $0x98] sm:$0x1] %v10467
  %v10469 = vld [vmem:[%s10375 + $0x9c] sm:$0xf]
  %v10470 = vsel %vm10377, %v9962, %v10469
  %10471 = vst [vmem:[%s10375 + $0x9c] sm:$0xf] %v10470
  %10472 = vst [vmem:[%s10375 + $0xa0] sm:$0xf] %v9971
  %v10473 = vld [vmem:[%s10375 + $0xa4] sm:$0x1]
  %v10474 = vsel %vm9322, %v9972, %v10473
  %10475 = vst [vmem:[%s10375 + $0xa4] sm:$0x1] %v10474
  %v10476 = vld [vmem:[%s10375 + $0xa8] sm:$0xf]
  %v10477 = vsel %vm10377, %v9979, %v10476
  %10478 = vst [vmem:[%s10375 + $0xa8] sm:$0xf] %v10477
  %10479 = vst [vmem:[%s10375 + $0xac] sm:$0xf] %v9988
  %v10480 = vld [vmem:[%s10375 + $0xb0] sm:$0x1]
  %v10481 = vsel %vm9322, %v9989, %v10480
  %10482 = vst [vmem:[%s10375 + $0xb0] sm:$0x1] %v10481
  %v10483 = vld [vmem:[%s10375 + $0xb4] sm:$0xf]
  %v10484 = vsel %vm10377, %v9996, %v10483
  %10485 = vst [vmem:[%s10375 + $0xb4] sm:$0xf] %v10484
  %10486 = vst [vmem:[%s10375 + $0xb8] sm:$0xf] %v10005
  %v10487 = vld [vmem:[%s10375 + $0xbc] sm:$0x1]
  %v10488 = vsel %vm9322, %v10006, %v10487
  %10489 = vst [vmem:[%s10375 + $0xbc] sm:$0x1] %v10488
  %v10490 = vld [vmem:[%s10375 + $0xd8] sm:$0xf]
  %v10491 = vsel %vm10377, %v10013, %v10490
  %10492 = vst [vmem:[%s10375 + $0xd8] sm:$0xf] %v10491
  %10493 = vst [vmem:[%s10375 + $0xdc] sm:$0xf] %v10022
  %v10494 = vld [vmem:[%s10375 + $0xe0] sm:$0x1]
  %v10495 = vsel %vm9322, %v10023, %v10494
  %10496 = vst [vmem:[%s10375 + $0xe0] sm:$0x1] %v10495
  %v10497 = vld [vmem:[%s10375 + $0xe4] sm:$0xf]
  %v10498 = vsel %vm10377, %v10030, %v10497
  %10499 = vst [vmem:[%s10375 + $0xe4] sm:$0xf] %v10498
  %10500 = vst [vmem:[%s10375 + $0xe8] sm:$0xf] %v10039
  %v10501 = vld [vmem:[%s10375 + $0xec] sm:$0x1]
  %v10502 = vsel %vm9322, %v10040, %v10501
  %10503 = vst [vmem:[%s10375 + $0xec] sm:$0x1] %v10502
  %v10504 = vld [vmem:[%s10375 + $0xf0] sm:$0xf]
  %v10505 = vsel %vm10377, %v10047, %v10504
  %10506 = vst [vmem:[%s10375 + $0xf0] sm:$0xf] %v10505
  %10507 = vst [vmem:[%s10375 + $0xf4] sm:$0xf] %v10056
  %v10508 = vld [vmem:[%s10375 + $0xf8] sm:$0x1]
  %v10509 = vsel %vm9322, %v10057, %v10508
  %10510 = vst [vmem:[%s10375 + $0xf8] sm:$0x1] %v10509
  %v10511 = vld [vmem:[%s10375 + $0xfc] sm:$0xf]
  %v10512 = vsel %vm10377, %v10064, %v10511
  %10513 = vst [vmem:[%s10375 + $0xfc] sm:$0xf] %v10512
  %10514 = vst [vmem:[%s10375 + $0x100] sm:$0xf] %v10073
  %v10515 = vld [vmem:[%s10375 + $0x104] sm:$0x1]
  %v10516 = vsel %vm9322, %v10074, %v10515
  %10517 = vst [vmem:[%s10375 + $0x104] sm:$0x1] %v10516
  %v10518 = vld [vmem:[%s10375 + $0x108] sm:$0xf]
  %v10519 = vsel %vm10377, %v10081, %v10518
  %10520 = vst [vmem:[%s10375 + $0x108] sm:$0xf] %v10519
  %10521 = vst [vmem:[%s10375 + $0x10c] sm:$0xf] %v10090
  %v10522 = vld [vmem:[%s10375 + $0x110] sm:$0x1]
  %v10523 = vsel %vm9322, %v10091, %v10522
  %10524 = vst [vmem:[%s10375 + $0x110] sm:$0x1] %v10523
  %v10525 = vld [vmem:[%s10375 + $0x114] sm:$0xf]
  %v10526 = vsel %vm10377, %v10098, %v10525
  %10527 = vst [vmem:[%s10375 + $0x114] sm:$0xf] %v10526
  %10528 = vst [vmem:[%s10375 + $0x118] sm:$0xf] %v10107
  %v10529 = vld [vmem:[%s10375 + $0x11c] sm:$0x1]
  %v10530 = vsel %vm9322, %v10108, %v10529
  %10531 = vst [vmem:[%s10375 + $0x11c] sm:$0x1] %v10530
  %v10532 = vld [vmem:[%s10375 + $0x120] sm:$0xf]
  %v10533 = vsel %vm10377, %v10115, %v10532
  %10534 = vst [vmem:[%s10375 + $0x120] sm:$0xf] %v10533
  %10535 = vst [vmem:[%s10375 + $0x124] sm:$0xf] %v10124
  %v10536 = vld [vmem:[%s10375 + $0x128] sm:$0x1]
  %v10537 = vsel %vm9322, %v10125, %v10536
  %10538 = vst [vmem:[%s10375 + $0x128] sm:$0x1] %v10537
  %v10539 = vld [vmem:[%s10375 + $0x12c] sm:$0xf]
  %v10540 = vsel %vm10377, %v10132, %v10539
  %10541 = vst [vmem:[%s10375 + $0x12c] sm:$0xf] %v10540
  %10542 = vst [vmem:[%s10375 + $0x130] sm:$0xf] %v10141
  %v10543 = vld [vmem:[%s10375 + $0x134] sm:$0x1]
  %v10544 = vsel %vm9322, %v10142, %v10543
  %10545 = vst [vmem:[%s10375 + $0x134] sm:$0x1] %v10544
  %v10546 = vld [vmem:[%s10375 + $0x138] sm:$0xf]
  %v10547 = vsel %vm10377, %v10149, %v10546
  %10548 = vst [vmem:[%s10375 + $0x138] sm:$0xf] %v10547
  %10549 = vst [vmem:[%s10375 + $0x13c] sm:$0xf] %v10158
  %v10550 = vld [vmem:[%s10375 + $0x140] sm:$0x1]
  %v10551 = vsel %vm9322, %v10159, %v10550
  %10552 = vst [vmem:[%s10375 + $0x140] sm:$0x1] %v10551
  %v10553 = vld [vmem:[%s10375 + $0x144] sm:$0xf]
  %v10554 = vsel %vm10377, %v10166, %v10553
  %10555 = vst [vmem:[%s10375 + $0x144] sm:$0xf] %v10554
  %10556 = vst [vmem:[%s10375 + $0x148] sm:$0xf] %v10175
  %v10557 = vld [vmem:[%s10375 + $0x14c] sm:$0x1]
  %v10558 = vsel %vm9322, %v10176, %v10557
  %10559 = vst [vmem:[%s10375 + $0x14c] sm:$0x1] %v10558
  %v10560 = vld [vmem:[%s10375 + $0x150] sm:$0xf]
  %v10561 = vsel %vm10377, %v10183, %v10560
  %10562 = vst [vmem:[%s10375 + $0x150] sm:$0xf] %v10561
  %10563 = vst [vmem:[%s10375 + $0x154] sm:$0xf] %v10192
  %v10564 = vld [vmem:[%s10375 + $0x158] sm:$0x1]
  %v10565 = vsel %vm9322, %v10193, %v10564
  %10566 = vst [vmem:[%s10375 + $0x158] sm:$0x1] %v10565
  %v10567 = vld [vmem:[%s10375 + $0x15c] sm:$0xf]
  %v10568 = vsel %vm10377, %v10200, %v10567
  %10569 = vst [vmem:[%s10375 + $0x15c] sm:$0xf] %v10568
  %10570 = vst [vmem:[%s10375 + $0x160] sm:$0xf] %v10209
  %v10571 = vld [vmem:[%s10375 + $0x164] sm:$0x1]
  %v10572 = vsel %vm9322, %v10210, %v10571
  %10573 = vst [vmem:[%s10375 + $0x164] sm:$0x1] %v10572
  %v10574 = vld [vmem:[%s10375 + $0x168] sm:$0xf]
  %v10575 = vsel %vm10377, %v10217, %v10574
  %10576 = vst [vmem:[%s10375 + $0x168] sm:$0xf] %v10575
  %10577 = vst [vmem:[%s10375 + $0x16c] sm:$0xf] %v10226
  %v10578 = vld [vmem:[%s10375 + $0x170] sm:$0x1]
  %v10579 = vsel %vm9322, %v10227, %v10578
  %10580 = vst [vmem:[%s10375 + $0x170] sm:$0x1] %v10579
  %v10581 = vld [vmem:[%s10375 + $0x174] sm:$0xf]
  %v10582 = vsel %vm10377, %v10234, %v10581
  %10583 = vst [vmem:[%s10375 + $0x174] sm:$0xf] %v10582
  %10584 = vst [vmem:[%s10375 + $0x178] sm:$0xf] %v10243
  %v10585 = vld [vmem:[%s10375 + $0x17c] sm:$0x1]
  %v10586 = vsel %vm9322, %v10244, %v10585
  %10587 = vst [vmem:[%s10375 + $0x17c] sm:$0x1] %v10586
  %v10588 = vld [vmem:[%s10375 + $0x180] sm:$0xf]
  %v10589 = vsel %vm10377, %v10251, %v10588
  %10590 = vst [vmem:[%s10375 + $0x180] sm:$0xf] %v10589
  %10591 = vst [vmem:[%s10375 + $0x184] sm:$0xf] %v10260
  %v10592 = vld [vmem:[%s10375 + $0x188] sm:$0x1]
  %v10593 = vsel %vm9322, %v10261, %v10592
  %10594 = vst [vmem:[%s10375 + $0x188] sm:$0x1] %v10593
  %v10595 = vld [vmem:[%s10375 + $0x18c] sm:$0xf]
  %v10596 = vsel %vm10377, %v10268, %v10595
  %10597 = vst [vmem:[%s10375 + $0x18c] sm:$0xf] %v10596
  %10598 = vst [vmem:[%s10375 + $0x190] sm:$0xf] %v10277
  %v10599 = vld [vmem:[%s10375 + $0x194] sm:$0x1]
  %v10600 = vsel %vm9322, %v10278, %v10599
  %10601 = vst [vmem:[%s10375 + $0x194] sm:$0x1] %v10600
  // Predicated region
  $region18: #{tpu_custom_call.1} parent=0 // pred_check
    _
  $region19: #{tpu_custom_call.1} parent=0 // pred_check_branch
    %10603 = sbr.rel (0) target = $region21
  $region20: #{tpu_custom_call.1} parent=0 // pred_region
    _
  $region21: #{tpu_custom_call.1} parent=0 // pred_fallthru
    _
  // Predicated region
  $region22: #{tpu_custom_call.1} parent=0 // pred_check
    _
  $region23: #{tpu_custom_call.1} parent=0 // pred_check_branch
    %10605 = sbr.rel (0) target = $region25
  $region24: #{tpu_custom_call.1} parent=0 // pred_region
    _
  $region25: #{tpu_custom_call.1} parent=0 // pred_fallthru
    _

</llo_original>
